<compile_context>
chip_gen: v7x
topology: tpu7x:2x2x1
jax: 0.10.0
libtpu: 0.0.40
codegen_flags: <defaults>
</compile_context>

<pallas_src>
import jax
import jax.numpy as jnp
from jax.experimental import pallas as pl
from jax.experimental.pallas import tpu as pltpu

# --- configuration mirroring the constants in attention1.py -----------------
BATCH = 3          # batch_size
E_MAX_LEN = 6      # encoder_max_len
D_MAX_LEN = 7      # decoder_max_len
NUM_LAYERS = 4     # num_layers
EMB = 32           # `embedding` constructor argument
E_VOCAB = 10       # synthetic stand-in for len(ld.e_data.vocab)
D_VOCAB = 12       # synthetic stand-in for len(ld.d_data.vocab)

_PLANES = 128      # lane width of the packed f32 parameter buffer
_ILANES = 8        # lane width of the packed int32 token buffer


def _build_layout(entries):
    """name -> (row_offset, shape); every segment starts on an 8-row boundary."""
    layout, row = {}, 0
    for name, shape in entries:
        layout[name] = (row, shape)
        row += ((shape[0] + 7) // 8) * 8
    return layout, row


_P_ENTRIES = [
    ("w1f", (NUM_LAYERS * 2 * EMB, 4 * EMB)),   # encoder LSTM: [W_ih.T; W_hh.T] per layer
    ("w2f", (NUM_LAYERS * 2 * EMB, 4 * EMB)),   # decoder LSTM, fused the same way
    ("b1", (NUM_LAYERS, 4 * EMB)),              # b_ih + b_hh per layer
    ("b2", (NUM_LAYERS, 4 * EMB)),
    ("emb1", (E_VOCAB + 1, EMB)),
    ("emb2", (D_VOCAB + 1, EMB)),               # row 0 zeroed (padding_idx=0)
    ("lin1_wt", (E_MAX_LEN, E_MAX_LEN)),        # lin1 weight, transposed
    ("lin1_b", (1, E_MAX_LEN)),
    ("lin2_wt", (E_MAX_LEN + EMB, EMB)),        # lin2 weight, transposed
    ("lin2_b", (1, EMB)),
    ("lin3_wt", (EMB, D_VOCAB)),                # lin3 weight, transposed
    ("lin3_b", (1, D_VOCAB)),
    ("seg", (E_MAX_LEN * EMB, E_MAX_LEN)),      # 0/1 segment-sum matrix (Te*H, Te)
]
_I_ENTRIES = [
    ("e_tok_pad", (8 * E_MAX_LEN, 1)),          # encoder tokens at row 8*t + b
    ("e_len", (BATCH, 1)),
    ("d_tok", (BATCH, D_MAX_LEN)),
    ("dx_pad", (8 * (D_MAX_LEN - 1), 1)),       # decoder input tokens at row 8*t + b
]
_PLAYOUT, _PROWS = _build_layout(_P_ENTRIES)
_ILAYOUT, _IROWS = _build_layout(_I_ENTRIES)


def _pget(pparam, name, layer=None):
    """Static slice of the packed f32 parameter buffer (loads at the use site)."""
    row, (nr, nc) = _PLAYOUT[name]
    if layer is not None:
        per = nr // NUM_LAYERS
        row, nr = row + per * layer, per
    return pparam[row:row + nr, 0:nc]


def _iget(itok, name):
    row, (nr, nc) = _ILAYOUT[name]
    return itok[row:row + nr, 0:nc]


def _forward_math(itok, pparam, recip):
    f32 = jnp.float32
    B, Te, Td, L = BATCH, E_MAX_LEN, D_MAX_LEN, NUM_LAYERS
    E = H = EMB
    Ve1, Vd1, Vd = E_VOCAB + 1, D_VOCAB + 1, D_VOCAB

    def dot(a, b):
        return jnp.dot(a, b, preferred_element_type=f32)

    def sigmoid(x):
        # exact logistic via tanh: keeps the divide off the VPU (tanh is EUP)
        return 0.5 * (jnp.tanh(0.5 * x) + 1.0)

    def lstm_cell(x, h, c, wf, b):
        # one fused (B, E+H) @ (E+H, 4H) MXU issue per cell; gate order i,f,g,o
        g = dot(jnp.concatenate([x, h], axis=1), wf) + b
        sg = sigmoid(g)                      # full-width EUP, sliced afterwards
        tg = jnp.tanh(g)
        i, f = sg[:, 0:H], sg[:, H:2 * H]
        gg, o = tg[:, 2 * H:3 * H], sg[:, 3 * H:4 * H]
        c_new = f * c + i * gg
        h_new = o * jnp.tanh(c_new)
        return h_new, c_new

    # ---- tiny int inputs (loaded once) --------------------------------------
    e_len = _iget(itok, "e_len")                           # (B, 1)
    d_tok = _iget(itok, "d_tok")                           # (B, Td)
    enc_mask = [e_len > t for t in range(Te)]              # hoisted (B,1) bools

    # ---- batched embedding lookups (one MXU matmul each, off the recurrence) -
    iota_e = jax.lax.broadcasted_iota(jnp.int32, (8 * Te, Ve1), 1)
    emb_e = dot((_iget(itok, "e_tok_pad") == iota_e).astype(f32),
                _pget(pparam, "emb1"))                     # (8*Te, E), row 8t+b
    iota_d = jax.lax.broadcasted_iota(jnp.int32, (8 * (Td - 1), Vd1), 1)
    emb_d = dot((_iget(itok, "dx_pad") == iota_d).astype(f32),
                _pget(pparam, "emb2"))                     # (8*(Td-1), E)

    # ---- encoder: packed 4-layer LSTM, processed layer-major -----------------
    layer_in = [emb_e[8 * t:8 * t + B, :] for t in range(Te)]
    h_state, c_state = [], []
    b1_all = _pget(pparam, "b1")                           # (L, 4H), one tile
    for l in range(L):
        wf = _pget(pparam, "w1f", l)                       # loaded once per layer
        b = b1_all[l:l + 1, :]
        h = jnp.zeros((B, H), f32)
        c = jnp.zeros((B, H), f32)
        outs = []
        for t in range(Te):
            h_new, c_new = lstm_cell(layer_in[t], h, c, wf, b)
            h = jnp.where(enc_mask[t], h_new, h)           # freeze past the length
            c = jnp.where(enc_mask[t], c_new, c)
            outs.append(h_new)
        layer_in = outs
        h_state.append(h)
        c_state.append(c)

    # padded encoder outputs, lane-concatenated: upo_cat[b, k*H + j] = upo[b,k,j]
    upo_cat = jnp.concatenate(
        [jnp.where(enc_mask[t], layer_in[t], 0.0) for t in range(Te)], axis=1)
    upo_sum = dot(upo_cat, _pget(pparam, "seg"))           # (B, Te) per-slot sums

    iota_out = jax.lax.broadcasted_iota(jnp.int32, (B, Vd), 1)
    b2_all = _pget(pparam, "b2")

    # ---- decoder: attention + lin2 + one lstm2 step + masked CE per step -----
    loss = jnp.zeros((1, 1), f32)
    for t in range(Td - 1):
        h_top = h_state[L - 1]
        # attention scores s[b,k] = <h_top[b,:], upo[b,k,:]>  (segmented matmul)
        h_rep = jnp.concatenate([h_top] * Te, axis=1)      # (B, Te*H)
        s = dot(upo_cat * h_rep, _pget(pparam, "seg"))     # (B, Te)
        s = dot(s, _pget(pparam, "lin1_wt")) + _pget(pparam, "lin1_b")
        p = jnp.exp(s - jnp.max(s, axis=1, keepdims=True))
        p = p * recip(jnp.sum(p, axis=1, keepdims=True))   # softmax(dim=1)
        ctx = p * upo_sum                                  # == (c[:,:,None]*upo).sum(2)

        de = emb_d[8 * t:8 * t + B, :]                     # emb2(dx_t), (B, E)
        x = dot(jnp.concatenate([ctx, de], axis=1),
                _pget(pparam, "lin2_wt")) + _pget(pparam, "lin2_b")

        for l in range(L):                                 # one lstm2 step
            wf = _pget(pparam, "w2f", l)                   # loaded at the use site
            h_new, c_new = lstm_cell(x, h_state[l], c_state[l], wf,
                                     b2_all[l:l + 1, :])
            h_state[l], c_state[l] = h_new, c_new
            x = h_new

        logits = dot(h_state[L - 1], _pget(pparam, "lin3_wt")) + _pget(pparam, "lin3_b")

        # masked CrossEntropyLoss (mean over rows with nonzero label)
        dy = d_tok[:, t + 1:t + 2]                         # (B, 1)
        valid = (dy != 0).astype(f32)
        tgt_oh = (jnp.maximum(dy - 1, 0) == iota_out).astype(f32)
        lmax = jnp.max(logits, axis=1, keepdims=True)
        lse = jnp.log(jnp.sum(jnp.exp(logits - lmax), axis=1, keepdims=True)) + lmax
        ce = lse - jnp.sum(tgt_oh * logits, axis=1, keepdims=True)    # (B, 1)
        cnt = jnp.sum(valid, keepdims=True)                           # (1, 1)
        step = jnp.where(cnt > 0.0,
                         jnp.sum(ce * valid, keepdims=True)
                         * recip(jnp.maximum(cnt, 1.0)),
                         0.0)
        loss = loss + step
    return loss


def _attention_kernel(itok_ref, pparam_ref, loss_ref):
    loss_ref[...] = _forward_math(
        itok_ref, pparam_ref,
        recip=lambda x: pl.reciprocal(x, approx=True))


# ---------------------------- host-side packing ------------------------------
def pack_params(raw):
    """Fuse per-layer LSTM weights and pack every f32 parameter (plus the
    constant segment-sum matrix) into one 128-lane VMEM buffer."""
    f32 = jnp.float32
    L, H = NUM_LAYERS, EMB
    w1f = jnp.concatenate(
        [jnp.concatenate([raw["w1ih"][l].T, raw["w1hh"][l].T], axis=0)
         for l in range(L)], axis=0)                       # (L*(E+H), 4H)
    w2f = jnp.concatenate(
        [jnp.concatenate([raw["w2ih"][l].T, raw["w2hh"][l].T], axis=0)
         for l in range(L)], axis=0)
    seg = (jnp.arange(E_MAX_LEN * H)[:, None] // H
           == jnp.arange(E_MAX_LEN)[None, :]).astype(f32)  # (Te*H, Te)
    vals = {
        "w1f": w1f,
        "w2f": w2f,
        "b1": raw["b1ih"] + raw["b1hh"],
        "b2": raw["b2ih"] + raw["b2hh"],
        "emb1": raw["emb1"],
        "emb2": raw["emb2"],
        "lin1_wt": raw["lin1_w"].T,
        "lin1_b": raw["lin1_b"][None, :],
        "lin2_wt": raw["lin2_w"].T,
        "lin2_b": raw["lin2_b"][None, :],
        "lin3_wt": raw["lin3_w"].T,
        "lin3_b": raw["lin3_b"][None, :],
        "seg": seg,
    }
    buf = jnp.zeros((_PROWS, _PLANES), f32)
    for name, (row, (nr, nc)) in _PLAYOUT.items():
        v = vals[name].astype(f32)
        assert v.shape == (nr, nc), (name, v.shape, (nr, nc))
        buf = buf.at[row:row + nr, 0:nc].set(v)
    return buf


def pack_tokens(e_tok, e_len, d_tok):
    """Pack tokens/lengths into one int32 buffer (layout plumbing only)."""
    i32 = jnp.int32
    e_pad = jnp.zeros((E_MAX_LEN, 8), i32).at[:, :BATCH].set(e_tok.T).reshape(-1, 1)
    dx = d_tok[:, :D_MAX_LEN - 1]
    dx_pad = jnp.zeros((D_MAX_LEN - 1, 8), i32).at[:, :BATCH].set(dx.T).reshape(-1, 1)
    vals = {"e_tok_pad": e_pad, "e_len": e_len.astype(i32),
            "d_tok": d_tok.astype(i32), "dx_pad": dx_pad}
    buf = jnp.zeros((_IROWS, _ILANES), i32)
    for name, (row, (nr, nc)) in _ILAYOUT.items():
        buf = buf.at[row:row + nr, 0:nc].set(vals[name])
    return buf


@jax.jit
def attention_forward(e_tok, e_len, d_tok, pparams):
    itok = pack_tokens(e_tok, e_len, d_tok)
    out = pl.pallas_call(
        _attention_kernel,
        out_shape=jax.ShapeDtypeStruct((1, 1), jnp.float32),
        in_specs=[pl.BlockSpec(memory_space=pltpu.MemorySpace.VMEM),
                  pl.BlockSpec(memory_space=pltpu.MemorySpace.VMEM)],
        out_specs=pl.BlockSpec(memory_space=pltpu.MemorySpace.VMEM),
    )(itok, pparams)
    return out[0, 0]


# ------------------------- parameter init + reference ------------------------
def init_raw_params(key):
    E = H = EMB
    L, Te = NUM_LAYERS, E_MAX_LEN
    ks = jax.random.split(key, 16)

    def u(k, shape, scale):
        return jax.random.uniform(k, shape, jnp.float32, -scale, scale)

    s_lstm = 1.0 / (H ** 0.5)
    return {
        "emb1": 0.5 * jax.random.normal(ks[0], (E_VOCAB + 1, E), jnp.float32),
        "w1ih": u(ks[1], (L, 4 * H, E), s_lstm),
        "w1hh": u(ks[2], (L, 4 * H, H), s_lstm),
        "b1ih": u(ks[3], (L, 4 * H), s_lstm),
        "b1hh": u(ks[4], (L, 4 * H), s_lstm),
        "lin1_w": u(ks[5], (Te, Te), 1.0 / (Te ** 0.5)),
        "lin1_b": u(ks[6], (Te,), 1.0 / (Te ** 0.5)),
        "emb2": (0.5 * jax.random.normal(ks[7], (D_VOCAB + 1, E), jnp.float32)
                 ).at[0].set(0.0),                         # padding_idx=0
        "lin2_w": u(ks[8], (E, Te + E), 1.0 / ((Te + E) ** 0.5)),
        "lin2_b": u(ks[9], (E,), 1.0 / ((Te + E) ** 0.5)),
        "w2ih": u(ks[10], (L, 4 * H, E), s_lstm),
        "w2hh": u(ks[11], (L, 4 * H, H), s_lstm),
        "b2ih": u(ks[12], (L, 4 * H), s_lstm),
        "b2hh": u(ks[13], (L, 4 * H), s_lstm),
        "lin3_w": u(ks[14], (D_VOCAB, E), 1.0 / (E ** 0.5)),
        "lin3_b": u(ks[15], (D_VOCAB,), 1.0 / (E ** 0.5)),
    }


def _reference_forward(e_tok, e_len, d_tok, raw):
    """Independent plain-JAX mirror of the PyTorch module (uses the raw,
    un-fused, un-packed parameters)."""
    f32 = jnp.float32
    B, Te = e_tok.shape
    Td = d_tok.shape[1]
    L, H = NUM_LAYERS, EMB

    def cell(x, h, c, wih, whh, bih, bhh):
        g = x @ wih.T + h @ whh.T + bih + bhh
        i = jax.nn.sigmoid(g[:, 0:H])
        f = jax.nn.sigmoid(g[:, H:2 * H])
        gg = jnp.tanh(g[:, 2 * H:3 * H])
        o = jax.nn.sigmoid(g[:, 3 * H:4 * H])
        c2 = f * c + i * gg
        return o * jnp.tanh(c2), c2

    h = [jnp.zeros((B, H), f32) for _ in range(L)]
    c = [jnp.zeros((B, H), f32) for _ in range(L)]
    upo = jnp.zeros((B, Te, H), f32)
    for t in range(Te):
        x = raw["emb1"][e_tok[:, t]]
        valid = (e_len[:, 0] > t)[:, None]
        for l in range(L):
            h2, c2 = cell(x, h[l], c[l], raw["w1ih"][l], raw["w1hh"][l],
                          raw["b1ih"][l], raw["b1hh"][l])
            h[l] = jnp.where(valid, h2, h[l])
            c[l] = jnp.where(valid, c2, c[l])
            x = h2
        upo = upo.at[:, t, :].set(jnp.where(valid, h[L - 1], 0.0))

    loss = jnp.zeros((), f32)
    for t in range(Td - 1):
        dxt = d_tok[:, t]
        dyt = d_tok[:, t + 1]
        h_top = h[L - 1]
        s = jnp.sum(h_top[:, None, :] * upo, axis=2)
        s = s @ raw["lin1_w"].T + raw["lin1_b"]
        p = jax.nn.softmax(s, axis=1)
        ctx = jnp.sum(p[:, :, None] * upo, axis=2)
        de = raw["emb2"][dxt]
        x = jnp.concatenate([ctx, de], axis=1) @ raw["lin2_w"].T + raw["lin2_b"]
        for l in range(L):
            h[l], c[l] = cell(x, h[l], c[l], raw["w2ih"][l], raw["w2hh"][l],
                              raw["b2ih"][l], raw["b2hh"][l])
            x = h[l]
        logits = h[L - 1] @ raw["lin3_w"].T + raw["lin3_b"]
        valid = (dyt != 0).astype(f32)
        tgt = jnp.maximum(dyt - 1, 0)
        logp = jax.nn.log_softmax(logits, axis=1)
        ce = -jnp.take_along_axis(logp, tgt[:, None], axis=1)[:, 0]
        cnt = jnp.sum(valid)
        loss = loss + jnp.where(cnt > 0,
                                jnp.sum(ce * valid) / jnp.maximum(cnt, 1.0), 0.0)
    return loss


if __name__ == "__main__":
    key = jax.random.PRNGKey(0)
    k_e, k_d, k_p = jax.random.split(key, 3)

    e_tok = jax.random.randint(k_e, (BATCH, E_MAX_LEN), 1, E_VOCAB + 1,
                               dtype=jnp.int32)
    # lengths sorted descending (pack_padded_sequence requirement)
    e_len = jnp.array([[E_MAX_LEN], [5], [3]], dtype=jnp.int32)
    d_tok = jax.random.randint(k_d, (BATCH, D_MAX_LEN), 1, D_VOCAB + 1,
                               dtype=jnp.int32)
    # add decoder padding (token 0) to exercise the nonzero-label masking
    d_tok = d_tok.at[1, 6:].set(0)
    d_tok = d_tok.at[2, 5:].set(0)

    raw = init_raw_params(k_p)
    pparams = pack_params(raw)

    loss = attention_forward(e_tok, e_len, d_tok, pparams)
    loss = jax.block_until_ready(loss)

    # independent pure-JAX reference on the raw (un-fused, un-packed) params
    with jax.default_matmul_precision("highest"):
        ref = jax.jit(_reference_forward)(e_tok, e_len, d_tok, raw)
    ref = jax.block_until_ready(ref)

    assert bool(jnp.isfinite(loss)), "kernel loss is not finite"
    assert abs(float(loss) - float(ref)) < 2e-2 + 2e-2 * abs(float(ref)), (
        f"kernel loss {float(loss)} != reference {float(ref)}")
    print("KERNEL_OK")
</pallas_src>

<mosaic_0001>
module attributes {stable_mosaic.version = 11 : i64} {
  func.func @_attention_kernel(%arg0: memref<112x8xi32, #tpu.memory_space<vmem>>, %arg1: memref<856x128xf32, #tpu.memory_space<vmem>>, %arg2: memref<1x1xf32, #tpu.memory_space<vmem>>) attributes {dimension_semantics = [], scalar_prefetch = 0 : i64, scratch_operands = 0 : i64, tpu.core_type = #tpu.core_type<tc>} {
    %c48 = arith.constant 48 : index
    %c0 = arith.constant 0 : index
    %0 = vector.load %arg0[%c48, %c0] : memref<112x8xi32, #tpu.memory_space<vmem>>, vector<3x1xi32>
    %c56 = arith.constant 56 : index
    %c0_0 = arith.constant 0 : index
    %1 = vector.load %arg0[%c56, %c0_0] : memref<112x8xi32, #tpu.memory_space<vmem>>, vector<3x7xi32>
    %c0_i32 = arith.constant 0 : i32
    %2 = vector.broadcast %c0_i32 : i32 to vector<3x1xi32>
    %3 = arith.cmpi sgt, %0, %2 : vector<3x1xi32>
    %c1_i32 = arith.constant 1 : i32
    %4 = vector.broadcast %c1_i32 : i32 to vector<3x1xi32>
    %5 = arith.cmpi sgt, %0, %4 : vector<3x1xi32>
    %c2_i32 = arith.constant 2 : i32
    %6 = vector.broadcast %c2_i32 : i32 to vector<3x1xi32>
    %7 = arith.cmpi sgt, %0, %6 : vector<3x1xi32>
    %c3_i32 = arith.constant 3 : i32
    %8 = vector.broadcast %c3_i32 : i32 to vector<3x1xi32>
    %9 = arith.cmpi sgt, %0, %8 : vector<3x1xi32>
    %c4_i32 = arith.constant 4 : i32
    %10 = vector.broadcast %c4_i32 : i32 to vector<3x1xi32>
    %11 = arith.cmpi sgt, %0, %10 : vector<3x1xi32>
    %c5_i32 = arith.constant 5 : i32
    %12 = vector.broadcast %c5_i32 : i32 to vector<3x1xi32>
    %13 = arith.cmpi sgt, %0, %12 : vector<3x1xi32>
    %14 = tpu.iota {dimensions = array<i32: 1>} : vector<48x11xi32>
    %c0_1 = arith.constant 0 : index
    %c0_2 = arith.constant 0 : index
    %15 = vector.load %arg0[%c0_1, %c0_2] : memref<112x8xi32, #tpu.memory_space<vmem>>, vector<48x1xi32>
    %16 = vector.broadcast %15 : vector<48x1xi32> to vector<48x11xi32>
    %17 = arith.cmpi eq, %16, %14 : vector<48x11xi32>
    %18 = arith.extui %17 : vector<48x11xi1> to vector<48x11xi32>
    %19 = arith.sitofp %18 : vector<48x11xi32> to vector<48x11xf32>
    %c528 = arith.constant 528 : index
    %c0_3 = arith.constant 0 : index
    %20 = vector.load %arg1[%c528, %c0_3] : memref<856x128xf32, #tpu.memory_space<vmem>>, vector<11x32xf32>
    %cst = arith.constant dense<0.000000e+00> : vector<48x32xf32>
    %21 = tpu.matmul %19, %20, %cst {dimension_numbers = #tpu.dot_dimension_numbers<[1], [0], [0], [1], [0, 0, 1, 1], [], []>} : vector<48x11xf32>, vector<11x32xf32>, vector<48x32xf32> -> vector<48x32xf32>
    %22 = tpu.iota {dimensions = array<i32: 1>} : vector<48x13xi32>
    %c64 = arith.constant 64 : index
    %c0_4 = arith.constant 0 : index
    %23 = vector.load %arg0[%c64, %c0_4] : memref<112x8xi32, #tpu.memory_space<vmem>>, vector<48x1xi32>
    %24 = vector.broadcast %23 : vector<48x1xi32> to vector<48x13xi32>
    %25 = arith.cmpi eq, %24, %22 : vector<48x13xi32>
    %26 = arith.extui %25 : vector<48x13xi1> to vector<48x13xi32>
    %27 = arith.sitofp %26 : vector<48x13xi32> to vector<48x13xf32>
    %c544 = arith.constant 544 : index
    %c0_5 = arith.constant 0 : index
    %28 = vector.load %arg1[%c544, %c0_5] : memref<856x128xf32, #tpu.memory_space<vmem>>, vector<13x32xf32>
    %cst_6 = arith.constant dense<0.000000e+00> : vector<48x32xf32>
    %29 = tpu.matmul %27, %28, %cst_6 {dimension_numbers = #tpu.dot_dimension_numbers<[1], [0], [0], [1], [0, 0, 1, 1], [], []>} : vector<48x13xf32>, vector<13x32xf32>, vector<48x32xf32> -> vector<48x32xf32>
    %30 = vector.extract_strided_slice %21 {offsets = [0, 0], sizes = [3, 32], strides = [1, 1]} : vector<48x32xf32> to vector<3x32xf32>
    %31 = vector.extract_strided_slice %21 {offsets = [8, 0], sizes = [3, 32], strides = [1, 1]} : vector<48x32xf32> to vector<3x32xf32>
    %32 = vector.extract_strided_slice %21 {offsets = [16, 0], sizes = [3, 32], strides = [1, 1]} : vector<48x32xf32> to vector<3x32xf32>
    %33 = vector.extract_strided_slice %21 {offsets = [24, 0], sizes = [3, 32], strides = [1, 1]} : vector<48x32xf32> to vector<3x32xf32>
    %34 = vector.extract_strided_slice %21 {offsets = [32, 0], sizes = [3, 32], strides = [1, 1]} : vector<48x32xf32> to vector<3x32xf32>
    %35 = vector.extract_strided_slice %21 {offsets = [40, 0], sizes = [3, 32], strides = [1, 1]} : vector<48x32xf32> to vector<3x32xf32>
    %c512 = arith.constant 512 : index
    %c0_7 = arith.constant 0 : index
    %36 = vector.load %arg1[%c512, %c0_7] : memref<856x128xf32, #tpu.memory_space<vmem>>, vector<4x128xf32>
    %c0_8 = arith.constant 0 : index
    %c0_9 = arith.constant 0 : index
    %37 = vector.load %arg1[%c0_8, %c0_9] : memref<856x128xf32, #tpu.memory_space<vmem>>, vector<64x128xf32>
    %38 = vector.extract_strided_slice %36 {offsets = [0, 0], sizes = [1, 128], strides = [1, 1]} : vector<4x128xf32> to vector<1x128xf32>
    %cst_10 = arith.constant 0.000000e+00 : f32
    %39 = vector.broadcast %cst_10 : f32 to vector<3x32xf32>
    %cst_11 = arith.constant 0.000000e+00 : f32
    %40 = vector.broadcast %cst_11 : f32 to vector<3x32xf32>
    %41 = tpu.concatenate %30, %39 in 1 : vector<3x32xf32>, vector<3x32xf32> -> vector<3x64xf32>
    %cst_12 = arith.constant dense<0.000000e+00> : vector<3x128xf32>
    %42 = tpu.matmul %41, %37, %cst_12 {dimension_numbers = #tpu.dot_dimension_numbers<[1], [0], [0], [1], [0, 0, 1, 1], [], []>} : vector<3x64xf32>, vector<64x128xf32>, vector<3x128xf32> -> vector<3x128xf32>
    %43 = vector.broadcast %38 : vector<1x128xf32> to vector<3x128xf32>
    %44 = arith.addf %42, %43 : vector<3x128xf32>
    %cst_13 = arith.constant 5.000000e-01 : f32
    %45 = vector.broadcast %cst_13 : f32 to vector<3x128xf32>
    %46 = arith.mulf %45, %44 : vector<3x128xf32>
    %47 = math.tanh %46 : vector<3x128xf32>
    %cst_14 = arith.constant 1.000000e+00 : f32
    %48 = vector.broadcast %cst_14 : f32 to vector<3x128xf32>
    %49 = arith.addf %47, %48 : vector<3x128xf32>
    %cst_15 = arith.constant 5.000000e-01 : f32
    %50 = vector.broadcast %cst_15 : f32 to vector<3x128xf32>
    %51 = arith.mulf %50, %49 : vector<3x128xf32>
    %52 = math.tanh %44 : vector<3x128xf32>
    %53 = vector.extract_strided_slice %51 {offsets = [0, 0], sizes = [3, 32], strides = [1, 1]} : vector<3x128xf32> to vector<3x32xf32>
    %54 = vector.extract_strided_slice %51 {offsets = [0, 32], sizes = [3, 32], strides = [1, 1]} : vector<3x128xf32> to vector<3x32xf32>
    %55 = vector.extract_strided_slice %52 {offsets = [0, 64], sizes = [3, 32], strides = [1, 1]} : vector<3x128xf32> to vector<3x32xf32>
    %56 = vector.extract_strided_slice %51 {offsets = [0, 96], sizes = [3, 32], strides = [1, 1]} : vector<3x128xf32> to vector<3x32xf32>
    %57 = arith.mulf %54, %40 : vector<3x32xf32>
    %58 = arith.mulf %53, %55 : vector<3x32xf32>
    %59 = arith.addf %57, %58 : vector<3x32xf32>
    %60 = math.tanh %59 : vector<3x32xf32>
    %61 = arith.mulf %56, %60 : vector<3x32xf32>
    %62 = vector.shape_cast %3 : vector<3x1xi1> to vector<3x1xi1>
    %63 = vector.broadcast %62 : vector<3x1xi1> to vector<3x32xi1>
    %64 = arith.select %63, %61, %39 : vector<3x32xi1>, vector<3x32xf32>
    %65 = vector.shape_cast %3 : vector<3x1xi1> to vector<3x1xi1>
    %66 = vector.broadcast %65 : vector<3x1xi1> to vector<3x32xi1>
    %67 = arith.select %66, %59, %40 : vector<3x32xi1>, vector<3x32xf32>
    %68 = tpu.concatenate %31, %64 in 1 : vector<3x32xf32>, vector<3x32xf32> -> vector<3x64xf32>
    %cst_16 = arith.constant dense<0.000000e+00> : vector<3x128xf32>
    %69 = tpu.matmul %68, %37, %cst_16 {dimension_numbers = #tpu.dot_dimension_numbers<[1], [0], [0], [1], [0, 0, 1, 1], [], []>} : vector<3x64xf32>, vector<64x128xf32>, vector<3x128xf32> -> vector<3x128xf32>
    %70 = vector.broadcast %38 : vector<1x128xf32> to vector<3x128xf32>
    %71 = arith.addf %69, %70 : vector<3x128xf32>
    %cst_17 = arith.constant 5.000000e-01 : f32
    %72 = vector.broadcast %cst_17 : f32 to vector<3x128xf32>
    %73 = arith.mulf %72, %71 : vector<3x128xf32>
    %74 = math.tanh %73 : vector<3x128xf32>
    %cst_18 = arith.constant 1.000000e+00 : f32
    %75 = vector.broadcast %cst_18 : f32 to vector<3x128xf32>
    %76 = arith.addf %74, %75 : vector<3x128xf32>
    %cst_19 = arith.constant 5.000000e-01 : f32
    %77 = vector.broadcast %cst_19 : f32 to vector<3x128xf32>
    %78 = arith.mulf %77, %76 : vector<3x128xf32>
    %79 = math.tanh %71 : vector<3x128xf32>
    %80 = vector.extract_strided_slice %78 {offsets = [0, 0], sizes = [3, 32], strides = [1, 1]} : vector<3x128xf32> to vector<3x32xf32>
    %81 = vector.extract_strided_slice %78 {offsets = [0, 32], sizes = [3, 32], strides = [1, 1]} : vector<3x128xf32> to vector<3x32xf32>
    %82 = vector.extract_strided_slice %79 {offsets = [0, 64], sizes = [3, 32], strides = [1, 1]} : vector<3x128xf32> to vector<3x32xf32>
    %83 = vector.extract_strided_slice %78 {offsets = [0, 96], sizes = [3, 32], strides = [1, 1]} : vector<3x128xf32> to vector<3x32xf32>
    %84 = arith.mulf %81, %67 : vector<3x32xf32>
    %85 = arith.mulf %80, %82 : vector<3x32xf32>
    %86 = arith.addf %84, %85 : vector<3x32xf32>
    %87 = math.tanh %86 : vector<3x32xf32>
    %88 = arith.mulf %83, %87 : vector<3x32xf32>
    %89 = vector.shape_cast %5 : vector<3x1xi1> to vector<3x1xi1>
    %90 = vector.broadcast %89 : vector<3x1xi1> to vector<3x32xi1>
    %91 = arith.select %90, %88, %64 : vector<3x32xi1>, vector<3x32xf32>
    %92 = vector.shape_cast %5 : vector<3x1xi1> to vector<3x1xi1>
    %93 = vector.broadcast %92 : vector<3x1xi1> to vector<3x32xi1>
    %94 = arith.select %93, %86, %67 : vector<3x32xi1>, vector<3x32xf32>
    %95 = tpu.concatenate %32, %91 in 1 : vector<3x32xf32>, vector<3x32xf32> -> vector<3x64xf32>
    %cst_20 = arith.constant dense<0.000000e+00> : vector<3x128xf32>
    %96 = tpu.matmul %95, %37, %cst_20 {dimension_numbers = #tpu.dot_dimension_numbers<[1], [0], [0], [1], [0, 0, 1, 1], [], []>} : vector<3x64xf32>, vector<64x128xf32>, vector<3x128xf32> -> vector<3x128xf32>
    %97 = vector.broadcast %38 : vector<1x128xf32> to vector<3x128xf32>
    %98 = arith.addf %96, %97 : vector<3x128xf32>
    %cst_21 = arith.constant 5.000000e-01 : f32
    %99 = vector.broadcast %cst_21 : f32 to vector<3x128xf32>
    %100 = arith.mulf %99, %98 : vector<3x128xf32>
    %101 = math.tanh %100 : vector<3x128xf32>
    %cst_22 = arith.constant 1.000000e+00 : f32
    %102 = vector.broadcast %cst_22 : f32 to vector<3x128xf32>
    %103 = arith.addf %101, %102 : vector<3x128xf32>
    %cst_23 = arith.constant 5.000000e-01 : f32
    %104 = vector.broadcast %cst_23 : f32 to vector<3x128xf32>
    %105 = arith.mulf %104, %103 : vector<3x128xf32>
    %106 = math.tanh %98 : vector<3x128xf32>
    %107 = vector.extract_strided_slice %105 {offsets = [0, 0], sizes = [3, 32], strides = [1, 1]} : vector<3x128xf32> to vector<3x32xf32>
    %108 = vector.extract_strided_slice %105 {offsets = [0, 32], sizes = [3, 32], strides = [1, 1]} : vector<3x128xf32> to vector<3x32xf32>
    %109 = vector.extract_strided_slice %106 {offsets = [0, 64], sizes = [3, 32], strides = [1, 1]} : vector<3x128xf32> to vector<3x32xf32>
    %110 = vector.extract_strided_slice %105 {offsets = [0, 96], sizes = [3, 32], strides = [1, 1]} : vector<3x128xf32> to vector<3x32xf32>
    %111 = arith.mulf %108, %94 : vector<3x32xf32>
    %112 = arith.mulf %107, %109 : vector<3x32xf32>
    %113 = arith.addf %111, %112 : vector<3x32xf32>
    %114 = math.tanh %113 : vector<3x32xf32>
    %115 = arith.mulf %110, %114 : vector<3x32xf32>
    %116 = vector.shape_cast %7 : vector<3x1xi1> to vector<3x1xi1>
    %117 = vector.broadcast %116 : vector<3x1xi1> to vector<3x32xi1>
    %118 = arith.select %117, %115, %91 : vector<3x32xi1>, vector<3x32xf32>
    %119 = vector.shape_cast %7 : vector<3x1xi1> to vector<3x1xi1>
    %120 = vector.broadcast %119 : vector<3x1xi1> to vector<3x32xi1>
    %121 = arith.select %120, %113, %94 : vector<3x32xi1>, vector<3x32xf32>
    %122 = tpu.concatenate %33, %118 in 1 : vector<3x32xf32>, vector<3x32xf32> -> vector<3x64xf32>
    %cst_24 = arith.constant dense<0.000000e+00> : vector<3x128xf32>
    %123 = tpu.matmul %122, %37, %cst_24 {dimension_numbers = #tpu.dot_dimension_numbers<[1], [0], [0], [1], [0, 0, 1, 1], [], []>} : vector<3x64xf32>, vector<64x128xf32>, vector<3x128xf32> -> vector<3x128xf32>
    %124 = vector.broadcast %38 : vector<1x128xf32> to vector<3x128xf32>
    %125 = arith.addf %123, %124 : vector<3x128xf32>
    %cst_25 = arith.constant 5.000000e-01 : f32
    %126 = vector.broadcast %cst_25 : f32 to vector<3x128xf32>
    %127 = arith.mulf %126, %125 : vector<3x128xf32>
    %128 = math.tanh %127 : vector<3x128xf32>
    %cst_26 = arith.constant 1.000000e+00 : f32
    %129 = vector.broadcast %cst_26 : f32 to vector<3x128xf32>
    %130 = arith.addf %128, %129 : vector<3x128xf32>
    %cst_27 = arith.constant 5.000000e-01 : f32
    %131 = vector.broadcast %cst_27 : f32 to vector<3x128xf32>
    %132 = arith.mulf %131, %130 : vector<3x128xf32>
    %133 = math.tanh %125 : vector<3x128xf32>
    %134 = vector.extract_strided_slice %132 {offsets = [0, 0], sizes = [3, 32], strides = [1, 1]} : vector<3x128xf32> to vector<3x32xf32>
    %135 = vector.extract_strided_slice %132 {offsets = [0, 32], sizes = [3, 32], strides = [1, 1]} : vector<3x128xf32> to vector<3x32xf32>
    %136 = vector.extract_strided_slice %133 {offsets = [0, 64], sizes = [3, 32], strides = [1, 1]} : vector<3x128xf32> to vector<3x32xf32>
    %137 = vector.extract_strided_slice %132 {offsets = [0, 96], sizes = [3, 32], strides = [1, 1]} : vector<3x128xf32> to vector<3x32xf32>
    %138 = arith.mulf %135, %121 : vector<3x32xf32>
    %139 = arith.mulf %134, %136 : vector<3x32xf32>
    %140 = arith.addf %138, %139 : vector<3x32xf32>
    %141 = math.tanh %140 : vector<3x32xf32>
    %142 = arith.mulf %137, %141 : vector<3x32xf32>
    %143 = vector.shape_cast %9 : vector<3x1xi1> to vector<3x1xi1>
    %144 = vector.broadcast %143 : vector<3x1xi1> to vector<3x32xi1>
    %145 = arith.select %144, %142, %118 : vector<3x32xi1>, vector<3x32xf32>
    %146 = vector.shape_cast %9 : vector<3x1xi1> to vector<3x1xi1>
    %147 = vector.broadcast %146 : vector<3x1xi1> to vector<3x32xi1>
    %148 = arith.select %147, %140, %121 : vector<3x32xi1>, vector<3x32xf32>
    %149 = tpu.concatenate %34, %145 in 1 : vector<3x32xf32>, vector<3x32xf32> -> vector<3x64xf32>
    %cst_28 = arith.constant dense<0.000000e+00> : vector<3x128xf32>
    %150 = tpu.matmul %149, %37, %cst_28 {dimension_numbers = #tpu.dot_dimension_numbers<[1], [0], [0], [1], [0, 0, 1, 1], [], []>} : vector<3x64xf32>, vector<64x128xf32>, vector<3x128xf32> -> vector<3x128xf32>
    %151 = vector.broadcast %38 : vector<1x128xf32> to vector<3x128xf32>
    %152 = arith.addf %150, %151 : vector<3x128xf32>
    %cst_29 = arith.constant 5.000000e-01 : f32
    %153 = vector.broadcast %cst_29 : f32 to vector<3x128xf32>
    %154 = arith.mulf %153, %152 : vector<3x128xf32>
    %155 = math.tanh %154 : vector<3x128xf32>
    %cst_30 = arith.constant 1.000000e+00 : f32
    %156 = vector.broadcast %cst_30 : f32 to vector<3x128xf32>
    %157 = arith.addf %155, %156 : vector<3x128xf32>
    %cst_31 = arith.constant 5.000000e-01 : f32
    %158 = vector.broadcast %cst_31 : f32 to vector<3x128xf32>
    %159 = arith.mulf %158, %157 : vector<3x128xf32>
    %160 = math.tanh %152 : vector<3x128xf32>
    %161 = vector.extract_strided_slice %159 {offsets = [0, 0], sizes = [3, 32], strides = [1, 1]} : vector<3x128xf32> to vector<3x32xf32>
    %162 = vector.extract_strided_slice %159 {offsets = [0, 32], sizes = [3, 32], strides = [1, 1]} : vector<3x128xf32> to vector<3x32xf32>
    %163 = vector.extract_strided_slice %160 {offsets = [0, 64], sizes = [3, 32], strides = [1, 1]} : vector<3x128xf32> to vector<3x32xf32>
    %164 = vector.extract_strided_slice %159 {offsets = [0, 96], sizes = [3, 32], strides = [1, 1]} : vector<3x128xf32> to vector<3x32xf32>
    %165 = arith.mulf %162, %148 : vector<3x32xf32>
    %166 = arith.mulf %161, %163 : vector<3x32xf32>
    %167 = arith.addf %165, %166 : vector<3x32xf32>
    %168 = math.tanh %167 : vector<3x32xf32>
    %169 = arith.mulf %164, %168 : vector<3x32xf32>
    %170 = vector.shape_cast %11 : vector<3x1xi1> to vector<3x1xi1>
    %171 = vector.broadcast %170 : vector<3x1xi1> to vector<3x32xi1>
    %172 = arith.select %171, %169, %145 : vector<3x32xi1>, vector<3x32xf32>
    %173 = vector.shape_cast %11 : vector<3x1xi1> to vector<3x1xi1>
    %174 = vector.broadcast %173 : vector<3x1xi1> to vector<3x32xi1>
    %175 = arith.select %174, %167, %148 : vector<3x32xi1>, vector<3x32xf32>
    %176 = tpu.concatenate %35, %172 in 1 : vector<3x32xf32>, vector<3x32xf32> -> vector<3x64xf32>
    %cst_32 = arith.constant dense<0.000000e+00> : vector<3x128xf32>
    %177 = tpu.matmul %176, %37, %cst_32 {dimension_numbers = #tpu.dot_dimension_numbers<[1], [0], [0], [1], [0, 0, 1, 1], [], []>} : vector<3x64xf32>, vector<64x128xf32>, vector<3x128xf32> -> vector<3x128xf32>
    %178 = vector.broadcast %38 : vector<1x128xf32> to vector<3x128xf32>
    %179 = arith.addf %177, %178 : vector<3x128xf32>
    %cst_33 = arith.constant 5.000000e-01 : f32
    %180 = vector.broadcast %cst_33 : f32 to vector<3x128xf32>
    %181 = arith.mulf %180, %179 : vector<3x128xf32>
    %182 = math.tanh %181 : vector<3x128xf32>
    %cst_34 = arith.constant 1.000000e+00 : f32
    %183 = vector.broadcast %cst_34 : f32 to vector<3x128xf32>
    %184 = arith.addf %182, %183 : vector<3x128xf32>
    %cst_35 = arith.constant 5.000000e-01 : f32
    %185 = vector.broadcast %cst_35 : f32 to vector<3x128xf32>
    %186 = arith.mulf %185, %184 : vector<3x128xf32>
    %187 = math.tanh %179 : vector<3x128xf32>
    %188 = vector.extract_strided_slice %186 {offsets = [0, 0], sizes = [3, 32], strides = [1, 1]} : vector<3x128xf32> to vector<3x32xf32>
    %189 = vector.extract_strided_slice %186 {offsets = [0, 32], sizes = [3, 32], strides = [1, 1]} : vector<3x128xf32> to vector<3x32xf32>
    %190 = vector.extract_strided_slice %187 {offsets = [0, 64], sizes = [3, 32], strides = [1, 1]} : vector<3x128xf32> to vector<3x32xf32>
    %191 = vector.extract_strided_slice %186 {offsets = [0, 96], sizes = [3, 32], strides = [1, 1]} : vector<3x128xf32> to vector<3x32xf32>
    %192 = arith.mulf %189, %175 : vector<3x32xf32>
    %193 = arith.mulf %188, %190 : vector<3x32xf32>
    %194 = arith.addf %192, %193 : vector<3x32xf32>
    %195 = math.tanh %194 : vector<3x32xf32>
    %196 = arith.mulf %191, %195 : vector<3x32xf32>
    %197 = vector.shape_cast %13 : vector<3x1xi1> to vector<3x1xi1>
    %198 = vector.broadcast %197 : vector<3x1xi1> to vector<3x32xi1>
    %199 = arith.select %198, %196, %172 : vector<3x32xi1>, vector<3x32xf32>
    %200 = vector.shape_cast %13 : vector<3x1xi1> to vector<3x1xi1>
    %201 = vector.broadcast %200 : vector<3x1xi1> to vector<3x32xi1>
    %202 = arith.select %201, %194, %175 : vector<3x32xi1>, vector<3x32xf32>
    %c64_36 = arith.constant 64 : index
    %c0_37 = arith.constant 0 : index
    %203 = vector.load %arg1[%c64_36, %c0_37] : memref<856x128xf32, #tpu.memory_space<vmem>>, vector<64x128xf32>
    %204 = vector.extract_strided_slice %36 {offsets = [1, 0], sizes = [1, 128], strides = [1, 1]} : vector<4x128xf32> to vector<1x128xf32>
    %cst_38 = arith.constant 0.000000e+00 : f32
    %205 = vector.broadcast %cst_38 : f32 to vector<3x32xf32>
    %cst_39 = arith.constant 0.000000e+00 : f32
    %206 = vector.broadcast %cst_39 : f32 to vector<3x32xf32>
    %207 = tpu.concatenate %61, %205 in 1 : vector<3x32xf32>, vector<3x32xf32> -> vector<3x64xf32>
    %cst_40 = arith.constant dense<0.000000e+00> : vector<3x128xf32>
    %208 = tpu.matmul %207, %203, %cst_40 {dimension_numbers = #tpu.dot_dimension_numbers<[1], [0], [0], [1], [0, 0, 1, 1], [], []>} : vector<3x64xf32>, vector<64x128xf32>, vector<3x128xf32> -> vector<3x128xf32>
    %209 = vector.broadcast %204 : vector<1x128xf32> to vector<3x128xf32>
    %210 = arith.addf %208, %209 : vector<3x128xf32>
    %cst_41 = arith.constant 5.000000e-01 : f32
    %211 = vector.broadcast %cst_41 : f32 to vector<3x128xf32>
    %212 = arith.mulf %211, %210 : vector<3x128xf32>
    %213 = math.tanh %212 : vector<3x128xf32>
    %cst_42 = arith.constant 1.000000e+00 : f32
    %214 = vector.broadcast %cst_42 : f32 to vector<3x128xf32>
    %215 = arith.addf %213, %214 : vector<3x128xf32>
    %cst_43 = arith.constant 5.000000e-01 : f32
    %216 = vector.broadcast %cst_43 : f32 to vector<3x128xf32>
    %217 = arith.mulf %216, %215 : vector<3x128xf32>
    %218 = math.tanh %210 : vector<3x128xf32>
    %219 = vector.extract_strided_slice %217 {offsets = [0, 0], sizes = [3, 32], strides = [1, 1]} : vector<3x128xf32> to vector<3x32xf32>
    %220 = vector.extract_strided_slice %217 {offsets = [0, 32], sizes = [3, 32], strides = [1, 1]} : vector<3x128xf32> to vector<3x32xf32>
    %221 = vector.extract_strided_slice %218 {offsets = [0, 64], sizes = [3, 32], strides = [1, 1]} : vector<3x128xf32> to vector<3x32xf32>
    %222 = vector.extract_strided_slice %217 {offsets = [0, 96], sizes = [3, 32], strides = [1, 1]} : vector<3x128xf32> to vector<3x32xf32>
    %223 = arith.mulf %220, %206 : vector<3x32xf32>
    %224 = arith.mulf %219, %221 : vector<3x32xf32>
    %225 = arith.addf %223, %224 : vector<3x32xf32>
    %226 = math.tanh %225 : vector<3x32xf32>
    %227 = arith.mulf %222, %226 : vector<3x32xf32>
    %228 = vector.shape_cast %3 : vector<3x1xi1> to vector<3x1xi1>
    %229 = vector.broadcast %228 : vector<3x1xi1> to vector<3x32xi1>
    %230 = arith.select %229, %227, %205 : vector<3x32xi1>, vector<3x32xf32>
    %231 = vector.shape_cast %3 : vector<3x1xi1> to vector<3x1xi1>
    %232 = vector.broadcast %231 : vector<3x1xi1> to vector<3x32xi1>
    %233 = arith.select %232, %225, %206 : vector<3x32xi1>, vector<3x32xf32>
    %234 = tpu.concatenate %88, %230 in 1 : vector<3x32xf32>, vector<3x32xf32> -> vector<3x64xf32>
    %cst_44 = arith.constant dense<0.000000e+00> : vector<3x128xf32>
    %235 = tpu.matmul %234, %203, %cst_44 {dimension_numbers = #tpu.dot_dimension_numbers<[1], [0], [0], [1], [0, 0, 1, 1], [], []>} : vector<3x64xf32>, vector<64x128xf32>, vector<3x128xf32> -> vector<3x128xf32>
    %236 = vector.broadcast %204 : vector<1x128xf32> to vector<3x128xf32>
    %237 = arith.addf %235, %236 : vector<3x128xf32>
    %cst_45 = arith.constant 5.000000e-01 : f32
    %238 = vector.broadcast %cst_45 : f32 to vector<3x128xf32>
    %239 = arith.mulf %238, %237 : vector<3x128xf32>
    %240 = math.tanh %239 : vector<3x128xf32>
    %cst_46 = arith.constant 1.000000e+00 : f32
    %241 = vector.broadcast %cst_46 : f32 to vector<3x128xf32>
    %242 = arith.addf %240, %241 : vector<3x128xf32>
    %cst_47 = arith.constant 5.000000e-01 : f32
    %243 = vector.broadcast %cst_47 : f32 to vector<3x128xf32>
    %244 = arith.mulf %243, %242 : vector<3x128xf32>
    %245 = math.tanh %237 : vector<3x128xf32>
    %246 = vector.extract_strided_slice %244 {offsets = [0, 0], sizes = [3, 32], strides = [1, 1]} : vector<3x128xf32> to vector<3x32xf32>
    %247 = vector.extract_strided_slice %244 {offsets = [0, 32], sizes = [3, 32], strides = [1, 1]} : vector<3x128xf32> to vector<3x32xf32>
    %248 = vector.extract_strided_slice %245 {offsets = [0, 64], sizes = [3, 32], strides = [1, 1]} : vector<3x128xf32> to vector<3x32xf32>
    %249 = vector.extract_strided_slice %244 {offsets = [0, 96], sizes = [3, 32], strides = [1, 1]} : vector<3x128xf32> to vector<3x32xf32>
    %250 = arith.mulf %247, %233 : vector<3x32xf32>
    %251 = arith.mulf %246, %248 : vector<3x32xf32>
    %252 = arith.addf %250, %251 : vector<3x32xf32>
    %253 = math.tanh %252 : vector<3x32xf32>
    %254 = arith.mulf %249, %253 : vector<3x32xf32>
    %255 = vector.shape_cast %5 : vector<3x1xi1> to vector<3x1xi1>
    %256 = vector.broadcast %255 : vector<3x1xi1> to vector<3x32xi1>
    %257 = arith.select %256, %254, %230 : vector<3x32xi1>, vector<3x32xf32>
    %258 = vector.shape_cast %5 : vector<3x1xi1> to vector<3x1xi1>
    %259 = vector.broadcast %258 : vector<3x1xi1> to vector<3x32xi1>
    %260 = arith.select %259, %252, %233 : vector<3x32xi1>, vector<3x32xf32>
    %261 = tpu.concatenate %115, %257 in 1 : vector<3x32xf32>, vector<3x32xf32> -> vector<3x64xf32>
    %cst_48 = arith.constant dense<0.000000e+00> : vector<3x128xf32>
    %262 = tpu.matmul %261, %203, %cst_48 {dimension_numbers = #tpu.dot_dimension_numbers<[1], [0], [0], [1], [0, 0, 1, 1], [], []>} : vector<3x64xf32>, vector<64x128xf32>, vector<3x128xf32> -> vector<3x128xf32>
    %263 = vector.broadcast %204 : vector<1x128xf32> to vector<3x128xf32>
    %264 = arith.addf %262, %263 : vector<3x128xf32>
    %cst_49 = arith.constant 5.000000e-01 : f32
    %265 = vector.broadcast %cst_49 : f32 to vector<3x128xf32>
    %266 = arith.mulf %265, %264 : vector<3x128xf32>
    %267 = math.tanh %266 : vector<3x128xf32>
    %cst_50 = arith.constant 1.000000e+00 : f32
    %268 = vector.broadcast %cst_50 : f32 to vector<3x128xf32>
    %269 = arith.addf %267, %268 : vector<3x128xf32>
    %cst_51 = arith.constant 5.000000e-01 : f32
    %270 = vector.broadcast %cst_51 : f32 to vector<3x128xf32>
    %271 = arith.mulf %270, %269 : vector<3x128xf32>
    %272 = math.tanh %264 : vector<3x128xf32>
    %273 = vector.extract_strided_slice %271 {offsets = [0, 0], sizes = [3, 32], strides = [1, 1]} : vector<3x128xf32> to vector<3x32xf32>
    %274 = vector.extract_strided_slice %271 {offsets = [0, 32], sizes = [3, 32], strides = [1, 1]} : vector<3x128xf32> to vector<3x32xf32>
    %275 = vector.extract_strided_slice %272 {offsets = [0, 64], sizes = [3, 32], strides = [1, 1]} : vector<3x128xf32> to vector<3x32xf32>
    %276 = vector.extract_strided_slice %271 {offsets = [0, 96], sizes = [3, 32], strides = [1, 1]} : vector<3x128xf32> to vector<3x32xf32>
    %277 = arith.mulf %274, %260 : vector<3x32xf32>
    %278 = arith.mulf %273, %275 : vector<3x32xf32>
    %279 = arith.addf %277, %278 : vector<3x32xf32>
    %280 = math.tanh %279 : vector<3x32xf32>
    %281 = arith.mulf %276, %280 : vector<3x32xf32>
    %282 = vector.shape_cast %7 : vector<3x1xi1> to vector<3x1xi1>
    %283 = vector.broadcast %282 : vector<3x1xi1> to vector<3x32xi1>
    %284 = arith.select %283, %281, %257 : vector<3x32xi1>, vector<3x32xf32>
    %285 = vector.shape_cast %7 : vector<3x1xi1> to vector<3x1xi1>
    %286 = vector.broadcast %285 : vector<3x1xi1> to vector<3x32xi1>
    %287 = arith.select %286, %279, %260 : vector<3x32xi1>, vector<3x32xf32>
    %288 = tpu.concatenate %142, %284 in 1 : vector<3x32xf32>, vector<3x32xf32> -> vector<3x64xf32>
    %cst_52 = arith.constant dense<0.000000e+00> : vector<3x128xf32>
    %289 = tpu.matmul %288, %203, %cst_52 {dimension_numbers = #tpu.dot_dimension_numbers<[1], [0], [0], [1], [0, 0, 1, 1], [], []>} : vector<3x64xf32>, vector<64x128xf32>, vector<3x128xf32> -> vector<3x128xf32>
    %290 = vector.broadcast %204 : vector<1x128xf32> to vector<3x128xf32>
    %291 = arith.addf %289, %290 : vector<3x128xf32>
    %cst_53 = arith.constant 5.000000e-01 : f32
    %292 = vector.broadcast %cst_53 : f32 to vector<3x128xf32>
    %293 = arith.mulf %292, %291 : vector<3x128xf32>
    %294 = math.tanh %293 : vector<3x128xf32>
    %cst_54 = arith.constant 1.000000e+00 : f32
    %295 = vector.broadcast %cst_54 : f32 to vector<3x128xf32>
    %296 = arith.addf %294, %295 : vector<3x128xf32>
    %cst_55 = arith.constant 5.000000e-01 : f32
    %297 = vector.broadcast %cst_55 : f32 to vector<3x128xf32>
    %298 = arith.mulf %297, %296 : vector<3x128xf32>
    %299 = math.tanh %291 : vector<3x128xf32>
    %300 = vector.extract_strided_slice %298 {offsets = [0, 0], sizes = [3, 32], strides = [1, 1]} : vector<3x128xf32> to vector<3x32xf32>
    %301 = vector.extract_strided_slice %298 {offsets = [0, 32], sizes = [3, 32], strides = [1, 1]} : vector<3x128xf32> to vector<3x32xf32>
    %302 = vector.extract_strided_slice %299 {offsets = [0, 64], sizes = [3, 32], strides = [1, 1]} : vector<3x128xf32> to vector<3x32xf32>
    %303 = vector.extract_strided_slice %298 {offsets = [0, 96], sizes = [3, 32], strides = [1, 1]} : vector<3x128xf32> to vector<3x32xf32>
    %304 = arith.mulf %301, %287 : vector<3x32xf32>
    %305 = arith.mulf %300, %302 : vector<3x32xf32>
    %306 = arith.addf %304, %305 : vector<3x32xf32>
    %307 = math.tanh %306 : vector<3x32xf32>
    %308 = arith.mulf %303, %307 : vector<3x32xf32>
    %309 = vector.shape_cast %9 : vector<3x1xi1> to vector<3x1xi1>
    %310 = vector.broadcast %309 : vector<3x1xi1> to vector<3x32xi1>
    %311 = arith.select %310, %308, %284 : vector<3x32xi1>, vector<3x32xf32>
    %312 = vector.shape_cast %9 : vector<3x1xi1> to vector<3x1xi1>
    %313 = vector.broadcast %312 : vector<3x1xi1> to vector<3x32xi1>
    %314 = arith.select %313, %306, %287 : vector<3x32xi1>, vector<3x32xf32>
    %315 = tpu.concatenate %169, %311 in 1 : vector<3x32xf32>, vector<3x32xf32> -> vector<3x64xf32>
    %cst_56 = arith.constant dense<0.000000e+00> : vector<3x128xf32>
    %316 = tpu.matmul %315, %203, %cst_56 {dimension_numbers = #tpu.dot_dimension_numbers<[1], [0], [0], [1], [0, 0, 1, 1], [], []>} : vector<3x64xf32>, vector<64x128xf32>, vector<3x128xf32> -> vector<3x128xf32>
    %317 = vector.broadcast %204 : vector<1x128xf32> to vector<3x128xf32>
    %318 = arith.addf %316, %317 : vector<3x128xf32>
    %cst_57 = arith.constant 5.000000e-01 : f32
    %319 = vector.broadcast %cst_57 : f32 to vector<3x128xf32>
    %320 = arith.mulf %319, %318 : vector<3x128xf32>
    %321 = math.tanh %320 : vector<3x128xf32>
    %cst_58 = arith.constant 1.000000e+00 : f32
    %322 = vector.broadcast %cst_58 : f32 to vector<3x128xf32>
    %323 = arith.addf %321, %322 : vector<3x128xf32>
    %cst_59 = arith.constant 5.000000e-01 : f32
    %324 = vector.broadcast %cst_59 : f32 to vector<3x128xf32>
    %325 = arith.mulf %324, %323 : vector<3x128xf32>
    %326 = math.tanh %318 : vector<3x128xf32>
    %327 = vector.extract_strided_slice %325 {offsets = [0, 0], sizes = [3, 32], strides = [1, 1]} : vector<3x128xf32> to vector<3x32xf32>
    %328 = vector.extract_strided_slice %325 {offsets = [0, 32], sizes = [3, 32], strides = [1, 1]} : vector<3x128xf32> to vector<3x32xf32>
    %329 = vector.extract_strided_slice %326 {offsets = [0, 64], sizes = [3, 32], strides = [1, 1]} : vector<3x128xf32> to vector<3x32xf32>
    %330 = vector.extract_strided_slice %325 {offsets = [0, 96], sizes = [3, 32], strides = [1, 1]} : vector<3x128xf32> to vector<3x32xf32>
    %331 = arith.mulf %328, %314 : vector<3x32xf32>
    %332 = arith.mulf %327, %329 : vector<3x32xf32>
    %333 = arith.addf %331, %332 : vector<3x32xf32>
    %334 = math.tanh %333 : vector<3x32xf32>
    %335 = arith.mulf %330, %334 : vector<3x32xf32>
    %336 = vector.shape_cast %11 : vector<3x1xi1> to vector<3x1xi1>
    %337 = vector.broadcast %336 : vector<3x1xi1> to vector<3x32xi1>
    %338 = arith.select %337, %335, %311 : vector<3x32xi1>, vector<3x32xf32>
    %339 = vector.shape_cast %11 : vector<3x1xi1> to vector<3x1xi1>
    %340 = vector.broadcast %339 : vector<3x1xi1> to vector<3x32xi1>
    %341 = arith.select %340, %333, %314 : vector<3x32xi1>, vector<3x32xf32>
    %342 = tpu.concatenate %196, %338 in 1 : vector<3x32xf32>, vector<3x32xf32> -> vector<3x64xf32>
    %cst_60 = arith.constant dense<0.000000e+00> : vector<3x128xf32>
    %343 = tpu.matmul %342, %203, %cst_60 {dimension_numbers = #tpu.dot_dimension_numbers<[1], [0], [0], [1], [0, 0, 1, 1], [], []>} : vector<3x64xf32>, vector<64x128xf32>, vector<3x128xf32> -> vector<3x128xf32>
    %344 = vector.broadcast %204 : vector<1x128xf32> to vector<3x128xf32>
    %345 = arith.addf %343, %344 : vector<3x128xf32>
    %cst_61 = arith.constant 5.000000e-01 : f32
    %346 = vector.broadcast %cst_61 : f32 to vector<3x128xf32>
    %347 = arith.mulf %346, %345 : vector<3x128xf32>
    %348 = math.tanh %347 : vector<3x128xf32>
    %cst_62 = arith.constant 1.000000e+00 : f32
    %349 = vector.broadcast %cst_62 : f32 to vector<3x128xf32>
    %350 = arith.addf %348, %349 : vector<3x128xf32>
    %cst_63 = arith.constant 5.000000e-01 : f32
    %351 = vector.broadcast %cst_63 : f32 to vector<3x128xf32>
    %352 = arith.mulf %351, %350 : vector<3x128xf32>
    %353 = math.tanh %345 : vector<3x128xf32>
    %354 = vector.extract_strided_slice %352 {offsets = [0, 0], sizes = [3, 32], strides = [1, 1]} : vector<3x128xf32> to vector<3x32xf32>
    %355 = vector.extract_strided_slice %352 {offsets = [0, 32], sizes = [3, 32], strides = [1, 1]} : vector<3x128xf32> to vector<3x32xf32>
    %356 = vector.extract_strided_slice %353 {offsets = [0, 64], sizes = [3, 32], strides = [1, 1]} : vector<3x128xf32> to vector<3x32xf32>
    %357 = vector.extract_strided_slice %352 {offsets = [0, 96], sizes = [3, 32], strides = [1, 1]} : vector<3x128xf32> to vector<3x32xf32>
    %358 = arith.mulf %355, %341 : vector<3x32xf32>
    %359 = arith.mulf %354, %356 : vector<3x32xf32>
    %360 = arith.addf %358, %359 : vector<3x32xf32>
    %361 = math.tanh %360 : vector<3x32xf32>
    %362 = arith.mulf %357, %361 : vector<3x32xf32>
    %363 = vector.shape_cast %13 : vector<3x1xi1> to vector<3x1xi1>
    %364 = vector.broadcast %363 : vector<3x1xi1> to vector<3x32xi1>
    %365 = arith.select %364, %362, %338 : vector<3x32xi1>, vector<3x32xf32>
    %366 = vector.shape_cast %13 : vector<3x1xi1> to vector<3x1xi1>
    %367 = vector.broadcast %366 : vector<3x1xi1> to vector<3x32xi1>
    %368 = arith.select %367, %360, %341 : vector<3x32xi1>, vector<3x32xf32>
    %c128 = arith.constant 128 : index
    %c0_64 = arith.constant 0 : index
    %369 = vector.load %arg1[%c128, %c0_64] : memref<856x128xf32, #tpu.memory_space<vmem>>, vector<64x128xf32>
    %370 = vector.extract_strided_slice %36 {offsets = [2, 0], sizes = [1, 128], strides = [1, 1]} : vector<4x128xf32> to vector<1x128xf32>
    %cst_65 = arith.constant 0.000000e+00 : f32
    %371 = vector.broadcast %cst_65 : f32 to vector<3x32xf32>
    %cst_66 = arith.constant 0.000000e+00 : f32
    %372 = vector.broadcast %cst_66 : f32 to vector<3x32xf32>
    %373 = tpu.concatenate %227, %371 in 1 : vector<3x32xf32>, vector<3x32xf32> -> vector<3x64xf32>
    %cst_67 = arith.constant dense<0.000000e+00> : vector<3x128xf32>
    %374 = tpu.matmul %373, %369, %cst_67 {dimension_numbers = #tpu.dot_dimension_numbers<[1], [0], [0], [1], [0, 0, 1, 1], [], []>} : vector<3x64xf32>, vector<64x128xf32>, vector<3x128xf32> -> vector<3x128xf32>
    %375 = vector.broadcast %370 : vector<1x128xf32> to vector<3x128xf32>
    %376 = arith.addf %374, %375 : vector<3x128xf32>
    %cst_68 = arith.constant 5.000000e-01 : f32
    %377 = vector.broadcast %cst_68 : f32 to vector<3x128xf32>
    %378 = arith.mulf %377, %376 : vector<3x128xf32>
    %379 = math.tanh %378 : vector<3x128xf32>
    %cst_69 = arith.constant 1.000000e+00 : f32
    %380 = vector.broadcast %cst_69 : f32 to vector<3x128xf32>
    %381 = arith.addf %379, %380 : vector<3x128xf32>
    %cst_70 = arith.constant 5.000000e-01 : f32
    %382 = vector.broadcast %cst_70 : f32 to vector<3x128xf32>
    %383 = arith.mulf %382, %381 : vector<3x128xf32>
    %384 = math.tanh %376 : vector<3x128xf32>
    %385 = vector.extract_strided_slice %383 {offsets = [0, 0], sizes = [3, 32], strides = [1, 1]} : vector<3x128xf32> to vector<3x32xf32>
    %386 = vector.extract_strided_slice %383 {offsets = [0, 32], sizes = [3, 32], strides = [1, 1]} : vector<3x128xf32> to vector<3x32xf32>
    %387 = vector.extract_strided_slice %384 {offsets = [0, 64], sizes = [3, 32], strides = [1, 1]} : vector<3x128xf32> to vector<3x32xf32>
    %388 = vector.extract_strided_slice %383 {offsets = [0, 96], sizes = [3, 32], strides = [1, 1]} : vector<3x128xf32> to vector<3x32xf32>
    %389 = arith.mulf %386, %372 : vector<3x32xf32>
    %390 = arith.mulf %385, %387 : vector<3x32xf32>
    %391 = arith.addf %389, %390 : vector<3x32xf32>
    %392 = math.tanh %391 : vector<3x32xf32>
    %393 = arith.mulf %388, %392 : vector<3x32xf32>
    %394 = vector.shape_cast %3 : vector<3x1xi1> to vector<3x1xi1>
    %395 = vector.broadcast %394 : vector<3x1xi1> to vector<3x32xi1>
    %396 = arith.select %395, %393, %371 : vector<3x32xi1>, vector<3x32xf32>
    %397 = vector.shape_cast %3 : vector<3x1xi1> to vector<3x1xi1>
    %398 = vector.broadcast %397 : vector<3x1xi1> to vector<3x32xi1>
    %399 = arith.select %398, %391, %372 : vector<3x32xi1>, vector<3x32xf32>
    %400 = tpu.concatenate %254, %396 in 1 : vector<3x32xf32>, vector<3x32xf32> -> vector<3x64xf32>
    %cst_71 = arith.constant dense<0.000000e+00> : vector<3x128xf32>
    %401 = tpu.matmul %400, %369, %cst_71 {dimension_numbers = #tpu.dot_dimension_numbers<[1], [0], [0], [1], [0, 0, 1, 1], [], []>} : vector<3x64xf32>, vector<64x128xf32>, vector<3x128xf32> -> vector<3x128xf32>
    %402 = vector.broadcast %370 : vector<1x128xf32> to vector<3x128xf32>
    %403 = arith.addf %401, %402 : vector<3x128xf32>
    %cst_72 = arith.constant 5.000000e-01 : f32
    %404 = vector.broadcast %cst_72 : f32 to vector<3x128xf32>
    %405 = arith.mulf %404, %403 : vector<3x128xf32>
    %406 = math.tanh %405 : vector<3x128xf32>
    %cst_73 = arith.constant 1.000000e+00 : f32
    %407 = vector.broadcast %cst_73 : f32 to vector<3x128xf32>
    %408 = arith.addf %406, %407 : vector<3x128xf32>
    %cst_74 = arith.constant 5.000000e-01 : f32
    %409 = vector.broadcast %cst_74 : f32 to vector<3x128xf32>
    %410 = arith.mulf %409, %408 : vector<3x128xf32>
    %411 = math.tanh %403 : vector<3x128xf32>
    %412 = vector.extract_strided_slice %410 {offsets = [0, 0], sizes = [3, 32], strides = [1, 1]} : vector<3x128xf32> to vector<3x32xf32>
    %413 = vector.extract_strided_slice %410 {offsets = [0, 32], sizes = [3, 32], strides = [1, 1]} : vector<3x128xf32> to vector<3x32xf32>
    %414 = vector.extract_strided_slice %411 {offsets = [0, 64], sizes = [3, 32], strides = [1, 1]} : vector<3x128xf32> to vector<3x32xf32>
    %415 = vector.extract_strided_slice %410 {offsets = [0, 96], sizes = [3, 32], strides = [1, 1]} : vector<3x128xf32> to vector<3x32xf32>
    %416 = arith.mulf %413, %399 : vector<3x32xf32>
    %417 = arith.mulf %412, %414 : vector<3x32xf32>
    %418 = arith.addf %416, %417 : vector<3x32xf32>
    %419 = math.tanh %418 : vector<3x32xf32>
    %420 = arith.mulf %415, %419 : vector<3x32xf32>
    %421 = vector.shape_cast %5 : vector<3x1xi1> to vector<3x1xi1>
    %422 = vector.broadcast %421 : vector<3x1xi1> to vector<3x32xi1>
    %423 = arith.select %422, %420, %396 : vector<3x32xi1>, vector<3x32xf32>
    %424 = vector.shape_cast %5 : vector<3x1xi1> to vector<3x1xi1>
    %425 = vector.broadcast %424 : vector<3x1xi1> to vector<3x32xi1>
    %426 = arith.select %425, %418, %399 : vector<3x32xi1>, vector<3x32xf32>
    %427 = tpu.concatenate %281, %423 in 1 : vector<3x32xf32>, vector<3x32xf32> -> vector<3x64xf32>
    %cst_75 = arith.constant dense<0.000000e+00> : vector<3x128xf32>
    %428 = tpu.matmul %427, %369, %cst_75 {dimension_numbers = #tpu.dot_dimension_numbers<[1], [0], [0], [1], [0, 0, 1, 1], [], []>} : vector<3x64xf32>, vector<64x128xf32>, vector<3x128xf32> -> vector<3x128xf32>
    %429 = vector.broadcast %370 : vector<1x128xf32> to vector<3x128xf32>
    %430 = arith.addf %428, %429 : vector<3x128xf32>
    %cst_76 = arith.constant 5.000000e-01 : f32
    %431 = vector.broadcast %cst_76 : f32 to vector<3x128xf32>
    %432 = arith.mulf %431, %430 : vector<3x128xf32>
    %433 = math.tanh %432 : vector<3x128xf32>
    %cst_77 = arith.constant 1.000000e+00 : f32
    %434 = vector.broadcast %cst_77 : f32 to vector<3x128xf32>
    %435 = arith.addf %433, %434 : vector<3x128xf32>
    %cst_78 = arith.constant 5.000000e-01 : f32
    %436 = vector.broadcast %cst_78 : f32 to vector<3x128xf32>
    %437 = arith.mulf %436, %435 : vector<3x128xf32>
    %438 = math.tanh %430 : vector<3x128xf32>
    %439 = vector.extract_strided_slice %437 {offsets = [0, 0], sizes = [3, 32], strides = [1, 1]} : vector<3x128xf32> to vector<3x32xf32>
    %440 = vector.extract_strided_slice %437 {offsets = [0, 32], sizes = [3, 32], strides = [1, 1]} : vector<3x128xf32> to vector<3x32xf32>
    %441 = vector.extract_strided_slice %438 {offsets = [0, 64], sizes = [3, 32], strides = [1, 1]} : vector<3x128xf32> to vector<3x32xf32>
    %442 = vector.extract_strided_slice %437 {offsets = [0, 96], sizes = [3, 32], strides = [1, 1]} : vector<3x128xf32> to vector<3x32xf32>
    %443 = arith.mulf %440, %426 : vector<3x32xf32>
    %444 = arith.mulf %439, %441 : vector<3x32xf32>
    %445 = arith.addf %443, %444 : vector<3x32xf32>
    %446 = math.tanh %445 : vector<3x32xf32>
    %447 = arith.mulf %442, %446 : vector<3x32xf32>
    %448 = vector.shape_cast %7 : vector<3x1xi1> to vector<3x1xi1>
    %449 = vector.broadcast %448 : vector<3x1xi1> to vector<3x32xi1>
    %450 = arith.select %449, %447, %423 : vector<3x32xi1>, vector<3x32xf32>
    %451 = vector.shape_cast %7 : vector<3x1xi1> to vector<3x1xi1>
    %452 = vector.broadcast %451 : vector<3x1xi1> to vector<3x32xi1>
    %453 = arith.select %452, %445, %426 : vector<3x32xi1>, vector<3x32xf32>
    %454 = tpu.concatenate %308, %450 in 1 : vector<3x32xf32>, vector<3x32xf32> -> vector<3x64xf32>
    %cst_79 = arith.constant dense<0.000000e+00> : vector<3x128xf32>
    %455 = tpu.matmul %454, %369, %cst_79 {dimension_numbers = #tpu.dot_dimension_numbers<[1], [0], [0], [1], [0, 0, 1, 1], [], []>} : vector<3x64xf32>, vector<64x128xf32>, vector<3x128xf32> -> vector<3x128xf32>
    %456 = vector.broadcast %370 : vector<1x128xf32> to vector<3x128xf32>
    %457 = arith.addf %455, %456 : vector<3x128xf32>
    %cst_80 = arith.constant 5.000000e-01 : f32
    %458 = vector.broadcast %cst_80 : f32 to vector<3x128xf32>
    %459 = arith.mulf %458, %457 : vector<3x128xf32>
    %460 = math.tanh %459 : vector<3x128xf32>
    %cst_81 = arith.constant 1.000000e+00 : f32
    %461 = vector.broadcast %cst_81 : f32 to vector<3x128xf32>
    %462 = arith.addf %460, %461 : vector<3x128xf32>
    %cst_82 = arith.constant 5.000000e-01 : f32
    %463 = vector.broadcast %cst_82 : f32 to vector<3x128xf32>
    %464 = arith.mulf %463, %462 : vector<3x128xf32>
    %465 = math.tanh %457 : vector<3x128xf32>
    %466 = vector.extract_strided_slice %464 {offsets = [0, 0], sizes = [3, 32], strides = [1, 1]} : vector<3x128xf32> to vector<3x32xf32>
    %467 = vector.extract_strided_slice %464 {offsets = [0, 32], sizes = [3, 32], strides = [1, 1]} : vector<3x128xf32> to vector<3x32xf32>
    %468 = vector.extract_strided_slice %465 {offsets = [0, 64], sizes = [3, 32], strides = [1, 1]} : vector<3x128xf32> to vector<3x32xf32>
    %469 = vector.extract_strided_slice %464 {offsets = [0, 96], sizes = [3, 32], strides = [1, 1]} : vector<3x128xf32> to vector<3x32xf32>
    %470 = arith.mulf %467, %453 : vector<3x32xf32>
    %471 = arith.mulf %466, %468 : vector<3x32xf32>
    %472 = arith.addf %470, %471 : vector<3x32xf32>
    %473 = math.tanh %472 : vector<3x32xf32>
    %474 = arith.mulf %469, %473 : vector<3x32xf32>
    %475 = vector.shape_cast %9 : vector<3x1xi1> to vector<3x1xi1>
    %476 = vector.broadcast %475 : vector<3x1xi1> to vector<3x32xi1>
    %477 = arith.select %476, %474, %450 : vector<3x32xi1>, vector<3x32xf32>
    %478 = vector.shape_cast %9 : vector<3x1xi1> to vector<3x1xi1>
    %479 = vector.broadcast %478 : vector<3x1xi1> to vector<3x32xi1>
    %480 = arith.select %479, %472, %453 : vector<3x32xi1>, vector<3x32xf32>
    %481 = tpu.concatenate %335, %477 in 1 : vector<3x32xf32>, vector<3x32xf32> -> vector<3x64xf32>
    %cst_83 = arith.constant dense<0.000000e+00> : vector<3x128xf32>
    %482 = tpu.matmul %481, %369, %cst_83 {dimension_numbers = #tpu.dot_dimension_numbers<[1], [0], [0], [1], [0, 0, 1, 1], [], []>} : vector<3x64xf32>, vector<64x128xf32>, vector<3x128xf32> -> vector<3x128xf32>
    %483 = vector.broadcast %370 : vector<1x128xf32> to vector<3x128xf32>
    %484 = arith.addf %482, %483 : vector<3x128xf32>
    %cst_84 = arith.constant 5.000000e-01 : f32
    %485 = vector.broadcast %cst_84 : f32 to vector<3x128xf32>
    %486 = arith.mulf %485, %484 : vector<3x128xf32>
    %487 = math.tanh %486 : vector<3x128xf32>
    %cst_85 = arith.constant 1.000000e+00 : f32
    %488 = vector.broadcast %cst_85 : f32 to vector<3x128xf32>
    %489 = arith.addf %487, %488 : vector<3x128xf32>
    %cst_86 = arith.constant 5.000000e-01 : f32
    %490 = vector.broadcast %cst_86 : f32 to vector<3x128xf32>
    %491 = arith.mulf %490, %489 : vector<3x128xf32>
    %492 = math.tanh %484 : vector<3x128xf32>
    %493 = vector.extract_strided_slice %491 {offsets = [0, 0], sizes = [3, 32], strides = [1, 1]} : vector<3x128xf32> to vector<3x32xf32>
    %494 = vector.extract_strided_slice %491 {offsets = [0, 32], sizes = [3, 32], strides = [1, 1]} : vector<3x128xf32> to vector<3x32xf32>
    %495 = vector.extract_strided_slice %492 {offsets = [0, 64], sizes = [3, 32], strides = [1, 1]} : vector<3x128xf32> to vector<3x32xf32>
    %496 = vector.extract_strided_slice %491 {offsets = [0, 96], sizes = [3, 32], strides = [1, 1]} : vector<3x128xf32> to vector<3x32xf32>
    %497 = arith.mulf %494, %480 : vector<3x32xf32>
    %498 = arith.mulf %493, %495 : vector<3x32xf32>
    %499 = arith.addf %497, %498 : vector<3x32xf32>
    %500 = math.tanh %499 : vector<3x32xf32>
    %501 = arith.mulf %496, %500 : vector<3x32xf32>
    %502 = vector.shape_cast %11 : vector<3x1xi1> to vector<3x1xi1>
    %503 = vector.broadcast %502 : vector<3x1xi1> to vector<3x32xi1>
    %504 = arith.select %503, %501, %477 : vector<3x32xi1>, vector<3x32xf32>
    %505 = vector.shape_cast %11 : vector<3x1xi1> to vector<3x1xi1>
    %506 = vector.broadcast %505 : vector<3x1xi1> to vector<3x32xi1>
    %507 = arith.select %506, %499, %480 : vector<3x32xi1>, vector<3x32xf32>
    %508 = tpu.concatenate %362, %504 in 1 : vector<3x32xf32>, vector<3x32xf32> -> vector<3x64xf32>
    %cst_87 = arith.constant dense<0.000000e+00> : vector<3x128xf32>
    %509 = tpu.matmul %508, %369, %cst_87 {dimension_numbers = #tpu.dot_dimension_numbers<[1], [0], [0], [1], [0, 0, 1, 1], [], []>} : vector<3x64xf32>, vector<64x128xf32>, vector<3x128xf32> -> vector<3x128xf32>
    %510 = vector.broadcast %370 : vector<1x128xf32> to vector<3x128xf32>
    %511 = arith.addf %509, %510 : vector<3x128xf32>
    %cst_88 = arith.constant 5.000000e-01 : f32
    %512 = vector.broadcast %cst_88 : f32 to vector<3x128xf32>
    %513 = arith.mulf %512, %511 : vector<3x128xf32>
    %514 = math.tanh %513 : vector<3x128xf32>
    %cst_89 = arith.constant 1.000000e+00 : f32
    %515 = vector.broadcast %cst_89 : f32 to vector<3x128xf32>
    %516 = arith.addf %514, %515 : vector<3x128xf32>
    %cst_90 = arith.constant 5.000000e-01 : f32
    %517 = vector.broadcast %cst_90 : f32 to vector<3x128xf32>
    %518 = arith.mulf %517, %516 : vector<3x128xf32>
    %519 = math.tanh %511 : vector<3x128xf32>
    %520 = vector.extract_strided_slice %518 {offsets = [0, 0], sizes = [3, 32], strides = [1, 1]} : vector<3x128xf32> to vector<3x32xf32>
    %521 = vector.extract_strided_slice %518 {offsets = [0, 32], sizes = [3, 32], strides = [1, 1]} : vector<3x128xf32> to vector<3x32xf32>
    %522 = vector.extract_strided_slice %519 {offsets = [0, 64], sizes = [3, 32], strides = [1, 1]} : vector<3x128xf32> to vector<3x32xf32>
    %523 = vector.extract_strided_slice %518 {offsets = [0, 96], sizes = [3, 32], strides = [1, 1]} : vector<3x128xf32> to vector<3x32xf32>
    %524 = arith.mulf %521, %507 : vector<3x32xf32>
    %525 = arith.mulf %520, %522 : vector<3x32xf32>
    %526 = arith.addf %524, %525 : vector<3x32xf32>
    %527 = math.tanh %526 : vector<3x32xf32>
    %528 = arith.mulf %523, %527 : vector<3x32xf32>
    %529 = vector.shape_cast %13 : vector<3x1xi1> to vector<3x1xi1>
    %530 = vector.broadcast %529 : vector<3x1xi1> to vector<3x32xi1>
    %531 = arith.select %530, %528, %504 : vector<3x32xi1>, vector<3x32xf32>
    %532 = vector.shape_cast %13 : vector<3x1xi1> to vector<3x1xi1>
    %533 = vector.broadcast %532 : vector<3x1xi1> to vector<3x32xi1>
    %534 = arith.select %533, %526, %507 : vector<3x32xi1>, vector<3x32xf32>
    %c192 = arith.constant 192 : index
    %c0_91 = arith.constant 0 : index
    %535 = vector.load %arg1[%c192, %c0_91] : memref<856x128xf32, #tpu.memory_space<vmem>>, vector<64x128xf32>
    %536 = vector.extract_strided_slice %36 {offsets = [3, 0], sizes = [1, 128], strides = [1, 1]} : vector<4x128xf32> to vector<1x128xf32>
    %cst_92 = arith.constant 0.000000e+00 : f32
    %537 = vector.broadcast %cst_92 : f32 to vector<3x32xf32>
    %cst_93 = arith.constant 0.000000e+00 : f32
    %538 = vector.broadcast %cst_93 : f32 to vector<3x32xf32>
    %539 = tpu.concatenate %393, %537 in 1 : vector<3x32xf32>, vector<3x32xf32> -> vector<3x64xf32>
    %cst_94 = arith.constant dense<0.000000e+00> : vector<3x128xf32>
    %540 = tpu.matmul %539, %535, %cst_94 {dimension_numbers = #tpu.dot_dimension_numbers<[1], [0], [0], [1], [0, 0, 1, 1], [], []>} : vector<3x64xf32>, vector<64x128xf32>, vector<3x128xf32> -> vector<3x128xf32>
    %541 = vector.broadcast %536 : vector<1x128xf32> to vector<3x128xf32>
    %542 = arith.addf %540, %541 : vector<3x128xf32>
    %cst_95 = arith.constant 5.000000e-01 : f32
    %543 = vector.broadcast %cst_95 : f32 to vector<3x128xf32>
    %544 = arith.mulf %543, %542 : vector<3x128xf32>
    %545 = math.tanh %544 : vector<3x128xf32>
    %cst_96 = arith.constant 1.000000e+00 : f32
    %546 = vector.broadcast %cst_96 : f32 to vector<3x128xf32>
    %547 = arith.addf %545, %546 : vector<3x128xf32>
    %cst_97 = arith.constant 5.000000e-01 : f32
    %548 = vector.broadcast %cst_97 : f32 to vector<3x128xf32>
    %549 = arith.mulf %548, %547 : vector<3x128xf32>
    %550 = math.tanh %542 : vector<3x128xf32>
    %551 = vector.extract_strided_slice %549 {offsets = [0, 0], sizes = [3, 32], strides = [1, 1]} : vector<3x128xf32> to vector<3x32xf32>
    %552 = vector.extract_strided_slice %549 {offsets = [0, 32], sizes = [3, 32], strides = [1, 1]} : vector<3x128xf32> to vector<3x32xf32>
    %553 = vector.extract_strided_slice %550 {offsets = [0, 64], sizes = [3, 32], strides = [1, 1]} : vector<3x128xf32> to vector<3x32xf32>
    %554 = vector.extract_strided_slice %549 {offsets = [0, 96], sizes = [3, 32], strides = [1, 1]} : vector<3x128xf32> to vector<3x32xf32>
    %555 = arith.mulf %552, %538 : vector<3x32xf32>
    %556 = arith.mulf %551, %553 : vector<3x32xf32>
    %557 = arith.addf %555, %556 : vector<3x32xf32>
    %558 = math.tanh %557 : vector<3x32xf32>
    %559 = arith.mulf %554, %558 : vector<3x32xf32>
    %560 = vector.shape_cast %3 : vector<3x1xi1> to vector<3x1xi1>
    %561 = vector.broadcast %560 : vector<3x1xi1> to vector<3x32xi1>
    %562 = arith.select %561, %559, %537 : vector<3x32xi1>, vector<3x32xf32>
    %563 = vector.shape_cast %3 : vector<3x1xi1> to vector<3x1xi1>
    %564 = vector.broadcast %563 : vector<3x1xi1> to vector<3x32xi1>
    %565 = arith.select %564, %557, %538 : vector<3x32xi1>, vector<3x32xf32>
    %566 = tpu.concatenate %420, %562 in 1 : vector<3x32xf32>, vector<3x32xf32> -> vector<3x64xf32>
    %cst_98 = arith.constant dense<0.000000e+00> : vector<3x128xf32>
    %567 = tpu.matmul %566, %535, %cst_98 {dimension_numbers = #tpu.dot_dimension_numbers<[1], [0], [0], [1], [0, 0, 1, 1], [], []>} : vector<3x64xf32>, vector<64x128xf32>, vector<3x128xf32> -> vector<3x128xf32>
    %568 = vector.broadcast %536 : vector<1x128xf32> to vector<3x128xf32>
    %569 = arith.addf %567, %568 : vector<3x128xf32>
    %cst_99 = arith.constant 5.000000e-01 : f32
    %570 = vector.broadcast %cst_99 : f32 to vector<3x128xf32>
    %571 = arith.mulf %570, %569 : vector<3x128xf32>
    %572 = math.tanh %571 : vector<3x128xf32>
    %cst_100 = arith.constant 1.000000e+00 : f32
    %573 = vector.broadcast %cst_100 : f32 to vector<3x128xf32>
    %574 = arith.addf %572, %573 : vector<3x128xf32>
    %cst_101 = arith.constant 5.000000e-01 : f32
    %575 = vector.broadcast %cst_101 : f32 to vector<3x128xf32>
    %576 = arith.mulf %575, %574 : vector<3x128xf32>
    %577 = math.tanh %569 : vector<3x128xf32>
    %578 = vector.extract_strided_slice %576 {offsets = [0, 0], sizes = [3, 32], strides = [1, 1]} : vector<3x128xf32> to vector<3x32xf32>
    %579 = vector.extract_strided_slice %576 {offsets = [0, 32], sizes = [3, 32], strides = [1, 1]} : vector<3x128xf32> to vector<3x32xf32>
    %580 = vector.extract_strided_slice %577 {offsets = [0, 64], sizes = [3, 32], strides = [1, 1]} : vector<3x128xf32> to vector<3x32xf32>
    %581 = vector.extract_strided_slice %576 {offsets = [0, 96], sizes = [3, 32], strides = [1, 1]} : vector<3x128xf32> to vector<3x32xf32>
    %582 = arith.mulf %579, %565 : vector<3x32xf32>
    %583 = arith.mulf %578, %580 : vector<3x32xf32>
    %584 = arith.addf %582, %583 : vector<3x32xf32>
    %585 = math.tanh %584 : vector<3x32xf32>
    %586 = arith.mulf %581, %585 : vector<3x32xf32>
    %587 = vector.shape_cast %5 : vector<3x1xi1> to vector<3x1xi1>
    %588 = vector.broadcast %587 : vector<3x1xi1> to vector<3x32xi1>
    %589 = arith.select %588, %586, %562 : vector<3x32xi1>, vector<3x32xf32>
    %590 = vector.shape_cast %5 : vector<3x1xi1> to vector<3x1xi1>
    %591 = vector.broadcast %590 : vector<3x1xi1> to vector<3x32xi1>
    %592 = arith.select %591, %584, %565 : vector<3x32xi1>, vector<3x32xf32>
    %593 = tpu.concatenate %447, %589 in 1 : vector<3x32xf32>, vector<3x32xf32> -> vector<3x64xf32>
    %cst_102 = arith.constant dense<0.000000e+00> : vector<3x128xf32>
    %594 = tpu.matmul %593, %535, %cst_102 {dimension_numbers = #tpu.dot_dimension_numbers<[1], [0], [0], [1], [0, 0, 1, 1], [], []>} : vector<3x64xf32>, vector<64x128xf32>, vector<3x128xf32> -> vector<3x128xf32>
    %595 = vector.broadcast %536 : vector<1x128xf32> to vector<3x128xf32>
    %596 = arith.addf %594, %595 : vector<3x128xf32>
    %cst_103 = arith.constant 5.000000e-01 : f32
    %597 = vector.broadcast %cst_103 : f32 to vector<3x128xf32>
    %598 = arith.mulf %597, %596 : vector<3x128xf32>
    %599 = math.tanh %598 : vector<3x128xf32>
    %cst_104 = arith.constant 1.000000e+00 : f32
    %600 = vector.broadcast %cst_104 : f32 to vector<3x128xf32>
    %601 = arith.addf %599, %600 : vector<3x128xf32>
    %cst_105 = arith.constant 5.000000e-01 : f32
    %602 = vector.broadcast %cst_105 : f32 to vector<3x128xf32>
    %603 = arith.mulf %602, %601 : vector<3x128xf32>
    %604 = math.tanh %596 : vector<3x128xf32>
    %605 = vector.extract_strided_slice %603 {offsets = [0, 0], sizes = [3, 32], strides = [1, 1]} : vector<3x128xf32> to vector<3x32xf32>
    %606 = vector.extract_strided_slice %603 {offsets = [0, 32], sizes = [3, 32], strides = [1, 1]} : vector<3x128xf32> to vector<3x32xf32>
    %607 = vector.extract_strided_slice %604 {offsets = [0, 64], sizes = [3, 32], strides = [1, 1]} : vector<3x128xf32> to vector<3x32xf32>
    %608 = vector.extract_strided_slice %603 {offsets = [0, 96], sizes = [3, 32], strides = [1, 1]} : vector<3x128xf32> to vector<3x32xf32>
    %609 = arith.mulf %606, %592 : vector<3x32xf32>
    %610 = arith.mulf %605, %607 : vector<3x32xf32>
    %611 = arith.addf %609, %610 : vector<3x32xf32>
    %612 = math.tanh %611 : vector<3x32xf32>
    %613 = arith.mulf %608, %612 : vector<3x32xf32>
    %614 = vector.shape_cast %7 : vector<3x1xi1> to vector<3x1xi1>
    %615 = vector.broadcast %614 : vector<3x1xi1> to vector<3x32xi1>
    %616 = arith.select %615, %613, %589 : vector<3x32xi1>, vector<3x32xf32>
    %617 = vector.shape_cast %7 : vector<3x1xi1> to vector<3x1xi1>
    %618 = vector.broadcast %617 : vector<3x1xi1> to vector<3x32xi1>
    %619 = arith.select %618, %611, %592 : vector<3x32xi1>, vector<3x32xf32>
    %620 = tpu.concatenate %474, %616 in 1 : vector<3x32xf32>, vector<3x32xf32> -> vector<3x64xf32>
    %cst_106 = arith.constant dense<0.000000e+00> : vector<3x128xf32>
    %621 = tpu.matmul %620, %535, %cst_106 {dimension_numbers = #tpu.dot_dimension_numbers<[1], [0], [0], [1], [0, 0, 1, 1], [], []>} : vector<3x64xf32>, vector<64x128xf32>, vector<3x128xf32> -> vector<3x128xf32>
    %622 = vector.broadcast %536 : vector<1x128xf32> to vector<3x128xf32>
    %623 = arith.addf %621, %622 : vector<3x128xf32>
    %cst_107 = arith.constant 5.000000e-01 : f32
    %624 = vector.broadcast %cst_107 : f32 to vector<3x128xf32>
    %625 = arith.mulf %624, %623 : vector<3x128xf32>
    %626 = math.tanh %625 : vector<3x128xf32>
    %cst_108 = arith.constant 1.000000e+00 : f32
    %627 = vector.broadcast %cst_108 : f32 to vector<3x128xf32>
    %628 = arith.addf %626, %627 : vector<3x128xf32>
    %cst_109 = arith.constant 5.000000e-01 : f32
    %629 = vector.broadcast %cst_109 : f32 to vector<3x128xf32>
    %630 = arith.mulf %629, %628 : vector<3x128xf32>
    %631 = math.tanh %623 : vector<3x128xf32>
    %632 = vector.extract_strided_slice %630 {offsets = [0, 0], sizes = [3, 32], strides = [1, 1]} : vector<3x128xf32> to vector<3x32xf32>
    %633 = vector.extract_strided_slice %630 {offsets = [0, 32], sizes = [3, 32], strides = [1, 1]} : vector<3x128xf32> to vector<3x32xf32>
    %634 = vector.extract_strided_slice %631 {offsets = [0, 64], sizes = [3, 32], strides = [1, 1]} : vector<3x128xf32> to vector<3x32xf32>
    %635 = vector.extract_strided_slice %630 {offsets = [0, 96], sizes = [3, 32], strides = [1, 1]} : vector<3x128xf32> to vector<3x32xf32>
    %636 = arith.mulf %633, %619 : vector<3x32xf32>
    %637 = arith.mulf %632, %634 : vector<3x32xf32>
    %638 = arith.addf %636, %637 : vector<3x32xf32>
    %639 = math.tanh %638 : vector<3x32xf32>
    %640 = arith.mulf %635, %639 : vector<3x32xf32>
    %641 = vector.shape_cast %9 : vector<3x1xi1> to vector<3x1xi1>
    %642 = vector.broadcast %641 : vector<3x1xi1> to vector<3x32xi1>
    %643 = arith.select %642, %640, %616 : vector<3x32xi1>, vector<3x32xf32>
    %644 = vector.shape_cast %9 : vector<3x1xi1> to vector<3x1xi1>
    %645 = vector.broadcast %644 : vector<3x1xi1> to vector<3x32xi1>
    %646 = arith.select %645, %638, %619 : vector<3x32xi1>, vector<3x32xf32>
    %647 = tpu.concatenate %501, %643 in 1 : vector<3x32xf32>, vector<3x32xf32> -> vector<3x64xf32>
    %cst_110 = arith.constant dense<0.000000e+00> : vector<3x128xf32>
    %648 = tpu.matmul %647, %535, %cst_110 {dimension_numbers = #tpu.dot_dimension_numbers<[1], [0], [0], [1], [0, 0, 1, 1], [], []>} : vector<3x64xf32>, vector<64x128xf32>, vector<3x128xf32> -> vector<3x128xf32>
    %649 = vector.broadcast %536 : vector<1x128xf32> to vector<3x128xf32>
    %650 = arith.addf %648, %649 : vector<3x128xf32>
    %cst_111 = arith.constant 5.000000e-01 : f32
    %651 = vector.broadcast %cst_111 : f32 to vector<3x128xf32>
    %652 = arith.mulf %651, %650 : vector<3x128xf32>
    %653 = math.tanh %652 : vector<3x128xf32>
    %cst_112 = arith.constant 1.000000e+00 : f32
    %654 = vector.broadcast %cst_112 : f32 to vector<3x128xf32>
    %655 = arith.addf %653, %654 : vector<3x128xf32>
    %cst_113 = arith.constant 5.000000e-01 : f32
    %656 = vector.broadcast %cst_113 : f32 to vector<3x128xf32>
    %657 = arith.mulf %656, %655 : vector<3x128xf32>
    %658 = math.tanh %650 : vector<3x128xf32>
    %659 = vector.extract_strided_slice %657 {offsets = [0, 0], sizes = [3, 32], strides = [1, 1]} : vector<3x128xf32> to vector<3x32xf32>
    %660 = vector.extract_strided_slice %657 {offsets = [0, 32], sizes = [3, 32], strides = [1, 1]} : vector<3x128xf32> to vector<3x32xf32>
    %661 = vector.extract_strided_slice %658 {offsets = [0, 64], sizes = [3, 32], strides = [1, 1]} : vector<3x128xf32> to vector<3x32xf32>
    %662 = vector.extract_strided_slice %657 {offsets = [0, 96], sizes = [3, 32], strides = [1, 1]} : vector<3x128xf32> to vector<3x32xf32>
    %663 = arith.mulf %660, %646 : vector<3x32xf32>
    %664 = arith.mulf %659, %661 : vector<3x32xf32>
    %665 = arith.addf %663, %664 : vector<3x32xf32>
    %666 = math.tanh %665 : vector<3x32xf32>
    %667 = arith.mulf %662, %666 : vector<3x32xf32>
    %668 = vector.shape_cast %11 : vector<3x1xi1> to vector<3x1xi1>
    %669 = vector.broadcast %668 : vector<3x1xi1> to vector<3x32xi1>
    %670 = arith.select %669, %667, %643 : vector<3x32xi1>, vector<3x32xf32>
    %671 = vector.shape_cast %11 : vector<3x1xi1> to vector<3x1xi1>
    %672 = vector.broadcast %671 : vector<3x1xi1> to vector<3x32xi1>
    %673 = arith.select %672, %665, %646 : vector<3x32xi1>, vector<3x32xf32>
    %674 = tpu.concatenate %528, %670 in 1 : vector<3x32xf32>, vector<3x32xf32> -> vector<3x64xf32>
    %cst_114 = arith.constant dense<0.000000e+00> : vector<3x128xf32>
    %675 = tpu.matmul %674, %535, %cst_114 {dimension_numbers = #tpu.dot_dimension_numbers<[1], [0], [0], [1], [0, 0, 1, 1], [], []>} : vector<3x64xf32>, vector<64x128xf32>, vector<3x128xf32> -> vector<3x128xf32>
    %676 = vector.broadcast %536 : vector<1x128xf32> to vector<3x128xf32>
    %677 = arith.addf %675, %676 : vector<3x128xf32>
    %cst_115 = arith.constant 5.000000e-01 : f32
    %678 = vector.broadcast %cst_115 : f32 to vector<3x128xf32>
    %679 = arith.mulf %678, %677 : vector<3x128xf32>
    %680 = math.tanh %679 : vector<3x128xf32>
    %cst_116 = arith.constant 1.000000e+00 : f32
    %681 = vector.broadcast %cst_116 : f32 to vector<3x128xf32>
    %682 = arith.addf %680, %681 : vector<3x128xf32>
    %cst_117 = arith.constant 5.000000e-01 : f32
    %683 = vector.broadcast %cst_117 : f32 to vector<3x128xf32>
    %684 = arith.mulf %683, %682 : vector<3x128xf32>
    %685 = math.tanh %677 : vector<3x128xf32>
    %686 = vector.extract_strided_slice %684 {offsets = [0, 0], sizes = [3, 32], strides = [1, 1]} : vector<3x128xf32> to vector<3x32xf32>
    %687 = vector.extract_strided_slice %684 {offsets = [0, 32], sizes = [3, 32], strides = [1, 1]} : vector<3x128xf32> to vector<3x32xf32>
    %688 = vector.extract_strided_slice %685 {offsets = [0, 64], sizes = [3, 32], strides = [1, 1]} : vector<3x128xf32> to vector<3x32xf32>
    %689 = vector.extract_strided_slice %684 {offsets = [0, 96], sizes = [3, 32], strides = [1, 1]} : vector<3x128xf32> to vector<3x32xf32>
    %690 = arith.mulf %687, %673 : vector<3x32xf32>
    %691 = arith.mulf %686, %688 : vector<3x32xf32>
    %692 = arith.addf %690, %691 : vector<3x32xf32>
    %693 = math.tanh %692 : vector<3x32xf32>
    %694 = arith.mulf %689, %693 : vector<3x32xf32>
    %695 = vector.shape_cast %13 : vector<3x1xi1> to vector<3x1xi1>
    %696 = vector.broadcast %695 : vector<3x1xi1> to vector<3x32xi1>
    %697 = arith.select %696, %694, %670 : vector<3x32xi1>, vector<3x32xf32>
    %698 = vector.shape_cast %13 : vector<3x1xi1> to vector<3x1xi1>
    %699 = vector.broadcast %698 : vector<3x1xi1> to vector<3x32xi1>
    %700 = arith.select %699, %692, %673 : vector<3x32xi1>, vector<3x32xf32>
    %cst_118 = arith.constant 0.000000e+00 : f32
    %701 = vector.shape_cast %3 : vector<3x1xi1> to vector<3x1xi1>
    %702 = vector.broadcast %701 : vector<3x1xi1> to vector<3x32xi1>
    %703 = vector.broadcast %cst_118 : f32 to vector<3x32xf32>
    %704 = arith.select %702, %559, %703 : vector<3x32xi1>, vector<3x32xf32>
    %cst_119 = arith.constant 0.000000e+00 : f32
    %705 = vector.shape_cast %5 : vector<3x1xi1> to vector<3x1xi1>
    %706 = vector.broadcast %705 : vector<3x1xi1> to vector<3x32xi1>
    %707 = vector.broadcast %cst_119 : f32 to vector<3x32xf32>
    %708 = arith.select %706, %586, %707 : vector<3x32xi1>, vector<3x32xf32>
    %cst_120 = arith.constant 0.000000e+00 : f32
    %709 = vector.shape_cast %7 : vector<3x1xi1> to vector<3x1xi1>
    %710 = vector.broadcast %709 : vector<3x1xi1> to vector<3x32xi1>
    %711 = vector.broadcast %cst_120 : f32 to vector<3x32xf32>
    %712 = arith.select %710, %613, %711 : vector<3x32xi1>, vector<3x32xf32>
    %cst_121 = arith.constant 0.000000e+00 : f32
    %713 = vector.shape_cast %9 : vector<3x1xi1> to vector<3x1xi1>
    %714 = vector.broadcast %713 : vector<3x1xi1> to vector<3x32xi1>
    %715 = vector.broadcast %cst_121 : f32 to vector<3x32xf32>
    %716 = arith.select %714, %640, %715 : vector<3x32xi1>, vector<3x32xf32>
    %cst_122 = arith.constant 0.000000e+00 : f32
    %717 = vector.shape_cast %11 : vector<3x1xi1> to vector<3x1xi1>
    %718 = vector.broadcast %717 : vector<3x1xi1> to vector<3x32xi1>
    %719 = vector.broadcast %cst_122 : f32 to vector<3x32xf32>
    %720 = arith.select %718, %667, %719 : vector<3x32xi1>, vector<3x32xf32>
    %cst_123 = arith.constant 0.000000e+00 : f32
    %721 = vector.shape_cast %13 : vector<3x1xi1> to vector<3x1xi1>
    %722 = vector.broadcast %721 : vector<3x1xi1> to vector<3x32xi1>
    %723 = vector.broadcast %cst_123 : f32 to vector<3x32xf32>
    %724 = arith.select %722, %694, %723 : vector<3x32xi1>, vector<3x32xf32>
    %725 = tpu.concatenate %704, %708, %712, %716, %720, %724 in 1 : vector<3x32xf32>, vector<3x32xf32>, vector<3x32xf32>, vector<3x32xf32>, vector<3x32xf32>, vector<3x32xf32> -> vector<3x192xf32>
    %c664 = arith.constant 664 : index
    %c0_124 = arith.constant 0 : index
    %726 = vector.load %arg1[%c664, %c0_124] : memref<856x128xf32, #tpu.memory_space<vmem>>, vector<192x6xf32>
    %cst_125 = arith.constant dense<0.000000e+00> : vector<3x6xf32>
    %727 = tpu.matmul %725, %726, %cst_125 {dimension_numbers = #tpu.dot_dimension_numbers<[1], [0], [0], [1], [0, 0, 1, 1], [], []>} : vector<3x192xf32>, vector<192x6xf32>, vector<3x6xf32> -> vector<3x6xf32>
    %728 = tpu.iota {dimensions = array<i32: 1>} : vector<3x12xi32>
    %c520 = arith.constant 520 : index
    %c0_126 = arith.constant 0 : index
    %729 = vector.load %arg1[%c520, %c0_126] : memref<856x128xf32, #tpu.memory_space<vmem>>, vector<4x128xf32>
    %cst_127 = arith.constant 0.000000e+00 : f32
    %730 = vector.broadcast %cst_127 : f32 to vector<1x1xf32>
    %731 = tpu.concatenate %697, %697, %697, %697, %697, %697 in 1 : vector<3x32xf32>, vector<3x32xf32>, vector<3x32xf32>, vector<3x32xf32>, vector<3x32xf32>, vector<3x32xf32> -> vector<3x192xf32>
    %732 = arith.mulf %725, %731 : vector<3x192xf32>
    %c664_128 = arith.constant 664 : index
    %c0_129 = arith.constant 0 : index
    %733 = vector.load %arg1[%c664_128, %c0_129] : memref<856x128xf32, #tpu.memory_space<vmem>>, vector<192x6xf32>
    %cst_130 = arith.constant dense<0.000000e+00> : vector<3x6xf32>
    %734 = tpu.matmul %732, %733, %cst_130 {dimension_numbers = #tpu.dot_dimension_numbers<[1], [0], [0], [1], [0, 0, 1, 1], [], []>} : vector<3x192xf32>, vector<192x6xf32>, vector<3x6xf32> -> vector<3x6xf32>
    %c560 = arith.constant 560 : index
    %c0_131 = arith.constant 0 : index
    %735 = vector.load %arg1[%c560, %c0_131] : memref<856x128xf32, #tpu.memory_space<vmem>>, vector<6x6xf32>
    %cst_132 = arith.constant dense<0.000000e+00> : vector<3x6xf32>
    %736 = tpu.matmul %734, %735, %cst_132 {dimension_numbers = #tpu.dot_dimension_numbers<[1], [0], [0], [1], [0, 0, 1, 1], [], []>} : vector<3x6xf32>, vector<6x6xf32>, vector<3x6xf32> -> vector<3x6xf32>
    %c568 = arith.constant 568 : index
    %c0_133 = arith.constant 0 : index
    %737 = vector.load %arg1[%c568, %c0_133] : memref<856x128xf32, #tpu.memory_space<vmem>>, vector<1x6xf32>
    %738 = vector.broadcast %737 : vector<1x6xf32> to vector<3x6xf32>
    %739 = arith.addf %736, %738 : vector<3x6xf32>
    %cst_134 = arith.constant dense<0xFF800000> : vector<3xf32>
    %740 = vector.multi_reduction <maximumf>, %739, %cst_134 [1] : vector<3x6xf32> to vector<3xf32>
    %741 = vector.shape_cast %740 : vector<3xf32> to vector<3x1xf32>
    %742 = vector.broadcast %741 : vector<3x1xf32> to vector<3x6xf32>
    %743 = arith.subf %739, %742 : vector<3x6xf32>
    %744 = math.exp %743 : vector<3x6xf32>
    %cst_135 = arith.constant dense<0.000000e+00> : vector<3xf32>
    %745 = vector.multi_reduction <add>, %744, %cst_135 [1] : vector<3x6xf32> to vector<3xf32>
    %746 = vector.shape_cast %745 : vector<3xf32> to vector<3x1xf32>
    %747 = tpu.reciprocal %746 {approx = true} : vector<3x1xf32> -> vector<3x1xf32>
    %748 = vector.broadcast %747 : vector<3x1xf32> to vector<3x6xf32>
    %749 = arith.mulf %744, %748 : vector<3x6xf32>
    %750 = arith.mulf %749, %727 : vector<3x6xf32>
    %751 = vector.extract_strided_slice %29 {offsets = [0, 0], sizes = [3, 32], strides = [1, 1]} : vector<48x32xf32> to vector<3x32xf32>
    %752 = tpu.concatenate %750, %751 in 1 : vector<3x6xf32>, vector<3x32xf32> -> vector<3x38xf32>
    %c576 = arith.constant 576 : index
    %c0_136 = arith.constant 0 : index
    %753 = vector.load %arg1[%c576, %c0_136] : memref<856x128xf32, #tpu.memory_space<vmem>>, vector<38x32xf32>
    %cst_137 = arith.constant dense<0.000000e+00> : vector<3x32xf32>
    %754 = tpu.matmul %752, %753, %cst_137 {dimension_numbers = #tpu.dot_dimension_numbers<[1], [0], [0], [1], [0, 0, 1, 1], [], []>} : vector<3x38xf32>, vector<38x32xf32>, vector<3x32xf32> -> vector<3x32xf32>
    %c616 = arith.constant 616 : index
    %c0_138 = arith.constant 0 : index
    %755 = vector.load %arg1[%c616, %c0_138] : memref<856x128xf32, #tpu.memory_space<vmem>>, vector<1x32xf32>
    %756 = vector.broadcast %755 : vector<1x32xf32> to vector<3x32xf32>
    %757 = arith.addf %754, %756 : vector<3x32xf32>
    %c256 = arith.constant 256 : index
    %c0_139 = arith.constant 0 : index
    %758 = vector.load %arg1[%c256, %c0_139] : memref<856x128xf32, #tpu.memory_space<vmem>>, vector<64x128xf32>
    %759 = vector.extract_strided_slice %729 {offsets = [0, 0], sizes = [1, 128], strides = [1, 1]} : vector<4x128xf32> to vector<1x128xf32>
    %760 = tpu.concatenate %757, %199 in 1 : vector<3x32xf32>, vector<3x32xf32> -> vector<3x64xf32>
    %cst_140 = arith.constant dense<0.000000e+00> : vector<3x128xf32>
    %761 = tpu.matmul %760, %758, %cst_140 {dimension_numbers = #tpu.dot_dimension_numbers<[1], [0], [0], [1], [0, 0, 1, 1], [], []>} : vector<3x64xf32>, vector<64x128xf32>, vector<3x128xf32> -> vector<3x128xf32>
    %762 = vector.broadcast %759 : vector<1x128xf32> to vector<3x128xf32>
    %763 = arith.addf %761, %762 : vector<3x128xf32>
    %cst_141 = arith.constant 5.000000e-01 : f32
    %764 = vector.broadcast %cst_141 : f32 to vector<3x128xf32>
    %765 = arith.mulf %764, %763 : vector<3x128xf32>
    %766 = math.tanh %765 : vector<3x128xf32>
    %cst_142 = arith.constant 1.000000e+00 : f32
    %767 = vector.broadcast %cst_142 : f32 to vector<3x128xf32>
    %768 = arith.addf %766, %767 : vector<3x128xf32>
    %cst_143 = arith.constant 5.000000e-01 : f32
    %769 = vector.broadcast %cst_143 : f32 to vector<3x128xf32>
    %770 = arith.mulf %769, %768 : vector<3x128xf32>
    %771 = math.tanh %763 : vector<3x128xf32>
    %772 = vector.extract_strided_slice %770 {offsets = [0, 0], sizes = [3, 32], strides = [1, 1]} : vector<3x128xf32> to vector<3x32xf32>
    %773 = vector.extract_strided_slice %770 {offsets = [0, 32], sizes = [3, 32], strides = [1, 1]} : vector<3x128xf32> to vector<3x32xf32>
    %774 = vector.extract_strided_slice %771 {offsets = [0, 64], sizes = [3, 32], strides = [1, 1]} : vector<3x128xf32> to vector<3x32xf32>
    %775 = vector.extract_strided_slice %770 {offsets = [0, 96], sizes = [3, 32], strides = [1, 1]} : vector<3x128xf32> to vector<3x32xf32>
    %776 = arith.mulf %773, %202 : vector<3x32xf32>
    %777 = arith.mulf %772, %774 : vector<3x32xf32>
    %778 = arith.addf %776, %777 : vector<3x32xf32>
    %779 = math.tanh %778 : vector<3x32xf32>
    %780 = arith.mulf %775, %779 : vector<3x32xf32>
    %c320 = arith.constant 320 : index
    %c0_144 = arith.constant 0 : index
    %781 = vector.load %arg1[%c320, %c0_144] : memref<856x128xf32, #tpu.memory_space<vmem>>, vector<64x128xf32>
    %782 = vector.extract_strided_slice %729 {offsets = [1, 0], sizes = [1, 128], strides = [1, 1]} : vector<4x128xf32> to vector<1x128xf32>
    %783 = tpu.concatenate %780, %365 in 1 : vector<3x32xf32>, vector<3x32xf32> -> vector<3x64xf32>
    %cst_145 = arith.constant dense<0.000000e+00> : vector<3x128xf32>
    %784 = tpu.matmul %783, %781, %cst_145 {dimension_numbers = #tpu.dot_dimension_numbers<[1], [0], [0], [1], [0, 0, 1, 1], [], []>} : vector<3x64xf32>, vector<64x128xf32>, vector<3x128xf32> -> vector<3x128xf32>
    %785 = vector.broadcast %782 : vector<1x128xf32> to vector<3x128xf32>
    %786 = arith.addf %784, %785 : vector<3x128xf32>
    %cst_146 = arith.constant 5.000000e-01 : f32
    %787 = vector.broadcast %cst_146 : f32 to vector<3x128xf32>
    %788 = arith.mulf %787, %786 : vector<3x128xf32>
    %789 = math.tanh %788 : vector<3x128xf32>
    %cst_147 = arith.constant 1.000000e+00 : f32
    %790 = vector.broadcast %cst_147 : f32 to vector<3x128xf32>
    %791 = arith.addf %789, %790 : vector<3x128xf32>
    %cst_148 = arith.constant 5.000000e-01 : f32
    %792 = vector.broadcast %cst_148 : f32 to vector<3x128xf32>
    %793 = arith.mulf %792, %791 : vector<3x128xf32>
    %794 = math.tanh %786 : vector<3x128xf32>
    %795 = vector.extract_strided_slice %793 {offsets = [0, 0], sizes = [3, 32], strides = [1, 1]} : vector<3x128xf32> to vector<3x32xf32>
    %796 = vector.extract_strided_slice %793 {offsets = [0, 32], sizes = [3, 32], strides = [1, 1]} : vector<3x128xf32> to vector<3x32xf32>
    %797 = vector.extract_strided_slice %794 {offsets = [0, 64], sizes = [3, 32], strides = [1, 1]} : vector<3x128xf32> to vector<3x32xf32>
    %798 = vector.extract_strided_slice %793 {offsets = [0, 96], sizes = [3, 32], strides = [1, 1]} : vector<3x128xf32> to vector<3x32xf32>
    %799 = arith.mulf %796, %368 : vector<3x32xf32>
    %800 = arith.mulf %795, %797 : vector<3x32xf32>
    %801 = arith.addf %799, %800 : vector<3x32xf32>
    %802 = math.tanh %801 : vector<3x32xf32>
    %803 = arith.mulf %798, %802 : vector<3x32xf32>
    %c384 = arith.constant 384 : index
    %c0_149 = arith.constant 0 : index
    %804 = vector.load %arg1[%c384, %c0_149] : memref<856x128xf32, #tpu.memory_space<vmem>>, vector<64x128xf32>
    %805 = vector.extract_strided_slice %729 {offsets = [2, 0], sizes = [1, 128], strides = [1, 1]} : vector<4x128xf32> to vector<1x128xf32>
    %806 = tpu.concatenate %803, %531 in 1 : vector<3x32xf32>, vector<3x32xf32> -> vector<3x64xf32>
    %cst_150 = arith.constant dense<0.000000e+00> : vector<3x128xf32>
    %807 = tpu.matmul %806, %804, %cst_150 {dimension_numbers = #tpu.dot_dimension_numbers<[1], [0], [0], [1], [0, 0, 1, 1], [], []>} : vector<3x64xf32>, vector<64x128xf32>, vector<3x128xf32> -> vector<3x128xf32>
    %808 = vector.broadcast %805 : vector<1x128xf32> to vector<3x128xf32>
    %809 = arith.addf %807, %808 : vector<3x128xf32>
    %cst_151 = arith.constant 5.000000e-01 : f32
    %810 = vector.broadcast %cst_151 : f32 to vector<3x128xf32>
    %811 = arith.mulf %810, %809 : vector<3x128xf32>
    %812 = math.tanh %811 : vector<3x128xf32>
    %cst_152 = arith.constant 1.000000e+00 : f32
    %813 = vector.broadcast %cst_152 : f32 to vector<3x128xf32>
    %814 = arith.addf %812, %813 : vector<3x128xf32>
    %cst_153 = arith.constant 5.000000e-01 : f32
    %815 = vector.broadcast %cst_153 : f32 to vector<3x128xf32>
    %816 = arith.mulf %815, %814 : vector<3x128xf32>
    %817 = math.tanh %809 : vector<3x128xf32>
    %818 = vector.extract_strided_slice %816 {offsets = [0, 0], sizes = [3, 32], strides = [1, 1]} : vector<3x128xf32> to vector<3x32xf32>
    %819 = vector.extract_strided_slice %816 {offsets = [0, 32], sizes = [3, 32], strides = [1, 1]} : vector<3x128xf32> to vector<3x32xf32>
    %820 = vector.extract_strided_slice %817 {offsets = [0, 64], sizes = [3, 32], strides = [1, 1]} : vector<3x128xf32> to vector<3x32xf32>
    %821 = vector.extract_strided_slice %816 {offsets = [0, 96], sizes = [3, 32], strides = [1, 1]} : vector<3x128xf32> to vector<3x32xf32>
    %822 = arith.mulf %819, %534 : vector<3x32xf32>
    %823 = arith.mulf %818, %820 : vector<3x32xf32>
    %824 = arith.addf %822, %823 : vector<3x32xf32>
    %825 = math.tanh %824 : vector<3x32xf32>
    %826 = arith.mulf %821, %825 : vector<3x32xf32>
    %c448 = arith.constant 448 : index
    %c0_154 = arith.constant 0 : index
    %827 = vector.load %arg1[%c448, %c0_154] : memref<856x128xf32, #tpu.memory_space<vmem>>, vector<64x128xf32>
    %828 = vector.extract_strided_slice %729 {offsets = [3, 0], sizes = [1, 128], strides = [1, 1]} : vector<4x128xf32> to vector<1x128xf32>
    %829 = tpu.concatenate %826, %697 in 1 : vector<3x32xf32>, vector<3x32xf32> -> vector<3x64xf32>
    %cst_155 = arith.constant dense<0.000000e+00> : vector<3x128xf32>
    %830 = tpu.matmul %829, %827, %cst_155 {dimension_numbers = #tpu.dot_dimension_numbers<[1], [0], [0], [1], [0, 0, 1, 1], [], []>} : vector<3x64xf32>, vector<64x128xf32>, vector<3x128xf32> -> vector<3x128xf32>
    %831 = vector.broadcast %828 : vector<1x128xf32> to vector<3x128xf32>
    %832 = arith.addf %830, %831 : vector<3x128xf32>
    %cst_156 = arith.constant 5.000000e-01 : f32
    %833 = vector.broadcast %cst_156 : f32 to vector<3x128xf32>
    %834 = arith.mulf %833, %832 : vector<3x128xf32>
    %835 = math.tanh %834 : vector<3x128xf32>
    %cst_157 = arith.constant 1.000000e+00 : f32
    %836 = vector.broadcast %cst_157 : f32 to vector<3x128xf32>
    %837 = arith.addf %835, %836 : vector<3x128xf32>
    %cst_158 = arith.constant 5.000000e-01 : f32
    %838 = vector.broadcast %cst_158 : f32 to vector<3x128xf32>
    %839 = arith.mulf %838, %837 : vector<3x128xf32>
    %840 = math.tanh %832 : vector<3x128xf32>
    %841 = vector.extract_strided_slice %839 {offsets = [0, 0], sizes = [3, 32], strides = [1, 1]} : vector<3x128xf32> to vector<3x32xf32>
    %842 = vector.extract_strided_slice %839 {offsets = [0, 32], sizes = [3, 32], strides = [1, 1]} : vector<3x128xf32> to vector<3x32xf32>
    %843 = vector.extract_strided_slice %840 {offsets = [0, 64], sizes = [3, 32], strides = [1, 1]} : vector<3x128xf32> to vector<3x32xf32>
    %844 = vector.extract_strided_slice %839 {offsets = [0, 96], sizes = [3, 32], strides = [1, 1]} : vector<3x128xf32> to vector<3x32xf32>
    %845 = arith.mulf %842, %700 : vector<3x32xf32>
    %846 = arith.mulf %841, %843 : vector<3x32xf32>
    %847 = arith.addf %845, %846 : vector<3x32xf32>
    %848 = math.tanh %847 : vector<3x32xf32>
    %849 = arith.mulf %844, %848 : vector<3x32xf32>
    %c624 = arith.constant 624 : index
    %c0_159 = arith.constant 0 : index
    %850 = vector.load %arg1[%c624, %c0_159] : memref<856x128xf32, #tpu.memory_space<vmem>>, vector<32x12xf32>
    %cst_160 = arith.constant dense<0.000000e+00> : vector<3x12xf32>
    %851 = tpu.matmul %849, %850, %cst_160 {dimension_numbers = #tpu.dot_dimension_numbers<[1], [0], [0], [1], [0, 0, 1, 1], [], []>} : vector<3x32xf32>, vector<32x12xf32>, vector<3x12xf32> -> vector<3x12xf32>
    %c656 = arith.constant 656 : index
    %c0_161 = arith.constant 0 : index
    %852 = vector.load %arg1[%c656, %c0_161] : memref<856x128xf32, #tpu.memory_space<vmem>>, vector<1x12xf32>
    %853 = vector.broadcast %852 : vector<1x12xf32> to vector<3x12xf32>
    %854 = arith.addf %851, %853 : vector<3x12xf32>
    %855 = vector.extract_strided_slice %1 {offsets = [0, 1], sizes = [3, 1], strides = [1, 1]} : vector<3x7xi32> to vector<3x1xi32>
    %c0_i32_162 = arith.constant 0 : i32
    %856 = vector.broadcast %c0_i32_162 : i32 to vector<3x1xi32>
    %857 = arith.cmpi ne, %855, %856 : vector<3x1xi32>
    %858 = arith.extui %857 : vector<3x1xi1> to vector<3x1xi32>
    %859 = arith.sitofp %858 : vector<3x1xi32> to vector<3x1xf32>
    %c1_i32_163 = arith.constant 1 : i32
    %860 = vector.broadcast %c1_i32_163 : i32 to vector<3x1xi32>
    %861 = arith.subi %855, %860 : vector<3x1xi32>
    %c0_i32_164 = arith.constant 0 : i32
    %862 = vector.broadcast %c0_i32_164 : i32 to vector<3x1xi32>
    %863 = arith.maxsi %861, %862 : vector<3x1xi32>
    %864 = vector.broadcast %863 : vector<3x1xi32> to vector<3x12xi32>
    %865 = arith.cmpi eq, %864, %728 : vector<3x12xi32>
    %866 = arith.extui %865 : vector<3x12xi1> to vector<3x12xi32>
    %867 = arith.sitofp %866 : vector<3x12xi32> to vector<3x12xf32>
    %cst_165 = arith.constant dense<0xFF800000> : vector<3xf32>
    %868 = vector.multi_reduction <maximumf>, %854, %cst_165 [1] : vector<3x12xf32> to vector<3xf32>
    %869 = vector.shape_cast %868 : vector<3xf32> to vector<3x1xf32>
    %870 = vector.broadcast %869 : vector<3x1xf32> to vector<3x12xf32>
    %871 = arith.subf %854, %870 : vector<3x12xf32>
    %872 = math.exp %871 : vector<3x12xf32>
    %cst_166 = arith.constant dense<0.000000e+00> : vector<3xf32>
    %873 = vector.multi_reduction <add>, %872, %cst_166 [1] : vector<3x12xf32> to vector<3xf32>
    %874 = vector.shape_cast %873 : vector<3xf32> to vector<3x1xf32>
    %875 = math.log %874 : vector<3x1xf32>
    %876 = arith.addf %875, %869 : vector<3x1xf32>
    %877 = arith.mulf %867, %854 : vector<3x12xf32>
    %cst_167 = arith.constant dense<0.000000e+00> : vector<3xf32>
    %878 = vector.multi_reduction <add>, %877, %cst_167 [1] : vector<3x12xf32> to vector<3xf32>
    %879 = vector.shape_cast %878 : vector<3xf32> to vector<3x1xf32>
    %880 = arith.subf %876, %879 : vector<3x1xf32>
    %881 = vector.shape_cast %859 : vector<3x1xf32> to vector<1x3x1xf32>
    %cst_168 = arith.constant dense<0.000000e+00> : vector<1xf32>
    %882 = vector.multi_reduction <add>, %881, %cst_168 [1, 2] : vector<1x3x1xf32> to vector<1xf32>
    %883 = vector.shape_cast %882 : vector<1xf32> to vector<1x1x1xf32>
    %884 = vector.extract %883[0, 0, 0] : f32 from vector<1x1x1xf32>
    %885 = vector.broadcast %884 : f32 to vector<1x1xf32>
    %cst_169 = arith.constant 0.000000e+00 : f32
    %886 = vector.broadcast %cst_169 : f32 to vector<1x1xf32>
    %887 = arith.cmpf ogt, %885, %886 : vector<1x1xf32>
    %888 = arith.mulf %880, %859 : vector<3x1xf32>
    %889 = vector.shape_cast %888 : vector<3x1xf32> to vector<1x3x1xf32>
    %cst_170 = arith.constant dense<0.000000e+00> : vector<1xf32>
    %890 = vector.multi_reduction <add>, %889, %cst_170 [1, 2] : vector<1x3x1xf32> to vector<1xf32>
    %891 = vector.shape_cast %890 : vector<1xf32> to vector<1x1x1xf32>
    %892 = vector.extract %891[0, 0, 0] : f32 from vector<1x1x1xf32>
    %893 = vector.broadcast %892 : f32 to vector<1x1xf32>
    %cst_171 = arith.constant 1.000000e+00 : f32
    %894 = vector.broadcast %cst_171 : f32 to vector<1x1xf32>
    %895 = arith.maximumf %885, %894 : vector<1x1xf32>
    %896 = tpu.reciprocal %895 {approx = true} : vector<1x1xf32> -> vector<1x1xf32>
    %897 = arith.mulf %893, %896 : vector<1x1xf32>
    %cst_172 = arith.constant 0.000000e+00 : f32
    %898 = vector.broadcast %cst_172 : f32 to vector<1x1xf32>
    %899 = arith.select %887, %897, %898 : vector<1x1xi1>, vector<1x1xf32>
    %900 = arith.addf %730, %899 : vector<1x1xf32>
    %901 = tpu.concatenate %849, %849, %849, %849, %849, %849 in 1 : vector<3x32xf32>, vector<3x32xf32>, vector<3x32xf32>, vector<3x32xf32>, vector<3x32xf32>, vector<3x32xf32> -> vector<3x192xf32>
    %902 = arith.mulf %725, %901 : vector<3x192xf32>
    %c664_173 = arith.constant 664 : index
    %c0_174 = arith.constant 0 : index
    %903 = vector.load %arg1[%c664_173, %c0_174] : memref<856x128xf32, #tpu.memory_space<vmem>>, vector<192x6xf32>
    %cst_175 = arith.constant dense<0.000000e+00> : vector<3x6xf32>
    %904 = tpu.matmul %902, %903, %cst_175 {dimension_numbers = #tpu.dot_dimension_numbers<[1], [0], [0], [1], [0, 0, 1, 1], [], []>} : vector<3x192xf32>, vector<192x6xf32>, vector<3x6xf32> -> vector<3x6xf32>
    %c560_176 = arith.constant 560 : index
    %c0_177 = arith.constant 0 : index
    %905 = vector.load %arg1[%c560_176, %c0_177] : memref<856x128xf32, #tpu.memory_space<vmem>>, vector<6x6xf32>
    %cst_178 = arith.constant dense<0.000000e+00> : vector<3x6xf32>
    %906 = tpu.matmul %904, %905, %cst_178 {dimension_numbers = #tpu.dot_dimension_numbers<[1], [0], [0], [1], [0, 0, 1, 1], [], []>} : vector<3x6xf32>, vector<6x6xf32>, vector<3x6xf32> -> vector<3x6xf32>
    %c568_179 = arith.constant 568 : index
    %c0_180 = arith.constant 0 : index
    %907 = vector.load %arg1[%c568_179, %c0_180] : memref<856x128xf32, #tpu.memory_space<vmem>>, vector<1x6xf32>
    %908 = vector.broadcast %907 : vector<1x6xf32> to vector<3x6xf32>
    %909 = arith.addf %906, %908 : vector<3x6xf32>
    %cst_181 = arith.constant dense<0xFF800000> : vector<3xf32>
    %910 = vector.multi_reduction <maximumf>, %909, %cst_181 [1] : vector<3x6xf32> to vector<3xf32>
    %911 = vector.shape_cast %910 : vector<3xf32> to vector<3x1xf32>
    %912 = vector.broadcast %911 : vector<3x1xf32> to vector<3x6xf32>
    %913 = arith.subf %909, %912 : vector<3x6xf32>
    %914 = math.exp %913 : vector<3x6xf32>
    %cst_182 = arith.constant dense<0.000000e+00> : vector<3xf32>
    %915 = vector.multi_reduction <add>, %914, %cst_182 [1] : vector<3x6xf32> to vector<3xf32>
    %916 = vector.shape_cast %915 : vector<3xf32> to vector<3x1xf32>
    %917 = tpu.reciprocal %916 {approx = true} : vector<3x1xf32> -> vector<3x1xf32>
    %918 = vector.broadcast %917 : vector<3x1xf32> to vector<3x6xf32>
    %919 = arith.mulf %914, %918 : vector<3x6xf32>
    %920 = arith.mulf %919, %727 : vector<3x6xf32>
    %921 = vector.extract_strided_slice %29 {offsets = [8, 0], sizes = [3, 32], strides = [1, 1]} : vector<48x32xf32> to vector<3x32xf32>
    %922 = tpu.concatenate %920, %921 in 1 : vector<3x6xf32>, vector<3x32xf32> -> vector<3x38xf32>
    %c576_183 = arith.constant 576 : index
    %c0_184 = arith.constant 0 : index
    %923 = vector.load %arg1[%c576_183, %c0_184] : memref<856x128xf32, #tpu.memory_space<vmem>>, vector<38x32xf32>
    %cst_185 = arith.constant dense<0.000000e+00> : vector<3x32xf32>
    %924 = tpu.matmul %922, %923, %cst_185 {dimension_numbers = #tpu.dot_dimension_numbers<[1], [0], [0], [1], [0, 0, 1, 1], [], []>} : vector<3x38xf32>, vector<38x32xf32>, vector<3x32xf32> -> vector<3x32xf32>
    %c616_186 = arith.constant 616 : index
    %c0_187 = arith.constant 0 : index
    %925 = vector.load %arg1[%c616_186, %c0_187] : memref<856x128xf32, #tpu.memory_space<vmem>>, vector<1x32xf32>
    %926 = vector.broadcast %925 : vector<1x32xf32> to vector<3x32xf32>
    %927 = arith.addf %924, %926 : vector<3x32xf32>
    %c256_188 = arith.constant 256 : index
    %c0_189 = arith.constant 0 : index
    %928 = vector.load %arg1[%c256_188, %c0_189] : memref<856x128xf32, #tpu.memory_space<vmem>>, vector<64x128xf32>
    %929 = vector.extract_strided_slice %729 {offsets = [0, 0], sizes = [1, 128], strides = [1, 1]} : vector<4x128xf32> to vector<1x128xf32>
    %930 = tpu.concatenate %927, %780 in 1 : vector<3x32xf32>, vector<3x32xf32> -> vector<3x64xf32>
    %cst_190 = arith.constant dense<0.000000e+00> : vector<3x128xf32>
    %931 = tpu.matmul %930, %928, %cst_190 {dimension_numbers = #tpu.dot_dimension_numbers<[1], [0], [0], [1], [0, 0, 1, 1], [], []>} : vector<3x64xf32>, vector<64x128xf32>, vector<3x128xf32> -> vector<3x128xf32>
    %932 = vector.broadcast %929 : vector<1x128xf32> to vector<3x128xf32>
    %933 = arith.addf %931, %932 : vector<3x128xf32>
    %cst_191 = arith.constant 5.000000e-01 : f32
    %934 = vector.broadcast %cst_191 : f32 to vector<3x128xf32>
    %935 = arith.mulf %934, %933 : vector<3x128xf32>
    %936 = math.tanh %935 : vector<3x128xf32>
    %cst_192 = arith.constant 1.000000e+00 : f32
    %937 = vector.broadcast %cst_192 : f32 to vector<3x128xf32>
    %938 = arith.addf %936, %937 : vector<3x128xf32>
    %cst_193 = arith.constant 5.000000e-01 : f32
    %939 = vector.broadcast %cst_193 : f32 to vector<3x128xf32>
    %940 = arith.mulf %939, %938 : vector<3x128xf32>
    %941 = math.tanh %933 : vector<3x128xf32>
    %942 = vector.extract_strided_slice %940 {offsets = [0, 0], sizes = [3, 32], strides = [1, 1]} : vector<3x128xf32> to vector<3x32xf32>
    %943 = vector.extract_strided_slice %940 {offsets = [0, 32], sizes = [3, 32], strides = [1, 1]} : vector<3x128xf32> to vector<3x32xf32>
    %944 = vector.extract_strided_slice %941 {offsets = [0, 64], sizes = [3, 32], strides = [1, 1]} : vector<3x128xf32> to vector<3x32xf32>
    %945 = vector.extract_strided_slice %940 {offsets = [0, 96], sizes = [3, 32], strides = [1, 1]} : vector<3x128xf32> to vector<3x32xf32>
    %946 = arith.mulf %943, %778 : vector<3x32xf32>
    %947 = arith.mulf %942, %944 : vector<3x32xf32>
    %948 = arith.addf %946, %947 : vector<3x32xf32>
    %949 = math.tanh %948 : vector<3x32xf32>
    %950 = arith.mulf %945, %949 : vector<3x32xf32>
    %c320_194 = arith.constant 320 : index
    %c0_195 = arith.constant 0 : index
    %951 = vector.load %arg1[%c320_194, %c0_195] : memref<856x128xf32, #tpu.memory_space<vmem>>, vector<64x128xf32>
    %952 = vector.extract_strided_slice %729 {offsets = [1, 0], sizes = [1, 128], strides = [1, 1]} : vector<4x128xf32> to vector<1x128xf32>
    %953 = tpu.concatenate %950, %803 in 1 : vector<3x32xf32>, vector<3x32xf32> -> vector<3x64xf32>
    %cst_196 = arith.constant dense<0.000000e+00> : vector<3x128xf32>
    %954 = tpu.matmul %953, %951, %cst_196 {dimension_numbers = #tpu.dot_dimension_numbers<[1], [0], [0], [1], [0, 0, 1, 1], [], []>} : vector<3x64xf32>, vector<64x128xf32>, vector<3x128xf32> -> vector<3x128xf32>
    %955 = vector.broadcast %952 : vector<1x128xf32> to vector<3x128xf32>
    %956 = arith.addf %954, %955 : vector<3x128xf32>
    %cst_197 = arith.constant 5.000000e-01 : f32
    %957 = vector.broadcast %cst_197 : f32 to vector<3x128xf32>
    %958 = arith.mulf %957, %956 : vector<3x128xf32>
    %959 = math.tanh %958 : vector<3x128xf32>
    %cst_198 = arith.constant 1.000000e+00 : f32
    %960 = vector.broadcast %cst_198 : f32 to vector<3x128xf32>
    %961 = arith.addf %959, %960 : vector<3x128xf32>
    %cst_199 = arith.constant 5.000000e-01 : f32
    %962 = vector.broadcast %cst_199 : f32 to vector<3x128xf32>
    %963 = arith.mulf %962, %961 : vector<3x128xf32>
    %964 = math.tanh %956 : vector<3x128xf32>
    %965 = vector.extract_strided_slice %963 {offsets = [0, 0], sizes = [3, 32], strides = [1, 1]} : vector<3x128xf32> to vector<3x32xf32>
    %966 = vector.extract_strided_slice %963 {offsets = [0, 32], sizes = [3, 32], strides = [1, 1]} : vector<3x128xf32> to vector<3x32xf32>
    %967 = vector.extract_strided_slice %964 {offsets = [0, 64], sizes = [3, 32], strides = [1, 1]} : vector<3x128xf32> to vector<3x32xf32>
    %968 = vector.extract_strided_slice %963 {offsets = [0, 96], sizes = [3, 32], strides = [1, 1]} : vector<3x128xf32> to vector<3x32xf32>
    %969 = arith.mulf %966, %801 : vector<3x32xf32>
    %970 = arith.mulf %965, %967 : vector<3x32xf32>
    %971 = arith.addf %969, %970 : vector<3x32xf32>
    %972 = math.tanh %971 : vector<3x32xf32>
    %973 = arith.mulf %968, %972 : vector<3x32xf32>
    %c384_200 = arith.constant 384 : index
    %c0_201 = arith.constant 0 : index
    %974 = vector.load %arg1[%c384_200, %c0_201] : memref<856x128xf32, #tpu.memory_space<vmem>>, vector<64x128xf32>
    %975 = vector.extract_strided_slice %729 {offsets = [2, 0], sizes = [1, 128], strides = [1, 1]} : vector<4x128xf32> to vector<1x128xf32>
    %976 = tpu.concatenate %973, %826 in 1 : vector<3x32xf32>, vector<3x32xf32> -> vector<3x64xf32>
    %cst_202 = arith.constant dense<0.000000e+00> : vector<3x128xf32>
    %977 = tpu.matmul %976, %974, %cst_202 {dimension_numbers = #tpu.dot_dimension_numbers<[1], [0], [0], [1], [0, 0, 1, 1], [], []>} : vector<3x64xf32>, vector<64x128xf32>, vector<3x128xf32> -> vector<3x128xf32>
    %978 = vector.broadcast %975 : vector<1x128xf32> to vector<3x128xf32>
    %979 = arith.addf %977, %978 : vector<3x128xf32>
    %cst_203 = arith.constant 5.000000e-01 : f32
    %980 = vector.broadcast %cst_203 : f32 to vector<3x128xf32>
    %981 = arith.mulf %980, %979 : vector<3x128xf32>
    %982 = math.tanh %981 : vector<3x128xf32>
    %cst_204 = arith.constant 1.000000e+00 : f32
    %983 = vector.broadcast %cst_204 : f32 to vector<3x128xf32>
    %984 = arith.addf %982, %983 : vector<3x128xf32>
    %cst_205 = arith.constant 5.000000e-01 : f32
    %985 = vector.broadcast %cst_205 : f32 to vector<3x128xf32>
    %986 = arith.mulf %985, %984 : vector<3x128xf32>
    %987 = math.tanh %979 : vector<3x128xf32>
    %988 = vector.extract_strided_slice %986 {offsets = [0, 0], sizes = [3, 32], strides = [1, 1]} : vector<3x128xf32> to vector<3x32xf32>
    %989 = vector.extract_strided_slice %986 {offsets = [0, 32], sizes = [3, 32], strides = [1, 1]} : vector<3x128xf32> to vector<3x32xf32>
    %990 = vector.extract_strided_slice %987 {offsets = [0, 64], sizes = [3, 32], strides = [1, 1]} : vector<3x128xf32> to vector<3x32xf32>
    %991 = vector.extract_strided_slice %986 {offsets = [0, 96], sizes = [3, 32], strides = [1, 1]} : vector<3x128xf32> to vector<3x32xf32>
    %992 = arith.mulf %989, %824 : vector<3x32xf32>
    %993 = arith.mulf %988, %990 : vector<3x32xf32>
    %994 = arith.addf %992, %993 : vector<3x32xf32>
    %995 = math.tanh %994 : vector<3x32xf32>
    %996 = arith.mulf %991, %995 : vector<3x32xf32>
    %c448_206 = arith.constant 448 : index
    %c0_207 = arith.constant 0 : index
    %997 = vector.load %arg1[%c448_206, %c0_207] : memref<856x128xf32, #tpu.memory_space<vmem>>, vector<64x128xf32>
    %998 = vector.extract_strided_slice %729 {offsets = [3, 0], sizes = [1, 128], strides = [1, 1]} : vector<4x128xf32> to vector<1x128xf32>
    %999 = tpu.concatenate %996, %849 in 1 : vector<3x32xf32>, vector<3x32xf32> -> vector<3x64xf32>
    %cst_208 = arith.constant dense<0.000000e+00> : vector<3x128xf32>
    %1000 = tpu.matmul %999, %997, %cst_208 {dimension_numbers = #tpu.dot_dimension_numbers<[1], [0], [0], [1], [0, 0, 1, 1], [], []>} : vector<3x64xf32>, vector<64x128xf32>, vector<3x128xf32> -> vector<3x128xf32>
    %1001 = vector.broadcast %998 : vector<1x128xf32> to vector<3x128xf32>
    %1002 = arith.addf %1000, %1001 : vector<3x128xf32>
    %cst_209 = arith.constant 5.000000e-01 : f32
    %1003 = vector.broadcast %cst_209 : f32 to vector<3x128xf32>
    %1004 = arith.mulf %1003, %1002 : vector<3x128xf32>
    %1005 = math.tanh %1004 : vector<3x128xf32>
    %cst_210 = arith.constant 1.000000e+00 : f32
    %1006 = vector.broadcast %cst_210 : f32 to vector<3x128xf32>
    %1007 = arith.addf %1005, %1006 : vector<3x128xf32>
    %cst_211 = arith.constant 5.000000e-01 : f32
    %1008 = vector.broadcast %cst_211 : f32 to vector<3x128xf32>
    %1009 = arith.mulf %1008, %1007 : vector<3x128xf32>
    %1010 = math.tanh %1002 : vector<3x128xf32>
    %1011 = vector.extract_strided_slice %1009 {offsets = [0, 0], sizes = [3, 32], strides = [1, 1]} : vector<3x128xf32> to vector<3x32xf32>
    %1012 = vector.extract_strided_slice %1009 {offsets = [0, 32], sizes = [3, 32], strides = [1, 1]} : vector<3x128xf32> to vector<3x32xf32>
    %1013 = vector.extract_strided_slice %1010 {offsets = [0, 64], sizes = [3, 32], strides = [1, 1]} : vector<3x128xf32> to vector<3x32xf32>
    %1014 = vector.extract_strided_slice %1009 {offsets = [0, 96], sizes = [3, 32], strides = [1, 1]} : vector<3x128xf32> to vector<3x32xf32>
    %1015 = arith.mulf %1012, %847 : vector<3x32xf32>
    %1016 = arith.mulf %1011, %1013 : vector<3x32xf32>
    %1017 = arith.addf %1015, %1016 : vector<3x32xf32>
    %1018 = math.tanh %1017 : vector<3x32xf32>
    %1019 = arith.mulf %1014, %1018 : vector<3x32xf32>
    %c624_212 = arith.constant 624 : index
    %c0_213 = arith.constant 0 : index
    %1020 = vector.load %arg1[%c624_212, %c0_213] : memref<856x128xf32, #tpu.memory_space<vmem>>, vector<32x12xf32>
    %cst_214 = arith.constant dense<0.000000e+00> : vector<3x12xf32>
    %1021 = tpu.matmul %1019, %1020, %cst_214 {dimension_numbers = #tpu.dot_dimension_numbers<[1], [0], [0], [1], [0, 0, 1, 1], [], []>} : vector<3x32xf32>, vector<32x12xf32>, vector<3x12xf32> -> vector<3x12xf32>
    %c656_215 = arith.constant 656 : index
    %c0_216 = arith.constant 0 : index
    %1022 = vector.load %arg1[%c656_215, %c0_216] : memref<856x128xf32, #tpu.memory_space<vmem>>, vector<1x12xf32>
    %1023 = vector.broadcast %1022 : vector<1x12xf32> to vector<3x12xf32>
    %1024 = arith.addf %1021, %1023 : vector<3x12xf32>
    %1025 = vector.extract_strided_slice %1 {offsets = [0, 2], sizes = [3, 1], strides = [1, 1]} : vector<3x7xi32> to vector<3x1xi32>
    %c0_i32_217 = arith.constant 0 : i32
    %1026 = vector.broadcast %c0_i32_217 : i32 to vector<3x1xi32>
    %1027 = arith.cmpi ne, %1025, %1026 : vector<3x1xi32>
    %1028 = arith.extui %1027 : vector<3x1xi1> to vector<3x1xi32>
    %1029 = arith.sitofp %1028 : vector<3x1xi32> to vector<3x1xf32>
    %c1_i32_218 = arith.constant 1 : i32
    %1030 = vector.broadcast %c1_i32_218 : i32 to vector<3x1xi32>
    %1031 = arith.subi %1025, %1030 : vector<3x1xi32>
    %c0_i32_219 = arith.constant 0 : i32
    %1032 = vector.broadcast %c0_i32_219 : i32 to vector<3x1xi32>
    %1033 = arith.maxsi %1031, %1032 : vector<3x1xi32>
    %1034 = vector.broadcast %1033 : vector<3x1xi32> to vector<3x12xi32>
    %1035 = arith.cmpi eq, %1034, %728 : vector<3x12xi32>
    %1036 = arith.extui %1035 : vector<3x12xi1> to vector<3x12xi32>
    %1037 = arith.sitofp %1036 : vector<3x12xi32> to vector<3x12xf32>
    %cst_220 = arith.constant dense<0xFF800000> : vector<3xf32>
    %1038 = vector.multi_reduction <maximumf>, %1024, %cst_220 [1] : vector<3x12xf32> to vector<3xf32>
    %1039 = vector.shape_cast %1038 : vector<3xf32> to vector<3x1xf32>
    %1040 = vector.broadcast %1039 : vector<3x1xf32> to vector<3x12xf32>
    %1041 = arith.subf %1024, %1040 : vector<3x12xf32>
    %1042 = math.exp %1041 : vector<3x12xf32>
    %cst_221 = arith.constant dense<0.000000e+00> : vector<3xf32>
    %1043 = vector.multi_reduction <add>, %1042, %cst_221 [1] : vector<3x12xf32> to vector<3xf32>
    %1044 = vector.shape_cast %1043 : vector<3xf32> to vector<3x1xf32>
    %1045 = math.log %1044 : vector<3x1xf32>
    %1046 = arith.addf %1045, %1039 : vector<3x1xf32>
    %1047 = arith.mulf %1037, %1024 : vector<3x12xf32>
    %cst_222 = arith.constant dense<0.000000e+00> : vector<3xf32>
    %1048 = vector.multi_reduction <add>, %1047, %cst_222 [1] : vector<3x12xf32> to vector<3xf32>
    %1049 = vector.shape_cast %1048 : vector<3xf32> to vector<3x1xf32>
    %1050 = arith.subf %1046, %1049 : vector<3x1xf32>
    %1051 = vector.shape_cast %1029 : vector<3x1xf32> to vector<1x3x1xf32>
    %cst_223 = arith.constant dense<0.000000e+00> : vector<1xf32>
    %1052 = vector.multi_reduction <add>, %1051, %cst_223 [1, 2] : vector<1x3x1xf32> to vector<1xf32>
    %1053 = vector.shape_cast %1052 : vector<1xf32> to vector<1x1x1xf32>
    %1054 = vector.extract %1053[0, 0, 0] : f32 from vector<1x1x1xf32>
    %1055 = vector.broadcast %1054 : f32 to vector<1x1xf32>
    %cst_224 = arith.constant 0.000000e+00 : f32
    %1056 = vector.broadcast %cst_224 : f32 to vector<1x1xf32>
    %1057 = arith.cmpf ogt, %1055, %1056 : vector<1x1xf32>
    %1058 = arith.mulf %1050, %1029 : vector<3x1xf32>
    %1059 = vector.shape_cast %1058 : vector<3x1xf32> to vector<1x3x1xf32>
    %cst_225 = arith.constant dense<0.000000e+00> : vector<1xf32>
    %1060 = vector.multi_reduction <add>, %1059, %cst_225 [1, 2] : vector<1x3x1xf32> to vector<1xf32>
    %1061 = vector.shape_cast %1060 : vector<1xf32> to vector<1x1x1xf32>
    %1062 = vector.extract %1061[0, 0, 0] : f32 from vector<1x1x1xf32>
    %1063 = vector.broadcast %1062 : f32 to vector<1x1xf32>
    %cst_226 = arith.constant 1.000000e+00 : f32
    %1064 = vector.broadcast %cst_226 : f32 to vector<1x1xf32>
    %1065 = arith.maximumf %1055, %1064 : vector<1x1xf32>
    %1066 = tpu.reciprocal %1065 {approx = true} : vector<1x1xf32> -> vector<1x1xf32>
    %1067 = arith.mulf %1063, %1066 : vector<1x1xf32>
    %cst_227 = arith.constant 0.000000e+00 : f32
    %1068 = vector.broadcast %cst_227 : f32 to vector<1x1xf32>
    %1069 = arith.select %1057, %1067, %1068 : vector<1x1xi1>, vector<1x1xf32>
    %1070 = arith.addf %900, %1069 : vector<1x1xf32>
    %1071 = tpu.concatenate %1019, %1019, %1019, %1019, %1019, %1019 in 1 : vector<3x32xf32>, vector<3x32xf32>, vector<3x32xf32>, vector<3x32xf32>, vector<3x32xf32>, vector<3x32xf32> -> vector<3x192xf32>
    %1072 = arith.mulf %725, %1071 : vector<3x192xf32>
    %c664_228 = arith.constant 664 : index
    %c0_229 = arith.constant 0 : index
    %1073 = vector.load %arg1[%c664_228, %c0_229] : memref<856x128xf32, #tpu.memory_space<vmem>>, vector<192x6xf32>
    %cst_230 = arith.constant dense<0.000000e+00> : vector<3x6xf32>
    %1074 = tpu.matmul %1072, %1073, %cst_230 {dimension_numbers = #tpu.dot_dimension_numbers<[1], [0], [0], [1], [0, 0, 1, 1], [], []>} : vector<3x192xf32>, vector<192x6xf32>, vector<3x6xf32> -> vector<3x6xf32>
    %c560_231 = arith.constant 560 : index
    %c0_232 = arith.constant 0 : index
    %1075 = vector.load %arg1[%c560_231, %c0_232] : memref<856x128xf32, #tpu.memory_space<vmem>>, vector<6x6xf32>
    %cst_233 = arith.constant dense<0.000000e+00> : vector<3x6xf32>
    %1076 = tpu.matmul %1074, %1075, %cst_233 {dimension_numbers = #tpu.dot_dimension_numbers<[1], [0], [0], [1], [0, 0, 1, 1], [], []>} : vector<3x6xf32>, vector<6x6xf32>, vector<3x6xf32> -> vector<3x6xf32>
    %c568_234 = arith.constant 568 : index
    %c0_235 = arith.constant 0 : index
    %1077 = vector.load %arg1[%c568_234, %c0_235] : memref<856x128xf32, #tpu.memory_space<vmem>>, vector<1x6xf32>
    %1078 = vector.broadcast %1077 : vector<1x6xf32> to vector<3x6xf32>
    %1079 = arith.addf %1076, %1078 : vector<3x6xf32>
    %cst_236 = arith.constant dense<0xFF800000> : vector<3xf32>
    %1080 = vector.multi_reduction <maximumf>, %1079, %cst_236 [1] : vector<3x6xf32> to vector<3xf32>
    %1081 = vector.shape_cast %1080 : vector<3xf32> to vector<3x1xf32>
    %1082 = vector.broadcast %1081 : vector<3x1xf32> to vector<3x6xf32>
    %1083 = arith.subf %1079, %1082 : vector<3x6xf32>
    %1084 = math.exp %1083 : vector<3x6xf32>
    %cst_237 = arith.constant dense<0.000000e+00> : vector<3xf32>
    %1085 = vector.multi_reduction <add>, %1084, %cst_237 [1] : vector<3x6xf32> to vector<3xf32>
    %1086 = vector.shape_cast %1085 : vector<3xf32> to vector<3x1xf32>
    %1087 = tpu.reciprocal %1086 {approx = true} : vector<3x1xf32> -> vector<3x1xf32>
    %1088 = vector.broadcast %1087 : vector<3x1xf32> to vector<3x6xf32>
    %1089 = arith.mulf %1084, %1088 : vector<3x6xf32>
    %1090 = arith.mulf %1089, %727 : vector<3x6xf32>
    %1091 = vector.extract_strided_slice %29 {offsets = [16, 0], sizes = [3, 32], strides = [1, 1]} : vector<48x32xf32> to vector<3x32xf32>
    %1092 = tpu.concatenate %1090, %1091 in 1 : vector<3x6xf32>, vector<3x32xf32> -> vector<3x38xf32>
    %c576_238 = arith.constant 576 : index
    %c0_239 = arith.constant 0 : index
    %1093 = vector.load %arg1[%c576_238, %c0_239] : memref<856x128xf32, #tpu.memory_space<vmem>>, vector<38x32xf32>
    %cst_240 = arith.constant dense<0.000000e+00> : vector<3x32xf32>
    %1094 = tpu.matmul %1092, %1093, %cst_240 {dimension_numbers = #tpu.dot_dimension_numbers<[1], [0], [0], [1], [0, 0, 1, 1], [], []>} : vector<3x38xf32>, vector<38x32xf32>, vector<3x32xf32> -> vector<3x32xf32>
    %c616_241 = arith.constant 616 : index
    %c0_242 = arith.constant 0 : index
    %1095 = vector.load %arg1[%c616_241, %c0_242] : memref<856x128xf32, #tpu.memory_space<vmem>>, vector<1x32xf32>
    %1096 = vector.broadcast %1095 : vector<1x32xf32> to vector<3x32xf32>
    %1097 = arith.addf %1094, %1096 : vector<3x32xf32>
    %c256_243 = arith.constant 256 : index
    %c0_244 = arith.constant 0 : index
    %1098 = vector.load %arg1[%c256_243, %c0_244] : memref<856x128xf32, #tpu.memory_space<vmem>>, vector<64x128xf32>
    %1099 = vector.extract_strided_slice %729 {offsets = [0, 0], sizes = [1, 128], strides = [1, 1]} : vector<4x128xf32> to vector<1x128xf32>
    %1100 = tpu.concatenate %1097, %950 in 1 : vector<3x32xf32>, vector<3x32xf32> -> vector<3x64xf32>
    %cst_245 = arith.constant dense<0.000000e+00> : vector<3x128xf32>
    %1101 = tpu.matmul %1100, %1098, %cst_245 {dimension_numbers = #tpu.dot_dimension_numbers<[1], [0], [0], [1], [0, 0, 1, 1], [], []>} : vector<3x64xf32>, vector<64x128xf32>, vector<3x128xf32> -> vector<3x128xf32>
    %1102 = vector.broadcast %1099 : vector<1x128xf32> to vector<3x128xf32>
    %1103 = arith.addf %1101, %1102 : vector<3x128xf32>
    %cst_246 = arith.constant 5.000000e-01 : f32
    %1104 = vector.broadcast %cst_246 : f32 to vector<3x128xf32>
    %1105 = arith.mulf %1104, %1103 : vector<3x128xf32>
    %1106 = math.tanh %1105 : vector<3x128xf32>
    %cst_247 = arith.constant 1.000000e+00 : f32
    %1107 = vector.broadcast %cst_247 : f32 to vector<3x128xf32>
    %1108 = arith.addf %1106, %1107 : vector<3x128xf32>
    %cst_248 = arith.constant 5.000000e-01 : f32
    %1109 = vector.broadcast %cst_248 : f32 to vector<3x128xf32>
    %1110 = arith.mulf %1109, %1108 : vector<3x128xf32>
    %1111 = math.tanh %1103 : vector<3x128xf32>
    %1112 = vector.extract_strided_slice %1110 {offsets = [0, 0], sizes = [3, 32], strides = [1, 1]} : vector<3x128xf32> to vector<3x32xf32>
    %1113 = vector.extract_strided_slice %1110 {offsets = [0, 32], sizes = [3, 32], strides = [1, 1]} : vector<3x128xf32> to vector<3x32xf32>
    %1114 = vector.extract_strided_slice %1111 {offsets = [0, 64], sizes = [3, 32], strides = [1, 1]} : vector<3x128xf32> to vector<3x32xf32>
    %1115 = vector.extract_strided_slice %1110 {offsets = [0, 96], sizes = [3, 32], strides = [1, 1]} : vector<3x128xf32> to vector<3x32xf32>
    %1116 = arith.mulf %1113, %948 : vector<3x32xf32>
    %1117 = arith.mulf %1112, %1114 : vector<3x32xf32>
    %1118 = arith.addf %1116, %1117 : vector<3x32xf32>
    %1119 = math.tanh %1118 : vector<3x32xf32>
    %1120 = arith.mulf %1115, %1119 : vector<3x32xf32>
    %c320_249 = arith.constant 320 : index
    %c0_250 = arith.constant 0 : index
    %1121 = vector.load %arg1[%c320_249, %c0_250] : memref<856x128xf32, #tpu.memory_space<vmem>>, vector<64x128xf32>
    %1122 = vector.extract_strided_slice %729 {offsets = [1, 0], sizes = [1, 128], strides = [1, 1]} : vector<4x128xf32> to vector<1x128xf32>
    %1123 = tpu.concatenate %1120, %973 in 1 : vector<3x32xf32>, vector<3x32xf32> -> vector<3x64xf32>
    %cst_251 = arith.constant dense<0.000000e+00> : vector<3x128xf32>
    %1124 = tpu.matmul %1123, %1121, %cst_251 {dimension_numbers = #tpu.dot_dimension_numbers<[1], [0], [0], [1], [0, 0, 1, 1], [], []>} : vector<3x64xf32>, vector<64x128xf32>, vector<3x128xf32> -> vector<3x128xf32>
    %1125 = vector.broadcast %1122 : vector<1x128xf32> to vector<3x128xf32>
    %1126 = arith.addf %1124, %1125 : vector<3x128xf32>
    %cst_252 = arith.constant 5.000000e-01 : f32
    %1127 = vector.broadcast %cst_252 : f32 to vector<3x128xf32>
    %1128 = arith.mulf %1127, %1126 : vector<3x128xf32>
    %1129 = math.tanh %1128 : vector<3x128xf32>
    %cst_253 = arith.constant 1.000000e+00 : f32
    %1130 = vector.broadcast %cst_253 : f32 to vector<3x128xf32>
    %1131 = arith.addf %1129, %1130 : vector<3x128xf32>
    %cst_254 = arith.constant 5.000000e-01 : f32
    %1132 = vector.broadcast %cst_254 : f32 to vector<3x128xf32>
    %1133 = arith.mulf %1132, %1131 : vector<3x128xf32>
    %1134 = math.tanh %1126 : vector<3x128xf32>
    %1135 = vector.extract_strided_slice %1133 {offsets = [0, 0], sizes = [3, 32], strides = [1, 1]} : vector<3x128xf32> to vector<3x32xf32>
    %1136 = vector.extract_strided_slice %1133 {offsets = [0, 32], sizes = [3, 32], strides = [1, 1]} : vector<3x128xf32> to vector<3x32xf32>
    %1137 = vector.extract_strided_slice %1134 {offsets = [0, 64], sizes = [3, 32], strides = [1, 1]} : vector<3x128xf32> to vector<3x32xf32>
    %1138 = vector.extract_strided_slice %1133 {offsets = [0, 96], sizes = [3, 32], strides = [1, 1]} : vector<3x128xf32> to vector<3x32xf32>
    %1139 = arith.mulf %1136, %971 : vector<3x32xf32>
    %1140 = arith.mulf %1135, %1137 : vector<3x32xf32>
    %1141 = arith.addf %1139, %1140 : vector<3x32xf32>
    %1142 = math.tanh %1141 : vector<3x32xf32>
    %1143 = arith.mulf %1138, %1142 : vector<3x32xf32>
    %c384_255 = arith.constant 384 : index
    %c0_256 = arith.constant 0 : index
    %1144 = vector.load %arg1[%c384_255, %c0_256] : memref<856x128xf32, #tpu.memory_space<vmem>>, vector<64x128xf32>
    %1145 = vector.extract_strided_slice %729 {offsets = [2, 0], sizes = [1, 128], strides = [1, 1]} : vector<4x128xf32> to vector<1x128xf32>
    %1146 = tpu.concatenate %1143, %996 in 1 : vector<3x32xf32>, vector<3x32xf32> -> vector<3x64xf32>
    %cst_257 = arith.constant dense<0.000000e+00> : vector<3x128xf32>
    %1147 = tpu.matmul %1146, %1144, %cst_257 {dimension_numbers = #tpu.dot_dimension_numbers<[1], [0], [0], [1], [0, 0, 1, 1], [], []>} : vector<3x64xf32>, vector<64x128xf32>, vector<3x128xf32> -> vector<3x128xf32>
    %1148 = vector.broadcast %1145 : vector<1x128xf32> to vector<3x128xf32>
    %1149 = arith.addf %1147, %1148 : vector<3x128xf32>
    %cst_258 = arith.constant 5.000000e-01 : f32
    %1150 = vector.broadcast %cst_258 : f32 to vector<3x128xf32>
    %1151 = arith.mulf %1150, %1149 : vector<3x128xf32>
    %1152 = math.tanh %1151 : vector<3x128xf32>
    %cst_259 = arith.constant 1.000000e+00 : f32
    %1153 = vector.broadcast %cst_259 : f32 to vector<3x128xf32>
    %1154 = arith.addf %1152, %1153 : vector<3x128xf32>
    %cst_260 = arith.constant 5.000000e-01 : f32
    %1155 = vector.broadcast %cst_260 : f32 to vector<3x128xf32>
    %1156 = arith.mulf %1155, %1154 : vector<3x128xf32>
    %1157 = math.tanh %1149 : vector<3x128xf32>
    %1158 = vector.extract_strided_slice %1156 {offsets = [0, 0], sizes = [3, 32], strides = [1, 1]} : vector<3x128xf32> to vector<3x32xf32>
    %1159 = vector.extract_strided_slice %1156 {offsets = [0, 32], sizes = [3, 32], strides = [1, 1]} : vector<3x128xf32> to vector<3x32xf32>
    %1160 = vector.extract_strided_slice %1157 {offsets = [0, 64], sizes = [3, 32], strides = [1, 1]} : vector<3x128xf32> to vector<3x32xf32>
    %1161 = vector.extract_strided_slice %1156 {offsets = [0, 96], sizes = [3, 32], strides = [1, 1]} : vector<3x128xf32> to vector<3x32xf32>
    %1162 = arith.mulf %1159, %994 : vector<3x32xf32>
    %1163 = arith.mulf %1158, %1160 : vector<3x32xf32>
    %1164 = arith.addf %1162, %1163 : vector<3x32xf32>
    %1165 = math.tanh %1164 : vector<3x32xf32>
    %1166 = arith.mulf %1161, %1165 : vector<3x32xf32>
    %c448_261 = arith.constant 448 : index
    %c0_262 = arith.constant 0 : index
    %1167 = vector.load %arg1[%c448_261, %c0_262] : memref<856x128xf32, #tpu.memory_space<vmem>>, vector<64x128xf32>
    %1168 = vector.extract_strided_slice %729 {offsets = [3, 0], sizes = [1, 128], strides = [1, 1]} : vector<4x128xf32> to vector<1x128xf32>
    %1169 = tpu.concatenate %1166, %1019 in 1 : vector<3x32xf32>, vector<3x32xf32> -> vector<3x64xf32>
    %cst_263 = arith.constant dense<0.000000e+00> : vector<3x128xf32>
    %1170 = tpu.matmul %1169, %1167, %cst_263 {dimension_numbers = #tpu.dot_dimension_numbers<[1], [0], [0], [1], [0, 0, 1, 1], [], []>} : vector<3x64xf32>, vector<64x128xf32>, vector<3x128xf32> -> vector<3x128xf32>
    %1171 = vector.broadcast %1168 : vector<1x128xf32> to vector<3x128xf32>
    %1172 = arith.addf %1170, %1171 : vector<3x128xf32>
    %cst_264 = arith.constant 5.000000e-01 : f32
    %1173 = vector.broadcast %cst_264 : f32 to vector<3x128xf32>
    %1174 = arith.mulf %1173, %1172 : vector<3x128xf32>
    %1175 = math.tanh %1174 : vector<3x128xf32>
    %cst_265 = arith.constant 1.000000e+00 : f32
    %1176 = vector.broadcast %cst_265 : f32 to vector<3x128xf32>
    %1177 = arith.addf %1175, %1176 : vector<3x128xf32>
    %cst_266 = arith.constant 5.000000e-01 : f32
    %1178 = vector.broadcast %cst_266 : f32 to vector<3x128xf32>
    %1179 = arith.mulf %1178, %1177 : vector<3x128xf32>
    %1180 = math.tanh %1172 : vector<3x128xf32>
    %1181 = vector.extract_strided_slice %1179 {offsets = [0, 0], sizes = [3, 32], strides = [1, 1]} : vector<3x128xf32> to vector<3x32xf32>
    %1182 = vector.extract_strided_slice %1179 {offsets = [0, 32], sizes = [3, 32], strides = [1, 1]} : vector<3x128xf32> to vector<3x32xf32>
    %1183 = vector.extract_strided_slice %1180 {offsets = [0, 64], sizes = [3, 32], strides = [1, 1]} : vector<3x128xf32> to vector<3x32xf32>
    %1184 = vector.extract_strided_slice %1179 {offsets = [0, 96], sizes = [3, 32], strides = [1, 1]} : vector<3x128xf32> to vector<3x32xf32>
    %1185 = arith.mulf %1182, %1017 : vector<3x32xf32>
    %1186 = arith.mulf %1181, %1183 : vector<3x32xf32>
    %1187 = arith.addf %1185, %1186 : vector<3x32xf32>
    %1188 = math.tanh %1187 : vector<3x32xf32>
    %1189 = arith.mulf %1184, %1188 : vector<3x32xf32>
    %c624_267 = arith.constant 624 : index
    %c0_268 = arith.constant 0 : index
    %1190 = vector.load %arg1[%c624_267, %c0_268] : memref<856x128xf32, #tpu.memory_space<vmem>>, vector<32x12xf32>
    %cst_269 = arith.constant dense<0.000000e+00> : vector<3x12xf32>
    %1191 = tpu.matmul %1189, %1190, %cst_269 {dimension_numbers = #tpu.dot_dimension_numbers<[1], [0], [0], [1], [0, 0, 1, 1], [], []>} : vector<3x32xf32>, vector<32x12xf32>, vector<3x12xf32> -> vector<3x12xf32>
    %c656_270 = arith.constant 656 : index
    %c0_271 = arith.constant 0 : index
    %1192 = vector.load %arg1[%c656_270, %c0_271] : memref<856x128xf32, #tpu.memory_space<vmem>>, vector<1x12xf32>
    %1193 = vector.broadcast %1192 : vector<1x12xf32> to vector<3x12xf32>
    %1194 = arith.addf %1191, %1193 : vector<3x12xf32>
    %1195 = vector.extract_strided_slice %1 {offsets = [0, 3], sizes = [3, 1], strides = [1, 1]} : vector<3x7xi32> to vector<3x1xi32>
    %c0_i32_272 = arith.constant 0 : i32
    %1196 = vector.broadcast %c0_i32_272 : i32 to vector<3x1xi32>
    %1197 = arith.cmpi ne, %1195, %1196 : vector<3x1xi32>
    %1198 = arith.extui %1197 : vector<3x1xi1> to vector<3x1xi32>
    %1199 = arith.sitofp %1198 : vector<3x1xi32> to vector<3x1xf32>
    %c1_i32_273 = arith.constant 1 : i32
    %1200 = vector.broadcast %c1_i32_273 : i32 to vector<3x1xi32>
    %1201 = arith.subi %1195, %1200 : vector<3x1xi32>
    %c0_i32_274 = arith.constant 0 : i32
    %1202 = vector.broadcast %c0_i32_274 : i32 to vector<3x1xi32>
    %1203 = arith.maxsi %1201, %1202 : vector<3x1xi32>
    %1204 = vector.broadcast %1203 : vector<3x1xi32> to vector<3x12xi32>
    %1205 = arith.cmpi eq, %1204, %728 : vector<3x12xi32>
    %1206 = arith.extui %1205 : vector<3x12xi1> to vector<3x12xi32>
    %1207 = arith.sitofp %1206 : vector<3x12xi32> to vector<3x12xf32>
    %cst_275 = arith.constant dense<0xFF800000> : vector<3xf32>
    %1208 = vector.multi_reduction <maximumf>, %1194, %cst_275 [1] : vector<3x12xf32> to vector<3xf32>
    %1209 = vector.shape_cast %1208 : vector<3xf32> to vector<3x1xf32>
    %1210 = vector.broadcast %1209 : vector<3x1xf32> to vector<3x12xf32>
    %1211 = arith.subf %1194, %1210 : vector<3x12xf32>
    %1212 = math.exp %1211 : vector<3x12xf32>
    %cst_276 = arith.constant dense<0.000000e+00> : vector<3xf32>
    %1213 = vector.multi_reduction <add>, %1212, %cst_276 [1] : vector<3x12xf32> to vector<3xf32>
    %1214 = vector.shape_cast %1213 : vector<3xf32> to vector<3x1xf32>
    %1215 = math.log %1214 : vector<3x1xf32>
    %1216 = arith.addf %1215, %1209 : vector<3x1xf32>
    %1217 = arith.mulf %1207, %1194 : vector<3x12xf32>
    %cst_277 = arith.constant dense<0.000000e+00> : vector<3xf32>
    %1218 = vector.multi_reduction <add>, %1217, %cst_277 [1] : vector<3x12xf32> to vector<3xf32>
    %1219 = vector.shape_cast %1218 : vector<3xf32> to vector<3x1xf32>
    %1220 = arith.subf %1216, %1219 : vector<3x1xf32>
    %1221 = vector.shape_cast %1199 : vector<3x1xf32> to vector<1x3x1xf32>
    %cst_278 = arith.constant dense<0.000000e+00> : vector<1xf32>
    %1222 = vector.multi_reduction <add>, %1221, %cst_278 [1, 2] : vector<1x3x1xf32> to vector<1xf32>
    %1223 = vector.shape_cast %1222 : vector<1xf32> to vector<1x1x1xf32>
    %1224 = vector.extract %1223[0, 0, 0] : f32 from vector<1x1x1xf32>
    %1225 = vector.broadcast %1224 : f32 to vector<1x1xf32>
    %cst_279 = arith.constant 0.000000e+00 : f32
    %1226 = vector.broadcast %cst_279 : f32 to vector<1x1xf32>
    %1227 = arith.cmpf ogt, %1225, %1226 : vector<1x1xf32>
    %1228 = arith.mulf %1220, %1199 : vector<3x1xf32>
    %1229 = vector.shape_cast %1228 : vector<3x1xf32> to vector<1x3x1xf32>
    %cst_280 = arith.constant dense<0.000000e+00> : vector<1xf32>
    %1230 = vector.multi_reduction <add>, %1229, %cst_280 [1, 2] : vector<1x3x1xf32> to vector<1xf32>
    %1231 = vector.shape_cast %1230 : vector<1xf32> to vector<1x1x1xf32>
    %1232 = vector.extract %1231[0, 0, 0] : f32 from vector<1x1x1xf32>
    %1233 = vector.broadcast %1232 : f32 to vector<1x1xf32>
    %cst_281 = arith.constant 1.000000e+00 : f32
    %1234 = vector.broadcast %cst_281 : f32 to vector<1x1xf32>
    %1235 = arith.maximumf %1225, %1234 : vector<1x1xf32>
    %1236 = tpu.reciprocal %1235 {approx = true} : vector<1x1xf32> -> vector<1x1xf32>
    %1237 = arith.mulf %1233, %1236 : vector<1x1xf32>
    %cst_282 = arith.constant 0.000000e+00 : f32
    %1238 = vector.broadcast %cst_282 : f32 to vector<1x1xf32>
    %1239 = arith.select %1227, %1237, %1238 : vector<1x1xi1>, vector<1x1xf32>
    %1240 = arith.addf %1070, %1239 : vector<1x1xf32>
    %1241 = tpu.concatenate %1189, %1189, %1189, %1189, %1189, %1189 in 1 : vector<3x32xf32>, vector<3x32xf32>, vector<3x32xf32>, vector<3x32xf32>, vector<3x32xf32>, vector<3x32xf32> -> vector<3x192xf32>
    %1242 = arith.mulf %725, %1241 : vector<3x192xf32>
    %c664_283 = arith.constant 664 : index
    %c0_284 = arith.constant 0 : index
    %1243 = vector.load %arg1[%c664_283, %c0_284] : memref<856x128xf32, #tpu.memory_space<vmem>>, vector<192x6xf32>
    %cst_285 = arith.constant dense<0.000000e+00> : vector<3x6xf32>
    %1244 = tpu.matmul %1242, %1243, %cst_285 {dimension_numbers = #tpu.dot_dimension_numbers<[1], [0], [0], [1], [0, 0, 1, 1], [], []>} : vector<3x192xf32>, vector<192x6xf32>, vector<3x6xf32> -> vector<3x6xf32>
    %c560_286 = arith.constant 560 : index
    %c0_287 = arith.constant 0 : index
    %1245 = vector.load %arg1[%c560_286, %c0_287] : memref<856x128xf32, #tpu.memory_space<vmem>>, vector<6x6xf32>
    %cst_288 = arith.constant dense<0.000000e+00> : vector<3x6xf32>
    %1246 = tpu.matmul %1244, %1245, %cst_288 {dimension_numbers = #tpu.dot_dimension_numbers<[1], [0], [0], [1], [0, 0, 1, 1], [], []>} : vector<3x6xf32>, vector<6x6xf32>, vector<3x6xf32> -> vector<3x6xf32>
    %c568_289 = arith.constant 568 : index
    %c0_290 = arith.constant 0 : index
    %1247 = vector.load %arg1[%c568_289, %c0_290] : memref<856x128xf32, #tpu.memory_space<vmem>>, vector<1x6xf32>
    %1248 = vector.broadcast %1247 : vector<1x6xf32> to vector<3x6xf32>
    %1249 = arith.addf %1246, %1248 : vector<3x6xf32>
    %cst_291 = arith.constant dense<0xFF800000> : vector<3xf32>
    %1250 = vector.multi_reduction <maximumf>, %1249, %cst_291 [1] : vector<3x6xf32> to vector<3xf32>
    %1251 = vector.shape_cast %1250 : vector<3xf32> to vector<3x1xf32>
    %1252 = vector.broadcast %1251 : vector<3x1xf32> to vector<3x6xf32>
    %1253 = arith.subf %1249, %1252 : vector<3x6xf32>
    %1254 = math.exp %1253 : vector<3x6xf32>
    %cst_292 = arith.constant dense<0.000000e+00> : vector<3xf32>
    %1255 = vector.multi_reduction <add>, %1254, %cst_292 [1] : vector<3x6xf32> to vector<3xf32>
    %1256 = vector.shape_cast %1255 : vector<3xf32> to vector<3x1xf32>
    %1257 = tpu.reciprocal %1256 {approx = true} : vector<3x1xf32> -> vector<3x1xf32>
    %1258 = vector.broadcast %1257 : vector<3x1xf32> to vector<3x6xf32>
    %1259 = arith.mulf %1254, %1258 : vector<3x6xf32>
    %1260 = arith.mulf %1259, %727 : vector<3x6xf32>
    %1261 = vector.extract_strided_slice %29 {offsets = [24, 0], sizes = [3, 32], strides = [1, 1]} : vector<48x32xf32> to vector<3x32xf32>
    %1262 = tpu.concatenate %1260, %1261 in 1 : vector<3x6xf32>, vector<3x32xf32> -> vector<3x38xf32>
    %c576_293 = arith.constant 576 : index
    %c0_294 = arith.constant 0 : index
    %1263 = vector.load %arg1[%c576_293, %c0_294] : memref<856x128xf32, #tpu.memory_space<vmem>>, vector<38x32xf32>
    %cst_295 = arith.constant dense<0.000000e+00> : vector<3x32xf32>
    %1264 = tpu.matmul %1262, %1263, %cst_295 {dimension_numbers = #tpu.dot_dimension_numbers<[1], [0], [0], [1], [0, 0, 1, 1], [], []>} : vector<3x38xf32>, vector<38x32xf32>, vector<3x32xf32> -> vector<3x32xf32>
    %c616_296 = arith.constant 616 : index
    %c0_297 = arith.constant 0 : index
    %1265 = vector.load %arg1[%c616_296, %c0_297] : memref<856x128xf32, #tpu.memory_space<vmem>>, vector<1x32xf32>
    %1266 = vector.broadcast %1265 : vector<1x32xf32> to vector<3x32xf32>
    %1267 = arith.addf %1264, %1266 : vector<3x32xf32>
    %c256_298 = arith.constant 256 : index
    %c0_299 = arith.constant 0 : index
    %1268 = vector.load %arg1[%c256_298, %c0_299] : memref<856x128xf32, #tpu.memory_space<vmem>>, vector<64x128xf32>
    %1269 = vector.extract_strided_slice %729 {offsets = [0, 0], sizes = [1, 128], strides = [1, 1]} : vector<4x128xf32> to vector<1x128xf32>
    %1270 = tpu.concatenate %1267, %1120 in 1 : vector<3x32xf32>, vector<3x32xf32> -> vector<3x64xf32>
    %cst_300 = arith.constant dense<0.000000e+00> : vector<3x128xf32>
    %1271 = tpu.matmul %1270, %1268, %cst_300 {dimension_numbers = #tpu.dot_dimension_numbers<[1], [0], [0], [1], [0, 0, 1, 1], [], []>} : vector<3x64xf32>, vector<64x128xf32>, vector<3x128xf32> -> vector<3x128xf32>
    %1272 = vector.broadcast %1269 : vector<1x128xf32> to vector<3x128xf32>
    %1273 = arith.addf %1271, %1272 : vector<3x128xf32>
    %cst_301 = arith.constant 5.000000e-01 : f32
    %1274 = vector.broadcast %cst_301 : f32 to vector<3x128xf32>
    %1275 = arith.mulf %1274, %1273 : vector<3x128xf32>
    %1276 = math.tanh %1275 : vector<3x128xf32>
    %cst_302 = arith.constant 1.000000e+00 : f32
    %1277 = vector.broadcast %cst_302 : f32 to vector<3x128xf32>
    %1278 = arith.addf %1276, %1277 : vector<3x128xf32>
    %cst_303 = arith.constant 5.000000e-01 : f32
    %1279 = vector.broadcast %cst_303 : f32 to vector<3x128xf32>
    %1280 = arith.mulf %1279, %1278 : vector<3x128xf32>
    %1281 = math.tanh %1273 : vector<3x128xf32>
    %1282 = vector.extract_strided_slice %1280 {offsets = [0, 0], sizes = [3, 32], strides = [1, 1]} : vector<3x128xf32> to vector<3x32xf32>
    %1283 = vector.extract_strided_slice %1280 {offsets = [0, 32], sizes = [3, 32], strides = [1, 1]} : vector<3x128xf32> to vector<3x32xf32>
    %1284 = vector.extract_strided_slice %1281 {offsets = [0, 64], sizes = [3, 32], strides = [1, 1]} : vector<3x128xf32> to vector<3x32xf32>
    %1285 = vector.extract_strided_slice %1280 {offsets = [0, 96], sizes = [3, 32], strides = [1, 1]} : vector<3x128xf32> to vector<3x32xf32>
    %1286 = arith.mulf %1283, %1118 : vector<3x32xf32>
    %1287 = arith.mulf %1282, %1284 : vector<3x32xf32>
    %1288 = arith.addf %1286, %1287 : vector<3x32xf32>
    %1289 = math.tanh %1288 : vector<3x32xf32>
    %1290 = arith.mulf %1285, %1289 : vector<3x32xf32>
    %c320_304 = arith.constant 320 : index
    %c0_305 = arith.constant 0 : index
    %1291 = vector.load %arg1[%c320_304, %c0_305] : memref<856x128xf32, #tpu.memory_space<vmem>>, vector<64x128xf32>
    %1292 = vector.extract_strided_slice %729 {offsets = [1, 0], sizes = [1, 128], strides = [1, 1]} : vector<4x128xf32> to vector<1x128xf32>
    %1293 = tpu.concatenate %1290, %1143 in 1 : vector<3x32xf32>, vector<3x32xf32> -> vector<3x64xf32>
    %cst_306 = arith.constant dense<0.000000e+00> : vector<3x128xf32>
    %1294 = tpu.matmul %1293, %1291, %cst_306 {dimension_numbers = #tpu.dot_dimension_numbers<[1], [0], [0], [1], [0, 0, 1, 1], [], []>} : vector<3x64xf32>, vector<64x128xf32>, vector<3x128xf32> -> vector<3x128xf32>
    %1295 = vector.broadcast %1292 : vector<1x128xf32> to vector<3x128xf32>
    %1296 = arith.addf %1294, %1295 : vector<3x128xf32>
    %cst_307 = arith.constant 5.000000e-01 : f32
    %1297 = vector.broadcast %cst_307 : f32 to vector<3x128xf32>
    %1298 = arith.mulf %1297, %1296 : vector<3x128xf32>
    %1299 = math.tanh %1298 : vector<3x128xf32>
    %cst_308 = arith.constant 1.000000e+00 : f32
    %1300 = vector.broadcast %cst_308 : f32 to vector<3x128xf32>
    %1301 = arith.addf %1299, %1300 : vector<3x128xf32>
    %cst_309 = arith.constant 5.000000e-01 : f32
    %1302 = vector.broadcast %cst_309 : f32 to vector<3x128xf32>
    %1303 = arith.mulf %1302, %1301 : vector<3x128xf32>
    %1304 = math.tanh %1296 : vector<3x128xf32>
    %1305 = vector.extract_strided_slice %1303 {offsets = [0, 0], sizes = [3, 32], strides = [1, 1]} : vector<3x128xf32> to vector<3x32xf32>
    %1306 = vector.extract_strided_slice %1303 {offsets = [0, 32], sizes = [3, 32], strides = [1, 1]} : vector<3x128xf32> to vector<3x32xf32>
    %1307 = vector.extract_strided_slice %1304 {offsets = [0, 64], sizes = [3, 32], strides = [1, 1]} : vector<3x128xf32> to vector<3x32xf32>
    %1308 = vector.extract_strided_slice %1303 {offsets = [0, 96], sizes = [3, 32], strides = [1, 1]} : vector<3x128xf32> to vector<3x32xf32>
    %1309 = arith.mulf %1306, %1141 : vector<3x32xf32>
    %1310 = arith.mulf %1305, %1307 : vector<3x32xf32>
    %1311 = arith.addf %1309, %1310 : vector<3x32xf32>
    %1312 = math.tanh %1311 : vector<3x32xf32>
    %1313 = arith.mulf %1308, %1312 : vector<3x32xf32>
    %c384_310 = arith.constant 384 : index
    %c0_311 = arith.constant 0 : index
    %1314 = vector.load %arg1[%c384_310, %c0_311] : memref<856x128xf32, #tpu.memory_space<vmem>>, vector<64x128xf32>
    %1315 = vector.extract_strided_slice %729 {offsets = [2, 0], sizes = [1, 128], strides = [1, 1]} : vector<4x128xf32> to vector<1x128xf32>
    %1316 = tpu.concatenate %1313, %1166 in 1 : vector<3x32xf32>, vector<3x32xf32> -> vector<3x64xf32>
    %cst_312 = arith.constant dense<0.000000e+00> : vector<3x128xf32>
    %1317 = tpu.matmul %1316, %1314, %cst_312 {dimension_numbers = #tpu.dot_dimension_numbers<[1], [0], [0], [1], [0, 0, 1, 1], [], []>} : vector<3x64xf32>, vector<64x128xf32>, vector<3x128xf32> -> vector<3x128xf32>
    %1318 = vector.broadcast %1315 : vector<1x128xf32> to vector<3x128xf32>
    %1319 = arith.addf %1317, %1318 : vector<3x128xf32>
    %cst_313 = arith.constant 5.000000e-01 : f32
    %1320 = vector.broadcast %cst_313 : f32 to vector<3x128xf32>
    %1321 = arith.mulf %1320, %1319 : vector<3x128xf32>
    %1322 = math.tanh %1321 : vector<3x128xf32>
    %cst_314 = arith.constant 1.000000e+00 : f32
    %1323 = vector.broadcast %cst_314 : f32 to vector<3x128xf32>
    %1324 = arith.addf %1322, %1323 : vector<3x128xf32>
    %cst_315 = arith.constant 5.000000e-01 : f32
    %1325 = vector.broadcast %cst_315 : f32 to vector<3x128xf32>
    %1326 = arith.mulf %1325, %1324 : vector<3x128xf32>
    %1327 = math.tanh %1319 : vector<3x128xf32>
    %1328 = vector.extract_strided_slice %1326 {offsets = [0, 0], sizes = [3, 32], strides = [1, 1]} : vector<3x128xf32> to vector<3x32xf32>
    %1329 = vector.extract_strided_slice %1326 {offsets = [0, 32], sizes = [3, 32], strides = [1, 1]} : vector<3x128xf32> to vector<3x32xf32>
    %1330 = vector.extract_strided_slice %1327 {offsets = [0, 64], sizes = [3, 32], strides = [1, 1]} : vector<3x128xf32> to vector<3x32xf32>
    %1331 = vector.extract_strided_slice %1326 {offsets = [0, 96], sizes = [3, 32], strides = [1, 1]} : vector<3x128xf32> to vector<3x32xf32>
    %1332 = arith.mulf %1329, %1164 : vector<3x32xf32>
    %1333 = arith.mulf %1328, %1330 : vector<3x32xf32>
    %1334 = arith.addf %1332, %1333 : vector<3x32xf32>
    %1335 = math.tanh %1334 : vector<3x32xf32>
    %1336 = arith.mulf %1331, %1335 : vector<3x32xf32>
    %c448_316 = arith.constant 448 : index
    %c0_317 = arith.constant 0 : index
    %1337 = vector.load %arg1[%c448_316, %c0_317] : memref<856x128xf32, #tpu.memory_space<vmem>>, vector<64x128xf32>
    %1338 = vector.extract_strided_slice %729 {offsets = [3, 0], sizes = [1, 128], strides = [1, 1]} : vector<4x128xf32> to vector<1x128xf32>
    %1339 = tpu.concatenate %1336, %1189 in 1 : vector<3x32xf32>, vector<3x32xf32> -> vector<3x64xf32>
    %cst_318 = arith.constant dense<0.000000e+00> : vector<3x128xf32>
    %1340 = tpu.matmul %1339, %1337, %cst_318 {dimension_numbers = #tpu.dot_dimension_numbers<[1], [0], [0], [1], [0, 0, 1, 1], [], []>} : vector<3x64xf32>, vector<64x128xf32>, vector<3x128xf32> -> vector<3x128xf32>
    %1341 = vector.broadcast %1338 : vector<1x128xf32> to vector<3x128xf32>
    %1342 = arith.addf %1340, %1341 : vector<3x128xf32>
    %cst_319 = arith.constant 5.000000e-01 : f32
    %1343 = vector.broadcast %cst_319 : f32 to vector<3x128xf32>
    %1344 = arith.mulf %1343, %1342 : vector<3x128xf32>
    %1345 = math.tanh %1344 : vector<3x128xf32>
    %cst_320 = arith.constant 1.000000e+00 : f32
    %1346 = vector.broadcast %cst_320 : f32 to vector<3x128xf32>
    %1347 = arith.addf %1345, %1346 : vector<3x128xf32>
    %cst_321 = arith.constant 5.000000e-01 : f32
    %1348 = vector.broadcast %cst_321 : f32 to vector<3x128xf32>
    %1349 = arith.mulf %1348, %1347 : vector<3x128xf32>
    %1350 = math.tanh %1342 : vector<3x128xf32>
    %1351 = vector.extract_strided_slice %1349 {offsets = [0, 0], sizes = [3, 32], strides = [1, 1]} : vector<3x128xf32> to vector<3x32xf32>
    %1352 = vector.extract_strided_slice %1349 {offsets = [0, 32], sizes = [3, 32], strides = [1, 1]} : vector<3x128xf32> to vector<3x32xf32>
    %1353 = vector.extract_strided_slice %1350 {offsets = [0, 64], sizes = [3, 32], strides = [1, 1]} : vector<3x128xf32> to vector<3x32xf32>
    %1354 = vector.extract_strided_slice %1349 {offsets = [0, 96], sizes = [3, 32], strides = [1, 1]} : vector<3x128xf32> to vector<3x32xf32>
    %1355 = arith.mulf %1352, %1187 : vector<3x32xf32>
    %1356 = arith.mulf %1351, %1353 : vector<3x32xf32>
    %1357 = arith.addf %1355, %1356 : vector<3x32xf32>
    %1358 = math.tanh %1357 : vector<3x32xf32>
    %1359 = arith.mulf %1354, %1358 : vector<3x32xf32>
    %c624_322 = arith.constant 624 : index
    %c0_323 = arith.constant 0 : index
    %1360 = vector.load %arg1[%c624_322, %c0_323] : memref<856x128xf32, #tpu.memory_space<vmem>>, vector<32x12xf32>
    %cst_324 = arith.constant dense<0.000000e+00> : vector<3x12xf32>
    %1361 = tpu.matmul %1359, %1360, %cst_324 {dimension_numbers = #tpu.dot_dimension_numbers<[1], [0], [0], [1], [0, 0, 1, 1], [], []>} : vector<3x32xf32>, vector<32x12xf32>, vector<3x12xf32> -> vector<3x12xf32>
    %c656_325 = arith.constant 656 : index
    %c0_326 = arith.constant 0 : index
    %1362 = vector.load %arg1[%c656_325, %c0_326] : memref<856x128xf32, #tpu.memory_space<vmem>>, vector<1x12xf32>
    %1363 = vector.broadcast %1362 : vector<1x12xf32> to vector<3x12xf32>
    %1364 = arith.addf %1361, %1363 : vector<3x12xf32>
    %1365 = vector.extract_strided_slice %1 {offsets = [0, 4], sizes = [3, 1], strides = [1, 1]} : vector<3x7xi32> to vector<3x1xi32>
    %c0_i32_327 = arith.constant 0 : i32
    %1366 = vector.broadcast %c0_i32_327 : i32 to vector<3x1xi32>
    %1367 = arith.cmpi ne, %1365, %1366 : vector<3x1xi32>
    %1368 = arith.extui %1367 : vector<3x1xi1> to vector<3x1xi32>
    %1369 = arith.sitofp %1368 : vector<3x1xi32> to vector<3x1xf32>
    %c1_i32_328 = arith.constant 1 : i32
    %1370 = vector.broadcast %c1_i32_328 : i32 to vector<3x1xi32>
    %1371 = arith.subi %1365, %1370 : vector<3x1xi32>
    %c0_i32_329 = arith.constant 0 : i32
    %1372 = vector.broadcast %c0_i32_329 : i32 to vector<3x1xi32>
    %1373 = arith.maxsi %1371, %1372 : vector<3x1xi32>
    %1374 = vector.broadcast %1373 : vector<3x1xi32> to vector<3x12xi32>
    %1375 = arith.cmpi eq, %1374, %728 : vector<3x12xi32>
    %1376 = arith.extui %1375 : vector<3x12xi1> to vector<3x12xi32>
    %1377 = arith.sitofp %1376 : vector<3x12xi32> to vector<3x12xf32>
    %cst_330 = arith.constant dense<0xFF800000> : vector<3xf32>
    %1378 = vector.multi_reduction <maximumf>, %1364, %cst_330 [1] : vector<3x12xf32> to vector<3xf32>
    %1379 = vector.shape_cast %1378 : vector<3xf32> to vector<3x1xf32>
    %1380 = vector.broadcast %1379 : vector<3x1xf32> to vector<3x12xf32>
    %1381 = arith.subf %1364, %1380 : vector<3x12xf32>
    %1382 = math.exp %1381 : vector<3x12xf32>
    %cst_331 = arith.constant dense<0.000000e+00> : vector<3xf32>
    %1383 = vector.multi_reduction <add>, %1382, %cst_331 [1] : vector<3x12xf32> to vector<3xf32>
    %1384 = vector.shape_cast %1383 : vector<3xf32> to vector<3x1xf32>
    %1385 = math.log %1384 : vector<3x1xf32>
    %1386 = arith.addf %1385, %1379 : vector<3x1xf32>
    %1387 = arith.mulf %1377, %1364 : vector<3x12xf32>
    %cst_332 = arith.constant dense<0.000000e+00> : vector<3xf32>
    %1388 = vector.multi_reduction <add>, %1387, %cst_332 [1] : vector<3x12xf32> to vector<3xf32>
    %1389 = vector.shape_cast %1388 : vector<3xf32> to vector<3x1xf32>
    %1390 = arith.subf %1386, %1389 : vector<3x1xf32>
    %1391 = vector.shape_cast %1369 : vector<3x1xf32> to vector<1x3x1xf32>
    %cst_333 = arith.constant dense<0.000000e+00> : vector<1xf32>
    %1392 = vector.multi_reduction <add>, %1391, %cst_333 [1, 2] : vector<1x3x1xf32> to vector<1xf32>
    %1393 = vector.shape_cast %1392 : vector<1xf32> to vector<1x1x1xf32>
    %1394 = vector.extract %1393[0, 0, 0] : f32 from vector<1x1x1xf32>
    %1395 = vector.broadcast %1394 : f32 to vector<1x1xf32>
    %cst_334 = arith.constant 0.000000e+00 : f32
    %1396 = vector.broadcast %cst_334 : f32 to vector<1x1xf32>
    %1397 = arith.cmpf ogt, %1395, %1396 : vector<1x1xf32>
    %1398 = arith.mulf %1390, %1369 : vector<3x1xf32>
    %1399 = vector.shape_cast %1398 : vector<3x1xf32> to vector<1x3x1xf32>
    %cst_335 = arith.constant dense<0.000000e+00> : vector<1xf32>
    %1400 = vector.multi_reduction <add>, %1399, %cst_335 [1, 2] : vector<1x3x1xf32> to vector<1xf32>
    %1401 = vector.shape_cast %1400 : vector<1xf32> to vector<1x1x1xf32>
    %1402 = vector.extract %1401[0, 0, 0] : f32 from vector<1x1x1xf32>
    %1403 = vector.broadcast %1402 : f32 to vector<1x1xf32>
    %cst_336 = arith.constant 1.000000e+00 : f32
    %1404 = vector.broadcast %cst_336 : f32 to vector<1x1xf32>
    %1405 = arith.maximumf %1395, %1404 : vector<1x1xf32>
    %1406 = tpu.reciprocal %1405 {approx = true} : vector<1x1xf32> -> vector<1x1xf32>
    %1407 = arith.mulf %1403, %1406 : vector<1x1xf32>
    %cst_337 = arith.constant 0.000000e+00 : f32
    %1408 = vector.broadcast %cst_337 : f32 to vector<1x1xf32>
    %1409 = arith.select %1397, %1407, %1408 : vector<1x1xi1>, vector<1x1xf32>
    %1410 = arith.addf %1240, %1409 : vector<1x1xf32>
    %1411 = tpu.concatenate %1359, %1359, %1359, %1359, %1359, %1359 in 1 : vector<3x32xf32>, vector<3x32xf32>, vector<3x32xf32>, vector<3x32xf32>, vector<3x32xf32>, vector<3x32xf32> -> vector<3x192xf32>
    %1412 = arith.mulf %725, %1411 : vector<3x192xf32>
    %c664_338 = arith.constant 664 : index
    %c0_339 = arith.constant 0 : index
    %1413 = vector.load %arg1[%c664_338, %c0_339] : memref<856x128xf32, #tpu.memory_space<vmem>>, vector<192x6xf32>
    %cst_340 = arith.constant dense<0.000000e+00> : vector<3x6xf32>
    %1414 = tpu.matmul %1412, %1413, %cst_340 {dimension_numbers = #tpu.dot_dimension_numbers<[1], [0], [0], [1], [0, 0, 1, 1], [], []>} : vector<3x192xf32>, vector<192x6xf32>, vector<3x6xf32> -> vector<3x6xf32>
    %c560_341 = arith.constant 560 : index
    %c0_342 = arith.constant 0 : index
    %1415 = vector.load %arg1[%c560_341, %c0_342] : memref<856x128xf32, #tpu.memory_space<vmem>>, vector<6x6xf32>
    %cst_343 = arith.constant dense<0.000000e+00> : vector<3x6xf32>
    %1416 = tpu.matmul %1414, %1415, %cst_343 {dimension_numbers = #tpu.dot_dimension_numbers<[1], [0], [0], [1], [0, 0, 1, 1], [], []>} : vector<3x6xf32>, vector<6x6xf32>, vector<3x6xf32> -> vector<3x6xf32>
    %c568_344 = arith.constant 568 : index
    %c0_345 = arith.constant 0 : index
    %1417 = vector.load %arg1[%c568_344, %c0_345] : memref<856x128xf32, #tpu.memory_space<vmem>>, vector<1x6xf32>
    %1418 = vector.broadcast %1417 : vector<1x6xf32> to vector<3x6xf32>
    %1419 = arith.addf %1416, %1418 : vector<3x6xf32>
    %cst_346 = arith.constant dense<0xFF800000> : vector<3xf32>
    %1420 = vector.multi_reduction <maximumf>, %1419, %cst_346 [1] : vector<3x6xf32> to vector<3xf32>
    %1421 = vector.shape_cast %1420 : vector<3xf32> to vector<3x1xf32>
    %1422 = vector.broadcast %1421 : vector<3x1xf32> to vector<3x6xf32>
    %1423 = arith.subf %1419, %1422 : vector<3x6xf32>
    %1424 = math.exp %1423 : vector<3x6xf32>
    %cst_347 = arith.constant dense<0.000000e+00> : vector<3xf32>
    %1425 = vector.multi_reduction <add>, %1424, %cst_347 [1] : vector<3x6xf32> to vector<3xf32>
    %1426 = vector.shape_cast %1425 : vector<3xf32> to vector<3x1xf32>
    %1427 = tpu.reciprocal %1426 {approx = true} : vector<3x1xf32> -> vector<3x1xf32>
    %1428 = vector.broadcast %1427 : vector<3x1xf32> to vector<3x6xf32>
    %1429 = arith.mulf %1424, %1428 : vector<3x6xf32>
    %1430 = arith.mulf %1429, %727 : vector<3x6xf32>
    %1431 = vector.extract_strided_slice %29 {offsets = [32, 0], sizes = [3, 32], strides = [1, 1]} : vector<48x32xf32> to vector<3x32xf32>
    %1432 = tpu.concatenate %1430, %1431 in 1 : vector<3x6xf32>, vector<3x32xf32> -> vector<3x38xf32>
    %c576_348 = arith.constant 576 : index
    %c0_349 = arith.constant 0 : index
    %1433 = vector.load %arg1[%c576_348, %c0_349] : memref<856x128xf32, #tpu.memory_space<vmem>>, vector<38x32xf32>
    %cst_350 = arith.constant dense<0.000000e+00> : vector<3x32xf32>
    %1434 = tpu.matmul %1432, %1433, %cst_350 {dimension_numbers = #tpu.dot_dimension_numbers<[1], [0], [0], [1], [0, 0, 1, 1], [], []>} : vector<3x38xf32>, vector<38x32xf32>, vector<3x32xf32> -> vector<3x32xf32>
    %c616_351 = arith.constant 616 : index
    %c0_352 = arith.constant 0 : index
    %1435 = vector.load %arg1[%c616_351, %c0_352] : memref<856x128xf32, #tpu.memory_space<vmem>>, vector<1x32xf32>
    %1436 = vector.broadcast %1435 : vector<1x32xf32> to vector<3x32xf32>
    %1437 = arith.addf %1434, %1436 : vector<3x32xf32>
    %c256_353 = arith.constant 256 : index
    %c0_354 = arith.constant 0 : index
    %1438 = vector.load %arg1[%c256_353, %c0_354] : memref<856x128xf32, #tpu.memory_space<vmem>>, vector<64x128xf32>
    %1439 = vector.extract_strided_slice %729 {offsets = [0, 0], sizes = [1, 128], strides = [1, 1]} : vector<4x128xf32> to vector<1x128xf32>
    %1440 = tpu.concatenate %1437, %1290 in 1 : vector<3x32xf32>, vector<3x32xf32> -> vector<3x64xf32>
    %cst_355 = arith.constant dense<0.000000e+00> : vector<3x128xf32>
    %1441 = tpu.matmul %1440, %1438, %cst_355 {dimension_numbers = #tpu.dot_dimension_numbers<[1], [0], [0], [1], [0, 0, 1, 1], [], []>} : vector<3x64xf32>, vector<64x128xf32>, vector<3x128xf32> -> vector<3x128xf32>
    %1442 = vector.broadcast %1439 : vector<1x128xf32> to vector<3x128xf32>
    %1443 = arith.addf %1441, %1442 : vector<3x128xf32>
    %cst_356 = arith.constant 5.000000e-01 : f32
    %1444 = vector.broadcast %cst_356 : f32 to vector<3x128xf32>
    %1445 = arith.mulf %1444, %1443 : vector<3x128xf32>
    %1446 = math.tanh %1445 : vector<3x128xf32>
    %cst_357 = arith.constant 1.000000e+00 : f32
    %1447 = vector.broadcast %cst_357 : f32 to vector<3x128xf32>
    %1448 = arith.addf %1446, %1447 : vector<3x128xf32>
    %cst_358 = arith.constant 5.000000e-01 : f32
    %1449 = vector.broadcast %cst_358 : f32 to vector<3x128xf32>
    %1450 = arith.mulf %1449, %1448 : vector<3x128xf32>
    %1451 = math.tanh %1443 : vector<3x128xf32>
    %1452 = vector.extract_strided_slice %1450 {offsets = [0, 0], sizes = [3, 32], strides = [1, 1]} : vector<3x128xf32> to vector<3x32xf32>
    %1453 = vector.extract_strided_slice %1450 {offsets = [0, 32], sizes = [3, 32], strides = [1, 1]} : vector<3x128xf32> to vector<3x32xf32>
    %1454 = vector.extract_strided_slice %1451 {offsets = [0, 64], sizes = [3, 32], strides = [1, 1]} : vector<3x128xf32> to vector<3x32xf32>
    %1455 = vector.extract_strided_slice %1450 {offsets = [0, 96], sizes = [3, 32], strides = [1, 1]} : vector<3x128xf32> to vector<3x32xf32>
    %1456 = arith.mulf %1453, %1288 : vector<3x32xf32>
    %1457 = arith.mulf %1452, %1454 : vector<3x32xf32>
    %1458 = arith.addf %1456, %1457 : vector<3x32xf32>
    %1459 = math.tanh %1458 : vector<3x32xf32>
    %1460 = arith.mulf %1455, %1459 : vector<3x32xf32>
    %c320_359 = arith.constant 320 : index
    %c0_360 = arith.constant 0 : index
    %1461 = vector.load %arg1[%c320_359, %c0_360] : memref<856x128xf32, #tpu.memory_space<vmem>>, vector<64x128xf32>
    %1462 = vector.extract_strided_slice %729 {offsets = [1, 0], sizes = [1, 128], strides = [1, 1]} : vector<4x128xf32> to vector<1x128xf32>
    %1463 = tpu.concatenate %1460, %1313 in 1 : vector<3x32xf32>, vector<3x32xf32> -> vector<3x64xf32>
    %cst_361 = arith.constant dense<0.000000e+00> : vector<3x128xf32>
    %1464 = tpu.matmul %1463, %1461, %cst_361 {dimension_numbers = #tpu.dot_dimension_numbers<[1], [0], [0], [1], [0, 0, 1, 1], [], []>} : vector<3x64xf32>, vector<64x128xf32>, vector<3x128xf32> -> vector<3x128xf32>
    %1465 = vector.broadcast %1462 : vector<1x128xf32> to vector<3x128xf32>
    %1466 = arith.addf %1464, %1465 : vector<3x128xf32>
    %cst_362 = arith.constant 5.000000e-01 : f32
    %1467 = vector.broadcast %cst_362 : f32 to vector<3x128xf32>
    %1468 = arith.mulf %1467, %1466 : vector<3x128xf32>
    %1469 = math.tanh %1468 : vector<3x128xf32>
    %cst_363 = arith.constant 1.000000e+00 : f32
    %1470 = vector.broadcast %cst_363 : f32 to vector<3x128xf32>
    %1471 = arith.addf %1469, %1470 : vector<3x128xf32>
    %cst_364 = arith.constant 5.000000e-01 : f32
    %1472 = vector.broadcast %cst_364 : f32 to vector<3x128xf32>
    %1473 = arith.mulf %1472, %1471 : vector<3x128xf32>
    %1474 = math.tanh %1466 : vector<3x128xf32>
    %1475 = vector.extract_strided_slice %1473 {offsets = [0, 0], sizes = [3, 32], strides = [1, 1]} : vector<3x128xf32> to vector<3x32xf32>
    %1476 = vector.extract_strided_slice %1473 {offsets = [0, 32], sizes = [3, 32], strides = [1, 1]} : vector<3x128xf32> to vector<3x32xf32>
    %1477 = vector.extract_strided_slice %1474 {offsets = [0, 64], sizes = [3, 32], strides = [1, 1]} : vector<3x128xf32> to vector<3x32xf32>
    %1478 = vector.extract_strided_slice %1473 {offsets = [0, 96], sizes = [3, 32], strides = [1, 1]} : vector<3x128xf32> to vector<3x32xf32>
    %1479 = arith.mulf %1476, %1311 : vector<3x32xf32>
    %1480 = arith.mulf %1475, %1477 : vector<3x32xf32>
    %1481 = arith.addf %1479, %1480 : vector<3x32xf32>
    %1482 = math.tanh %1481 : vector<3x32xf32>
    %1483 = arith.mulf %1478, %1482 : vector<3x32xf32>
    %c384_365 = arith.constant 384 : index
    %c0_366 = arith.constant 0 : index
    %1484 = vector.load %arg1[%c384_365, %c0_366] : memref<856x128xf32, #tpu.memory_space<vmem>>, vector<64x128xf32>
    %1485 = vector.extract_strided_slice %729 {offsets = [2, 0], sizes = [1, 128], strides = [1, 1]} : vector<4x128xf32> to vector<1x128xf32>
    %1486 = tpu.concatenate %1483, %1336 in 1 : vector<3x32xf32>, vector<3x32xf32> -> vector<3x64xf32>
    %cst_367 = arith.constant dense<0.000000e+00> : vector<3x128xf32>
    %1487 = tpu.matmul %1486, %1484, %cst_367 {dimension_numbers = #tpu.dot_dimension_numbers<[1], [0], [0], [1], [0, 0, 1, 1], [], []>} : vector<3x64xf32>, vector<64x128xf32>, vector<3x128xf32> -> vector<3x128xf32>
    %1488 = vector.broadcast %1485 : vector<1x128xf32> to vector<3x128xf32>
    %1489 = arith.addf %1487, %1488 : vector<3x128xf32>
    %cst_368 = arith.constant 5.000000e-01 : f32
    %1490 = vector.broadcast %cst_368 : f32 to vector<3x128xf32>
    %1491 = arith.mulf %1490, %1489 : vector<3x128xf32>
    %1492 = math.tanh %1491 : vector<3x128xf32>
    %cst_369 = arith.constant 1.000000e+00 : f32
    %1493 = vector.broadcast %cst_369 : f32 to vector<3x128xf32>
    %1494 = arith.addf %1492, %1493 : vector<3x128xf32>
    %cst_370 = arith.constant 5.000000e-01 : f32
    %1495 = vector.broadcast %cst_370 : f32 to vector<3x128xf32>
    %1496 = arith.mulf %1495, %1494 : vector<3x128xf32>
    %1497 = math.tanh %1489 : vector<3x128xf32>
    %1498 = vector.extract_strided_slice %1496 {offsets = [0, 0], sizes = [3, 32], strides = [1, 1]} : vector<3x128xf32> to vector<3x32xf32>
    %1499 = vector.extract_strided_slice %1496 {offsets = [0, 32], sizes = [3, 32], strides = [1, 1]} : vector<3x128xf32> to vector<3x32xf32>
    %1500 = vector.extract_strided_slice %1497 {offsets = [0, 64], sizes = [3, 32], strides = [1, 1]} : vector<3x128xf32> to vector<3x32xf32>
    %1501 = vector.extract_strided_slice %1496 {offsets = [0, 96], sizes = [3, 32], strides = [1, 1]} : vector<3x128xf32> to vector<3x32xf32>
    %1502 = arith.mulf %1499, %1334 : vector<3x32xf32>
    %1503 = arith.mulf %1498, %1500 : vector<3x32xf32>
    %1504 = arith.addf %1502, %1503 : vector<3x32xf32>
    %1505 = math.tanh %1504 : vector<3x32xf32>
    %1506 = arith.mulf %1501, %1505 : vector<3x32xf32>
    %c448_371 = arith.constant 448 : index
    %c0_372 = arith.constant 0 : index
    %1507 = vector.load %arg1[%c448_371, %c0_372] : memref<856x128xf32, #tpu.memory_space<vmem>>, vector<64x128xf32>
    %1508 = vector.extract_strided_slice %729 {offsets = [3, 0], sizes = [1, 128], strides = [1, 1]} : vector<4x128xf32> to vector<1x128xf32>
    %1509 = tpu.concatenate %1506, %1359 in 1 : vector<3x32xf32>, vector<3x32xf32> -> vector<3x64xf32>
    %cst_373 = arith.constant dense<0.000000e+00> : vector<3x128xf32>
    %1510 = tpu.matmul %1509, %1507, %cst_373 {dimension_numbers = #tpu.dot_dimension_numbers<[1], [0], [0], [1], [0, 0, 1, 1], [], []>} : vector<3x64xf32>, vector<64x128xf32>, vector<3x128xf32> -> vector<3x128xf32>
    %1511 = vector.broadcast %1508 : vector<1x128xf32> to vector<3x128xf32>
    %1512 = arith.addf %1510, %1511 : vector<3x128xf32>
    %cst_374 = arith.constant 5.000000e-01 : f32
    %1513 = vector.broadcast %cst_374 : f32 to vector<3x128xf32>
    %1514 = arith.mulf %1513, %1512 : vector<3x128xf32>
    %1515 = math.tanh %1514 : vector<3x128xf32>
    %cst_375 = arith.constant 1.000000e+00 : f32
    %1516 = vector.broadcast %cst_375 : f32 to vector<3x128xf32>
    %1517 = arith.addf %1515, %1516 : vector<3x128xf32>
    %cst_376 = arith.constant 5.000000e-01 : f32
    %1518 = vector.broadcast %cst_376 : f32 to vector<3x128xf32>
    %1519 = arith.mulf %1518, %1517 : vector<3x128xf32>
    %1520 = math.tanh %1512 : vector<3x128xf32>
    %1521 = vector.extract_strided_slice %1519 {offsets = [0, 0], sizes = [3, 32], strides = [1, 1]} : vector<3x128xf32> to vector<3x32xf32>
    %1522 = vector.extract_strided_slice %1519 {offsets = [0, 32], sizes = [3, 32], strides = [1, 1]} : vector<3x128xf32> to vector<3x32xf32>
    %1523 = vector.extract_strided_slice %1520 {offsets = [0, 64], sizes = [3, 32], strides = [1, 1]} : vector<3x128xf32> to vector<3x32xf32>
    %1524 = vector.extract_strided_slice %1519 {offsets = [0, 96], sizes = [3, 32], strides = [1, 1]} : vector<3x128xf32> to vector<3x32xf32>
    %1525 = arith.mulf %1522, %1357 : vector<3x32xf32>
    %1526 = arith.mulf %1521, %1523 : vector<3x32xf32>
    %1527 = arith.addf %1525, %1526 : vector<3x32xf32>
    %1528 = math.tanh %1527 : vector<3x32xf32>
    %1529 = arith.mulf %1524, %1528 : vector<3x32xf32>
    %c624_377 = arith.constant 624 : index
    %c0_378 = arith.constant 0 : index
    %1530 = vector.load %arg1[%c624_377, %c0_378] : memref<856x128xf32, #tpu.memory_space<vmem>>, vector<32x12xf32>
    %cst_379 = arith.constant dense<0.000000e+00> : vector<3x12xf32>
    %1531 = tpu.matmul %1529, %1530, %cst_379 {dimension_numbers = #tpu.dot_dimension_numbers<[1], [0], [0], [1], [0, 0, 1, 1], [], []>} : vector<3x32xf32>, vector<32x12xf32>, vector<3x12xf32> -> vector<3x12xf32>
    %c656_380 = arith.constant 656 : index
    %c0_381 = arith.constant 0 : index
    %1532 = vector.load %arg1[%c656_380, %c0_381] : memref<856x128xf32, #tpu.memory_space<vmem>>, vector<1x12xf32>
    %1533 = vector.broadcast %1532 : vector<1x12xf32> to vector<3x12xf32>
    %1534 = arith.addf %1531, %1533 : vector<3x12xf32>
    %1535 = vector.extract_strided_slice %1 {offsets = [0, 5], sizes = [3, 1], strides = [1, 1]} : vector<3x7xi32> to vector<3x1xi32>
    %c0_i32_382 = arith.constant 0 : i32
    %1536 = vector.broadcast %c0_i32_382 : i32 to vector<3x1xi32>
    %1537 = arith.cmpi ne, %1535, %1536 : vector<3x1xi32>
    %1538 = arith.extui %1537 : vector<3x1xi1> to vector<3x1xi32>
    %1539 = arith.sitofp %1538 : vector<3x1xi32> to vector<3x1xf32>
    %c1_i32_383 = arith.constant 1 : i32
    %1540 = vector.broadcast %c1_i32_383 : i32 to vector<3x1xi32>
    %1541 = arith.subi %1535, %1540 : vector<3x1xi32>
    %c0_i32_384 = arith.constant 0 : i32
    %1542 = vector.broadcast %c0_i32_384 : i32 to vector<3x1xi32>
    %1543 = arith.maxsi %1541, %1542 : vector<3x1xi32>
    %1544 = vector.broadcast %1543 : vector<3x1xi32> to vector<3x12xi32>
    %1545 = arith.cmpi eq, %1544, %728 : vector<3x12xi32>
    %1546 = arith.extui %1545 : vector<3x12xi1> to vector<3x12xi32>
    %1547 = arith.sitofp %1546 : vector<3x12xi32> to vector<3x12xf32>
    %cst_385 = arith.constant dense<0xFF800000> : vector<3xf32>
    %1548 = vector.multi_reduction <maximumf>, %1534, %cst_385 [1] : vector<3x12xf32> to vector<3xf32>
    %1549 = vector.shape_cast %1548 : vector<3xf32> to vector<3x1xf32>
    %1550 = vector.broadcast %1549 : vector<3x1xf32> to vector<3x12xf32>
    %1551 = arith.subf %1534, %1550 : vector<3x12xf32>
    %1552 = math.exp %1551 : vector<3x12xf32>
    %cst_386 = arith.constant dense<0.000000e+00> : vector<3xf32>
    %1553 = vector.multi_reduction <add>, %1552, %cst_386 [1] : vector<3x12xf32> to vector<3xf32>
    %1554 = vector.shape_cast %1553 : vector<3xf32> to vector<3x1xf32>
    %1555 = math.log %1554 : vector<3x1xf32>
    %1556 = arith.addf %1555, %1549 : vector<3x1xf32>
    %1557 = arith.mulf %1547, %1534 : vector<3x12xf32>
    %cst_387 = arith.constant dense<0.000000e+00> : vector<3xf32>
    %1558 = vector.multi_reduction <add>, %1557, %cst_387 [1] : vector<3x12xf32> to vector<3xf32>
    %1559 = vector.shape_cast %1558 : vector<3xf32> to vector<3x1xf32>
    %1560 = arith.subf %1556, %1559 : vector<3x1xf32>
    %1561 = vector.shape_cast %1539 : vector<3x1xf32> to vector<1x3x1xf32>
    %cst_388 = arith.constant dense<0.000000e+00> : vector<1xf32>
    %1562 = vector.multi_reduction <add>, %1561, %cst_388 [1, 2] : vector<1x3x1xf32> to vector<1xf32>
    %1563 = vector.shape_cast %1562 : vector<1xf32> to vector<1x1x1xf32>
    %1564 = vector.extract %1563[0, 0, 0] : f32 from vector<1x1x1xf32>
    %1565 = vector.broadcast %1564 : f32 to vector<1x1xf32>
    %cst_389 = arith.constant 0.000000e+00 : f32
    %1566 = vector.broadcast %cst_389 : f32 to vector<1x1xf32>
    %1567 = arith.cmpf ogt, %1565, %1566 : vector<1x1xf32>
    %1568 = arith.mulf %1560, %1539 : vector<3x1xf32>
    %1569 = vector.shape_cast %1568 : vector<3x1xf32> to vector<1x3x1xf32>
    %cst_390 = arith.constant dense<0.000000e+00> : vector<1xf32>
    %1570 = vector.multi_reduction <add>, %1569, %cst_390 [1, 2] : vector<1x3x1xf32> to vector<1xf32>
    %1571 = vector.shape_cast %1570 : vector<1xf32> to vector<1x1x1xf32>
    %1572 = vector.extract %1571[0, 0, 0] : f32 from vector<1x1x1xf32>
    %1573 = vector.broadcast %1572 : f32 to vector<1x1xf32>
    %cst_391 = arith.constant 1.000000e+00 : f32
    %1574 = vector.broadcast %cst_391 : f32 to vector<1x1xf32>
    %1575 = arith.maximumf %1565, %1574 : vector<1x1xf32>
    %1576 = tpu.reciprocal %1575 {approx = true} : vector<1x1xf32> -> vector<1x1xf32>
    %1577 = arith.mulf %1573, %1576 : vector<1x1xf32>
    %cst_392 = arith.constant 0.000000e+00 : f32
    %1578 = vector.broadcast %cst_392 : f32 to vector<1x1xf32>
    %1579 = arith.select %1567, %1577, %1578 : vector<1x1xi1>, vector<1x1xf32>
    %1580 = arith.addf %1410, %1579 : vector<1x1xf32>
    %1581 = tpu.concatenate %1529, %1529, %1529, %1529, %1529, %1529 in 1 : vector<3x32xf32>, vector<3x32xf32>, vector<3x32xf32>, vector<3x32xf32>, vector<3x32xf32>, vector<3x32xf32> -> vector<3x192xf32>
    %1582 = arith.mulf %725, %1581 : vector<3x192xf32>
    %c664_393 = arith.constant 664 : index
    %c0_394 = arith.constant 0 : index
    %1583 = vector.load %arg1[%c664_393, %c0_394] : memref<856x128xf32, #tpu.memory_space<vmem>>, vector<192x6xf32>
    %cst_395 = arith.constant dense<0.000000e+00> : vector<3x6xf32>
    %1584 = tpu.matmul %1582, %1583, %cst_395 {dimension_numbers = #tpu.dot_dimension_numbers<[1], [0], [0], [1], [0, 0, 1, 1], [], []>} : vector<3x192xf32>, vector<192x6xf32>, vector<3x6xf32> -> vector<3x6xf32>
    %c560_396 = arith.constant 560 : index
    %c0_397 = arith.constant 0 : index
    %1585 = vector.load %arg1[%c560_396, %c0_397] : memref<856x128xf32, #tpu.memory_space<vmem>>, vector<6x6xf32>
    %cst_398 = arith.constant dense<0.000000e+00> : vector<3x6xf32>
    %1586 = tpu.matmul %1584, %1585, %cst_398 {dimension_numbers = #tpu.dot_dimension_numbers<[1], [0], [0], [1], [0, 0, 1, 1], [], []>} : vector<3x6xf32>, vector<6x6xf32>, vector<3x6xf32> -> vector<3x6xf32>
    %c568_399 = arith.constant 568 : index
    %c0_400 = arith.constant 0 : index
    %1587 = vector.load %arg1[%c568_399, %c0_400] : memref<856x128xf32, #tpu.memory_space<vmem>>, vector<1x6xf32>
    %1588 = vector.broadcast %1587 : vector<1x6xf32> to vector<3x6xf32>
    %1589 = arith.addf %1586, %1588 : vector<3x6xf32>
    %cst_401 = arith.constant dense<0xFF800000> : vector<3xf32>
    %1590 = vector.multi_reduction <maximumf>, %1589, %cst_401 [1] : vector<3x6xf32> to vector<3xf32>
    %1591 = vector.shape_cast %1590 : vector<3xf32> to vector<3x1xf32>
    %1592 = vector.broadcast %1591 : vector<3x1xf32> to vector<3x6xf32>
    %1593 = arith.subf %1589, %1592 : vector<3x6xf32>
    %1594 = math.exp %1593 : vector<3x6xf32>
    %cst_402 = arith.constant dense<0.000000e+00> : vector<3xf32>
    %1595 = vector.multi_reduction <add>, %1594, %cst_402 [1] : vector<3x6xf32> to vector<3xf32>
    %1596 = vector.shape_cast %1595 : vector<3xf32> to vector<3x1xf32>
    %1597 = tpu.reciprocal %1596 {approx = true} : vector<3x1xf32> -> vector<3x1xf32>
    %1598 = vector.broadcast %1597 : vector<3x1xf32> to vector<3x6xf32>
    %1599 = arith.mulf %1594, %1598 : vector<3x6xf32>
    %1600 = arith.mulf %1599, %727 : vector<3x6xf32>
    %1601 = vector.extract_strided_slice %29 {offsets = [40, 0], sizes = [3, 32], strides = [1, 1]} : vector<48x32xf32> to vector<3x32xf32>
    %1602 = tpu.concatenate %1600, %1601 in 1 : vector<3x6xf32>, vector<3x32xf32> -> vector<3x38xf32>
    %c576_403 = arith.constant 576 : index
    %c0_404 = arith.constant 0 : index
    %1603 = vector.load %arg1[%c576_403, %c0_404] : memref<856x128xf32, #tpu.memory_space<vmem>>, vector<38x32xf32>
    %cst_405 = arith.constant dense<0.000000e+00> : vector<3x32xf32>
    %1604 = tpu.matmul %1602, %1603, %cst_405 {dimension_numbers = #tpu.dot_dimension_numbers<[1], [0], [0], [1], [0, 0, 1, 1], [], []>} : vector<3x38xf32>, vector<38x32xf32>, vector<3x32xf32> -> vector<3x32xf32>
    %c616_406 = arith.constant 616 : index
    %c0_407 = arith.constant 0 : index
    %1605 = vector.load %arg1[%c616_406, %c0_407] : memref<856x128xf32, #tpu.memory_space<vmem>>, vector<1x32xf32>
    %1606 = vector.broadcast %1605 : vector<1x32xf32> to vector<3x32xf32>
    %1607 = arith.addf %1604, %1606 : vector<3x32xf32>
    %c256_408 = arith.constant 256 : index
    %c0_409 = arith.constant 0 : index
    %1608 = vector.load %arg1[%c256_408, %c0_409] : memref<856x128xf32, #tpu.memory_space<vmem>>, vector<64x128xf32>
    %1609 = vector.extract_strided_slice %729 {offsets = [0, 0], sizes = [1, 128], strides = [1, 1]} : vector<4x128xf32> to vector<1x128xf32>
    %1610 = tpu.concatenate %1607, %1460 in 1 : vector<3x32xf32>, vector<3x32xf32> -> vector<3x64xf32>
    %cst_410 = arith.constant dense<0.000000e+00> : vector<3x128xf32>
    %1611 = tpu.matmul %1610, %1608, %cst_410 {dimension_numbers = #tpu.dot_dimension_numbers<[1], [0], [0], [1], [0, 0, 1, 1], [], []>} : vector<3x64xf32>, vector<64x128xf32>, vector<3x128xf32> -> vector<3x128xf32>
    %1612 = vector.broadcast %1609 : vector<1x128xf32> to vector<3x128xf32>
    %1613 = arith.addf %1611, %1612 : vector<3x128xf32>
    %cst_411 = arith.constant 5.000000e-01 : f32
    %1614 = vector.broadcast %cst_411 : f32 to vector<3x128xf32>
    %1615 = arith.mulf %1614, %1613 : vector<3x128xf32>
    %1616 = math.tanh %1615 : vector<3x128xf32>
    %cst_412 = arith.constant 1.000000e+00 : f32
    %1617 = vector.broadcast %cst_412 : f32 to vector<3x128xf32>
    %1618 = arith.addf %1616, %1617 : vector<3x128xf32>
    %cst_413 = arith.constant 5.000000e-01 : f32
    %1619 = vector.broadcast %cst_413 : f32 to vector<3x128xf32>
    %1620 = arith.mulf %1619, %1618 : vector<3x128xf32>
    %1621 = math.tanh %1613 : vector<3x128xf32>
    %1622 = vector.extract_strided_slice %1620 {offsets = [0, 0], sizes = [3, 32], strides = [1, 1]} : vector<3x128xf32> to vector<3x32xf32>
    %1623 = vector.extract_strided_slice %1620 {offsets = [0, 32], sizes = [3, 32], strides = [1, 1]} : vector<3x128xf32> to vector<3x32xf32>
    %1624 = vector.extract_strided_slice %1621 {offsets = [0, 64], sizes = [3, 32], strides = [1, 1]} : vector<3x128xf32> to vector<3x32xf32>
    %1625 = vector.extract_strided_slice %1620 {offsets = [0, 96], sizes = [3, 32], strides = [1, 1]} : vector<3x128xf32> to vector<3x32xf32>
    %1626 = arith.mulf %1623, %1458 : vector<3x32xf32>
    %1627 = arith.mulf %1622, %1624 : vector<3x32xf32>
    %1628 = arith.addf %1626, %1627 : vector<3x32xf32>
    %1629 = math.tanh %1628 : vector<3x32xf32>
    %1630 = arith.mulf %1625, %1629 : vector<3x32xf32>
    %c320_414 = arith.constant 320 : index
    %c0_415 = arith.constant 0 : index
    %1631 = vector.load %arg1[%c320_414, %c0_415] : memref<856x128xf32, #tpu.memory_space<vmem>>, vector<64x128xf32>
    %1632 = vector.extract_strided_slice %729 {offsets = [1, 0], sizes = [1, 128], strides = [1, 1]} : vector<4x128xf32> to vector<1x128xf32>
    %1633 = tpu.concatenate %1630, %1483 in 1 : vector<3x32xf32>, vector<3x32xf32> -> vector<3x64xf32>
    %cst_416 = arith.constant dense<0.000000e+00> : vector<3x128xf32>
    %1634 = tpu.matmul %1633, %1631, %cst_416 {dimension_numbers = #tpu.dot_dimension_numbers<[1], [0], [0], [1], [0, 0, 1, 1], [], []>} : vector<3x64xf32>, vector<64x128xf32>, vector<3x128xf32> -> vector<3x128xf32>
    %1635 = vector.broadcast %1632 : vector<1x128xf32> to vector<3x128xf32>
    %1636 = arith.addf %1634, %1635 : vector<3x128xf32>
    %cst_417 = arith.constant 5.000000e-01 : f32
    %1637 = vector.broadcast %cst_417 : f32 to vector<3x128xf32>
    %1638 = arith.mulf %1637, %1636 : vector<3x128xf32>
    %1639 = math.tanh %1638 : vector<3x128xf32>
    %cst_418 = arith.constant 1.000000e+00 : f32
    %1640 = vector.broadcast %cst_418 : f32 to vector<3x128xf32>
    %1641 = arith.addf %1639, %1640 : vector<3x128xf32>
    %cst_419 = arith.constant 5.000000e-01 : f32
    %1642 = vector.broadcast %cst_419 : f32 to vector<3x128xf32>
    %1643 = arith.mulf %1642, %1641 : vector<3x128xf32>
    %1644 = math.tanh %1636 : vector<3x128xf32>
    %1645 = vector.extract_strided_slice %1643 {offsets = [0, 0], sizes = [3, 32], strides = [1, 1]} : vector<3x128xf32> to vector<3x32xf32>
    %1646 = vector.extract_strided_slice %1643 {offsets = [0, 32], sizes = [3, 32], strides = [1, 1]} : vector<3x128xf32> to vector<3x32xf32>
    %1647 = vector.extract_strided_slice %1644 {offsets = [0, 64], sizes = [3, 32], strides = [1, 1]} : vector<3x128xf32> to vector<3x32xf32>
    %1648 = vector.extract_strided_slice %1643 {offsets = [0, 96], sizes = [3, 32], strides = [1, 1]} : vector<3x128xf32> to vector<3x32xf32>
    %1649 = arith.mulf %1646, %1481 : vector<3x32xf32>
    %1650 = arith.mulf %1645, %1647 : vector<3x32xf32>
    %1651 = arith.addf %1649, %1650 : vector<3x32xf32>
    %1652 = math.tanh %1651 : vector<3x32xf32>
    %1653 = arith.mulf %1648, %1652 : vector<3x32xf32>
    %c384_420 = arith.constant 384 : index
    %c0_421 = arith.constant 0 : index
    %1654 = vector.load %arg1[%c384_420, %c0_421] : memref<856x128xf32, #tpu.memory_space<vmem>>, vector<64x128xf32>
    %1655 = vector.extract_strided_slice %729 {offsets = [2, 0], sizes = [1, 128], strides = [1, 1]} : vector<4x128xf32> to vector<1x128xf32>
    %1656 = tpu.concatenate %1653, %1506 in 1 : vector<3x32xf32>, vector<3x32xf32> -> vector<3x64xf32>
    %cst_422 = arith.constant dense<0.000000e+00> : vector<3x128xf32>
    %1657 = tpu.matmul %1656, %1654, %cst_422 {dimension_numbers = #tpu.dot_dimension_numbers<[1], [0], [0], [1], [0, 0, 1, 1], [], []>} : vector<3x64xf32>, vector<64x128xf32>, vector<3x128xf32> -> vector<3x128xf32>
    %1658 = vector.broadcast %1655 : vector<1x128xf32> to vector<3x128xf32>
    %1659 = arith.addf %1657, %1658 : vector<3x128xf32>
    %cst_423 = arith.constant 5.000000e-01 : f32
    %1660 = vector.broadcast %cst_423 : f32 to vector<3x128xf32>
    %1661 = arith.mulf %1660, %1659 : vector<3x128xf32>
    %1662 = math.tanh %1661 : vector<3x128xf32>
    %cst_424 = arith.constant 1.000000e+00 : f32
    %1663 = vector.broadcast %cst_424 : f32 to vector<3x128xf32>
    %1664 = arith.addf %1662, %1663 : vector<3x128xf32>
    %cst_425 = arith.constant 5.000000e-01 : f32
    %1665 = vector.broadcast %cst_425 : f32 to vector<3x128xf32>
    %1666 = arith.mulf %1665, %1664 : vector<3x128xf32>
    %1667 = math.tanh %1659 : vector<3x128xf32>
    %1668 = vector.extract_strided_slice %1666 {offsets = [0, 0], sizes = [3, 32], strides = [1, 1]} : vector<3x128xf32> to vector<3x32xf32>
    %1669 = vector.extract_strided_slice %1666 {offsets = [0, 32], sizes = [3, 32], strides = [1, 1]} : vector<3x128xf32> to vector<3x32xf32>
    %1670 = vector.extract_strided_slice %1667 {offsets = [0, 64], sizes = [3, 32], strides = [1, 1]} : vector<3x128xf32> to vector<3x32xf32>
    %1671 = vector.extract_strided_slice %1666 {offsets = [0, 96], sizes = [3, 32], strides = [1, 1]} : vector<3x128xf32> to vector<3x32xf32>
    %1672 = arith.mulf %1669, %1504 : vector<3x32xf32>
    %1673 = arith.mulf %1668, %1670 : vector<3x32xf32>
    %1674 = arith.addf %1672, %1673 : vector<3x32xf32>
    %1675 = math.tanh %1674 : vector<3x32xf32>
    %1676 = arith.mulf %1671, %1675 : vector<3x32xf32>
    %c448_426 = arith.constant 448 : index
    %c0_427 = arith.constant 0 : index
    %1677 = vector.load %arg1[%c448_426, %c0_427] : memref<856x128xf32, #tpu.memory_space<vmem>>, vector<64x128xf32>
    %1678 = vector.extract_strided_slice %729 {offsets = [3, 0], sizes = [1, 128], strides = [1, 1]} : vector<4x128xf32> to vector<1x128xf32>
    %1679 = tpu.concatenate %1676, %1529 in 1 : vector<3x32xf32>, vector<3x32xf32> -> vector<3x64xf32>
    %cst_428 = arith.constant dense<0.000000e+00> : vector<3x128xf32>
    %1680 = tpu.matmul %1679, %1677, %cst_428 {dimension_numbers = #tpu.dot_dimension_numbers<[1], [0], [0], [1], [0, 0, 1, 1], [], []>} : vector<3x64xf32>, vector<64x128xf32>, vector<3x128xf32> -> vector<3x128xf32>
    %1681 = vector.broadcast %1678 : vector<1x128xf32> to vector<3x128xf32>
    %1682 = arith.addf %1680, %1681 : vector<3x128xf32>
    %cst_429 = arith.constant 5.000000e-01 : f32
    %1683 = vector.broadcast %cst_429 : f32 to vector<3x128xf32>
    %1684 = arith.mulf %1683, %1682 : vector<3x128xf32>
    %1685 = math.tanh %1684 : vector<3x128xf32>
    %cst_430 = arith.constant 1.000000e+00 : f32
    %1686 = vector.broadcast %cst_430 : f32 to vector<3x128xf32>
    %1687 = arith.addf %1685, %1686 : vector<3x128xf32>
    %cst_431 = arith.constant 5.000000e-01 : f32
    %1688 = vector.broadcast %cst_431 : f32 to vector<3x128xf32>
    %1689 = arith.mulf %1688, %1687 : vector<3x128xf32>
    %1690 = math.tanh %1682 : vector<3x128xf32>
    %1691 = vector.extract_strided_slice %1689 {offsets = [0, 0], sizes = [3, 32], strides = [1, 1]} : vector<3x128xf32> to vector<3x32xf32>
    %1692 = vector.extract_strided_slice %1689 {offsets = [0, 32], sizes = [3, 32], strides = [1, 1]} : vector<3x128xf32> to vector<3x32xf32>
    %1693 = vector.extract_strided_slice %1690 {offsets = [0, 64], sizes = [3, 32], strides = [1, 1]} : vector<3x128xf32> to vector<3x32xf32>
    %1694 = vector.extract_strided_slice %1689 {offsets = [0, 96], sizes = [3, 32], strides = [1, 1]} : vector<3x128xf32> to vector<3x32xf32>
    %1695 = arith.mulf %1692, %1527 : vector<3x32xf32>
    %1696 = arith.mulf %1691, %1693 : vector<3x32xf32>
    %1697 = arith.addf %1695, %1696 : vector<3x32xf32>
    %1698 = math.tanh %1697 : vector<3x32xf32>
    %1699 = arith.mulf %1694, %1698 : vector<3x32xf32>
    %c624_432 = arith.constant 624 : index
    %c0_433 = arith.constant 0 : index
    %1700 = vector.load %arg1[%c624_432, %c0_433] : memref<856x128xf32, #tpu.memory_space<vmem>>, vector<32x12xf32>
    %cst_434 = arith.constant dense<0.000000e+00> : vector<3x12xf32>
    %1701 = tpu.matmul %1699, %1700, %cst_434 {dimension_numbers = #tpu.dot_dimension_numbers<[1], [0], [0], [1], [0, 0, 1, 1], [], []>} : vector<3x32xf32>, vector<32x12xf32>, vector<3x12xf32> -> vector<3x12xf32>
    %c656_435 = arith.constant 656 : index
    %c0_436 = arith.constant 0 : index
    %1702 = vector.load %arg1[%c656_435, %c0_436] : memref<856x128xf32, #tpu.memory_space<vmem>>, vector<1x12xf32>
    %1703 = vector.broadcast %1702 : vector<1x12xf32> to vector<3x12xf32>
    %1704 = arith.addf %1701, %1703 : vector<3x12xf32>
    %1705 = vector.extract_strided_slice %1 {offsets = [0, 6], sizes = [3, 1], strides = [1, 1]} : vector<3x7xi32> to vector<3x1xi32>
    %c0_i32_437 = arith.constant 0 : i32
    %1706 = vector.broadcast %c0_i32_437 : i32 to vector<3x1xi32>
    %1707 = arith.cmpi ne, %1705, %1706 : vector<3x1xi32>
    %1708 = arith.extui %1707 : vector<3x1xi1> to vector<3x1xi32>
    %1709 = arith.sitofp %1708 : vector<3x1xi32> to vector<3x1xf32>
    %c1_i32_438 = arith.constant 1 : i32
    %1710 = vector.broadcast %c1_i32_438 : i32 to vector<3x1xi32>
    %1711 = arith.subi %1705, %1710 : vector<3x1xi32>
    %c0_i32_439 = arith.constant 0 : i32
    %1712 = vector.broadcast %c0_i32_439 : i32 to vector<3x1xi32>
    %1713 = arith.maxsi %1711, %1712 : vector<3x1xi32>
    %1714 = vector.broadcast %1713 : vector<3x1xi32> to vector<3x12xi32>
    %1715 = arith.cmpi eq, %1714, %728 : vector<3x12xi32>
    %1716 = arith.extui %1715 : vector<3x12xi1> to vector<3x12xi32>
    %1717 = arith.sitofp %1716 : vector<3x12xi32> to vector<3x12xf32>
    %cst_440 = arith.constant dense<0xFF800000> : vector<3xf32>
    %1718 = vector.multi_reduction <maximumf>, %1704, %cst_440 [1] : vector<3x12xf32> to vector<3xf32>
    %1719 = vector.shape_cast %1718 : vector<3xf32> to vector<3x1xf32>
    %1720 = vector.broadcast %1719 : vector<3x1xf32> to vector<3x12xf32>
    %1721 = arith.subf %1704, %1720 : vector<3x12xf32>
    %1722 = math.exp %1721 : vector<3x12xf32>
    %cst_441 = arith.constant dense<0.000000e+00> : vector<3xf32>
    %1723 = vector.multi_reduction <add>, %1722, %cst_441 [1] : vector<3x12xf32> to vector<3xf32>
    %1724 = vector.shape_cast %1723 : vector<3xf32> to vector<3x1xf32>
    %1725 = math.log %1724 : vector<3x1xf32>
    %1726 = arith.addf %1725, %1719 : vector<3x1xf32>
    %1727 = arith.mulf %1717, %1704 : vector<3x12xf32>
    %cst_442 = arith.constant dense<0.000000e+00> : vector<3xf32>
    %1728 = vector.multi_reduction <add>, %1727, %cst_442 [1] : vector<3x12xf32> to vector<3xf32>
    %1729 = vector.shape_cast %1728 : vector<3xf32> to vector<3x1xf32>
    %1730 = arith.subf %1726, %1729 : vector<3x1xf32>
    %1731 = vector.shape_cast %1709 : vector<3x1xf32> to vector<1x3x1xf32>
    %cst_443 = arith.constant dense<0.000000e+00> : vector<1xf32>
    %1732 = vector.multi_reduction <add>, %1731, %cst_443 [1, 2] : vector<1x3x1xf32> to vector<1xf32>
    %1733 = vector.shape_cast %1732 : vector<1xf32> to vector<1x1x1xf32>
    %1734 = vector.extract %1733[0, 0, 0] : f32 from vector<1x1x1xf32>
    %1735 = vector.broadcast %1734 : f32 to vector<1x1xf32>
    %cst_444 = arith.constant 0.000000e+00 : f32
    %1736 = vector.broadcast %cst_444 : f32 to vector<1x1xf32>
    %1737 = arith.cmpf ogt, %1735, %1736 : vector<1x1xf32>
    %1738 = arith.mulf %1730, %1709 : vector<3x1xf32>
    %1739 = vector.shape_cast %1738 : vector<3x1xf32> to vector<1x3x1xf32>
    %cst_445 = arith.constant dense<0.000000e+00> : vector<1xf32>
    %1740 = vector.multi_reduction <add>, %1739, %cst_445 [1, 2] : vector<1x3x1xf32> to vector<1xf32>
    %1741 = vector.shape_cast %1740 : vector<1xf32> to vector<1x1x1xf32>
    %1742 = vector.extract %1741[0, 0, 0] : f32 from vector<1x1x1xf32>
    %1743 = vector.broadcast %1742 : f32 to vector<1x1xf32>
    %cst_446 = arith.constant 1.000000e+00 : f32
    %1744 = vector.broadcast %cst_446 : f32 to vector<1x1xf32>
    %1745 = arith.maximumf %1735, %1744 : vector<1x1xf32>
    %1746 = tpu.reciprocal %1745 {approx = true} : vector<1x1xf32> -> vector<1x1xf32>
    %1747 = arith.mulf %1743, %1746 : vector<1x1xf32>
    %cst_447 = arith.constant 0.000000e+00 : f32
    %1748 = vector.broadcast %cst_447 : f32 to vector<1x1xf32>
    %1749 = arith.select %1737, %1747, %1748 : vector<1x1xi1>, vector<1x1xf32>
    %1750 = arith.addf %1580, %1749 : vector<1x1xf32>
    %c0_448 = arith.constant 0 : index
    %c0_449 = arith.constant 0 : index
    %1751 = vector.load %arg2[%c0_448, %c0_449] : memref<1x1xf32, #tpu.memory_space<vmem>>, vector<1x1xf32>
    tpu.vector_store %arg2[%c0_448, %c0_449], %1750 {strides = array<i32>} : memref<1x1xf32, #tpu.memory_space<vmem>>, vector<1x1xf32>,
    return
  }
}

</mosaic_0001>

<llo_original>
// kernel: attention_forward.1
$region0: #{attention_forward.1}
  #allocation0 [shape = 'u32[]', space=smem, size = 0x4, offset = 0x4, fixed_abs, tag = 'smem constant byte address 0x4 - core index']
  #allocation1 [shape = 'u32[144,128]{1,0:T(1,128)}', space=vmem, size = 0x12000, scoped, tag = 'internal scratch']
  %s0 = inlined_call_operand.vmem [shape: s32[112,8], index: 0, kind: input, shape index: {}]
  %s1 = inlined_call_operand.hbm [shape: f32[856,128], index: 1, kind: input, shape index: {}]
  %s2 = inlined_call_operand.hbm [shape: f32[1,1], index: 2, kind: output, shape index: {}]
  %s3 = sld [smem:[#allocation0]]
  $region22: #{attention_forward.1} parent=0
    _
  %s5 = ssub.s32 1, %s3
  %s6 = scalar_select 0, %s5, %s3
  $region1: #{attention_forward.1} parent=0
    #allocation2 [shape = 'u8[438272]{0}', space=vmem, size = 0x6b000, scoped, tag = 'input window, operand 1, single buffered']
    #allocation3 [shape = 's32[1]{0}', space=sflag, size = 0x4, scoped, tag = 'scoped memory for attention_forward.1']
    #allocation4 [shape = 's32[1]{0}', space=sflag, size = 0x4, scoped, tag = 'scoped memory for attention_forward.1']
    #allocation5 [shape = 'u8[512]{0}', space=vmem, size = 0x400, scoped, tag = 'output window, operand 0, single buffered']
    %7 = vsyncpa [#allocation3], 0
    %8 = vsyncpa [#allocation4], 0
    // Predicated region
    $region2: #{attention_forward.1} parent=1 // pred_check
      _
    $region3: #{attention_forward.1} parent=1 // pred_check_branch
      %10 = sbr.rel (0) target = $region5
    $region4: #{attention_forward.1} parent=1 // pred_region
      _
    $region5: #{attention_forward.1} parent=1 // pred_fallthru
      _
    // Predicated region
    $region6: #{attention_forward.1} parent=1 // pred_check
      _
    $region7: #{attention_forward.1} parent=1 // pred_check_branch
      %12 = sbr.rel (0) target = $region9
    $region8: #{attention_forward.1} parent=1 // pred_region
      %s14 = ssub.s32 13696, 13696
      %15 = vsyncadd [#allocation3], %s14
      %s16 = sshll.u32 [#allocation2], 4
      %s17 = int_to_ptr.vmem [resolvable:$true] %s16
      %22 = dma.hbm_to_vmem [thread:$0]  %s1, 13696, %s17, [#allocation3], 128, 128, 8
    $region9: #{attention_forward.1} parent=1 // pred_fallthru
      _
    // Predicated region
    $region10: #{attention_forward.1} parent=1 // pred_check
      _
    $region11: #{attention_forward.1} parent=1 // pred_check_branch
      %24 = sbr.rel (0) target = $region13
    $region12: #{attention_forward.1} parent=1 // pred_region
      %25 = dma.done [#allocation3], 13696
    $region13: #{attention_forward.1} parent=1 // pred_fallthru
      _
    %v26 = vld [vmem:[%s0 + $0x30] sm:$0x7]
    %v27 = vld [vmem:[%s0 + $0x38] sm:$0x7]
    %vm28 = vcmp.gt.s32.totalorder %v26, 0
    %vm29 = vcmp.gt.s32.totalorder %v26, 1
    %vm30 = vcmp.gt.s32.totalorder %v26, 2
    %vm31 = vcmp.gt.s32.totalorder %v26, 3
    %vm32 = vcmp.gt.s32.totalorder %v26, 4
    %vm33 = vcmp.gt.s32.totalorder %v26, 5
    %v34 = vlaneseq
    %v35 = vand.u32 %v34, 127
    %v36 = vld [vmem:[%s0] sm:$0xff]
    %v37 = vld [vmem:[%s0 + $0x8] sm:$0xff]
    %v38 = vld [vmem:[%s0 + $0x10] sm:$0xff]
    %v39 = vld [vmem:[%s0 + $0x18] sm:$0xff]
    %v40 = vld [vmem:[%s0 + $0x20] sm:$0xff]
    %v41 = vld [vmem:[%s0 + $0x28] sm:$0xff]
    %42 = vset.pattern.permute.xlu0 0
    %43 = vperm.xlu0 %42, %v36
    %v44 = vpop.permute.xlu0 %43
    %45 = vset.pattern.permute.xlu0 0
    %46 = vperm.xlu0 %45, %v37
    %v47 = vpop.permute.xlu0 %46
    %48 = vset.pattern.permute.xlu0 0
    %49 = vperm.xlu0 %48, %v38
    %v50 = vpop.permute.xlu0 %49
    %51 = vset.pattern.permute.xlu0 0
    %52 = vperm.xlu0 %51, %v39
    %v53 = vpop.permute.xlu0 %52
    %54 = vset.pattern.permute.xlu0 0
    %55 = vperm.xlu0 %54, %v40
    %v56 = vpop.permute.xlu0 %55
    %57 = vset.pattern.permute.xlu0 0
    %58 = vperm.xlu0 %57, %v41
    %v59 = vpop.permute.xlu0 %58
    %vm60 = vcmp.eq.s32.totalorder %v44, %v35
    %vm61 = vcmp.eq.s32.totalorder %v47, %v35
    %vm62 = vcmp.eq.s32.totalorder %v50, %v35
    %vm63 = vcmp.eq.s32.totalorder %v53, %v35
    %vm64 = vcmp.eq.s32.totalorder %v56, %v35
    %vm65 = vcmp.eq.s32.totalorder %v59, %v35
    %v66 = vsel %vm60, 1, 0
    %v67 = vsel %vm61, 1, 0
    %v68 = vsel %vm62, 1, 0
    %v69 = vsel %vm63, 1, 0
    %v70 = vsel %vm64, 1, 0
    %v71 = vsel %vm65, 1, 0
    %v72 = vcvt.s32.f32 %v66
    %v73 = vcvt.s32.f32 %v67
    %v74 = vcvt.s32.f32 %v68
    %v75 = vcvt.s32.f32 %v69
    %v76 = vcvt.s32.f32 %v70
    %v77 = vcvt.s32.f32 %v71
    %v78 = vld [vmem:[#allocation2 + $0x210] sm:$0xff]
    %v79 = vld [vmem:[#allocation2 + $0x218] sm:$0x7]
    %vm80 = vcmask 89088
    %v82 = vsel %vm80, %v72, 0
    %v85 = vsel %vm80, %v73, 0
    %v88 = vsel %vm80, %v74, 0
    %v91 = vsel %vm80, %v75, 0
    %v94 = vsel %vm80, %v76, 0
    %v97 = vsel %vm80, %v77, 0
    %vm99 = vcmask 1042432
    %v101 = vsel %vm99, %v79, 0
    %103 = vmatprep.subr.mxu0 0.0
    %104 = vmatpush1.msra.mxu0 %v78
    %105 = vmatprep.subr.mxu0 0.0
    %106 = vmatpush1.msra.mxu0 %v101
    %107 = vmatprep.subr.mxu0 0.0
    %108 = vmatpush1.msra.mxu0 0.0
    %109 = vmatprep.subr.mxu0 0.0
    %110 = vmatpush1.msra.mxu0 0.0
    %111 = vmatprep.subr.mxu0 0.0
    %112 = vmatpush1.msra.mxu0 0.0
    %113 = vmatprep.subr.mxu0 0.0
    %114 = vmatpush1.msra.mxu0 0.0
    %115 = vmatprep.subr.mxu0 0.0
    %116 = vmatpush1.msra.mxu0 0.0
    %117 = vmatprep.subr.mxu0 0.0
    %118 = vmatpush1.msra.mxu0 0.0
    %119 = vmatprep.subr.mxu0 0.0
    %120 = vmatpush1.msra.mxu0 0.0
    %121 = vmatprep.subr.mxu0 0.0
    %122 = vmatpush1.msra.mxu0 0.0
    %123 = vmatprep.subr.mxu0 0.0
    %124 = vmatpush1.msra.mxu0 0.0
    %125 = vmatprep.subr.mxu0 0.0
    %126 = vmatpush1.msra.mxu0 0.0
    %127 = vmatprep.subr.mxu0 0.0
    %128 = vmatpush1.msra.mxu0 0.0
    %129 = vmatprep.subr.mxu0 0.0
    %130 = vmatpush1.msra.mxu0 0.0
    %131 = vmatprep.subr.mxu0 0.0
    %132 = vmatpush1.msra.mxu0 0.0
    %133 = vmatprep.subr.mxu0 0.0
    %134 = vmatpush1.msra.mxu0 0.0
    %135 = vmatprep.subr.mxu0 0.0
    %136 = vmatpush1.msra.mxu0 0.0
    %137 = vmatprep.subr.mxu0 0.0
    %138 = vmatpush1.msra.mxu0 0.0
    %139 = vmatprep.subr.mxu0 0.0
    %140 = vmatpush1.msra.mxu0 0.0
    %141 = vmatprep.subr.mxu0 0.0
    %142 = vmatpush1.msra.mxu0 0.0
    %143 = vmatprep.subr.mxu0 0.0
    %144 = vmatpush1.msra.mxu0 0.0
    %145 = vmatprep.subr.mxu0 0.0
    %146 = vmatpush1.msra.mxu0 0.0
    %147 = vmatprep.subr.mxu0 0.0
    %148 = vmatpush1.msra.mxu0 0.0
    %149 = vmatprep.subr.mxu0 0.0
    %150 = vmatpush1.msra.mxu0 0.0
    %151 = vmatprep.subr.mxu0 0.0
    %152 = vmatpush1.msra.mxu0 0.0
    %153 = vmatprep.subr.mxu0 0.0
    %154 = vmatpush1.msra.mxu0 0.0
    %155 = vmatprep.subr.mxu0 0.0
    %156 = vmatpush1.msra.mxu0 0.0
    %157 = vmatprep.subr.mxu0 0.0
    %158 = vmatpush1.msra.mxu0 0.0
    %159 = vmatprep.subr.mxu0 0.0
    %160 = vmatpush1.msra.mxu0 0.0
    %161 = vmatprep.subr.mxu0 0.0
    %162 = vmatpush1.msra.mxu0 0.0
    %163 = vmatprep.subr.mxu0 0.0
    %164 = vmatpush1.msra.mxu0 0.0
    %165 = vmatprep.subr.mxu0 0.0
    %166 = vmatpush1.msra.mxu0 0.0
    %167 = vmatprep.mubr.f32.mxu0 0.0
    %168 = vmatmul.mubr.f32.gmra.mrb[0].mxu0 %v82
    %v169 = vpop.f32.mrb[0].mxu0
    %v170 = vadd.f32 0.0, %v169
    %v171 = vpop.f32.mrb[0].mxu0
    %172 = vmatprep.mubr.f32.mxu0 0.0
    %173 = vmatmul.mubr.f32.gmra.mrb[0].mxu0 %v85
    %v174 = vpop.f32.mrb[0].mxu0
    %v175 = vadd.f32 0.0, %v174
    %v176 = vpop.f32.mrb[0].mxu0
    %177 = vmatprep.mubr.f32.mxu0 0.0
    %178 = vmatmul.mubr.f32.gmra.mrb[0].mxu0 %v88
    %v179 = vpop.f32.mrb[0].mxu0
    %v180 = vadd.f32 0.0, %v179
    %v181 = vpop.f32.mrb[0].mxu0
    %182 = vmatprep.mubr.f32.mxu0 0.0
    %183 = vmatmul.mubr.f32.gmra.mrb[0].mxu0 %v91
    %v184 = vpop.f32.mrb[0].mxu0
    %v185 = vadd.f32 0.0, %v184
    %v186 = vpop.f32.mrb[0].mxu0
    %187 = vmatprep.mubr.f32.mxu0 0.0
    %188 = vmatmul.mubr.f32.gmra.mrb[0].mxu0 %v94
    %v189 = vpop.f32.mrb[0].mxu0
    %v190 = vadd.f32 0.0, %v189
    %v191 = vpop.f32.mrb[0].mxu0
    %192 = vmatprep.mubr.f32.mxu0 0.0
    %193 = vmatmul.mubr.f32.gmra.mrb[0].mxu0 %v97
    %v194 = vpop.f32.mrb[0].mxu0
    %v195 = vadd.f32 0.0, %v194
    %v196 = vpop.f32.mrb[0].mxu0
    %197 = vdwg.mxu0
    %v198 = vld [vmem:[%s0 + $0x40] sm:$0xff]
    %v199 = vld [vmem:[%s0 + $0x48] sm:$0xff]
    %v200 = vld [vmem:[%s0 + $0x50] sm:$0xff]
    %v201 = vld [vmem:[%s0 + $0x58] sm:$0xff]
    %v202 = vld [vmem:[%s0 + $0x60] sm:$0xff]
    %v203 = vld [vmem:[%s0 + $0x68] sm:$0xff]
    %204 = vset.pattern.permute.xlu0 0
    %205 = vperm.xlu0 %204, %v198
    %v206 = vpop.permute.xlu0 %205
    %207 = vset.pattern.permute.xlu0 0
    %208 = vperm.xlu0 %207, %v199
    %v209 = vpop.permute.xlu0 %208
    %210 = vset.pattern.permute.xlu0 0
    %211 = vperm.xlu0 %210, %v200
    %v212 = vpop.permute.xlu0 %211
    %213 = vset.pattern.permute.xlu0 0
    %214 = vperm.xlu0 %213, %v201
    %v215 = vpop.permute.xlu0 %214
    %216 = vset.pattern.permute.xlu0 0
    %217 = vperm.xlu0 %216, %v202
    %v218 = vpop.permute.xlu0 %217
    %219 = vset.pattern.permute.xlu0 0
    %220 = vperm.xlu0 %219, %v203
    %v221 = vpop.permute.xlu0 %220
    %vm222 = vcmp.eq.s32.totalorder %v206, %v35
    %vm223 = vcmp.eq.s32.totalorder %v209, %v35
    %vm224 = vcmp.eq.s32.totalorder %v212, %v35
    %vm225 = vcmp.eq.s32.totalorder %v215, %v35
    %vm226 = vcmp.eq.s32.totalorder %v218, %v35
    %vm227 = vcmp.eq.s32.totalorder %v221, %v35
    %v228 = vsel %vm222, 1, 0
    %v229 = vsel %vm223, 1, 0
    %v230 = vsel %vm224, 1, 0
    %v231 = vsel %vm225, 1, 0
    %v232 = vsel %vm226, 1, 0
    %v233 = vsel %vm227, 1, 0
    %v234 = vcvt.s32.f32 %v228
    %v235 = vcvt.s32.f32 %v229
    %v236 = vcvt.s32.f32 %v230
    %v237 = vcvt.s32.f32 %v231
    %v238 = vcvt.s32.f32 %v232
    %v239 = vcvt.s32.f32 %v233
    %v240 = vld [vmem:[#allocation2 + $0x220] sm:$0xff]
    %v241 = vld [vmem:[#allocation2 + $0x228] sm:$0x1f]
    %vm242 = vcmask 105472
    %v244 = vsel %vm242, %v234, 0
    %v247 = vsel %vm242, %v235, 0
    %v250 = vsel %vm242, %v236, 0
    %v253 = vsel %vm242, %v237, 0
    %v256 = vsel %vm242, %v238, 0
    %v259 = vsel %vm242, %v239, 0
    %vm261 = vcmask 1044480
    %v263 = vsel %vm261, %v241, 0
    %265 = vmatprep.subr.mxu0 0.0
    %266 = vmatpush1.msra.mxu0 %v240
    %267 = vmatprep.subr.mxu0 0.0
    %268 = vmatpush1.msra.mxu0 %v263
    %269 = vmatprep.subr.mxu0 0.0
    %270 = vmatpush1.msra.mxu0 0.0
    %271 = vmatprep.subr.mxu0 0.0
    %272 = vmatpush1.msra.mxu0 0.0
    %273 = vmatprep.subr.mxu0 0.0
    %274 = vmatpush1.msra.mxu0 0.0
    %275 = vmatprep.subr.mxu0 0.0
    %276 = vmatpush1.msra.mxu0 0.0
    %277 = vmatprep.subr.mxu0 0.0
    %278 = vmatpush1.msra.mxu0 0.0
    %279 = vmatprep.subr.mxu0 0.0
    %280 = vmatpush1.msra.mxu0 0.0
    %281 = vmatprep.subr.mxu0 0.0
    %282 = vmatpush1.msra.mxu0 0.0
    %283 = vmatprep.subr.mxu0 0.0
    %284 = vmatpush1.msra.mxu0 0.0
    %285 = vmatprep.subr.mxu0 0.0
    %286 = vmatpush1.msra.mxu0 0.0
    %287 = vmatprep.subr.mxu0 0.0
    %288 = vmatpush1.msra.mxu0 0.0
    %289 = vmatprep.subr.mxu0 0.0
    %290 = vmatpush1.msra.mxu0 0.0
    %291 = vmatprep.subr.mxu0 0.0
    %292 = vmatpush1.msra.mxu0 0.0
    %293 = vmatprep.subr.mxu0 0.0
    %294 = vmatpush1.msra.mxu0 0.0
    %295 = vmatprep.subr.mxu0 0.0
    %296 = vmatpush1.msra.mxu0 0.0
    %297 = vmatprep.subr.mxu0 0.0
    %298 = vmatpush1.msra.mxu0 0.0
    %299 = vmatprep.subr.mxu0 0.0
    %300 = vmatpush1.msra.mxu0 0.0
    %301 = vmatprep.subr.mxu0 0.0
    %302 = vmatpush1.msra.mxu0 0.0
    %303 = vmatprep.subr.mxu0 0.0
    %304 = vmatpush1.msra.mxu0 0.0
    %305 = vmatprep.subr.mxu0 0.0
    %306 = vmatpush1.msra.mxu0 0.0
    %307 = vmatprep.subr.mxu0 0.0
    %308 = vmatpush1.msra.mxu0 0.0
    %309 = vmatprep.subr.mxu0 0.0
    %310 = vmatpush1.msra.mxu0 0.0
    %311 = vmatprep.subr.mxu0 0.0
    %312 = vmatpush1.msra.mxu0 0.0
    %313 = vmatprep.subr.mxu0 0.0
    %314 = vmatpush1.msra.mxu0 0.0
    %315 = vmatprep.subr.mxu0 0.0
    %316 = vmatpush1.msra.mxu0 0.0
    %317 = vmatprep.subr.mxu0 0.0
    %318 = vmatpush1.msra.mxu0 0.0
    %319 = vmatprep.subr.mxu0 0.0
    %320 = vmatpush1.msra.mxu0 0.0
    %321 = vmatprep.subr.mxu0 0.0
    %322 = vmatpush1.msra.mxu0 0.0
    %323 = vmatprep.subr.mxu0 0.0
    %324 = vmatpush1.msra.mxu0 0.0
    %325 = vmatprep.subr.mxu0 0.0
    %326 = vmatpush1.msra.mxu0 0.0
    %327 = vmatprep.subr.mxu0 0.0
    %328 = vmatpush1.msra.mxu0 0.0
    %329 = vmatprep.mubr.f32.mxu0 0.0
    %330 = vmatmul.mubr.f32.gmra.mrb[0].mxu0 %v244
    %v331 = vpop.f32.mrb[0].mxu0
    %v332 = vadd.f32 0.0, %v331
    %v333 = vpop.f32.mrb[0].mxu0
    %334 = vmatprep.mubr.f32.mxu0 0.0
    %335 = vmatmul.mubr.f32.gmra.mrb[0].mxu0 %v247
    %v336 = vpop.f32.mrb[0].mxu0
    %v337 = vadd.f32 0.0, %v336
    %v338 = vpop.f32.mrb[0].mxu0
    %339 = vmatprep.mubr.f32.mxu0 0.0
    %340 = vmatmul.mubr.f32.gmra.mrb[0].mxu0 %v250
    %v341 = vpop.f32.mrb[0].mxu0
    %v342 = vadd.f32 0.0, %v341
    %v343 = vpop.f32.mrb[0].mxu0
    %344 = vmatprep.mubr.f32.mxu0 0.0
    %345 = vmatmul.mubr.f32.gmra.mrb[0].mxu0 %v253
    %v346 = vpop.f32.mrb[0].mxu0
    %v347 = vadd.f32 0.0, %v346
    %v348 = vpop.f32.mrb[0].mxu0
    %349 = vmatprep.mubr.f32.mxu0 0.0
    %350 = vmatmul.mubr.f32.gmra.mrb[0].mxu0 %v256
    %v351 = vpop.f32.mrb[0].mxu0
    %v352 = vadd.f32 0.0, %v351
    %v353 = vpop.f32.mrb[0].mxu0
    %354 = vmatprep.mubr.f32.mxu0 0.0
    %355 = vmatmul.mubr.f32.gmra.mrb[0].mxu0 %v259
    %v356 = vpop.f32.mrb[0].mxu0
    %v357 = vadd.f32 0.0, %v356
    %v358 = vpop.f32.mrb[0].mxu0
    %359 = vdwg.mxu0
    %v360 = vld [vmem:[#allocation2 + $0x200] sm:$0xf]
    %v361 = vld [vmem:[#allocation2] sm:$0xff]
    %v362 = vld [vmem:[#allocation2 + $0x8] sm:$0xff]
    %v363 = vld [vmem:[#allocation2 + $0x10] sm:$0xff]
    %v364 = vld [vmem:[#allocation2 + $0x18] sm:$0xff]
    %v365 = vld [vmem:[#allocation2 + $0x20] sm:$0xff]
    %v366 = vld [vmem:[#allocation2 + $0x28] sm:$0xff]
    %v367 = vld [vmem:[#allocation2 + $0x30] sm:$0xff]
    %v368 = vld [vmem:[#allocation2 + $0x38] sm:$0xff]
    %vm369 = vcmask 261120
    %v370 = vsel %vm369, %v170, 0.0
    %v371 = vlaneseq
    %v372 = vshrl.u32 %v371, 7
    %v373 = vsub.s32 0, %v372
    %v374 = vrot.slane %v360, %v373
    %vm375 = vcmask 523264
    %v377 = vsel %vm375, %v370, 0
    %379 = vmatprep.subr.mxu0 0.0
    %380 = vmatpush1.msra.mxu0 %v361
    %381 = vmatprep.subr.mxu0 0.0
    %382 = vmatpush1.msra.mxu0 %v362
    %383 = vmatprep.subr.mxu0 0.0
    %384 = vmatpush1.msra.mxu0 %v363
    %385 = vmatprep.subr.mxu0 0.0
    %386 = vmatpush1.msra.mxu0 %v364
    %387 = vmatprep.subr.mxu0 0.0
    %388 = vmatpush1.msra.mxu0 %v365
    %389 = vmatprep.subr.mxu0 0.0
    %390 = vmatpush1.msra.mxu0 %v366
    %391 = vmatprep.subr.mxu0 0.0
    %392 = vmatpush1.msra.mxu0 %v367
    %393 = vmatprep.subr.mxu0 0.0
    %394 = vmatpush1.msra.mxu0 %v368
    %395 = vmatprep.subr.mxu0 0.0
    %396 = vmatpush1.msra.mxu0 0.0
    %397 = vmatprep.subr.mxu0 0.0
    %398 = vmatpush1.msra.mxu0 0.0
    %399 = vmatprep.subr.mxu0 0.0
    %400 = vmatpush1.msra.mxu0 0.0
    %401 = vmatprep.subr.mxu0 0.0
    %402 = vmatpush1.msra.mxu0 0.0
    %403 = vmatprep.subr.mxu0 0.0
    %404 = vmatpush1.msra.mxu0 0.0
    %405 = vmatprep.subr.mxu0 0.0
    %406 = vmatpush1.msra.mxu0 0.0
    %407 = vmatprep.subr.mxu0 0.0
    %408 = vmatpush1.msra.mxu0 0.0
    %409 = vmatprep.subr.mxu0 0.0
    %410 = vmatpush1.msra.mxu0 0.0
    %411 = vmatprep.subr.mxu0 0.0
    %412 = vmatpush1.msra.mxu0 0.0
    %413 = vmatprep.subr.mxu0 0.0
    %414 = vmatpush1.msra.mxu0 0.0
    %415 = vmatprep.subr.mxu0 0.0
    %416 = vmatpush1.msra.mxu0 0.0
    %417 = vmatprep.subr.mxu0 0.0
    %418 = vmatpush1.msra.mxu0 0.0
    %419 = vmatprep.subr.mxu0 0.0
    %420 = vmatpush1.msra.mxu0 0.0
    %421 = vmatprep.subr.mxu0 0.0
    %422 = vmatpush1.msra.mxu0 0.0
    %423 = vmatprep.subr.mxu0 0.0
    %424 = vmatpush1.msra.mxu0 0.0
    %425 = vmatprep.subr.mxu0 0.0
    %426 = vmatpush1.msra.mxu0 0.0
    %427 = vmatprep.subr.mxu0 0.0
    %428 = vmatpush1.msra.mxu0 0.0
    %429 = vmatprep.subr.mxu0 0.0
    %430 = vmatpush1.msra.mxu0 0.0
    %431 = vmatprep.subr.mxu0 0.0
    %432 = vmatpush1.msra.mxu0 0.0
    %433 = vmatprep.subr.mxu0 0.0
    %434 = vmatpush1.msra.mxu0 0.0
    %435 = vmatprep.subr.mxu0 0.0
    %436 = vmatpush1.msra.mxu0 0.0
    %437 = vmatprep.subr.mxu0 0.0
    %438 = vmatpush1.msra.mxu0 0.0
    %439 = vmatprep.subr.mxu0 0.0
    %440 = vmatpush1.msra.mxu0 0.0
    %441 = vmatprep.subr.mxu0 0.0
    %442 = vmatpush1.msra.mxu0 0.0
    %443 = vmatprep.mubr.f32.mxu0 0.0
    %444 = vmatmul.mubr.f32.gmra.mrb[0].mxu0 %v377
    %v445 = vpop.f32.mrb[0].mxu0
    %v446 = vadd.f32 %v374, %v445
    %v447 = vpop.f32.mrb[0].mxu0
    %448 = vdwg.mxu0
    %v449 = vmul.f32 %v446, 0.5
    %v450 = vtanh.pop %v449
    %v451 = vadd.f32 %v450, 1.0
    %v452 = vmul.f32 %v451, 0.5
    %v453 = vtanh.pop %v446
    %v454 = vmul.f32 %v452, 0.0
    %456 = vrot.lane.b32.xlu0 %v453, 64
    %v457 = vpop.permute.xlu0 %456
    %v459 = vmul.f32 %v452, %v457
    %461 = vrot.lane.b32.xlu0 %v459, 32
    %v462 = vpop.permute.xlu0 %461
    %v464 = vadd.f32 %v454, %v462
    %v465 = vtanh.pop %v464
    %467 = vrot.lane.b32.xlu0 %v465, 64
    %v468 = vpop.permute.xlu0 %467
    %v470 = vmul.f32 %v452, %v468
    %v471 = vsel %vm28, 1, 0
    %472 = vset.pattern.permute.xlu0 0
    %473 = vperm.xlu0 %472, %v471
    %v474 = vpop.permute.xlu0 %473
    %vm475 = vcmp.eq.s32.totalorder %v474, 1
    %v476 = vsel %vm475, %v470, 0.0
    %v477 = vsel %vm475, %v464, 0.0
    %479 = vrot.lane.b32.xlu0 %v476, 64
    %v480 = vpop.permute.xlu0 %479
    %v482 = vsel %vm369, %v175, %v480
    %v484 = vsel %vm375, %v482, 0
    %486 = vmatprep.subr.mxu0 0.0
    %487 = vmatpush1.msra.mxu0 %v361
    %488 = vmatprep.subr.mxu0 0.0
    %489 = vmatpush1.msra.mxu0 %v362
    %490 = vmatprep.subr.mxu0 0.0
    %491 = vmatpush1.msra.mxu0 %v363
    %492 = vmatprep.subr.mxu0 0.0
    %493 = vmatpush1.msra.mxu0 %v364
    %494 = vmatprep.subr.mxu0 0.0
    %495 = vmatpush1.msra.mxu0 %v365
    %496 = vmatprep.subr.mxu0 0.0
    %497 = vmatpush1.msra.mxu0 %v366
    %498 = vmatprep.subr.mxu0 0.0
    %499 = vmatpush1.msra.mxu0 %v367
    %500 = vmatprep.subr.mxu0 0.0
    %501 = vmatpush1.msra.mxu0 %v368
    %502 = vmatprep.subr.mxu0 0.0
    %503 = vmatpush1.msra.mxu0 0.0
    %504 = vmatprep.subr.mxu0 0.0
    %505 = vmatpush1.msra.mxu0 0.0
    %506 = vmatprep.subr.mxu0 0.0
    %507 = vmatpush1.msra.mxu0 0.0
    %508 = vmatprep.subr.mxu0 0.0
    %509 = vmatpush1.msra.mxu0 0.0
    %510 = vmatprep.subr.mxu0 0.0
    %511 = vmatpush1.msra.mxu0 0.0
    %512 = vmatprep.subr.mxu0 0.0
    %513 = vmatpush1.msra.mxu0 0.0
    %514 = vmatprep.subr.mxu0 0.0
    %515 = vmatpush1.msra.mxu0 0.0
    %516 = vmatprep.subr.mxu0 0.0
    %517 = vmatpush1.msra.mxu0 0.0
    %518 = vmatprep.subr.mxu0 0.0
    %519 = vmatpush1.msra.mxu0 0.0
    %520 = vmatprep.subr.mxu0 0.0
    %521 = vmatpush1.msra.mxu0 0.0
    %522 = vmatprep.subr.mxu0 0.0
    %523 = vmatpush1.msra.mxu0 0.0
    %524 = vmatprep.subr.mxu0 0.0
    %525 = vmatpush1.msra.mxu0 0.0
    %526 = vmatprep.subr.mxu0 0.0
    %527 = vmatpush1.msra.mxu0 0.0
    %528 = vmatprep.subr.mxu0 0.0
    %529 = vmatpush1.msra.mxu0 0.0
    %530 = vmatprep.subr.mxu0 0.0
    %531 = vmatpush1.msra.mxu0 0.0
    %532 = vmatprep.subr.mxu0 0.0
    %533 = vmatpush1.msra.mxu0 0.0
    %534 = vmatprep.subr.mxu0 0.0
    %535 = vmatpush1.msra.mxu0 0.0
    %536 = vmatprep.subr.mxu0 0.0
    %537 = vmatpush1.msra.mxu0 0.0
    %538 = vmatprep.subr.mxu0 0.0
    %539 = vmatpush1.msra.mxu0 0.0
    %540 = vmatprep.subr.mxu0 0.0
    %541 = vmatpush1.msra.mxu0 0.0
    %542 = vmatprep.subr.mxu0 0.0
    %543 = vmatpush1.msra.mxu0 0.0
    %544 = vmatprep.subr.mxu0 0.0
    %545 = vmatpush1.msra.mxu0 0.0
    %546 = vmatprep.subr.mxu0 0.0
    %547 = vmatpush1.msra.mxu0 0.0
    %548 = vmatprep.subr.mxu0 0.0
    %549 = vmatpush1.msra.mxu0 0.0
    %550 = vmatprep.mubr.f32.mxu0 0.0
    %551 = vmatmul.mubr.f32.gmra.mrb[0].mxu0 %v484
    %v552 = vpop.f32.mrb[0].mxu0
    %v553 = vadd.f32 %v374, %v552
    %v554 = vpop.f32.mrb[0].mxu0
    %555 = vdwg.mxu0
    %v556 = vmul.f32 %v553, 0.5
    %v557 = vtanh.pop %v556
    %v558 = vadd.f32 %v557, 1.0
    %v559 = vmul.f32 %v558, 0.5
    %v560 = vtanh.pop %v553
    %v561 = vmul.f32 %v559, %v477
    %563 = vrot.lane.b32.xlu0 %v560, 64
    %v564 = vpop.permute.xlu0 %563
    %v566 = vmul.f32 %v559, %v564
    %568 = vrot.lane.b32.xlu0 %v566, 32
    %v569 = vpop.permute.xlu0 %568
    %v571 = vadd.f32 %v561, %v569
    %v572 = vtanh.pop %v571
    %574 = vrot.lane.b32.xlu0 %v572, 64
    %v575 = vpop.permute.xlu0 %574
    %v577 = vmul.f32 %v559, %v575
    %v578 = vsel %vm29, 1, 0
    %579 = vset.pattern.permute.xlu0 0
    %580 = vperm.xlu0 %579, %v578
    %v581 = vpop.permute.xlu0 %580
    %vm582 = vcmp.eq.s32.totalorder %v581, 1
    %v583 = vsel %vm582, %v577, %v476
    %v584 = vsel %vm582, %v571, %v477
    %586 = vrot.lane.b32.xlu0 %v583, 64
    %v587 = vpop.permute.xlu0 %586
    %v589 = vsel %vm369, %v180, %v587
    %v591 = vsel %vm375, %v589, 0
    %593 = vmatprep.subr.mxu0 0.0
    %594 = vmatpush1.msra.mxu0 %v361
    %595 = vmatprep.subr.mxu0 0.0
    %596 = vmatpush1.msra.mxu0 %v362
    %597 = vmatprep.subr.mxu0 0.0
    %598 = vmatpush1.msra.mxu0 %v363
    %599 = vmatprep.subr.mxu0 0.0
    %600 = vmatpush1.msra.mxu0 %v364
    %601 = vmatprep.subr.mxu0 0.0
    %602 = vmatpush1.msra.mxu0 %v365
    %603 = vmatprep.subr.mxu0 0.0
    %604 = vmatpush1.msra.mxu0 %v366
    %605 = vmatprep.subr.mxu0 0.0
    %606 = vmatpush1.msra.mxu0 %v367
    %607 = vmatprep.subr.mxu0 0.0
    %608 = vmatpush1.msra.mxu0 %v368
    %609 = vmatprep.subr.mxu0 0.0
    %610 = vmatpush1.msra.mxu0 0.0
    %611 = vmatprep.subr.mxu0 0.0
    %612 = vmatpush1.msra.mxu0 0.0
    %613 = vmatprep.subr.mxu0 0.0
    %614 = vmatpush1.msra.mxu0 0.0
    %615 = vmatprep.subr.mxu0 0.0
    %616 = vmatpush1.msra.mxu0 0.0
    %617 = vmatprep.subr.mxu0 0.0
    %618 = vmatpush1.msra.mxu0 0.0
    %619 = vmatprep.subr.mxu0 0.0
    %620 = vmatpush1.msra.mxu0 0.0
    %621 = vmatprep.subr.mxu0 0.0
    %622 = vmatpush1.msra.mxu0 0.0
    %623 = vmatprep.subr.mxu0 0.0
    %624 = vmatpush1.msra.mxu0 0.0
    %625 = vmatprep.subr.mxu0 0.0
    %626 = vmatpush1.msra.mxu0 0.0
    %627 = vmatprep.subr.mxu0 0.0
    %628 = vmatpush1.msra.mxu0 0.0
    %629 = vmatprep.subr.mxu0 0.0
    %630 = vmatpush1.msra.mxu0 0.0
    %631 = vmatprep.subr.mxu0 0.0
    %632 = vmatpush1.msra.mxu0 0.0
    %633 = vmatprep.subr.mxu0 0.0
    %634 = vmatpush1.msra.mxu0 0.0
    %635 = vmatprep.subr.mxu0 0.0
    %636 = vmatpush1.msra.mxu0 0.0
    %637 = vmatprep.subr.mxu0 0.0
    %638 = vmatpush1.msra.mxu0 0.0
    %639 = vmatprep.subr.mxu0 0.0
    %640 = vmatpush1.msra.mxu0 0.0
    %641 = vmatprep.subr.mxu0 0.0
    %642 = vmatpush1.msra.mxu0 0.0
    %643 = vmatprep.subr.mxu0 0.0
    %644 = vmatpush1.msra.mxu0 0.0
    %645 = vmatprep.subr.mxu0 0.0
    %646 = vmatpush1.msra.mxu0 0.0
    %647 = vmatprep.subr.mxu0 0.0
    %648 = vmatpush1.msra.mxu0 0.0
    %649 = vmatprep.subr.mxu0 0.0
    %650 = vmatpush1.msra.mxu0 0.0
    %651 = vmatprep.subr.mxu0 0.0
    %652 = vmatpush1.msra.mxu0 0.0
    %653 = vmatprep.subr.mxu0 0.0
    %654 = vmatpush1.msra.mxu0 0.0
    %655 = vmatprep.subr.mxu0 0.0
    %656 = vmatpush1.msra.mxu0 0.0
    %657 = vmatprep.mubr.f32.mxu0 0.0
    %658 = vmatmul.mubr.f32.gmra.mrb[0].mxu0 %v591
    %v659 = vpop.f32.mrb[0].mxu0
    %v660 = vadd.f32 %v374, %v659
    %v661 = vpop.f32.mrb[0].mxu0
    %662 = vdwg.mxu0
    %v663 = vmul.f32 %v660, 0.5
    %v664 = vtanh.pop %v663
    %v665 = vadd.f32 %v664, 1.0
    %v666 = vmul.f32 %v665, 0.5
    %v667 = vtanh.pop %v660
    %v668 = vmul.f32 %v666, %v584
    %670 = vrot.lane.b32.xlu0 %v667, 64
    %v671 = vpop.permute.xlu0 %670
    %v673 = vmul.f32 %v666, %v671
    %675 = vrot.lane.b32.xlu0 %v673, 32
    %v676 = vpop.permute.xlu0 %675
    %v678 = vadd.f32 %v668, %v676
    %v679 = vtanh.pop %v678
    %681 = vrot.lane.b32.xlu0 %v679, 64
    %v682 = vpop.permute.xlu0 %681
    %v684 = vmul.f32 %v666, %v682
    %v685 = vsel %vm30, 1, 0
    %686 = vset.pattern.permute.xlu0 0
    %687 = vperm.xlu0 %686, %v685
    %v688 = vpop.permute.xlu0 %687
    %vm689 = vcmp.eq.s32.totalorder %v688, 1
    %v690 = vsel %vm689, %v684, %v583
    %v691 = vsel %vm689, %v678, %v584
    %693 = vrot.lane.b32.xlu0 %v690, 64
    %v694 = vpop.permute.xlu0 %693
    %v696 = vsel %vm369, %v185, %v694
    %v698 = vsel %vm375, %v696, 0
    %700 = vmatprep.subr.mxu0 0.0
    %701 = vmatpush1.msra.mxu0 %v361
    %702 = vmatprep.subr.mxu0 0.0
    %703 = vmatpush1.msra.mxu0 %v362
    %704 = vmatprep.subr.mxu0 0.0
    %705 = vmatpush1.msra.mxu0 %v363
    %706 = vmatprep.subr.mxu0 0.0
    %707 = vmatpush1.msra.mxu0 %v364
    %708 = vmatprep.subr.mxu0 0.0
    %709 = vmatpush1.msra.mxu0 %v365
    %710 = vmatprep.subr.mxu0 0.0
    %711 = vmatpush1.msra.mxu0 %v366
    %712 = vmatprep.subr.mxu0 0.0
    %713 = vmatpush1.msra.mxu0 %v367
    %714 = vmatprep.subr.mxu0 0.0
    %715 = vmatpush1.msra.mxu0 %v368
    %716 = vmatprep.subr.mxu0 0.0
    %717 = vmatpush1.msra.mxu0 0.0
    %718 = vmatprep.subr.mxu0 0.0
    %719 = vmatpush1.msra.mxu0 0.0
    %720 = vmatprep.subr.mxu0 0.0
    %721 = vmatpush1.msra.mxu0 0.0
    %722 = vmatprep.subr.mxu0 0.0
    %723 = vmatpush1.msra.mxu0 0.0
    %724 = vmatprep.subr.mxu0 0.0
    %725 = vmatpush1.msra.mxu0 0.0
    %726 = vmatprep.subr.mxu0 0.0
    %727 = vmatpush1.msra.mxu0 0.0
    %728 = vmatprep.subr.mxu0 0.0
    %729 = vmatpush1.msra.mxu0 0.0
    %730 = vmatprep.subr.mxu0 0.0
    %731 = vmatpush1.msra.mxu0 0.0
    %732 = vmatprep.subr.mxu0 0.0
    %733 = vmatpush1.msra.mxu0 0.0
    %734 = vmatprep.subr.mxu0 0.0
    %735 = vmatpush1.msra.mxu0 0.0
    %736 = vmatprep.subr.mxu0 0.0
    %737 = vmatpush1.msra.mxu0 0.0
    %738 = vmatprep.subr.mxu0 0.0
    %739 = vmatpush1.msra.mxu0 0.0
    %740 = vmatprep.subr.mxu0 0.0
    %741 = vmatpush1.msra.mxu0 0.0
    %742 = vmatprep.subr.mxu0 0.0
    %743 = vmatpush1.msra.mxu0 0.0
    %744 = vmatprep.subr.mxu0 0.0
    %745 = vmatpush1.msra.mxu0 0.0
    %746 = vmatprep.subr.mxu0 0.0
    %747 = vmatpush1.msra.mxu0 0.0
    %748 = vmatprep.subr.mxu0 0.0
    %749 = vmatpush1.msra.mxu0 0.0
    %750 = vmatprep.subr.mxu0 0.0
    %751 = vmatpush1.msra.mxu0 0.0
    %752 = vmatprep.subr.mxu0 0.0
    %753 = vmatpush1.msra.mxu0 0.0
    %754 = vmatprep.subr.mxu0 0.0
    %755 = vmatpush1.msra.mxu0 0.0
    %756 = vmatprep.subr.mxu0 0.0
    %757 = vmatpush1.msra.mxu0 0.0
    %758 = vmatprep.subr.mxu0 0.0
    %759 = vmatpush1.msra.mxu0 0.0
    %760 = vmatprep.subr.mxu0 0.0
    %761 = vmatpush1.msra.mxu0 0.0
    %762 = vmatprep.subr.mxu0 0.0
    %763 = vmatpush1.msra.mxu0 0.0
    %764 = vmatprep.mubr.f32.mxu0 0.0
    %765 = vmatmul.mubr.f32.gmra.mrb[0].mxu0 %v698
    %v766 = vpop.f32.mrb[0].mxu0
    %v767 = vadd.f32 %v374, %v766
    %v768 = vpop.f32.mrb[0].mxu0
    %769 = vdwg.mxu0
    %v770 = vmul.f32 %v767, 0.5
    %v771 = vtanh.pop %v770
    %v772 = vadd.f32 %v771, 1.0
    %v773 = vmul.f32 %v772, 0.5
    %v774 = vtanh.pop %v767
    %v775 = vmul.f32 %v773, %v691
    %777 = vrot.lane.b32.xlu0 %v774, 64
    %v778 = vpop.permute.xlu0 %777
    %v780 = vmul.f32 %v773, %v778
    %782 = vrot.lane.b32.xlu0 %v780, 32
    %v783 = vpop.permute.xlu0 %782
    %v785 = vadd.f32 %v775, %v783
    %v786 = vtanh.pop %v785
    %788 = vrot.lane.b32.xlu0 %v786, 64
    %v789 = vpop.permute.xlu0 %788
    %v791 = vmul.f32 %v773, %v789
    %v792 = vsel %vm31, 1, 0
    %793 = vset.pattern.permute.xlu0 0
    %794 = vperm.xlu0 %793, %v792
    %v795 = vpop.permute.xlu0 %794
    %vm796 = vcmp.eq.s32.totalorder %v795, 1
    %v797 = vsel %vm796, %v791, %v690
    %v798 = vsel %vm796, %v785, %v691
    %800 = vrot.lane.b32.xlu0 %v797, 64
    %v801 = vpop.permute.xlu0 %800
    %v803 = vsel %vm369, %v190, %v801
    %v805 = vsel %vm375, %v803, 0
    %807 = vmatprep.subr.mxu0 0.0
    %808 = vmatpush1.msra.mxu0 %v361
    %809 = vmatprep.subr.mxu0 0.0
    %810 = vmatpush1.msra.mxu0 %v362
    %811 = vmatprep.subr.mxu0 0.0
    %812 = vmatpush1.msra.mxu0 %v363
    %813 = vmatprep.subr.mxu0 0.0
    %814 = vmatpush1.msra.mxu0 %v364
    %815 = vmatprep.subr.mxu0 0.0
    %816 = vmatpush1.msra.mxu0 %v365
    %817 = vmatprep.subr.mxu0 0.0
    %818 = vmatpush1.msra.mxu0 %v366
    %819 = vmatprep.subr.mxu0 0.0
    %820 = vmatpush1.msra.mxu0 %v367
    %821 = vmatprep.subr.mxu0 0.0
    %822 = vmatpush1.msra.mxu0 %v368
    %823 = vmatprep.subr.mxu0 0.0
    %824 = vmatpush1.msra.mxu0 0.0
    %825 = vmatprep.subr.mxu0 0.0
    %826 = vmatpush1.msra.mxu0 0.0
    %827 = vmatprep.subr.mxu0 0.0
    %828 = vmatpush1.msra.mxu0 0.0
    %829 = vmatprep.subr.mxu0 0.0
    %830 = vmatpush1.msra.mxu0 0.0
    %831 = vmatprep.subr.mxu0 0.0
    %832 = vmatpush1.msra.mxu0 0.0
    %833 = vmatprep.subr.mxu0 0.0
    %834 = vmatpush1.msra.mxu0 0.0
    %835 = vmatprep.subr.mxu0 0.0
    %836 = vmatpush1.msra.mxu0 0.0
    %837 = vmatprep.subr.mxu0 0.0
    %838 = vmatpush1.msra.mxu0 0.0
    %839 = vmatprep.subr.mxu0 0.0
    %840 = vmatpush1.msra.mxu0 0.0
    %841 = vmatprep.subr.mxu0 0.0
    %842 = vmatpush1.msra.mxu0 0.0
    %843 = vmatprep.subr.mxu0 0.0
    %844 = vmatpush1.msra.mxu0 0.0
    %845 = vmatprep.subr.mxu0 0.0
    %846 = vmatpush1.msra.mxu0 0.0
    %847 = vmatprep.subr.mxu0 0.0
    %848 = vmatpush1.msra.mxu0 0.0
    %849 = vmatprep.subr.mxu0 0.0
    %850 = vmatpush1.msra.mxu0 0.0
    %851 = vmatprep.subr.mxu0 0.0
    %852 = vmatpush1.msra.mxu0 0.0
    %853 = vmatprep.subr.mxu0 0.0
    %854 = vmatpush1.msra.mxu0 0.0
    %855 = vmatprep.subr.mxu0 0.0
    %856 = vmatpush1.msra.mxu0 0.0
    %857 = vmatprep.subr.mxu0 0.0
    %858 = vmatpush1.msra.mxu0 0.0
    %859 = vmatprep.subr.mxu0 0.0
    %860 = vmatpush1.msra.mxu0 0.0
    %861 = vmatprep.subr.mxu0 0.0
    %862 = vmatpush1.msra.mxu0 0.0
    %863 = vmatprep.subr.mxu0 0.0
    %864 = vmatpush1.msra.mxu0 0.0
    %865 = vmatprep.subr.mxu0 0.0
    %866 = vmatpush1.msra.mxu0 0.0
    %867 = vmatprep.subr.mxu0 0.0
    %868 = vmatpush1.msra.mxu0 0.0
    %869 = vmatprep.subr.mxu0 0.0
    %870 = vmatpush1.msra.mxu0 0.0
    %871 = vmatprep.mubr.f32.mxu0 0.0
    %872 = vmatmul.mubr.f32.gmra.mrb[0].mxu0 %v805
    %v873 = vpop.f32.mrb[0].mxu0
    %v874 = vadd.f32 %v374, %v873
    %v875 = vpop.f32.mrb[0].mxu0
    %876 = vdwg.mxu0
    %v877 = vmul.f32 %v874, 0.5
    %v878 = vtanh.pop %v877
    %v879 = vadd.f32 %v878, 1.0
    %v880 = vmul.f32 %v879, 0.5
    %v881 = vtanh.pop %v874
    %v882 = vmul.f32 %v880, %v798
    %884 = vrot.lane.b32.xlu0 %v881, 64
    %v885 = vpop.permute.xlu0 %884
    %v887 = vmul.f32 %v880, %v885
    %889 = vrot.lane.b32.xlu0 %v887, 32
    %v890 = vpop.permute.xlu0 %889
    %v892 = vadd.f32 %v882, %v890
    %v893 = vtanh.pop %v892
    %895 = vrot.lane.b32.xlu0 %v893, 64
    %v896 = vpop.permute.xlu0 %895
    %v898 = vmul.f32 %v880, %v896
    %v899 = vsel %vm32, 1, 0
    %900 = vset.pattern.permute.xlu0 0
    %901 = vperm.xlu0 %900, %v899
    %v902 = vpop.permute.xlu0 %901
    %vm903 = vcmp.eq.s32.totalorder %v902, 1
    %v904 = vsel %vm903, %v898, %v797
    %v905 = vsel %vm903, %v892, %v798
    %907 = vrot.lane.b32.xlu0 %v904, 64
    %v908 = vpop.permute.xlu0 %907
    %v910 = vsel %vm369, %v195, %v908
    %v912 = vsel %vm375, %v910, 0
    %914 = vmatprep.subr.mxu0 0.0
    %915 = vmatpush1.msra.mxu0 %v361
    %916 = vmatprep.subr.mxu0 0.0
    %917 = vmatpush1.msra.mxu0 %v362
    %918 = vmatprep.subr.mxu0 0.0
    %919 = vmatpush1.msra.mxu0 %v363
    %920 = vmatprep.subr.mxu0 0.0
    %921 = vmatpush1.msra.mxu0 %v364
    %922 = vmatprep.subr.mxu0 0.0
    %923 = vmatpush1.msra.mxu0 %v365
    %924 = vmatprep.subr.mxu0 0.0
    %925 = vmatpush1.msra.mxu0 %v366
    %926 = vmatprep.subr.mxu0 0.0
    %927 = vmatpush1.msra.mxu0 %v367
    %928 = vmatprep.subr.mxu0 0.0
    %929 = vmatpush1.msra.mxu0 %v368
    %930 = vmatprep.subr.mxu0 0.0
    %931 = vmatpush1.msra.mxu0 0.0
    %932 = vmatprep.subr.mxu0 0.0
    %933 = vmatpush1.msra.mxu0 0.0
    %934 = vmatprep.subr.mxu0 0.0
    %935 = vmatpush1.msra.mxu0 0.0
    %936 = vmatprep.subr.mxu0 0.0
    %937 = vmatpush1.msra.mxu0 0.0
    %938 = vmatprep.subr.mxu0 0.0
    %939 = vmatpush1.msra.mxu0 0.0
    %940 = vmatprep.subr.mxu0 0.0
    %941 = vmatpush1.msra.mxu0 0.0
    %942 = vmatprep.subr.mxu0 0.0
    %943 = vmatpush1.msra.mxu0 0.0
    %944 = vmatprep.subr.mxu0 0.0
    %945 = vmatpush1.msra.mxu0 0.0
    %946 = vmatprep.subr.mxu0 0.0
    %947 = vmatpush1.msra.mxu0 0.0
    %948 = vmatprep.subr.mxu0 0.0
    %949 = vmatpush1.msra.mxu0 0.0
    %950 = vmatprep.subr.mxu0 0.0
    %951 = vmatpush1.msra.mxu0 0.0
    %952 = vmatprep.subr.mxu0 0.0
    %953 = vmatpush1.msra.mxu0 0.0
    %954 = vmatprep.subr.mxu0 0.0
    %955 = vmatpush1.msra.mxu0 0.0
    %956 = vmatprep.subr.mxu0 0.0
    %957 = vmatpush1.msra.mxu0 0.0
    %958 = vmatprep.subr.mxu0 0.0
    %959 = vmatpush1.msra.mxu0 0.0
    %960 = vmatprep.subr.mxu0 0.0
    %961 = vmatpush1.msra.mxu0 0.0
    %962 = vmatprep.subr.mxu0 0.0
    %963 = vmatpush1.msra.mxu0 0.0
    %964 = vmatprep.subr.mxu0 0.0
    %965 = vmatpush1.msra.mxu0 0.0
    %966 = vmatprep.subr.mxu0 0.0
    %967 = vmatpush1.msra.mxu0 0.0
    %968 = vmatprep.subr.mxu0 0.0
    %969 = vmatpush1.msra.mxu0 0.0
    %970 = vmatprep.subr.mxu0 0.0
    %971 = vmatpush1.msra.mxu0 0.0
    %972 = vmatprep.subr.mxu0 0.0
    %973 = vmatpush1.msra.mxu0 0.0
    %974 = vmatprep.subr.mxu0 0.0
    %975 = vmatpush1.msra.mxu0 0.0
    %976 = vmatprep.subr.mxu0 0.0
    %977 = vmatpush1.msra.mxu0 0.0
    %978 = vmatprep.mubr.f32.mxu0 0.0
    %979 = vmatmul.mubr.f32.gmra.mrb[0].mxu0 %v912
    %v980 = vpop.f32.mrb[0].mxu0
    %v981 = vadd.f32 %v374, %v980
    %v982 = vpop.f32.mrb[0].mxu0
    %983 = vdwg.mxu0
    %v984 = vmul.f32 %v981, 0.5
    %v985 = vtanh.pop %v984
    %v986 = vadd.f32 %v985, 1.0
    %v987 = vmul.f32 %v986, 0.5
    %v988 = vtanh.pop %v981
    %v989 = vmul.f32 %v987, %v905
    %991 = vrot.lane.b32.xlu0 %v988, 64
    %v992 = vpop.permute.xlu0 %991
    %v994 = vmul.f32 %v987, %v992
    %996 = vrot.lane.b32.xlu0 %v994, 32
    %v997 = vpop.permute.xlu0 %996
    %v999 = vadd.f32 %v989, %v997
    %v1000 = vtanh.pop %v999
    %1002 = vrot.lane.b32.xlu0 %v1000, 64
    %v1003 = vpop.permute.xlu0 %1002
    %v1005 = vmul.f32 %v987, %v1003
    %v1006 = vsel %vm33, 1, 0
    %1007 = vset.pattern.permute.xlu0 0
    %1008 = vperm.xlu0 %1007, %v1006
    %v1009 = vpop.permute.xlu0 %1008
    %vm1010 = vcmp.eq.s32.totalorder %v1009, 1
    %v1011 = vsel %vm1010, %v1005, %v904
    %v1012 = vsel %vm1010, %v999, %v905
    %v1013 = vld [vmem:[#allocation2 + $0x40] sm:$0xff]
    %v1014 = vld [vmem:[#allocation2 + $0x48] sm:$0xff]
    %v1015 = vld [vmem:[#allocation2 + $0x50] sm:$0xff]
    %v1016 = vld [vmem:[#allocation2 + $0x58] sm:$0xff]
    %v1017 = vld [vmem:[#allocation2 + $0x60] sm:$0xff]
    %v1018 = vld [vmem:[#allocation2 + $0x68] sm:$0xff]
    %v1019 = vld [vmem:[#allocation2 + $0x70] sm:$0xff]
    %v1020 = vld [vmem:[#allocation2 + $0x78] sm:$0xff]
    %1022 = vrot.lane.b32.xlu0 %v470, 32
    %v1023 = vpop.permute.xlu0 %1022
    %v1025 = vsel %vm369, %v1023, 0.0
    %v1026 = vlaneseq
    %v1027 = vshrl.u32 %v1026, 7
    %v1028 = vsub.s32 1, %v1027
    %v1029 = vrot.slane %v360, %v1028
    %v1031 = vsel %vm375, %v1025, 0
    %1033 = vmatprep.subr.mxu0 0.0
    %1034 = vmatpush1.msra.mxu0 %v1013
    %1035 = vmatprep.subr.mxu0 0.0
    %1036 = vmatpush1.msra.mxu0 %v1014
    %1037 = vmatprep.subr.mxu0 0.0
    %1038 = vmatpush1.msra.mxu0 %v1015
    %1039 = vmatprep.subr.mxu0 0.0
    %1040 = vmatpush1.msra.mxu0 %v1016
    %1041 = vmatprep.subr.mxu0 0.0
    %1042 = vmatpush1.msra.mxu0 %v1017
    %1043 = vmatprep.subr.mxu0 0.0
    %1044 = vmatpush1.msra.mxu0 %v1018
    %1045 = vmatprep.subr.mxu0 0.0
    %1046 = vmatpush1.msra.mxu0 %v1019
    %1047 = vmatprep.subr.mxu0 0.0
    %1048 = vmatpush1.msra.mxu0 %v1020
    %1049 = vmatprep.subr.mxu0 0.0
    %1050 = vmatpush1.msra.mxu0 0.0
    %1051 = vmatprep.subr.mxu0 0.0
    %1052 = vmatpush1.msra.mxu0 0.0
    %1053 = vmatprep.subr.mxu0 0.0
    %1054 = vmatpush1.msra.mxu0 0.0
    %1055 = vmatprep.subr.mxu0 0.0
    %1056 = vmatpush1.msra.mxu0 0.0
    %1057 = vmatprep.subr.mxu0 0.0
    %1058 = vmatpush1.msra.mxu0 0.0
    %1059 = vmatprep.subr.mxu0 0.0
    %1060 = vmatpush1.msra.mxu0 0.0
    %1061 = vmatprep.subr.mxu0 0.0
    %1062 = vmatpush1.msra.mxu0 0.0
    %1063 = vmatprep.subr.mxu0 0.0
    %1064 = vmatpush1.msra.mxu0 0.0
    %1065 = vmatprep.subr.mxu0 0.0
    %1066 = vmatpush1.msra.mxu0 0.0
    %1067 = vmatprep.subr.mxu0 0.0
    %1068 = vmatpush1.msra.mxu0 0.0
    %1069 = vmatprep.subr.mxu0 0.0
    %1070 = vmatpush1.msra.mxu0 0.0
    %1071 = vmatprep.subr.mxu0 0.0
    %1072 = vmatpush1.msra.mxu0 0.0
    %1073 = vmatprep.subr.mxu0 0.0
    %1074 = vmatpush1.msra.mxu0 0.0
    %1075 = vmatprep.subr.mxu0 0.0
    %1076 = vmatpush1.msra.mxu0 0.0
    %1077 = vmatprep.subr.mxu0 0.0
    %1078 = vmatpush1.msra.mxu0 0.0
    %1079 = vmatprep.subr.mxu0 0.0
    %1080 = vmatpush1.msra.mxu0 0.0
    %1081 = vmatprep.subr.mxu0 0.0
    %1082 = vmatpush1.msra.mxu0 0.0
    %1083 = vmatprep.subr.mxu0 0.0
    %1084 = vmatpush1.msra.mxu0 0.0
    %1085 = vmatprep.subr.mxu0 0.0
    %1086 = vmatpush1.msra.mxu0 0.0
    %1087 = vmatprep.subr.mxu0 0.0
    %1088 = vmatpush1.msra.mxu0 0.0
    %1089 = vmatprep.subr.mxu0 0.0
    %1090 = vmatpush1.msra.mxu0 0.0
    %1091 = vmatprep.subr.mxu0 0.0
    %1092 = vmatpush1.msra.mxu0 0.0
    %1093 = vmatprep.subr.mxu0 0.0
    %1094 = vmatpush1.msra.mxu0 0.0
    %1095 = vmatprep.subr.mxu0 0.0
    %1096 = vmatpush1.msra.mxu0 0.0
    %1097 = vmatprep.mubr.f32.mxu0 0.0
    %1098 = vmatmul.mubr.f32.gmra.mrb[0].mxu0 %v1031
    %v1099 = vpop.f32.mrb[0].mxu0
    %v1100 = vadd.f32 %v1029, %v1099
    %v1101 = vpop.f32.mrb[0].mxu0
    %1102 = vdwg.mxu0
    %v1103 = vmul.f32 %v1100, 0.5
    %v1104 = vtanh.pop %v1103
    %v1105 = vadd.f32 %v1104, 1.0
    %v1106 = vmul.f32 %v1105, 0.5
    %v1107 = vtanh.pop %v1100
    %v1108 = vmul.f32 %v1106, 0.0
    %1110 = vrot.lane.b32.xlu0 %v1107, 64
    %v1111 = vpop.permute.xlu0 %1110
    %v1113 = vmul.f32 %v1106, %v1111
    %1115 = vrot.lane.b32.xlu0 %v1113, 32
    %v1116 = vpop.permute.xlu0 %1115
    %v1118 = vadd.f32 %v1108, %v1116
    %v1119 = vtanh.pop %v1118
    %1121 = vrot.lane.b32.xlu0 %v1119, 64
    %v1122 = vpop.permute.xlu0 %1121
    %v1124 = vmul.f32 %v1106, %v1122
    %v1125 = vsel %vm475, %v1124, 0.0
    %v1126 = vsel %vm475, %v1118, 0.0
    %1128 = vrot.lane.b32.xlu0 %v577, 32
    %v1129 = vpop.permute.xlu0 %1128
    %1132 = vrot.lane.b32.xlu0 %v1125, 64
    %v1133 = vpop.permute.xlu0 %1132
    %v1135 = vsel %vm369, %v1129, %v1133
    %v1137 = vsel %vm375, %v1135, 0
    %1139 = vmatprep.subr.mxu0 0.0
    %1140 = vmatpush1.msra.mxu0 %v1013
    %1141 = vmatprep.subr.mxu0 0.0
    %1142 = vmatpush1.msra.mxu0 %v1014
    %1143 = vmatprep.subr.mxu0 0.0
    %1144 = vmatpush1.msra.mxu0 %v1015
    %1145 = vmatprep.subr.mxu0 0.0
    %1146 = vmatpush1.msra.mxu0 %v1016
    %1147 = vmatprep.subr.mxu0 0.0
    %1148 = vmatpush1.msra.mxu0 %v1017
    %1149 = vmatprep.subr.mxu0 0.0
    %1150 = vmatpush1.msra.mxu0 %v1018
    %1151 = vmatprep.subr.mxu0 0.0
    %1152 = vmatpush1.msra.mxu0 %v1019
    %1153 = vmatprep.subr.mxu0 0.0
    %1154 = vmatpush1.msra.mxu0 %v1020
    %1155 = vmatprep.subr.mxu0 0.0
    %1156 = vmatpush1.msra.mxu0 0.0
    %1157 = vmatprep.subr.mxu0 0.0
    %1158 = vmatpush1.msra.mxu0 0.0
    %1159 = vmatprep.subr.mxu0 0.0
    %1160 = vmatpush1.msra.mxu0 0.0
    %1161 = vmatprep.subr.mxu0 0.0
    %1162 = vmatpush1.msra.mxu0 0.0
    %1163 = vmatprep.subr.mxu0 0.0
    %1164 = vmatpush1.msra.mxu0 0.0
    %1165 = vmatprep.subr.mxu0 0.0
    %1166 = vmatpush1.msra.mxu0 0.0
    %1167 = vmatprep.subr.mxu0 0.0
    %1168 = vmatpush1.msra.mxu0 0.0
    %1169 = vmatprep.subr.mxu0 0.0
    %1170 = vmatpush1.msra.mxu0 0.0
    %1171 = vmatprep.subr.mxu0 0.0
    %1172 = vmatpush1.msra.mxu0 0.0
    %1173 = vmatprep.subr.mxu0 0.0
    %1174 = vmatpush1.msra.mxu0 0.0
    %1175 = vmatprep.subr.mxu0 0.0
    %1176 = vmatpush1.msra.mxu0 0.0
    %1177 = vmatprep.subr.mxu0 0.0
    %1178 = vmatpush1.msra.mxu0 0.0
    %1179 = vmatprep.subr.mxu0 0.0
    %1180 = vmatpush1.msra.mxu0 0.0
    %1181 = vmatprep.subr.mxu0 0.0
    %1182 = vmatpush1.msra.mxu0 0.0
    %1183 = vmatprep.subr.mxu0 0.0
    %1184 = vmatpush1.msra.mxu0 0.0
    %1185 = vmatprep.subr.mxu0 0.0
    %1186 = vmatpush1.msra.mxu0 0.0
    %1187 = vmatprep.subr.mxu0 0.0
    %1188 = vmatpush1.msra.mxu0 0.0
    %1189 = vmatprep.subr.mxu0 0.0
    %1190 = vmatpush1.msra.mxu0 0.0
    %1191 = vmatprep.subr.mxu0 0.0
    %1192 = vmatpush1.msra.mxu0 0.0
    %1193 = vmatprep.subr.mxu0 0.0
    %1194 = vmatpush1.msra.mxu0 0.0
    %1195 = vmatprep.subr.mxu0 0.0
    %1196 = vmatpush1.msra.mxu0 0.0
    %1197 = vmatprep.subr.mxu0 0.0
    %1198 = vmatpush1.msra.mxu0 0.0
    %1199 = vmatprep.subr.mxu0 0.0
    %1200 = vmatpush1.msra.mxu0 0.0
    %1201 = vmatprep.subr.mxu0 0.0
    %1202 = vmatpush1.msra.mxu0 0.0
    %1203 = vmatprep.mubr.f32.mxu0 0.0
    %1204 = vmatmul.mubr.f32.gmra.mrb[0].mxu0 %v1137
    %v1205 = vpop.f32.mrb[0].mxu0
    %v1206 = vadd.f32 %v1029, %v1205
    %v1207 = vpop.f32.mrb[0].mxu0
    %1208 = vdwg.mxu0
    %v1209 = vmul.f32 %v1206, 0.5
    %v1210 = vtanh.pop %v1209
    %v1211 = vadd.f32 %v1210, 1.0
    %v1212 = vmul.f32 %v1211, 0.5
    %v1213 = vtanh.pop %v1206
    %v1214 = vmul.f32 %v1212, %v1126
    %1216 = vrot.lane.b32.xlu0 %v1213, 64
    %v1217 = vpop.permute.xlu0 %1216
    %v1219 = vmul.f32 %v1212, %v1217
    %1221 = vrot.lane.b32.xlu0 %v1219, 32
    %v1222 = vpop.permute.xlu0 %1221
    %v1224 = vadd.f32 %v1214, %v1222
    %v1225 = vtanh.pop %v1224
    %1227 = vrot.lane.b32.xlu0 %v1225, 64
    %v1228 = vpop.permute.xlu0 %1227
    %v1230 = vmul.f32 %v1212, %v1228
    %v1231 = vsel %vm582, %v1230, %v1125
    %v1232 = vsel %vm582, %v1224, %v1126
    %1234 = vrot.lane.b32.xlu0 %v684, 32
    %v1235 = vpop.permute.xlu0 %1234
    %1238 = vrot.lane.b32.xlu0 %v1231, 64
    %v1239 = vpop.permute.xlu0 %1238
    %v1241 = vsel %vm369, %v1235, %v1239
    %v1243 = vsel %vm375, %v1241, 0
    %1245 = vmatprep.subr.mxu0 0.0
    %1246 = vmatpush1.msra.mxu0 %v1013
    %1247 = vmatprep.subr.mxu0 0.0
    %1248 = vmatpush1.msra.mxu0 %v1014
    %1249 = vmatprep.subr.mxu0 0.0
    %1250 = vmatpush1.msra.mxu0 %v1015
    %1251 = vmatprep.subr.mxu0 0.0
    %1252 = vmatpush1.msra.mxu0 %v1016
    %1253 = vmatprep.subr.mxu0 0.0
    %1254 = vmatpush1.msra.mxu0 %v1017
    %1255 = vmatprep.subr.mxu0 0.0
    %1256 = vmatpush1.msra.mxu0 %v1018
    %1257 = vmatprep.subr.mxu0 0.0
    %1258 = vmatpush1.msra.mxu0 %v1019
    %1259 = vmatprep.subr.mxu0 0.0
    %1260 = vmatpush1.msra.mxu0 %v1020
    %1261 = vmatprep.subr.mxu0 0.0
    %1262 = vmatpush1.msra.mxu0 0.0
    %1263 = vmatprep.subr.mxu0 0.0
    %1264 = vmatpush1.msra.mxu0 0.0
    %1265 = vmatprep.subr.mxu0 0.0
    %1266 = vmatpush1.msra.mxu0 0.0
    %1267 = vmatprep.subr.mxu0 0.0
    %1268 = vmatpush1.msra.mxu0 0.0
    %1269 = vmatprep.subr.mxu0 0.0
    %1270 = vmatpush1.msra.mxu0 0.0
    %1271 = vmatprep.subr.mxu0 0.0
    %1272 = vmatpush1.msra.mxu0 0.0
    %1273 = vmatprep.subr.mxu0 0.0
    %1274 = vmatpush1.msra.mxu0 0.0
    %1275 = vmatprep.subr.mxu0 0.0
    %1276 = vmatpush1.msra.mxu0 0.0
    %1277 = vmatprep.subr.mxu0 0.0
    %1278 = vmatpush1.msra.mxu0 0.0
    %1279 = vmatprep.subr.mxu0 0.0
    %1280 = vmatpush1.msra.mxu0 0.0
    %1281 = vmatprep.subr.mxu0 0.0
    %1282 = vmatpush1.msra.mxu0 0.0
    %1283 = vmatprep.subr.mxu0 0.0
    %1284 = vmatpush1.msra.mxu0 0.0
    %1285 = vmatprep.subr.mxu0 0.0
    %1286 = vmatpush1.msra.mxu0 0.0
    %1287 = vmatprep.subr.mxu0 0.0
    %1288 = vmatpush1.msra.mxu0 0.0
    %1289 = vmatprep.subr.mxu0 0.0
    %1290 = vmatpush1.msra.mxu0 0.0
    %1291 = vmatprep.subr.mxu0 0.0
    %1292 = vmatpush1.msra.mxu0 0.0
    %1293 = vmatprep.subr.mxu0 0.0
    %1294 = vmatpush1.msra.mxu0 0.0
    %1295 = vmatprep.subr.mxu0 0.0
    %1296 = vmatpush1.msra.mxu0 0.0
    %1297 = vmatprep.subr.mxu0 0.0
    %1298 = vmatpush1.msra.mxu0 0.0
    %1299 = vmatprep.subr.mxu0 0.0
    %1300 = vmatpush1.msra.mxu0 0.0
    %1301 = vmatprep.subr.mxu0 0.0
    %1302 = vmatpush1.msra.mxu0 0.0
    %1303 = vmatprep.subr.mxu0 0.0
    %1304 = vmatpush1.msra.mxu0 0.0
    %1305 = vmatprep.subr.mxu0 0.0
    %1306 = vmatpush1.msra.mxu0 0.0
    %1307 = vmatprep.subr.mxu0 0.0
    %1308 = vmatpush1.msra.mxu0 0.0
    %1309 = vmatprep.mubr.f32.mxu0 0.0
    %1310 = vmatmul.mubr.f32.gmra.mrb[0].mxu0 %v1243
    %v1311 = vpop.f32.mrb[0].mxu0
    %v1312 = vadd.f32 %v1029, %v1311
    %v1313 = vpop.f32.mrb[0].mxu0
    %1314 = vdwg.mxu0
    %v1315 = vmul.f32 %v1312, 0.5
    %v1316 = vtanh.pop %v1315
    %v1317 = vadd.f32 %v1316, 1.0
    %v1318 = vmul.f32 %v1317, 0.5
    %v1319 = vtanh.pop %v1312
    %v1320 = vmul.f32 %v1318, %v1232
    %1322 = vrot.lane.b32.xlu0 %v1319, 64
    %v1323 = vpop.permute.xlu0 %1322
    %v1325 = vmul.f32 %v1318, %v1323
    %1327 = vrot.lane.b32.xlu0 %v1325, 32
    %v1328 = vpop.permute.xlu0 %1327
    %v1330 = vadd.f32 %v1320, %v1328
    %v1331 = vtanh.pop %v1330
    %1333 = vrot.lane.b32.xlu0 %v1331, 64
    %v1334 = vpop.permute.xlu0 %1333
    %v1336 = vmul.f32 %v1318, %v1334
    %v1337 = vsel %vm689, %v1336, %v1231
    %v1338 = vsel %vm689, %v1330, %v1232
    %1340 = vrot.lane.b32.xlu0 %v791, 32
    %v1341 = vpop.permute.xlu0 %1340
    %1344 = vrot.lane.b32.xlu0 %v1337, 64
    %v1345 = vpop.permute.xlu0 %1344
    %v1347 = vsel %vm369, %v1341, %v1345
    %v1349 = vsel %vm375, %v1347, 0
    %1351 = vmatprep.subr.mxu0 0.0
    %1352 = vmatpush1.msra.mxu0 %v1013
    %1353 = vmatprep.subr.mxu0 0.0
    %1354 = vmatpush1.msra.mxu0 %v1014
    %1355 = vmatprep.subr.mxu0 0.0
    %1356 = vmatpush1.msra.mxu0 %v1015
    %1357 = vmatprep.subr.mxu0 0.0
    %1358 = vmatpush1.msra.mxu0 %v1016
    %1359 = vmatprep.subr.mxu0 0.0
    %1360 = vmatpush1.msra.mxu0 %v1017
    %1361 = vmatprep.subr.mxu0 0.0
    %1362 = vmatpush1.msra.mxu0 %v1018
    %1363 = vmatprep.subr.mxu0 0.0
    %1364 = vmatpush1.msra.mxu0 %v1019
    %1365 = vmatprep.subr.mxu0 0.0
    %1366 = vmatpush1.msra.mxu0 %v1020
    %1367 = vmatprep.subr.mxu0 0.0
    %1368 = vmatpush1.msra.mxu0 0.0
    %1369 = vmatprep.subr.mxu0 0.0
    %1370 = vmatpush1.msra.mxu0 0.0
    %1371 = vmatprep.subr.mxu0 0.0
    %1372 = vmatpush1.msra.mxu0 0.0
    %1373 = vmatprep.subr.mxu0 0.0
    %1374 = vmatpush1.msra.mxu0 0.0
    %1375 = vmatprep.subr.mxu0 0.0
    %1376 = vmatpush1.msra.mxu0 0.0
    %1377 = vmatprep.subr.mxu0 0.0
    %1378 = vmatpush1.msra.mxu0 0.0
    %1379 = vmatprep.subr.mxu0 0.0
    %1380 = vmatpush1.msra.mxu0 0.0
    %1381 = vmatprep.subr.mxu0 0.0
    %1382 = vmatpush1.msra.mxu0 0.0
    %1383 = vmatprep.subr.mxu0 0.0
    %1384 = vmatpush1.msra.mxu0 0.0
    %1385 = vmatprep.subr.mxu0 0.0
    %1386 = vmatpush1.msra.mxu0 0.0
    %1387 = vmatprep.subr.mxu0 0.0
    %1388 = vmatpush1.msra.mxu0 0.0
    %1389 = vmatprep.subr.mxu0 0.0
    %1390 = vmatpush1.msra.mxu0 0.0
    %1391 = vmatprep.subr.mxu0 0.0
    %1392 = vmatpush1.msra.mxu0 0.0
    %1393 = vmatprep.subr.mxu0 0.0
    %1394 = vmatpush1.msra.mxu0 0.0
    %1395 = vmatprep.subr.mxu0 0.0
    %1396 = vmatpush1.msra.mxu0 0.0
    %1397 = vmatprep.subr.mxu0 0.0
    %1398 = vmatpush1.msra.mxu0 0.0
    %1399 = vmatprep.subr.mxu0 0.0
    %1400 = vmatpush1.msra.mxu0 0.0
    %1401 = vmatprep.subr.mxu0 0.0
    %1402 = vmatpush1.msra.mxu0 0.0
    %1403 = vmatprep.subr.mxu0 0.0
    %1404 = vmatpush1.msra.mxu0 0.0
    %1405 = vmatprep.subr.mxu0 0.0
    %1406 = vmatpush1.msra.mxu0 0.0
    %1407 = vmatprep.subr.mxu0 0.0
    %1408 = vmatpush1.msra.mxu0 0.0
    %1409 = vmatprep.subr.mxu0 0.0
    %1410 = vmatpush1.msra.mxu0 0.0
    %1411 = vmatprep.subr.mxu0 0.0
    %1412 = vmatpush1.msra.mxu0 0.0
    %1413 = vmatprep.subr.mxu0 0.0
    %1414 = vmatpush1.msra.mxu0 0.0
    %1415 = vmatprep.mubr.f32.mxu0 0.0
    %1416 = vmatmul.mubr.f32.gmra.mrb[0].mxu0 %v1349
    %v1417 = vpop.f32.mrb[0].mxu0
    %v1418 = vadd.f32 %v1029, %v1417
    %v1419 = vpop.f32.mrb[0].mxu0
    %1420 = vdwg.mxu0
    %v1421 = vmul.f32 %v1418, 0.5
    %v1422 = vtanh.pop %v1421
    %v1423 = vadd.f32 %v1422, 1.0
    %v1424 = vmul.f32 %v1423, 0.5
    %v1425 = vtanh.pop %v1418
    %v1426 = vmul.f32 %v1424, %v1338
    %1428 = vrot.lane.b32.xlu0 %v1425, 64
    %v1429 = vpop.permute.xlu0 %1428
    %v1431 = vmul.f32 %v1424, %v1429
    %1433 = vrot.lane.b32.xlu0 %v1431, 32
    %v1434 = vpop.permute.xlu0 %1433
    %v1436 = vadd.f32 %v1426, %v1434
    %v1437 = vtanh.pop %v1436
    %1439 = vrot.lane.b32.xlu0 %v1437, 64
    %v1440 = vpop.permute.xlu0 %1439
    %v1442 = vmul.f32 %v1424, %v1440
    %v1443 = vsel %vm796, %v1442, %v1337
    %v1444 = vsel %vm796, %v1436, %v1338
    %1446 = vrot.lane.b32.xlu0 %v898, 32
    %v1447 = vpop.permute.xlu0 %1446
    %1450 = vrot.lane.b32.xlu0 %v1443, 64
    %v1451 = vpop.permute.xlu0 %1450
    %v1453 = vsel %vm369, %v1447, %v1451
    %v1455 = vsel %vm375, %v1453, 0
    %1457 = vmatprep.subr.mxu0 0.0
    %1458 = vmatpush1.msra.mxu0 %v1013
    %1459 = vmatprep.subr.mxu0 0.0
    %1460 = vmatpush1.msra.mxu0 %v1014
    %1461 = vmatprep.subr.mxu0 0.0
    %1462 = vmatpush1.msra.mxu0 %v1015
    %1463 = vmatprep.subr.mxu0 0.0
    %1464 = vmatpush1.msra.mxu0 %v1016
    %1465 = vmatprep.subr.mxu0 0.0
    %1466 = vmatpush1.msra.mxu0 %v1017
    %1467 = vmatprep.subr.mxu0 0.0
    %1468 = vmatpush1.msra.mxu0 %v1018
    %1469 = vmatprep.subr.mxu0 0.0
    %1470 = vmatpush1.msra.mxu0 %v1019
    %1471 = vmatprep.subr.mxu0 0.0
    %1472 = vmatpush1.msra.mxu0 %v1020
    %1473 = vmatprep.subr.mxu0 0.0
    %1474 = vmatpush1.msra.mxu0 0.0
    %1475 = vmatprep.subr.mxu0 0.0
    %1476 = vmatpush1.msra.mxu0 0.0
    %1477 = vmatprep.subr.mxu0 0.0
    %1478 = vmatpush1.msra.mxu0 0.0
    %1479 = vmatprep.subr.mxu0 0.0
    %1480 = vmatpush1.msra.mxu0 0.0
    %1481 = vmatprep.subr.mxu0 0.0
    %1482 = vmatpush1.msra.mxu0 0.0
    %1483 = vmatprep.subr.mxu0 0.0
    %1484 = vmatpush1.msra.mxu0 0.0
    %1485 = vmatprep.subr.mxu0 0.0
    %1486 = vmatpush1.msra.mxu0 0.0
    %1487 = vmatprep.subr.mxu0 0.0
    %1488 = vmatpush1.msra.mxu0 0.0
    %1489 = vmatprep.subr.mxu0 0.0
    %1490 = vmatpush1.msra.mxu0 0.0
    %1491 = vmatprep.subr.mxu0 0.0
    %1492 = vmatpush1.msra.mxu0 0.0
    %1493 = vmatprep.subr.mxu0 0.0
    %1494 = vmatpush1.msra.mxu0 0.0
    %1495 = vmatprep.subr.mxu0 0.0
    %1496 = vmatpush1.msra.mxu0 0.0
    %1497 = vmatprep.subr.mxu0 0.0
    %1498 = vmatpush1.msra.mxu0 0.0
    %1499 = vmatprep.subr.mxu0 0.0
    %1500 = vmatpush1.msra.mxu0 0.0
    %1501 = vmatprep.subr.mxu0 0.0
    %1502 = vmatpush1.msra.mxu0 0.0
    %1503 = vmatprep.subr.mxu0 0.0
    %1504 = vmatpush1.msra.mxu0 0.0
    %1505 = vmatprep.subr.mxu0 0.0
    %1506 = vmatpush1.msra.mxu0 0.0
    %1507 = vmatprep.subr.mxu0 0.0
    %1508 = vmatpush1.msra.mxu0 0.0
    %1509 = vmatprep.subr.mxu0 0.0
    %1510 = vmatpush1.msra.mxu0 0.0
    %1511 = vmatprep.subr.mxu0 0.0
    %1512 = vmatpush1.msra.mxu0 0.0
    %1513 = vmatprep.subr.mxu0 0.0
    %1514 = vmatpush1.msra.mxu0 0.0
    %1515 = vmatprep.subr.mxu0 0.0
    %1516 = vmatpush1.msra.mxu0 0.0
    %1517 = vmatprep.subr.mxu0 0.0
    %1518 = vmatpush1.msra.mxu0 0.0
    %1519 = vmatprep.subr.mxu0 0.0
    %1520 = vmatpush1.msra.mxu0 0.0
    %1521 = vmatprep.mubr.f32.mxu0 0.0
    %1522 = vmatmul.mubr.f32.gmra.mrb[0].mxu0 %v1455
    %v1523 = vpop.f32.mrb[0].mxu0
    %v1524 = vadd.f32 %v1029, %v1523
    %v1525 = vpop.f32.mrb[0].mxu0
    %1526 = vdwg.mxu0
    %v1527 = vmul.f32 %v1524, 0.5
    %v1528 = vtanh.pop %v1527
    %v1529 = vadd.f32 %v1528, 1.0
    %v1530 = vmul.f32 %v1529, 0.5
    %v1531 = vtanh.pop %v1524
    %v1532 = vmul.f32 %v1530, %v1444
    %1534 = vrot.lane.b32.xlu0 %v1531, 64
    %v1535 = vpop.permute.xlu0 %1534
    %v1537 = vmul.f32 %v1530, %v1535
    %1539 = vrot.lane.b32.xlu0 %v1537, 32
    %v1540 = vpop.permute.xlu0 %1539
    %v1542 = vadd.f32 %v1532, %v1540
    %v1543 = vtanh.pop %v1542
    %1545 = vrot.lane.b32.xlu0 %v1543, 64
    %v1546 = vpop.permute.xlu0 %1545
    %v1548 = vmul.f32 %v1530, %v1546
    %v1549 = vsel %vm903, %v1548, %v1443
    %v1550 = vsel %vm903, %v1542, %v1444
    %1552 = vrot.lane.b32.xlu0 %v1005, 32
    %v1553 = vpop.permute.xlu0 %1552
    %1556 = vrot.lane.b32.xlu0 %v1549, 64
    %v1557 = vpop.permute.xlu0 %1556
    %v1559 = vsel %vm369, %v1553, %v1557
    %v1561 = vsel %vm375, %v1559, 0
    %1563 = vmatprep.subr.mxu0 0.0
    %1564 = vmatpush1.msra.mxu0 %v1013
    %1565 = vmatprep.subr.mxu0 0.0
    %1566 = vmatpush1.msra.mxu0 %v1014
    %1567 = vmatprep.subr.mxu0 0.0
    %1568 = vmatpush1.msra.mxu0 %v1015
    %1569 = vmatprep.subr.mxu0 0.0
    %1570 = vmatpush1.msra.mxu0 %v1016
    %1571 = vmatprep.subr.mxu0 0.0
    %1572 = vmatpush1.msra.mxu0 %v1017
    %1573 = vmatprep.subr.mxu0 0.0
    %1574 = vmatpush1.msra.mxu0 %v1018
    %1575 = vmatprep.subr.mxu0 0.0
    %1576 = vmatpush1.msra.mxu0 %v1019
    %1577 = vmatprep.subr.mxu0 0.0
    %1578 = vmatpush1.msra.mxu0 %v1020
    %1579 = vmatprep.subr.mxu0 0.0
    %1580 = vmatpush1.msra.mxu0 0.0
    %1581 = vmatprep.subr.mxu0 0.0
    %1582 = vmatpush1.msra.mxu0 0.0
    %1583 = vmatprep.subr.mxu0 0.0
    %1584 = vmatpush1.msra.mxu0 0.0
    %1585 = vmatprep.subr.mxu0 0.0
    %1586 = vmatpush1.msra.mxu0 0.0
    %1587 = vmatprep.subr.mxu0 0.0
    %1588 = vmatpush1.msra.mxu0 0.0
    %1589 = vmatprep.subr.mxu0 0.0
    %1590 = vmatpush1.msra.mxu0 0.0
    %1591 = vmatprep.subr.mxu0 0.0
    %1592 = vmatpush1.msra.mxu0 0.0
    %1593 = vmatprep.subr.mxu0 0.0
    %1594 = vmatpush1.msra.mxu0 0.0
    %1595 = vmatprep.subr.mxu0 0.0
    %1596 = vmatpush1.msra.mxu0 0.0
    %1597 = vmatprep.subr.mxu0 0.0
    %1598 = vmatpush1.msra.mxu0 0.0
    %1599 = vmatprep.subr.mxu0 0.0
    %1600 = vmatpush1.msra.mxu0 0.0
    %1601 = vmatprep.subr.mxu0 0.0
    %1602 = vmatpush1.msra.mxu0 0.0
    %1603 = vmatprep.subr.mxu0 0.0
    %1604 = vmatpush1.msra.mxu0 0.0
    %1605 = vmatprep.subr.mxu0 0.0
    %1606 = vmatpush1.msra.mxu0 0.0
    %1607 = vmatprep.subr.mxu0 0.0
    %1608 = vmatpush1.msra.mxu0 0.0
    %1609 = vmatprep.subr.mxu0 0.0
    %1610 = vmatpush1.msra.mxu0 0.0
    %1611 = vmatprep.subr.mxu0 0.0
    %1612 = vmatpush1.msra.mxu0 0.0
    %1613 = vmatprep.subr.mxu0 0.0
    %1614 = vmatpush1.msra.mxu0 0.0
    %1615 = vmatprep.subr.mxu0 0.0
    %1616 = vmatpush1.msra.mxu0 0.0
    %1617 = vmatprep.subr.mxu0 0.0
    %1618 = vmatpush1.msra.mxu0 0.0
    %1619 = vmatprep.subr.mxu0 0.0
    %1620 = vmatpush1.msra.mxu0 0.0
    %1621 = vmatprep.subr.mxu0 0.0
    %1622 = vmatpush1.msra.mxu0 0.0
    %1623 = vmatprep.subr.mxu0 0.0
    %1624 = vmatpush1.msra.mxu0 0.0
    %1625 = vmatprep.subr.mxu0 0.0
    %1626 = vmatpush1.msra.mxu0 0.0
    %1627 = vmatprep.mubr.f32.mxu0 0.0
    %1628 = vmatmul.mubr.f32.gmra.mrb[0].mxu0 %v1561
    %v1629 = vpop.f32.mrb[0].mxu0
    %v1630 = vadd.f32 %v1029, %v1629
    %v1631 = vpop.f32.mrb[0].mxu0
    %1632 = vdwg.mxu0
    %v1633 = vmul.f32 %v1630, 0.5
    %v1634 = vtanh.pop %v1633
    %v1635 = vadd.f32 %v1634, 1.0
    %v1636 = vmul.f32 %v1635, 0.5
    %v1637 = vtanh.pop %v1630
    %v1638 = vmul.f32 %v1636, %v1550
    %1640 = vrot.lane.b32.xlu0 %v1637, 64
    %v1641 = vpop.permute.xlu0 %1640
    %v1643 = vmul.f32 %v1636, %v1641
    %1645 = vrot.lane.b32.xlu0 %v1643, 32
    %v1646 = vpop.permute.xlu0 %1645
    %v1648 = vadd.f32 %v1638, %v1646
    %v1649 = vtanh.pop %v1648
    %1651 = vrot.lane.b32.xlu0 %v1649, 64
    %v1652 = vpop.permute.xlu0 %1651
    %v1654 = vmul.f32 %v1636, %v1652
    %v1655 = vsel %vm1010, %v1654, %v1549
    %v1656 = vsel %vm1010, %v1648, %v1550
    %v1657 = vld [vmem:[#allocation2 + $0x80] sm:$0xff]
    %v1658 = vld [vmem:[#allocation2 + $0x88] sm:$0xff]
    %v1659 = vld [vmem:[#allocation2 + $0x90] sm:$0xff]
    %v1660 = vld [vmem:[#allocation2 + $0x98] sm:$0xff]
    %v1661 = vld [vmem:[#allocation2 + $0xa0] sm:$0xff]
    %v1662 = vld [vmem:[#allocation2 + $0xa8] sm:$0xff]
    %v1663 = vld [vmem:[#allocation2 + $0xb0] sm:$0xff]
    %v1664 = vld [vmem:[#allocation2 + $0xb8] sm:$0xff]
    %1666 = vrot.lane.b32.xlu0 %v1124, 32
    %v1667 = vpop.permute.xlu0 %1666
    %v1669 = vsel %vm369, %v1667, 0.0
    %v1670 = vlaneseq
    %v1671 = vshrl.u32 %v1670, 7
    %v1672 = vsub.s32 2, %v1671
    %v1673 = vrot.slane %v360, %v1672
    %v1675 = vsel %vm375, %v1669, 0
    %1677 = vmatprep.subr.mxu0 0.0
    %1678 = vmatpush1.msra.mxu0 %v1657
    %1679 = vmatprep.subr.mxu0 0.0
    %1680 = vmatpush1.msra.mxu0 %v1658
    %1681 = vmatprep.subr.mxu0 0.0
    %1682 = vmatpush1.msra.mxu0 %v1659
    %1683 = vmatprep.subr.mxu0 0.0
    %1684 = vmatpush1.msra.mxu0 %v1660
    %1685 = vmatprep.subr.mxu0 0.0
    %1686 = vmatpush1.msra.mxu0 %v1661
    %1687 = vmatprep.subr.mxu0 0.0
    %1688 = vmatpush1.msra.mxu0 %v1662
    %1689 = vmatprep.subr.mxu0 0.0
    %1690 = vmatpush1.msra.mxu0 %v1663
    %1691 = vmatprep.subr.mxu0 0.0
    %1692 = vmatpush1.msra.mxu0 %v1664
    %1693 = vmatprep.subr.mxu0 0.0
    %1694 = vmatpush1.msra.mxu0 0.0
    %1695 = vmatprep.subr.mxu0 0.0
    %1696 = vmatpush1.msra.mxu0 0.0
    %1697 = vmatprep.subr.mxu0 0.0
    %1698 = vmatpush1.msra.mxu0 0.0
    %1699 = vmatprep.subr.mxu0 0.0
    %1700 = vmatpush1.msra.mxu0 0.0
    %1701 = vmatprep.subr.mxu0 0.0
    %1702 = vmatpush1.msra.mxu0 0.0
    %1703 = vmatprep.subr.mxu0 0.0
    %1704 = vmatpush1.msra.mxu0 0.0
    %1705 = vmatprep.subr.mxu0 0.0
    %1706 = vmatpush1.msra.mxu0 0.0
    %1707 = vmatprep.subr.mxu0 0.0
    %1708 = vmatpush1.msra.mxu0 0.0
    %1709 = vmatprep.subr.mxu0 0.0
    %1710 = vmatpush1.msra.mxu0 0.0
    %1711 = vmatprep.subr.mxu0 0.0
    %1712 = vmatpush1.msra.mxu0 0.0
    %1713 = vmatprep.subr.mxu0 0.0
    %1714 = vmatpush1.msra.mxu0 0.0
    %1715 = vmatprep.subr.mxu0 0.0
    %1716 = vmatpush1.msra.mxu0 0.0
    %1717 = vmatprep.subr.mxu0 0.0
    %1718 = vmatpush1.msra.mxu0 0.0
    %1719 = vmatprep.subr.mxu0 0.0
    %1720 = vmatpush1.msra.mxu0 0.0
    %1721 = vmatprep.subr.mxu0 0.0
    %1722 = vmatpush1.msra.mxu0 0.0
    %1723 = vmatprep.subr.mxu0 0.0
    %1724 = vmatpush1.msra.mxu0 0.0
    %1725 = vmatprep.subr.mxu0 0.0
    %1726 = vmatpush1.msra.mxu0 0.0
    %1727 = vmatprep.subr.mxu0 0.0
    %1728 = vmatpush1.msra.mxu0 0.0
    %1729 = vmatprep.subr.mxu0 0.0
    %1730 = vmatpush1.msra.mxu0 0.0
    %1731 = vmatprep.subr.mxu0 0.0
    %1732 = vmatpush1.msra.mxu0 0.0
    %1733 = vmatprep.subr.mxu0 0.0
    %1734 = vmatpush1.msra.mxu0 0.0
    %1735 = vmatprep.subr.mxu0 0.0
    %1736 = vmatpush1.msra.mxu0 0.0
    %1737 = vmatprep.subr.mxu0 0.0
    %1738 = vmatpush1.msra.mxu0 0.0
    %1739 = vmatprep.subr.mxu0 0.0
    %1740 = vmatpush1.msra.mxu0 0.0
    %1741 = vmatprep.mubr.f32.mxu0 0.0
    %1742 = vmatmul.mubr.f32.gmra.mrb[0].mxu0 %v1675
    %v1743 = vpop.f32.mrb[0].mxu0
    %v1744 = vadd.f32 %v1673, %v1743
    %v1745 = vpop.f32.mrb[0].mxu0
    %1746 = vdwg.mxu0
    %v1747 = vmul.f32 %v1744, 0.5
    %v1748 = vtanh.pop %v1747
    %v1749 = vadd.f32 %v1748, 1.0
    %v1750 = vmul.f32 %v1749, 0.5
    %v1751 = vtanh.pop %v1744
    %v1752 = vmul.f32 %v1750, 0.0
    %1754 = vrot.lane.b32.xlu0 %v1751, 64
    %v1755 = vpop.permute.xlu0 %1754
    %v1757 = vmul.f32 %v1750, %v1755
    %1759 = vrot.lane.b32.xlu0 %v1757, 32
    %v1760 = vpop.permute.xlu0 %1759
    %v1762 = vadd.f32 %v1752, %v1760
    %v1763 = vtanh.pop %v1762
    %1765 = vrot.lane.b32.xlu0 %v1763, 64
    %v1766 = vpop.permute.xlu0 %1765
    %v1768 = vmul.f32 %v1750, %v1766
    %v1769 = vsel %vm475, %v1768, 0.0
    %v1770 = vsel %vm475, %v1762, 0.0
    %1772 = vrot.lane.b32.xlu0 %v1230, 32
    %v1773 = vpop.permute.xlu0 %1772
    %1776 = vrot.lane.b32.xlu0 %v1769, 64
    %v1777 = vpop.permute.xlu0 %1776
    %v1779 = vsel %vm369, %v1773, %v1777
    %v1781 = vsel %vm375, %v1779, 0
    %1783 = vmatprep.subr.mxu0 0.0
    %1784 = vmatpush1.msra.mxu0 %v1657
    %1785 = vmatprep.subr.mxu0 0.0
    %1786 = vmatpush1.msra.mxu0 %v1658
    %1787 = vmatprep.subr.mxu0 0.0
    %1788 = vmatpush1.msra.mxu0 %v1659
    %1789 = vmatprep.subr.mxu0 0.0
    %1790 = vmatpush1.msra.mxu0 %v1660
    %1791 = vmatprep.subr.mxu0 0.0
    %1792 = vmatpush1.msra.mxu0 %v1661
    %1793 = vmatprep.subr.mxu0 0.0
    %1794 = vmatpush1.msra.mxu0 %v1662
    %1795 = vmatprep.subr.mxu0 0.0
    %1796 = vmatpush1.msra.mxu0 %v1663
    %1797 = vmatprep.subr.mxu0 0.0
    %1798 = vmatpush1.msra.mxu0 %v1664
    %1799 = vmatprep.subr.mxu0 0.0
    %1800 = vmatpush1.msra.mxu0 0.0
    %1801 = vmatprep.subr.mxu0 0.0
    %1802 = vmatpush1.msra.mxu0 0.0
    %1803 = vmatprep.subr.mxu0 0.0
    %1804 = vmatpush1.msra.mxu0 0.0
    %1805 = vmatprep.subr.mxu0 0.0
    %1806 = vmatpush1.msra.mxu0 0.0
    %1807 = vmatprep.subr.mxu0 0.0
    %1808 = vmatpush1.msra.mxu0 0.0
    %1809 = vmatprep.subr.mxu0 0.0
    %1810 = vmatpush1.msra.mxu0 0.0
    %1811 = vmatprep.subr.mxu0 0.0
    %1812 = vmatpush1.msra.mxu0 0.0
    %1813 = vmatprep.subr.mxu0 0.0
    %1814 = vmatpush1.msra.mxu0 0.0
    %1815 = vmatprep.subr.mxu0 0.0
    %1816 = vmatpush1.msra.mxu0 0.0
    %1817 = vmatprep.subr.mxu0 0.0
    %1818 = vmatpush1.msra.mxu0 0.0
    %1819 = vmatprep.subr.mxu0 0.0
    %1820 = vmatpush1.msra.mxu0 0.0
    %1821 = vmatprep.subr.mxu0 0.0
    %1822 = vmatpush1.msra.mxu0 0.0
    %1823 = vmatprep.subr.mxu0 0.0
    %1824 = vmatpush1.msra.mxu0 0.0
    %1825 = vmatprep.subr.mxu0 0.0
    %1826 = vmatpush1.msra.mxu0 0.0
    %1827 = vmatprep.subr.mxu0 0.0
    %1828 = vmatpush1.msra.mxu0 0.0
    %1829 = vmatprep.subr.mxu0 0.0
    %1830 = vmatpush1.msra.mxu0 0.0
    %1831 = vmatprep.subr.mxu0 0.0
    %1832 = vmatpush1.msra.mxu0 0.0
    %1833 = vmatprep.subr.mxu0 0.0
    %1834 = vmatpush1.msra.mxu0 0.0
    %1835 = vmatprep.subr.mxu0 0.0
    %1836 = vmatpush1.msra.mxu0 0.0
    %1837 = vmatprep.subr.mxu0 0.0
    %1838 = vmatpush1.msra.mxu0 0.0
    %1839 = vmatprep.subr.mxu0 0.0
    %1840 = vmatpush1.msra.mxu0 0.0
    %1841 = vmatprep.subr.mxu0 0.0
    %1842 = vmatpush1.msra.mxu0 0.0
    %1843 = vmatprep.subr.mxu0 0.0
    %1844 = vmatpush1.msra.mxu0 0.0
    %1845 = vmatprep.subr.mxu0 0.0
    %1846 = vmatpush1.msra.mxu0 0.0
    %1847 = vmatprep.mubr.f32.mxu0 0.0
    %1848 = vmatmul.mubr.f32.gmra.mrb[0].mxu0 %v1781
    %v1849 = vpop.f32.mrb[0].mxu0
    %v1850 = vadd.f32 %v1673, %v1849
    %v1851 = vpop.f32.mrb[0].mxu0
    %1852 = vdwg.mxu0
    %v1853 = vmul.f32 %v1850, 0.5
    %v1854 = vtanh.pop %v1853
    %v1855 = vadd.f32 %v1854, 1.0
    %v1856 = vmul.f32 %v1855, 0.5
    %v1857 = vtanh.pop %v1850
    %v1858 = vmul.f32 %v1856, %v1770
    %1860 = vrot.lane.b32.xlu0 %v1857, 64
    %v1861 = vpop.permute.xlu0 %1860
    %v1863 = vmul.f32 %v1856, %v1861
    %1865 = vrot.lane.b32.xlu0 %v1863, 32
    %v1866 = vpop.permute.xlu0 %1865
    %v1868 = vadd.f32 %v1858, %v1866
    %v1869 = vtanh.pop %v1868
    %1871 = vrot.lane.b32.xlu0 %v1869, 64
    %v1872 = vpop.permute.xlu0 %1871
    %v1874 = vmul.f32 %v1856, %v1872
    %v1875 = vsel %vm582, %v1874, %v1769
    %v1876 = vsel %vm582, %v1868, %v1770
    %1878 = vrot.lane.b32.xlu0 %v1336, 32
    %v1879 = vpop.permute.xlu0 %1878
    %1882 = vrot.lane.b32.xlu0 %v1875, 64
    %v1883 = vpop.permute.xlu0 %1882
    %v1885 = vsel %vm369, %v1879, %v1883
    %v1887 = vsel %vm375, %v1885, 0
    %1889 = vmatprep.subr.mxu0 0.0
    %1890 = vmatpush1.msra.mxu0 %v1657
    %1891 = vmatprep.subr.mxu0 0.0
    %1892 = vmatpush1.msra.mxu0 %v1658
    %1893 = vmatprep.subr.mxu0 0.0
    %1894 = vmatpush1.msra.mxu0 %v1659
    %1895 = vmatprep.subr.mxu0 0.0
    %1896 = vmatpush1.msra.mxu0 %v1660
    %1897 = vmatprep.subr.mxu0 0.0
    %1898 = vmatpush1.msra.mxu0 %v1661
    %1899 = vmatprep.subr.mxu0 0.0
    %1900 = vmatpush1.msra.mxu0 %v1662
    %1901 = vmatprep.subr.mxu0 0.0
    %1902 = vmatpush1.msra.mxu0 %v1663
    %1903 = vmatprep.subr.mxu0 0.0
    %1904 = vmatpush1.msra.mxu0 %v1664
    %1905 = vmatprep.subr.mxu0 0.0
    %1906 = vmatpush1.msra.mxu0 0.0
    %1907 = vmatprep.subr.mxu0 0.0
    %1908 = vmatpush1.msra.mxu0 0.0
    %1909 = vmatprep.subr.mxu0 0.0
    %1910 = vmatpush1.msra.mxu0 0.0
    %1911 = vmatprep.subr.mxu0 0.0
    %1912 = vmatpush1.msra.mxu0 0.0
    %1913 = vmatprep.subr.mxu0 0.0
    %1914 = vmatpush1.msra.mxu0 0.0
    %1915 = vmatprep.subr.mxu0 0.0
    %1916 = vmatpush1.msra.mxu0 0.0
    %1917 = vmatprep.subr.mxu0 0.0
    %1918 = vmatpush1.msra.mxu0 0.0
    %1919 = vmatprep.subr.mxu0 0.0
    %1920 = vmatpush1.msra.mxu0 0.0
    %1921 = vmatprep.subr.mxu0 0.0
    %1922 = vmatpush1.msra.mxu0 0.0
    %1923 = vmatprep.subr.mxu0 0.0
    %1924 = vmatpush1.msra.mxu0 0.0
    %1925 = vmatprep.subr.mxu0 0.0
    %1926 = vmatpush1.msra.mxu0 0.0
    %1927 = vmatprep.subr.mxu0 0.0
    %1928 = vmatpush1.msra.mxu0 0.0
    %1929 = vmatprep.subr.mxu0 0.0
    %1930 = vmatpush1.msra.mxu0 0.0
    %1931 = vmatprep.subr.mxu0 0.0
    %1932 = vmatpush1.msra.mxu0 0.0
    %1933 = vmatprep.subr.mxu0 0.0
    %1934 = vmatpush1.msra.mxu0 0.0
    %1935 = vmatprep.subr.mxu0 0.0
    %1936 = vmatpush1.msra.mxu0 0.0
    %1937 = vmatprep.subr.mxu0 0.0
    %1938 = vmatpush1.msra.mxu0 0.0
    %1939 = vmatprep.subr.mxu0 0.0
    %1940 = vmatpush1.msra.mxu0 0.0
    %1941 = vmatprep.subr.mxu0 0.0
    %1942 = vmatpush1.msra.mxu0 0.0
    %1943 = vmatprep.subr.mxu0 0.0
    %1944 = vmatpush1.msra.mxu0 0.0
    %1945 = vmatprep.subr.mxu0 0.0
    %1946 = vmatpush1.msra.mxu0 0.0
    %1947 = vmatprep.subr.mxu0 0.0
    %1948 = vmatpush1.msra.mxu0 0.0
    %1949 = vmatprep.subr.mxu0 0.0
    %1950 = vmatpush1.msra.mxu0 0.0
    %1951 = vmatprep.subr.mxu0 0.0
    %1952 = vmatpush1.msra.mxu0 0.0
    %1953 = vmatprep.mubr.f32.mxu0 0.0
    %1954 = vmatmul.mubr.f32.gmra.mrb[0].mxu0 %v1887
    %v1955 = vpop.f32.mrb[0].mxu0
    %v1956 = vadd.f32 %v1673, %v1955
    %v1957 = vpop.f32.mrb[0].mxu0
    %1958 = vdwg.mxu0
    %v1959 = vmul.f32 %v1956, 0.5
    %v1960 = vtanh.pop %v1959
    %v1961 = vadd.f32 %v1960, 1.0
    %v1962 = vmul.f32 %v1961, 0.5
    %v1963 = vtanh.pop %v1956
    %v1964 = vmul.f32 %v1962, %v1876
    %1966 = vrot.lane.b32.xlu0 %v1963, 64
    %v1967 = vpop.permute.xlu0 %1966
    %v1969 = vmul.f32 %v1962, %v1967
    %1971 = vrot.lane.b32.xlu0 %v1969, 32
    %v1972 = vpop.permute.xlu0 %1971
    %v1974 = vadd.f32 %v1964, %v1972
    %v1975 = vtanh.pop %v1974
    %1977 = vrot.lane.b32.xlu0 %v1975, 64
    %v1978 = vpop.permute.xlu0 %1977
    %v1980 = vmul.f32 %v1962, %v1978
    %v1981 = vsel %vm689, %v1980, %v1875
    %v1982 = vsel %vm689, %v1974, %v1876
    %1984 = vrot.lane.b32.xlu0 %v1442, 32
    %v1985 = vpop.permute.xlu0 %1984
    %1988 = vrot.lane.b32.xlu0 %v1981, 64
    %v1989 = vpop.permute.xlu0 %1988
    %v1991 = vsel %vm369, %v1985, %v1989
    %v1993 = vsel %vm375, %v1991, 0
    %1995 = vmatprep.subr.mxu0 0.0
    %1996 = vmatpush1.msra.mxu0 %v1657
    %1997 = vmatprep.subr.mxu0 0.0
    %1998 = vmatpush1.msra.mxu0 %v1658
    %1999 = vmatprep.subr.mxu0 0.0
    %2000 = vmatpush1.msra.mxu0 %v1659
    %2001 = vmatprep.subr.mxu0 0.0
    %2002 = vmatpush1.msra.mxu0 %v1660
    %2003 = vmatprep.subr.mxu0 0.0
    %2004 = vmatpush1.msra.mxu0 %v1661
    %2005 = vmatprep.subr.mxu0 0.0
    %2006 = vmatpush1.msra.mxu0 %v1662
    %2007 = vmatprep.subr.mxu0 0.0
    %2008 = vmatpush1.msra.mxu0 %v1663
    %2009 = vmatprep.subr.mxu0 0.0
    %2010 = vmatpush1.msra.mxu0 %v1664
    %2011 = vmatprep.subr.mxu0 0.0
    %2012 = vmatpush1.msra.mxu0 0.0
    %2013 = vmatprep.subr.mxu0 0.0
    %2014 = vmatpush1.msra.mxu0 0.0
    %2015 = vmatprep.subr.mxu0 0.0
    %2016 = vmatpush1.msra.mxu0 0.0
    %2017 = vmatprep.subr.mxu0 0.0
    %2018 = vmatpush1.msra.mxu0 0.0
    %2019 = vmatprep.subr.mxu0 0.0
    %2020 = vmatpush1.msra.mxu0 0.0
    %2021 = vmatprep.subr.mxu0 0.0
    %2022 = vmatpush1.msra.mxu0 0.0
    %2023 = vmatprep.subr.mxu0 0.0
    %2024 = vmatpush1.msra.mxu0 0.0
    %2025 = vmatprep.subr.mxu0 0.0
    %2026 = vmatpush1.msra.mxu0 0.0
    %2027 = vmatprep.subr.mxu0 0.0
    %2028 = vmatpush1.msra.mxu0 0.0
    %2029 = vmatprep.subr.mxu0 0.0
    %2030 = vmatpush1.msra.mxu0 0.0
    %2031 = vmatprep.subr.mxu0 0.0
    %2032 = vmatpush1.msra.mxu0 0.0
    %2033 = vmatprep.subr.mxu0 0.0
    %2034 = vmatpush1.msra.mxu0 0.0
    %2035 = vmatprep.subr.mxu0 0.0
    %2036 = vmatpush1.msra.mxu0 0.0
    %2037 = vmatprep.subr.mxu0 0.0
    %2038 = vmatpush1.msra.mxu0 0.0
    %2039 = vmatprep.subr.mxu0 0.0
    %2040 = vmatpush1.msra.mxu0 0.0
    %2041 = vmatprep.subr.mxu0 0.0
    %2042 = vmatpush1.msra.mxu0 0.0
    %2043 = vmatprep.subr.mxu0 0.0
    %2044 = vmatpush1.msra.mxu0 0.0
    %2045 = vmatprep.subr.mxu0 0.0
    %2046 = vmatpush1.msra.mxu0 0.0
    %2047 = vmatprep.subr.mxu0 0.0
    %2048 = vmatpush1.msra.mxu0 0.0
    %2049 = vmatprep.subr.mxu0 0.0
    %2050 = vmatpush1.msra.mxu0 0.0
    %2051 = vmatprep.subr.mxu0 0.0
    %2052 = vmatpush1.msra.mxu0 0.0
    %2053 = vmatprep.subr.mxu0 0.0
    %2054 = vmatpush1.msra.mxu0 0.0
    %2055 = vmatprep.subr.mxu0 0.0
    %2056 = vmatpush1.msra.mxu0 0.0
    %2057 = vmatprep.subr.mxu0 0.0
    %2058 = vmatpush1.msra.mxu0 0.0
    %2059 = vmatprep.mubr.f32.mxu0 0.0
    %2060 = vmatmul.mubr.f32.gmra.mrb[0].mxu0 %v1993
    %v2061 = vpop.f32.mrb[0].mxu0
    %v2062 = vadd.f32 %v1673, %v2061
    %v2063 = vpop.f32.mrb[0].mxu0
    %2064 = vdwg.mxu0
    %v2065 = vmul.f32 %v2062, 0.5
    %v2066 = vtanh.pop %v2065
    %v2067 = vadd.f32 %v2066, 1.0
    %v2068 = vmul.f32 %v2067, 0.5
    %v2069 = vtanh.pop %v2062
    %v2070 = vmul.f32 %v2068, %v1982
    %2072 = vrot.lane.b32.xlu0 %v2069, 64
    %v2073 = vpop.permute.xlu0 %2072
    %v2075 = vmul.f32 %v2068, %v2073
    %2077 = vrot.lane.b32.xlu0 %v2075, 32
    %v2078 = vpop.permute.xlu0 %2077
    %v2080 = vadd.f32 %v2070, %v2078
    %v2081 = vtanh.pop %v2080
    %2083 = vrot.lane.b32.xlu0 %v2081, 64
    %v2084 = vpop.permute.xlu0 %2083
    %v2086 = vmul.f32 %v2068, %v2084
    %v2087 = vsel %vm796, %v2086, %v1981
    %v2088 = vsel %vm796, %v2080, %v1982
    %2090 = vrot.lane.b32.xlu0 %v1548, 32
    %v2091 = vpop.permute.xlu0 %2090
    %2094 = vrot.lane.b32.xlu0 %v2087, 64
    %v2095 = vpop.permute.xlu0 %2094
    %v2097 = vsel %vm369, %v2091, %v2095
    %v2099 = vsel %vm375, %v2097, 0
    %2101 = vmatprep.subr.mxu0 0.0
    %2102 = vmatpush1.msra.mxu0 %v1657
    %2103 = vmatprep.subr.mxu0 0.0
    %2104 = vmatpush1.msra.mxu0 %v1658
    %2105 = vmatprep.subr.mxu0 0.0
    %2106 = vmatpush1.msra.mxu0 %v1659
    %2107 = vmatprep.subr.mxu0 0.0
    %2108 = vmatpush1.msra.mxu0 %v1660
    %2109 = vmatprep.subr.mxu0 0.0
    %2110 = vmatpush1.msra.mxu0 %v1661
    %2111 = vmatprep.subr.mxu0 0.0
    %2112 = vmatpush1.msra.mxu0 %v1662
    %2113 = vmatprep.subr.mxu0 0.0
    %2114 = vmatpush1.msra.mxu0 %v1663
    %2115 = vmatprep.subr.mxu0 0.0
    %2116 = vmatpush1.msra.mxu0 %v1664
    %2117 = vmatprep.subr.mxu0 0.0
    %2118 = vmatpush1.msra.mxu0 0.0
    %2119 = vmatprep.subr.mxu0 0.0
    %2120 = vmatpush1.msra.mxu0 0.0
    %2121 = vmatprep.subr.mxu0 0.0
    %2122 = vmatpush1.msra.mxu0 0.0
    %2123 = vmatprep.subr.mxu0 0.0
    %2124 = vmatpush1.msra.mxu0 0.0
    %2125 = vmatprep.subr.mxu0 0.0
    %2126 = vmatpush1.msra.mxu0 0.0
    %2127 = vmatprep.subr.mxu0 0.0
    %2128 = vmatpush1.msra.mxu0 0.0
    %2129 = vmatprep.subr.mxu0 0.0
    %2130 = vmatpush1.msra.mxu0 0.0
    %2131 = vmatprep.subr.mxu0 0.0
    %2132 = vmatpush1.msra.mxu0 0.0
    %2133 = vmatprep.subr.mxu0 0.0
    %2134 = vmatpush1.msra.mxu0 0.0
    %2135 = vmatprep.subr.mxu0 0.0
    %2136 = vmatpush1.msra.mxu0 0.0
    %2137 = vmatprep.subr.mxu0 0.0
    %2138 = vmatpush1.msra.mxu0 0.0
    %2139 = vmatprep.subr.mxu0 0.0
    %2140 = vmatpush1.msra.mxu0 0.0
    %2141 = vmatprep.subr.mxu0 0.0
    %2142 = vmatpush1.msra.mxu0 0.0
    %2143 = vmatprep.subr.mxu0 0.0
    %2144 = vmatpush1.msra.mxu0 0.0
    %2145 = vmatprep.subr.mxu0 0.0
    %2146 = vmatpush1.msra.mxu0 0.0
    %2147 = vmatprep.subr.mxu0 0.0
    %2148 = vmatpush1.msra.mxu0 0.0
    %2149 = vmatprep.subr.mxu0 0.0
    %2150 = vmatpush1.msra.mxu0 0.0
    %2151 = vmatprep.subr.mxu0 0.0
    %2152 = vmatpush1.msra.mxu0 0.0
    %2153 = vmatprep.subr.mxu0 0.0
    %2154 = vmatpush1.msra.mxu0 0.0
    %2155 = vmatprep.subr.mxu0 0.0
    %2156 = vmatpush1.msra.mxu0 0.0
    %2157 = vmatprep.subr.mxu0 0.0
    %2158 = vmatpush1.msra.mxu0 0.0
    %2159 = vmatprep.subr.mxu0 0.0
    %2160 = vmatpush1.msra.mxu0 0.0
    %2161 = vmatprep.subr.mxu0 0.0
    %2162 = vmatpush1.msra.mxu0 0.0
    %2163 = vmatprep.subr.mxu0 0.0
    %2164 = vmatpush1.msra.mxu0 0.0
    %2165 = vmatprep.mubr.f32.mxu0 0.0
    %2166 = vmatmul.mubr.f32.gmra.mrb[0].mxu0 %v2099
    %v2167 = vpop.f32.mrb[0].mxu0
    %v2168 = vadd.f32 %v1673, %v2167
    %v2169 = vpop.f32.mrb[0].mxu0
    %2170 = vdwg.mxu0
    %v2171 = vmul.f32 %v2168, 0.5
    %v2172 = vtanh.pop %v2171
    %v2173 = vadd.f32 %v2172, 1.0
    %v2174 = vmul.f32 %v2173, 0.5
    %v2175 = vtanh.pop %v2168
    %v2176 = vmul.f32 %v2174, %v2088
    %2178 = vrot.lane.b32.xlu0 %v2175, 64
    %v2179 = vpop.permute.xlu0 %2178
    %v2181 = vmul.f32 %v2174, %v2179
    %2183 = vrot.lane.b32.xlu0 %v2181, 32
    %v2184 = vpop.permute.xlu0 %2183
    %v2186 = vadd.f32 %v2176, %v2184
    %v2187 = vtanh.pop %v2186
    %2189 = vrot.lane.b32.xlu0 %v2187, 64
    %v2190 = vpop.permute.xlu0 %2189
    %v2192 = vmul.f32 %v2174, %v2190
    %v2193 = vsel %vm903, %v2192, %v2087
    %v2194 = vsel %vm903, %v2186, %v2088
    %2196 = vrot.lane.b32.xlu0 %v1654, 32
    %v2197 = vpop.permute.xlu0 %2196
    %2200 = vrot.lane.b32.xlu0 %v2193, 64
    %v2201 = vpop.permute.xlu0 %2200
    %v2203 = vsel %vm369, %v2197, %v2201
    %v2205 = vsel %vm375, %v2203, 0
    %2207 = vmatprep.subr.mxu0 0.0
    %2208 = vmatpush1.msra.mxu0 %v1657
    %2209 = vmatprep.subr.mxu0 0.0
    %2210 = vmatpush1.msra.mxu0 %v1658
    %2211 = vmatprep.subr.mxu0 0.0
    %2212 = vmatpush1.msra.mxu0 %v1659
    %2213 = vmatprep.subr.mxu0 0.0
    %2214 = vmatpush1.msra.mxu0 %v1660
    %2215 = vmatprep.subr.mxu0 0.0
    %2216 = vmatpush1.msra.mxu0 %v1661
    %2217 = vmatprep.subr.mxu0 0.0
    %2218 = vmatpush1.msra.mxu0 %v1662
    %2219 = vmatprep.subr.mxu0 0.0
    %2220 = vmatpush1.msra.mxu0 %v1663
    %2221 = vmatprep.subr.mxu0 0.0
    %2222 = vmatpush1.msra.mxu0 %v1664
    %2223 = vmatprep.subr.mxu0 0.0
    %2224 = vmatpush1.msra.mxu0 0.0
    %2225 = vmatprep.subr.mxu0 0.0
    %2226 = vmatpush1.msra.mxu0 0.0
    %2227 = vmatprep.subr.mxu0 0.0
    %2228 = vmatpush1.msra.mxu0 0.0
    %2229 = vmatprep.subr.mxu0 0.0
    %2230 = vmatpush1.msra.mxu0 0.0
    %2231 = vmatprep.subr.mxu0 0.0
    %2232 = vmatpush1.msra.mxu0 0.0
    %2233 = vmatprep.subr.mxu0 0.0
    %2234 = vmatpush1.msra.mxu0 0.0
    %2235 = vmatprep.subr.mxu0 0.0
    %2236 = vmatpush1.msra.mxu0 0.0
    %2237 = vmatprep.subr.mxu0 0.0
    %2238 = vmatpush1.msra.mxu0 0.0
    %2239 = vmatprep.subr.mxu0 0.0
    %2240 = vmatpush1.msra.mxu0 0.0
    %2241 = vmatprep.subr.mxu0 0.0
    %2242 = vmatpush1.msra.mxu0 0.0
    %2243 = vmatprep.subr.mxu0 0.0
    %2244 = vmatpush1.msra.mxu0 0.0
    %2245 = vmatprep.subr.mxu0 0.0
    %2246 = vmatpush1.msra.mxu0 0.0
    %2247 = vmatprep.subr.mxu0 0.0
    %2248 = vmatpush1.msra.mxu0 0.0
    %2249 = vmatprep.subr.mxu0 0.0
    %2250 = vmatpush1.msra.mxu0 0.0
    %2251 = vmatprep.subr.mxu0 0.0
    %2252 = vmatpush1.msra.mxu0 0.0
    %2253 = vmatprep.subr.mxu0 0.0
    %2254 = vmatpush1.msra.mxu0 0.0
    %2255 = vmatprep.subr.mxu0 0.0
    %2256 = vmatpush1.msra.mxu0 0.0
    %2257 = vmatprep.subr.mxu0 0.0
    %2258 = vmatpush1.msra.mxu0 0.0
    %2259 = vmatprep.subr.mxu0 0.0
    %2260 = vmatpush1.msra.mxu0 0.0
    %2261 = vmatprep.subr.mxu0 0.0
    %2262 = vmatpush1.msra.mxu0 0.0
    %2263 = vmatprep.subr.mxu0 0.0
    %2264 = vmatpush1.msra.mxu0 0.0
    %2265 = vmatprep.subr.mxu0 0.0
    %2266 = vmatpush1.msra.mxu0 0.0
    %2267 = vmatprep.subr.mxu0 0.0
    %2268 = vmatpush1.msra.mxu0 0.0
    %2269 = vmatprep.subr.mxu0 0.0
    %2270 = vmatpush1.msra.mxu0 0.0
    %2271 = vmatprep.mubr.f32.mxu0 0.0
    %2272 = vmatmul.mubr.f32.gmra.mrb[0].mxu0 %v2205
    %v2273 = vpop.f32.mrb[0].mxu0
    %v2274 = vadd.f32 %v1673, %v2273
    %v2275 = vpop.f32.mrb[0].mxu0
    %2276 = vdwg.mxu0
    %v2277 = vmul.f32 %v2274, 0.5
    %v2278 = vtanh.pop %v2277
    %v2279 = vadd.f32 %v2278, 1.0
    %v2280 = vmul.f32 %v2279, 0.5
    %v2281 = vtanh.pop %v2274
    %v2282 = vmul.f32 %v2280, %v2194
    %2284 = vrot.lane.b32.xlu0 %v2281, 64
    %v2285 = vpop.permute.xlu0 %2284
    %v2287 = vmul.f32 %v2280, %v2285
    %2289 = vrot.lane.b32.xlu0 %v2287, 32
    %v2290 = vpop.permute.xlu0 %2289
    %v2292 = vadd.f32 %v2282, %v2290
    %v2293 = vtanh.pop %v2292
    %2295 = vrot.lane.b32.xlu0 %v2293, 64
    %v2296 = vpop.permute.xlu0 %2295
    %v2298 = vmul.f32 %v2280, %v2296
    %v2299 = vsel %vm1010, %v2298, %v2193
    %v2300 = vsel %vm1010, %v2292, %v2194
    %v2301 = vld [vmem:[#allocation2 + $0xc0] sm:$0xff]
    %v2302 = vld [vmem:[#allocation2 + $0xc8] sm:$0xff]
    %v2303 = vld [vmem:[#allocation2 + $0xd0] sm:$0xff]
    %v2304 = vld [vmem:[#allocation2 + $0xd8] sm:$0xff]
    %v2305 = vld [vmem:[#allocation2 + $0xe0] sm:$0xff]
    %v2306 = vld [vmem:[#allocation2 + $0xe8] sm:$0xff]
    %v2307 = vld [vmem:[#allocation2 + $0xf0] sm:$0xff]
    %v2308 = vld [vmem:[#allocation2 + $0xf8] sm:$0xff]
    %2310 = vrot.lane.b32.xlu0 %v1768, 32
    %v2311 = vpop.permute.xlu0 %2310
    %v2313 = vsel %vm369, %v2311, 0.0
    %v2314 = vlaneseq
    %v2315 = vshrl.u32 %v2314, 7
    %v2316 = vsub.s32 3, %v2315
    %v2317 = vrot.slane %v360, %v2316
    %v2319 = vsel %vm375, %v2313, 0
    %2321 = vmatprep.subr.mxu0 0.0
    %2322 = vmatpush1.msra.mxu0 %v2301
    %2323 = vmatprep.subr.mxu0 0.0
    %2324 = vmatpush1.msra.mxu0 %v2302
    %2325 = vmatprep.subr.mxu0 0.0
    %2326 = vmatpush1.msra.mxu0 %v2303
    %2327 = vmatprep.subr.mxu0 0.0
    %2328 = vmatpush1.msra.mxu0 %v2304
    %2329 = vmatprep.subr.mxu0 0.0
    %2330 = vmatpush1.msra.mxu0 %v2305
    %2331 = vmatprep.subr.mxu0 0.0
    %2332 = vmatpush1.msra.mxu0 %v2306
    %2333 = vmatprep.subr.mxu0 0.0
    %2334 = vmatpush1.msra.mxu0 %v2307
    %2335 = vmatprep.subr.mxu0 0.0
    %2336 = vmatpush1.msra.mxu0 %v2308
    %2337 = vmatprep.subr.mxu0 0.0
    %2338 = vmatpush1.msra.mxu0 0.0
    %2339 = vmatprep.subr.mxu0 0.0
    %2340 = vmatpush1.msra.mxu0 0.0
    %2341 = vmatprep.subr.mxu0 0.0
    %2342 = vmatpush1.msra.mxu0 0.0
    %2343 = vmatprep.subr.mxu0 0.0
    %2344 = vmatpush1.msra.mxu0 0.0
    %2345 = vmatprep.subr.mxu0 0.0
    %2346 = vmatpush1.msra.mxu0 0.0
    %2347 = vmatprep.subr.mxu0 0.0
    %2348 = vmatpush1.msra.mxu0 0.0
    %2349 = vmatprep.subr.mxu0 0.0
    %2350 = vmatpush1.msra.mxu0 0.0
    %2351 = vmatprep.subr.mxu0 0.0
    %2352 = vmatpush1.msra.mxu0 0.0
    %2353 = vmatprep.subr.mxu0 0.0
    %2354 = vmatpush1.msra.mxu0 0.0
    %2355 = vmatprep.subr.mxu0 0.0
    %2356 = vmatpush1.msra.mxu0 0.0
    %2357 = vmatprep.subr.mxu0 0.0
    %2358 = vmatpush1.msra.mxu0 0.0
    %2359 = vmatprep.subr.mxu0 0.0
    %2360 = vmatpush1.msra.mxu0 0.0
    %2361 = vmatprep.subr.mxu0 0.0
    %2362 = vmatpush1.msra.mxu0 0.0
    %2363 = vmatprep.subr.mxu0 0.0
    %2364 = vmatpush1.msra.mxu0 0.0
    %2365 = vmatprep.subr.mxu0 0.0
    %2366 = vmatpush1.msra.mxu0 0.0
    %2367 = vmatprep.subr.mxu0 0.0
    %2368 = vmatpush1.msra.mxu0 0.0
    %2369 = vmatprep.subr.mxu0 0.0
    %2370 = vmatpush1.msra.mxu0 0.0
    %2371 = vmatprep.subr.mxu0 0.0
    %2372 = vmatpush1.msra.mxu0 0.0
    %2373 = vmatprep.subr.mxu0 0.0
    %2374 = vmatpush1.msra.mxu0 0.0
    %2375 = vmatprep.subr.mxu0 0.0
    %2376 = vmatpush1.msra.mxu0 0.0
    %2377 = vmatprep.subr.mxu0 0.0
    %2378 = vmatpush1.msra.mxu0 0.0
    %2379 = vmatprep.subr.mxu0 0.0
    %2380 = vmatpush1.msra.mxu0 0.0
    %2381 = vmatprep.subr.mxu0 0.0
    %2382 = vmatpush1.msra.mxu0 0.0
    %2383 = vmatprep.subr.mxu0 0.0
    %2384 = vmatpush1.msra.mxu0 0.0
    %2385 = vmatprep.mubr.f32.mxu0 0.0
    %2386 = vmatmul.mubr.f32.gmra.mrb[0].mxu0 %v2319
    %v2387 = vpop.f32.mrb[0].mxu0
    %v2388 = vadd.f32 %v2317, %v2387
    %v2389 = vpop.f32.mrb[0].mxu0
    %2390 = vdwg.mxu0
    %v2391 = vmul.f32 %v2388, 0.5
    %v2392 = vtanh.pop %v2391
    %v2393 = vadd.f32 %v2392, 1.0
    %v2394 = vmul.f32 %v2393, 0.5
    %v2395 = vtanh.pop %v2388
    %v2396 = vmul.f32 %v2394, 0.0
    %2398 = vrot.lane.b32.xlu0 %v2395, 64
    %v2399 = vpop.permute.xlu0 %2398
    %v2401 = vmul.f32 %v2394, %v2399
    %2403 = vrot.lane.b32.xlu0 %v2401, 32
    %v2404 = vpop.permute.xlu0 %2403
    %v2406 = vadd.f32 %v2396, %v2404
    %v2407 = vtanh.pop %v2406
    %2409 = vrot.lane.b32.xlu0 %v2407, 64
    %v2410 = vpop.permute.xlu0 %2409
    %v2412 = vmul.f32 %v2394, %v2410
    %v2413 = vsel %vm475, %v2412, 0.0
    %v2414 = vsel %vm475, %v2406, 0.0
    %2416 = vrot.lane.b32.xlu0 %v1874, 32
    %v2417 = vpop.permute.xlu0 %2416
    %2420 = vrot.lane.b32.xlu0 %v2413, 64
    %v2421 = vpop.permute.xlu0 %2420
    %v2423 = vsel %vm369, %v2417, %v2421
    %v2425 = vsel %vm375, %v2423, 0
    %2427 = vmatprep.subr.mxu0 0.0
    %2428 = vmatpush1.msra.mxu0 %v2301
    %2429 = vmatprep.subr.mxu0 0.0
    %2430 = vmatpush1.msra.mxu0 %v2302
    %2431 = vmatprep.subr.mxu0 0.0
    %2432 = vmatpush1.msra.mxu0 %v2303
    %2433 = vmatprep.subr.mxu0 0.0
    %2434 = vmatpush1.msra.mxu0 %v2304
    %2435 = vmatprep.subr.mxu0 0.0
    %2436 = vmatpush1.msra.mxu0 %v2305
    %2437 = vmatprep.subr.mxu0 0.0
    %2438 = vmatpush1.msra.mxu0 %v2306
    %2439 = vmatprep.subr.mxu0 0.0
    %2440 = vmatpush1.msra.mxu0 %v2307
    %2441 = vmatprep.subr.mxu0 0.0
    %2442 = vmatpush1.msra.mxu0 %v2308
    %2443 = vmatprep.subr.mxu0 0.0
    %2444 = vmatpush1.msra.mxu0 0.0
    %2445 = vmatprep.subr.mxu0 0.0
    %2446 = vmatpush1.msra.mxu0 0.0
    %2447 = vmatprep.subr.mxu0 0.0
    %2448 = vmatpush1.msra.mxu0 0.0
    %2449 = vmatprep.subr.mxu0 0.0
    %2450 = vmatpush1.msra.mxu0 0.0
    %2451 = vmatprep.subr.mxu0 0.0
    %2452 = vmatpush1.msra.mxu0 0.0
    %2453 = vmatprep.subr.mxu0 0.0
    %2454 = vmatpush1.msra.mxu0 0.0
    %2455 = vmatprep.subr.mxu0 0.0
    %2456 = vmatpush1.msra.mxu0 0.0
    %2457 = vmatprep.subr.mxu0 0.0
    %2458 = vmatpush1.msra.mxu0 0.0
    %2459 = vmatprep.subr.mxu0 0.0
    %2460 = vmatpush1.msra.mxu0 0.0
    %2461 = vmatprep.subr.mxu0 0.0
    %2462 = vmatpush1.msra.mxu0 0.0
    %2463 = vmatprep.subr.mxu0 0.0
    %2464 = vmatpush1.msra.mxu0 0.0
    %2465 = vmatprep.subr.mxu0 0.0
    %2466 = vmatpush1.msra.mxu0 0.0
    %2467 = vmatprep.subr.mxu0 0.0
    %2468 = vmatpush1.msra.mxu0 0.0
    %2469 = vmatprep.subr.mxu0 0.0
    %2470 = vmatpush1.msra.mxu0 0.0
    %2471 = vmatprep.subr.mxu0 0.0
    %2472 = vmatpush1.msra.mxu0 0.0
    %2473 = vmatprep.subr.mxu0 0.0
    %2474 = vmatpush1.msra.mxu0 0.0
    %2475 = vmatprep.subr.mxu0 0.0
    %2476 = vmatpush1.msra.mxu0 0.0
    %2477 = vmatprep.subr.mxu0 0.0
    %2478 = vmatpush1.msra.mxu0 0.0
    %2479 = vmatprep.subr.mxu0 0.0
    %2480 = vmatpush1.msra.mxu0 0.0
    %2481 = vmatprep.subr.mxu0 0.0
    %2482 = vmatpush1.msra.mxu0 0.0
    %2483 = vmatprep.subr.mxu0 0.0
    %2484 = vmatpush1.msra.mxu0 0.0
    %2485 = vmatprep.subr.mxu0 0.0
    %2486 = vmatpush1.msra.mxu0 0.0
    %2487 = vmatprep.subr.mxu0 0.0
    %2488 = vmatpush1.msra.mxu0 0.0
    %2489 = vmatprep.subr.mxu0 0.0
    %2490 = vmatpush1.msra.mxu0 0.0
    %2491 = vmatprep.mubr.f32.mxu0 0.0
    %2492 = vmatmul.mubr.f32.gmra.mrb[0].mxu0 %v2425
    %v2493 = vpop.f32.mrb[0].mxu0
    %v2494 = vadd.f32 %v2317, %v2493
    %v2495 = vpop.f32.mrb[0].mxu0
    %2496 = vdwg.mxu0
    %v2497 = vmul.f32 %v2494, 0.5
    %v2498 = vtanh.pop %v2497
    %v2499 = vadd.f32 %v2498, 1.0
    %v2500 = vmul.f32 %v2499, 0.5
    %v2501 = vtanh.pop %v2494
    %v2502 = vmul.f32 %v2500, %v2414
    %2504 = vrot.lane.b32.xlu0 %v2501, 64
    %v2505 = vpop.permute.xlu0 %2504
    %v2507 = vmul.f32 %v2500, %v2505
    %2509 = vrot.lane.b32.xlu0 %v2507, 32
    %v2510 = vpop.permute.xlu0 %2509
    %v2512 = vadd.f32 %v2502, %v2510
    %v2513 = vtanh.pop %v2512
    %2515 = vrot.lane.b32.xlu0 %v2513, 64
    %v2516 = vpop.permute.xlu0 %2515
    %v2518 = vmul.f32 %v2500, %v2516
    %v2519 = vsel %vm582, %v2518, %v2413
    %v2520 = vsel %vm582, %v2512, %v2414
    %2522 = vrot.lane.b32.xlu0 %v1980, 32
    %v2523 = vpop.permute.xlu0 %2522
    %2526 = vrot.lane.b32.xlu0 %v2519, 64
    %v2527 = vpop.permute.xlu0 %2526
    %v2529 = vsel %vm369, %v2523, %v2527
    %v2531 = vsel %vm375, %v2529, 0
    %2533 = vmatprep.subr.mxu0 0.0
    %2534 = vmatpush1.msra.mxu0 %v2301
    %2535 = vmatprep.subr.mxu0 0.0
    %2536 = vmatpush1.msra.mxu0 %v2302
    %2537 = vmatprep.subr.mxu0 0.0
    %2538 = vmatpush1.msra.mxu0 %v2303
    %2539 = vmatprep.subr.mxu0 0.0
    %2540 = vmatpush1.msra.mxu0 %v2304
    %2541 = vmatprep.subr.mxu0 0.0
    %2542 = vmatpush1.msra.mxu0 %v2305
    %2543 = vmatprep.subr.mxu0 0.0
    %2544 = vmatpush1.msra.mxu0 %v2306
    %2545 = vmatprep.subr.mxu0 0.0
    %2546 = vmatpush1.msra.mxu0 %v2307
    %2547 = vmatprep.subr.mxu0 0.0
    %2548 = vmatpush1.msra.mxu0 %v2308
    %2549 = vmatprep.subr.mxu0 0.0
    %2550 = vmatpush1.msra.mxu0 0.0
    %2551 = vmatprep.subr.mxu0 0.0
    %2552 = vmatpush1.msra.mxu0 0.0
    %2553 = vmatprep.subr.mxu0 0.0
    %2554 = vmatpush1.msra.mxu0 0.0
    %2555 = vmatprep.subr.mxu0 0.0
    %2556 = vmatpush1.msra.mxu0 0.0
    %2557 = vmatprep.subr.mxu0 0.0
    %2558 = vmatpush1.msra.mxu0 0.0
    %2559 = vmatprep.subr.mxu0 0.0
    %2560 = vmatpush1.msra.mxu0 0.0
    %2561 = vmatprep.subr.mxu0 0.0
    %2562 = vmatpush1.msra.mxu0 0.0
    %2563 = vmatprep.subr.mxu0 0.0
    %2564 = vmatpush1.msra.mxu0 0.0
    %2565 = vmatprep.subr.mxu0 0.0
    %2566 = vmatpush1.msra.mxu0 0.0
    %2567 = vmatprep.subr.mxu0 0.0
    %2568 = vmatpush1.msra.mxu0 0.0
    %2569 = vmatprep.subr.mxu0 0.0
    %2570 = vmatpush1.msra.mxu0 0.0
    %2571 = vmatprep.subr.mxu0 0.0
    %2572 = vmatpush1.msra.mxu0 0.0
    %2573 = vmatprep.subr.mxu0 0.0
    %2574 = vmatpush1.msra.mxu0 0.0
    %2575 = vmatprep.subr.mxu0 0.0
    %2576 = vmatpush1.msra.mxu0 0.0
    %2577 = vmatprep.subr.mxu0 0.0
    %2578 = vmatpush1.msra.mxu0 0.0
    %2579 = vmatprep.subr.mxu0 0.0
    %2580 = vmatpush1.msra.mxu0 0.0
    %2581 = vmatprep.subr.mxu0 0.0
    %2582 = vmatpush1.msra.mxu0 0.0
    %2583 = vmatprep.subr.mxu0 0.0
    %2584 = vmatpush1.msra.mxu0 0.0
    %2585 = vmatprep.subr.mxu0 0.0
    %2586 = vmatpush1.msra.mxu0 0.0
    %2587 = vmatprep.subr.mxu0 0.0
    %2588 = vmatpush1.msra.mxu0 0.0
    %2589 = vmatprep.subr.mxu0 0.0
    %2590 = vmatpush1.msra.mxu0 0.0
    %2591 = vmatprep.subr.mxu0 0.0
    %2592 = vmatpush1.msra.mxu0 0.0
    %2593 = vmatprep.subr.mxu0 0.0
    %2594 = vmatpush1.msra.mxu0 0.0
    %2595 = vmatprep.subr.mxu0 0.0
    %2596 = vmatpush1.msra.mxu0 0.0
    %2597 = vmatprep.mubr.f32.mxu0 0.0
    %2598 = vmatmul.mubr.f32.gmra.mrb[0].mxu0 %v2531
    %v2599 = vpop.f32.mrb[0].mxu0
    %v2600 = vadd.f32 %v2317, %v2599
    %v2601 = vpop.f32.mrb[0].mxu0
    %2602 = vdwg.mxu0
    %v2603 = vmul.f32 %v2600, 0.5
    %v2604 = vtanh.pop %v2603
    %v2605 = vadd.f32 %v2604, 1.0
    %v2606 = vmul.f32 %v2605, 0.5
    %v2607 = vtanh.pop %v2600
    %v2608 = vmul.f32 %v2606, %v2520
    %2610 = vrot.lane.b32.xlu0 %v2607, 64
    %v2611 = vpop.permute.xlu0 %2610
    %v2613 = vmul.f32 %v2606, %v2611
    %2615 = vrot.lane.b32.xlu0 %v2613, 32
    %v2616 = vpop.permute.xlu0 %2615
    %v2618 = vadd.f32 %v2608, %v2616
    %v2619 = vtanh.pop %v2618
    %2621 = vrot.lane.b32.xlu0 %v2619, 64
    %v2622 = vpop.permute.xlu0 %2621
    %v2624 = vmul.f32 %v2606, %v2622
    %v2625 = vsel %vm689, %v2624, %v2519
    %v2626 = vsel %vm689, %v2618, %v2520
    %2628 = vrot.lane.b32.xlu0 %v2086, 32
    %v2629 = vpop.permute.xlu0 %2628
    %2632 = vrot.lane.b32.xlu0 %v2625, 64
    %v2633 = vpop.permute.xlu0 %2632
    %v2635 = vsel %vm369, %v2629, %v2633
    %v2637 = vsel %vm375, %v2635, 0
    %2639 = vmatprep.subr.mxu0 0.0
    %2640 = vmatpush1.msra.mxu0 %v2301
    %2641 = vmatprep.subr.mxu0 0.0
    %2642 = vmatpush1.msra.mxu0 %v2302
    %2643 = vmatprep.subr.mxu0 0.0
    %2644 = vmatpush1.msra.mxu0 %v2303
    %2645 = vmatprep.subr.mxu0 0.0
    %2646 = vmatpush1.msra.mxu0 %v2304
    %2647 = vmatprep.subr.mxu0 0.0
    %2648 = vmatpush1.msra.mxu0 %v2305
    %2649 = vmatprep.subr.mxu0 0.0
    %2650 = vmatpush1.msra.mxu0 %v2306
    %2651 = vmatprep.subr.mxu0 0.0
    %2652 = vmatpush1.msra.mxu0 %v2307
    %2653 = vmatprep.subr.mxu0 0.0
    %2654 = vmatpush1.msra.mxu0 %v2308
    %2655 = vmatprep.subr.mxu0 0.0
    %2656 = vmatpush1.msra.mxu0 0.0
    %2657 = vmatprep.subr.mxu0 0.0
    %2658 = vmatpush1.msra.mxu0 0.0
    %2659 = vmatprep.subr.mxu0 0.0
    %2660 = vmatpush1.msra.mxu0 0.0
    %2661 = vmatprep.subr.mxu0 0.0
    %2662 = vmatpush1.msra.mxu0 0.0
    %2663 = vmatprep.subr.mxu0 0.0
    %2664 = vmatpush1.msra.mxu0 0.0
    %2665 = vmatprep.subr.mxu0 0.0
    %2666 = vmatpush1.msra.mxu0 0.0
    %2667 = vmatprep.subr.mxu0 0.0
    %2668 = vmatpush1.msra.mxu0 0.0
    %2669 = vmatprep.subr.mxu0 0.0
    %2670 = vmatpush1.msra.mxu0 0.0
    %2671 = vmatprep.subr.mxu0 0.0
    %2672 = vmatpush1.msra.mxu0 0.0
    %2673 = vmatprep.subr.mxu0 0.0
    %2674 = vmatpush1.msra.mxu0 0.0
    %2675 = vmatprep.subr.mxu0 0.0
    %2676 = vmatpush1.msra.mxu0 0.0
    %2677 = vmatprep.subr.mxu0 0.0
    %2678 = vmatpush1.msra.mxu0 0.0
    %2679 = vmatprep.subr.mxu0 0.0
    %2680 = vmatpush1.msra.mxu0 0.0
    %2681 = vmatprep.subr.mxu0 0.0
    %2682 = vmatpush1.msra.mxu0 0.0
    %2683 = vmatprep.subr.mxu0 0.0
    %2684 = vmatpush1.msra.mxu0 0.0
    %2685 = vmatprep.subr.mxu0 0.0
    %2686 = vmatpush1.msra.mxu0 0.0
    %2687 = vmatprep.subr.mxu0 0.0
    %2688 = vmatpush1.msra.mxu0 0.0
    %2689 = vmatprep.subr.mxu0 0.0
    %2690 = vmatpush1.msra.mxu0 0.0
    %2691 = vmatprep.subr.mxu0 0.0
    %2692 = vmatpush1.msra.mxu0 0.0
    %2693 = vmatprep.subr.mxu0 0.0
    %2694 = vmatpush1.msra.mxu0 0.0
    %2695 = vmatprep.subr.mxu0 0.0
    %2696 = vmatpush1.msra.mxu0 0.0
    %2697 = vmatprep.subr.mxu0 0.0
    %2698 = vmatpush1.msra.mxu0 0.0
    %2699 = vmatprep.subr.mxu0 0.0
    %2700 = vmatpush1.msra.mxu0 0.0
    %2701 = vmatprep.subr.mxu0 0.0
    %2702 = vmatpush1.msra.mxu0 0.0
    %2703 = vmatprep.mubr.f32.mxu0 0.0
    %2704 = vmatmul.mubr.f32.gmra.mrb[0].mxu0 %v2637
    %v2705 = vpop.f32.mrb[0].mxu0
    %v2706 = vadd.f32 %v2317, %v2705
    %v2707 = vpop.f32.mrb[0].mxu0
    %2708 = vdwg.mxu0
    %v2709 = vmul.f32 %v2706, 0.5
    %v2710 = vtanh.pop %v2709
    %v2711 = vadd.f32 %v2710, 1.0
    %v2712 = vmul.f32 %v2711, 0.5
    %v2713 = vtanh.pop %v2706
    %v2714 = vmul.f32 %v2712, %v2626
    %2716 = vrot.lane.b32.xlu0 %v2713, 64
    %v2717 = vpop.permute.xlu0 %2716
    %v2719 = vmul.f32 %v2712, %v2717
    %2721 = vrot.lane.b32.xlu0 %v2719, 32
    %v2722 = vpop.permute.xlu0 %2721
    %v2724 = vadd.f32 %v2714, %v2722
    %v2725 = vtanh.pop %v2724
    %2727 = vrot.lane.b32.xlu0 %v2725, 64
    %v2728 = vpop.permute.xlu0 %2727
    %v2730 = vmul.f32 %v2712, %v2728
    %v2731 = vsel %vm796, %v2730, %v2625
    %v2732 = vsel %vm796, %v2724, %v2626
    %2734 = vrot.lane.b32.xlu0 %v2192, 32
    %v2735 = vpop.permute.xlu0 %2734
    %2738 = vrot.lane.b32.xlu0 %v2731, 64
    %v2739 = vpop.permute.xlu0 %2738
    %v2741 = vsel %vm369, %v2735, %v2739
    %v2743 = vsel %vm375, %v2741, 0
    %2745 = vmatprep.subr.mxu0 0.0
    %2746 = vmatpush1.msra.mxu0 %v2301
    %2747 = vmatprep.subr.mxu0 0.0
    %2748 = vmatpush1.msra.mxu0 %v2302
    %2749 = vmatprep.subr.mxu0 0.0
    %2750 = vmatpush1.msra.mxu0 %v2303
    %2751 = vmatprep.subr.mxu0 0.0
    %2752 = vmatpush1.msra.mxu0 %v2304
    %2753 = vmatprep.subr.mxu0 0.0
    %2754 = vmatpush1.msra.mxu0 %v2305
    %2755 = vmatprep.subr.mxu0 0.0
    %2756 = vmatpush1.msra.mxu0 %v2306
    %2757 = vmatprep.subr.mxu0 0.0
    %2758 = vmatpush1.msra.mxu0 %v2307
    %2759 = vmatprep.subr.mxu0 0.0
    %2760 = vmatpush1.msra.mxu0 %v2308
    %2761 = vmatprep.subr.mxu0 0.0
    %2762 = vmatpush1.msra.mxu0 0.0
    %2763 = vmatprep.subr.mxu0 0.0
    %2764 = vmatpush1.msra.mxu0 0.0
    %2765 = vmatprep.subr.mxu0 0.0
    %2766 = vmatpush1.msra.mxu0 0.0
    %2767 = vmatprep.subr.mxu0 0.0
    %2768 = vmatpush1.msra.mxu0 0.0
    %2769 = vmatprep.subr.mxu0 0.0
    %2770 = vmatpush1.msra.mxu0 0.0
    %2771 = vmatprep.subr.mxu0 0.0
    %2772 = vmatpush1.msra.mxu0 0.0
    %2773 = vmatprep.subr.mxu0 0.0
    %2774 = vmatpush1.msra.mxu0 0.0
    %2775 = vmatprep.subr.mxu0 0.0
    %2776 = vmatpush1.msra.mxu0 0.0
    %2777 = vmatprep.subr.mxu0 0.0
    %2778 = vmatpush1.msra.mxu0 0.0
    %2779 = vmatprep.subr.mxu0 0.0
    %2780 = vmatpush1.msra.mxu0 0.0
    %2781 = vmatprep.subr.mxu0 0.0
    %2782 = vmatpush1.msra.mxu0 0.0
    %2783 = vmatprep.subr.mxu0 0.0
    %2784 = vmatpush1.msra.mxu0 0.0
    %2785 = vmatprep.subr.mxu0 0.0
    %2786 = vmatpush1.msra.mxu0 0.0
    %2787 = vmatprep.subr.mxu0 0.0
    %2788 = vmatpush1.msra.mxu0 0.0
    %2789 = vmatprep.subr.mxu0 0.0
    %2790 = vmatpush1.msra.mxu0 0.0
    %2791 = vmatprep.subr.mxu0 0.0
    %2792 = vmatpush1.msra.mxu0 0.0
    %2793 = vmatprep.subr.mxu0 0.0
    %2794 = vmatpush1.msra.mxu0 0.0
    %2795 = vmatprep.subr.mxu0 0.0
    %2796 = vmatpush1.msra.mxu0 0.0
    %2797 = vmatprep.subr.mxu0 0.0
    %2798 = vmatpush1.msra.mxu0 0.0
    %2799 = vmatprep.subr.mxu0 0.0
    %2800 = vmatpush1.msra.mxu0 0.0
    %2801 = vmatprep.subr.mxu0 0.0
    %2802 = vmatpush1.msra.mxu0 0.0
    %2803 = vmatprep.subr.mxu0 0.0
    %2804 = vmatpush1.msra.mxu0 0.0
    %2805 = vmatprep.subr.mxu0 0.0
    %2806 = vmatpush1.msra.mxu0 0.0
    %2807 = vmatprep.subr.mxu0 0.0
    %2808 = vmatpush1.msra.mxu0 0.0
    %2809 = vmatprep.mubr.f32.mxu0 0.0
    %2810 = vmatmul.mubr.f32.gmra.mrb[0].mxu0 %v2743
    %v2811 = vpop.f32.mrb[0].mxu0
    %v2812 = vadd.f32 %v2317, %v2811
    %v2813 = vpop.f32.mrb[0].mxu0
    %2814 = vdwg.mxu0
    %v2815 = vmul.f32 %v2812, 0.5
    %v2816 = vtanh.pop %v2815
    %v2817 = vadd.f32 %v2816, 1.0
    %v2818 = vmul.f32 %v2817, 0.5
    %v2819 = vtanh.pop %v2812
    %v2820 = vmul.f32 %v2818, %v2732
    %2822 = vrot.lane.b32.xlu0 %v2819, 64
    %v2823 = vpop.permute.xlu0 %2822
    %v2825 = vmul.f32 %v2818, %v2823
    %2827 = vrot.lane.b32.xlu0 %v2825, 32
    %v2828 = vpop.permute.xlu0 %2827
    %v2830 = vadd.f32 %v2820, %v2828
    %v2831 = vtanh.pop %v2830
    %2833 = vrot.lane.b32.xlu0 %v2831, 64
    %v2834 = vpop.permute.xlu0 %2833
    %v2836 = vmul.f32 %v2818, %v2834
    %v2837 = vsel %vm903, %v2836, %v2731
    %v2838 = vsel %vm903, %v2830, %v2732
    %2840 = vrot.lane.b32.xlu0 %v2298, 32
    %v2841 = vpop.permute.xlu0 %2840
    %2844 = vrot.lane.b32.xlu0 %v2837, 64
    %v2845 = vpop.permute.xlu0 %2844
    %v2847 = vsel %vm369, %v2841, %v2845
    %v2849 = vsel %vm375, %v2847, 0
    %2851 = vmatprep.subr.mxu0 0.0
    %2852 = vmatpush1.msra.mxu0 %v2301
    %2853 = vmatprep.subr.mxu0 0.0
    %2854 = vmatpush1.msra.mxu0 %v2302
    %2855 = vmatprep.subr.mxu0 0.0
    %2856 = vmatpush1.msra.mxu0 %v2303
    %2857 = vmatprep.subr.mxu0 0.0
    %2858 = vmatpush1.msra.mxu0 %v2304
    %2859 = vmatprep.subr.mxu0 0.0
    %2860 = vmatpush1.msra.mxu0 %v2305
    %2861 = vmatprep.subr.mxu0 0.0
    %2862 = vmatpush1.msra.mxu0 %v2306
    %2863 = vmatprep.subr.mxu0 0.0
    %2864 = vmatpush1.msra.mxu0 %v2307
    %2865 = vmatprep.subr.mxu0 0.0
    %2866 = vmatpush1.msra.mxu0 %v2308
    %2867 = vmatprep.subr.mxu0 0.0
    %2868 = vmatpush1.msra.mxu0 0.0
    %2869 = vmatprep.subr.mxu0 0.0
    %2870 = vmatpush1.msra.mxu0 0.0
    %2871 = vmatprep.subr.mxu0 0.0
    %2872 = vmatpush1.msra.mxu0 0.0
    %2873 = vmatprep.subr.mxu0 0.0
    %2874 = vmatpush1.msra.mxu0 0.0
    %2875 = vmatprep.subr.mxu0 0.0
    %2876 = vmatpush1.msra.mxu0 0.0
    %2877 = vmatprep.subr.mxu0 0.0
    %2878 = vmatpush1.msra.mxu0 0.0
    %2879 = vmatprep.subr.mxu0 0.0
    %2880 = vmatpush1.msra.mxu0 0.0
    %2881 = vmatprep.subr.mxu0 0.0
    %2882 = vmatpush1.msra.mxu0 0.0
    %2883 = vmatprep.subr.mxu0 0.0
    %2884 = vmatpush1.msra.mxu0 0.0
    %2885 = vmatprep.subr.mxu0 0.0
    %2886 = vmatpush1.msra.mxu0 0.0
    %2887 = vmatprep.subr.mxu0 0.0
    %2888 = vmatpush1.msra.mxu0 0.0
    %2889 = vmatprep.subr.mxu0 0.0
    %2890 = vmatpush1.msra.mxu0 0.0
    %2891 = vmatprep.subr.mxu0 0.0
    %2892 = vmatpush1.msra.mxu0 0.0
    %2893 = vmatprep.subr.mxu0 0.0
    %2894 = vmatpush1.msra.mxu0 0.0
    %2895 = vmatprep.subr.mxu0 0.0
    %2896 = vmatpush1.msra.mxu0 0.0
    %2897 = vmatprep.subr.mxu0 0.0
    %2898 = vmatpush1.msra.mxu0 0.0
    %2899 = vmatprep.subr.mxu0 0.0
    %2900 = vmatpush1.msra.mxu0 0.0
    %2901 = vmatprep.subr.mxu0 0.0
    %2902 = vmatpush1.msra.mxu0 0.0
    %2903 = vmatprep.subr.mxu0 0.0
    %2904 = vmatpush1.msra.mxu0 0.0
    %2905 = vmatprep.subr.mxu0 0.0
    %2906 = vmatpush1.msra.mxu0 0.0
    %2907 = vmatprep.subr.mxu0 0.0
    %2908 = vmatpush1.msra.mxu0 0.0
    %2909 = vmatprep.subr.mxu0 0.0
    %2910 = vmatpush1.msra.mxu0 0.0
    %2911 = vmatprep.subr.mxu0 0.0
    %2912 = vmatpush1.msra.mxu0 0.0
    %2913 = vmatprep.subr.mxu0 0.0
    %2914 = vmatpush1.msra.mxu0 0.0
    %2915 = vmatprep.mubr.f32.mxu0 0.0
    %2916 = vmatmul.mubr.f32.gmra.mrb[0].mxu0 %v2849
    %v2917 = vpop.f32.mrb[0].mxu0
    %v2918 = vadd.f32 %v2317, %v2917
    %v2919 = vpop.f32.mrb[0].mxu0
    %2920 = vdwg.mxu0
    %v2921 = vmul.f32 %v2918, 0.5
    %v2922 = vtanh.pop %v2921
    %v2923 = vadd.f32 %v2922, 1.0
    %v2924 = vmul.f32 %v2923, 0.5
    %v2925 = vtanh.pop %v2918
    %v2926 = vmul.f32 %v2924, %v2838
    %2928 = vrot.lane.b32.xlu0 %v2925, 64
    %v2929 = vpop.permute.xlu0 %2928
    %v2931 = vmul.f32 %v2924, %v2929
    %2933 = vrot.lane.b32.xlu0 %v2931, 32
    %v2934 = vpop.permute.xlu0 %2933
    %v2936 = vadd.f32 %v2926, %v2934
    %v2937 = vtanh.pop %v2936
    %2939 = vrot.lane.b32.xlu0 %v2937, 64
    %v2940 = vpop.permute.xlu0 %2939
    %v2942 = vmul.f32 %v2924, %v2940
    %v2943 = vsel %vm1010, %v2942, %v2837
    %v2944 = vsel %vm1010, %v2936, %v2838
    %v2945 = vsel %vm582, %v2518, 0.0
    %v2946 = vsel %vm689, %v2624, 0.0
    %v2947 = vsel %vm796, %v2730, 0.0
    %v2948 = vsel %vm903, %v2836, 0.0
    %v2949 = vsel %vm1010, %v2942, 0.0
    %2950 = vrot.lane.b32.xlu0 %v2413, 32
    %v2951 = vpop.permute.xlu0 %2950
    %2954 = vrot.lane.b32.xlu0 %v2945, 64
    %v2955 = vpop.permute.xlu0 %2954
    %2958 = vrot.lane.b32.xlu0 %v2946, 96
    %v2959 = vpop.permute.xlu0 %2958
    %2962 = vrot.lane.b32.xlu0 %v2948, 32
    %v2963 = vpop.permute.xlu0 %2962
    %2966 = vrot.lane.b32.xlu0 %v2949, 64
    %v2967 = vpop.permute.xlu0 %2966
    %v2969 = vsel %vm369, %v2951, %v2955
    %v2970 = vsel %vm375, %v2969, %v2959
    %vm2971 = vcmask 785408
    %v2972 = vsel %vm2971, %v2970, %v2947
    %v2973 = vsel %vm369, %v2963, %v2967
    %v2974 = vld [vmem:[#allocation2 + $0x298] sm:$0xff]
    %v2975 = vld [vmem:[#allocation2 + $0x2a0] sm:$0xff]
    %v2976 = vld [vmem:[#allocation2 + $0x2a8] sm:$0xff]
    %v2977 = vld [vmem:[#allocation2 + $0x2b0] sm:$0xff]
    %v2978 = vld [vmem:[#allocation2 + $0x2b8] sm:$0xff]
    %v2979 = vld [vmem:[#allocation2 + $0x2c0] sm:$0xff]
    %v2980 = vld [vmem:[#allocation2 + $0x2c8] sm:$0xff]
    %v2981 = vld [vmem:[#allocation2 + $0x2d0] sm:$0xff]
    %v2982 = vld [vmem:[#allocation2 + $0x2d8] sm:$0xff]
    %v2983 = vld [vmem:[#allocation2 + $0x2e0] sm:$0xff]
    %v2984 = vld [vmem:[#allocation2 + $0x2e8] sm:$0xff]
    %v2985 = vld [vmem:[#allocation2 + $0x2f0] sm:$0xff]
    %v2986 = vld [vmem:[#allocation2 + $0x2f8] sm:$0xff]
    %v2987 = vld [vmem:[#allocation2 + $0x300] sm:$0xff]
    %v2988 = vld [vmem:[#allocation2 + $0x308] sm:$0xff]
    %v2989 = vld [vmem:[#allocation2 + $0x310] sm:$0xff]
    %v2990 = vld [vmem:[#allocation2 + $0x318] sm:$0xff]
    %v2991 = vld [vmem:[#allocation2 + $0x320] sm:$0xff]
    %v2992 = vld [vmem:[#allocation2 + $0x328] sm:$0xff]
    %v2993 = vld [vmem:[#allocation2 + $0x330] sm:$0xff]
    %v2994 = vld [vmem:[#allocation2 + $0x338] sm:$0xff]
    %v2995 = vld [vmem:[#allocation2 + $0x340] sm:$0xff]
    %v2996 = vld [vmem:[#allocation2 + $0x348] sm:$0xff]
    %v2997 = vld [vmem:[#allocation2 + $0x350] sm:$0xff]
    %v2999 = vsel %vm375, %v2973, 0
    %3001 = vmatprep.subr.mxu0 0.0
    %3002 = vmatpush1.msra.mxu0 %v2974
    %3003 = vmatprep.subr.mxu0 0.0
    %3004 = vmatpush1.msra.mxu0 %v2975
    %3005 = vmatprep.subr.mxu0 0.0
    %3006 = vmatpush1.msra.mxu0 %v2976
    %3007 = vmatprep.subr.mxu0 0.0
    %3008 = vmatpush1.msra.mxu0 %v2977
    %3009 = vmatprep.subr.mxu0 0.0
    %3010 = vmatpush1.msra.mxu0 %v2978
    %3011 = vmatprep.subr.mxu0 0.0
    %3012 = vmatpush1.msra.mxu0 %v2979
    %3013 = vmatprep.subr.mxu0 0.0
    %3014 = vmatpush1.msra.mxu0 %v2980
    %3015 = vmatprep.subr.mxu0 0.0
    %3016 = vmatpush1.msra.mxu0 %v2981
    %3017 = vmatprep.subr.mxu0 0.0
    %3018 = vmatpush1.msra.mxu0 %v2982
    %3019 = vmatprep.subr.mxu0 0.0
    %3020 = vmatpush1.msra.mxu0 %v2983
    %3021 = vmatprep.subr.mxu0 0.0
    %3022 = vmatpush1.msra.mxu0 %v2984
    %3023 = vmatprep.subr.mxu0 0.0
    %3024 = vmatpush1.msra.mxu0 %v2985
    %3025 = vmatprep.subr.mxu0 0.0
    %3026 = vmatpush1.msra.mxu0 %v2986
    %3027 = vmatprep.subr.mxu0 0.0
    %3028 = vmatpush1.msra.mxu0 %v2987
    %3029 = vmatprep.subr.mxu0 0.0
    %3030 = vmatpush1.msra.mxu0 %v2988
    %3031 = vmatprep.subr.mxu0 0.0
    %3032 = vmatpush1.msra.mxu0 %v2989
    %3033 = vmatprep.subr.mxu0 0.0
    %3034 = vmatpush1.msra.mxu0 %v2990
    %3035 = vmatprep.subr.mxu0 0.0
    %3036 = vmatpush1.msra.mxu0 %v2991
    %3037 = vmatprep.subr.mxu0 0.0
    %3038 = vmatpush1.msra.mxu0 %v2992
    %3039 = vmatprep.subr.mxu0 0.0
    %3040 = vmatpush1.msra.mxu0 %v2993
    %3041 = vmatprep.subr.mxu0 0.0
    %3042 = vmatpush1.msra.mxu0 %v2994
    %3043 = vmatprep.subr.mxu0 0.0
    %3044 = vmatpush1.msra.mxu0 %v2995
    %3045 = vmatprep.subr.mxu0 0.0
    %3046 = vmatpush1.msra.mxu0 %v2996
    %3047 = vmatprep.subr.mxu0 0.0
    %3048 = vmatpush1.msra.mxu0 %v2997
    %3049 = vmatprep.subr.mxu0 0.0
    %3050 = vmatpush1.msra.mxu0 0.0
    %3051 = vmatprep.subr.mxu0 0.0
    %3052 = vmatpush1.msra.mxu0 0.0
    %3053 = vmatprep.subr.mxu0 0.0
    %3054 = vmatpush1.msra.mxu0 0.0
    %3055 = vmatprep.subr.mxu0 0.0
    %3056 = vmatpush1.msra.mxu0 0.0
    %3057 = vmatprep.subr.mxu0 0.0
    %3058 = vmatpush1.msra.mxu0 0.0
    %3059 = vmatprep.subr.mxu0 0.0
    %3060 = vmatpush1.msra.mxu0 0.0
    %3061 = vmatprep.subr.mxu0 0.0
    %3062 = vmatpush1.msra.mxu0 0.0
    %3063 = vmatprep.subr.mxu0 0.0
    %3064 = vmatpush1.msra.mxu0 0.0
    %3065 = vmatprep.mubr.f32.mxu0 %v2999
    %3066 = vmatmul.mubr.f32.gmra.mrb[0].mxu0 %v2972
    %v3067 = vpop.f32.mrb[0].mxu0
    %v3068 = vadd.f32 0.0, %v3067
    %v3069 = vpop.f32.mrb[0].mxu0
    %3070 = vdwg.mxu0
    %v3071 = vld [vmem:[#allocation2 + $0x208] sm:$0xf]
    %3073 = vrot.lane.b32.xlu0 %v2943, 32
    %v3074 = vpop.permute.xlu0 %3073
    %3076 = vrot.lane.b32.xlu0 %v2943, 64
    %v3077 = vpop.permute.xlu0 %3076
    %3079 = vrot.lane.b32.xlu0 %v2943, 96
    %v3080 = vpop.permute.xlu0 %3079
    %v3082 = vsel %vm369, %v3074, %v3077
    %v3083 = vsel %vm375, %v3082, %v3080
    %v3084 = vsel %vm2971, %v3083, %v2943
    %v3085 = vmul.f32 %v2972, %v3084
    %v3086 = vmul.f32 %v2973, %v3082
    %v3088 = vsel %vm375, %v3086, 0
    %3090 = vmatprep.subr.mxu0 0.0
    %3091 = vmatpush1.msra.mxu0 %v2974
    %3092 = vmatprep.subr.mxu0 0.0
    %3093 = vmatpush1.msra.mxu0 %v2975
    %3094 = vmatprep.subr.mxu0 0.0
    %3095 = vmatpush1.msra.mxu0 %v2976
    %3096 = vmatprep.subr.mxu0 0.0
    %3097 = vmatpush1.msra.mxu0 %v2977
    %3098 = vmatprep.subr.mxu0 0.0
    %3099 = vmatpush1.msra.mxu0 %v2978
    %3100 = vmatprep.subr.mxu0 0.0
    %3101 = vmatpush1.msra.mxu0 %v2979
    %3102 = vmatprep.subr.mxu0 0.0
    %3103 = vmatpush1.msra.mxu0 %v2980
    %3104 = vmatprep.subr.mxu0 0.0
    %3105 = vmatpush1.msra.mxu0 %v2981
    %3106 = vmatprep.subr.mxu0 0.0
    %3107 = vmatpush1.msra.mxu0 %v2982
    %3108 = vmatprep.subr.mxu0 0.0
    %3109 = vmatpush1.msra.mxu0 %v2983
    %3110 = vmatprep.subr.mxu0 0.0
    %3111 = vmatpush1.msra.mxu0 %v2984
    %3112 = vmatprep.subr.mxu0 0.0
    %3113 = vmatpush1.msra.mxu0 %v2985
    %3114 = vmatprep.subr.mxu0 0.0
    %3115 = vmatpush1.msra.mxu0 %v2986
    %3116 = vmatprep.subr.mxu0 0.0
    %3117 = vmatpush1.msra.mxu0 %v2987
    %3118 = vmatprep.subr.mxu0 0.0
    %3119 = vmatpush1.msra.mxu0 %v2988
    %3120 = vmatprep.subr.mxu0 0.0
    %3121 = vmatpush1.msra.mxu0 %v2989
    %3122 = vmatprep.subr.mxu0 0.0
    %3123 = vmatpush1.msra.mxu0 %v2990
    %3124 = vmatprep.subr.mxu0 0.0
    %3125 = vmatpush1.msra.mxu0 %v2991
    %3126 = vmatprep.subr.mxu0 0.0
    %3127 = vmatpush1.msra.mxu0 %v2992
    %3128 = vmatprep.subr.mxu0 0.0
    %3129 = vmatpush1.msra.mxu0 %v2993
    %3130 = vmatprep.subr.mxu0 0.0
    %3131 = vmatpush1.msra.mxu0 %v2994
    %3132 = vmatprep.subr.mxu0 0.0
    %3133 = vmatpush1.msra.mxu0 %v2995
    %3134 = vmatprep.subr.mxu0 0.0
    %3135 = vmatpush1.msra.mxu0 %v2996
    %3136 = vmatprep.subr.mxu0 0.0
    %3137 = vmatpush1.msra.mxu0 %v2997
    %3138 = vmatprep.subr.mxu0 0.0
    %3139 = vmatpush1.msra.mxu0 0.0
    %3140 = vmatprep.subr.mxu0 0.0
    %3141 = vmatpush1.msra.mxu0 0.0
    %3142 = vmatprep.subr.mxu0 0.0
    %3143 = vmatpush1.msra.mxu0 0.0
    %3144 = vmatprep.subr.mxu0 0.0
    %3145 = vmatpush1.msra.mxu0 0.0
    %3146 = vmatprep.subr.mxu0 0.0
    %3147 = vmatpush1.msra.mxu0 0.0
    %3148 = vmatprep.subr.mxu0 0.0
    %3149 = vmatpush1.msra.mxu0 0.0
    %3150 = vmatprep.subr.mxu0 0.0
    %3151 = vmatpush1.msra.mxu0 0.0
    %3152 = vmatprep.subr.mxu0 0.0
    %3153 = vmatpush1.msra.mxu0 0.0
    %3154 = vmatprep.mubr.f32.mxu0 %v3088
    %3155 = vmatmul.mubr.f32.gmra.mrb[0].mxu0 %v3085
    %v3156 = vpop.f32.mrb[0].mxu0
    %v3157 = vadd.f32 0.0, %v3156
    %v3158 = vpop.f32.mrb[0].mxu0
    %3159 = vdwg.mxu0
    %v3160 = vld [vmem:[#allocation2 + $0x230] sm:$0x3f]
    %v3161 = vld [vmem:[#allocation2 + $0x238] sm:$0x1]
    %v3162 = vlaneseq
    %v3163 = vshrl.u32 %v3162, 7
    %v3164 = vsub.s32 0, %v3163
    %v3165 = vrot.slane %v3161, %v3164
    %vm3166 = vcmask 48128
    %v3168 = vsel %vm3166, %v3157, 0
    %vm3170 = vcmask 1045504
    %v3172 = vsel %vm3170, %v3160, 0
    %3174 = vmatprep.subr.mxu0 0.0
    %3175 = vmatpush1.msra.mxu0 %v3172
    %3176 = vmatprep.subr.mxu0 0.0
    %3177 = vmatpush1.msra.mxu0 0.0
    %3178 = vmatprep.subr.mxu0 0.0
    %3179 = vmatpush1.msra.mxu0 0.0
    %3180 = vmatprep.subr.mxu0 0.0
    %3181 = vmatpush1.msra.mxu0 0.0
    %3182 = vmatprep.subr.mxu0 0.0
    %3183 = vmatpush1.msra.mxu0 0.0
    %3184 = vmatprep.subr.mxu0 0.0
    %3185 = vmatpush1.msra.mxu0 0.0
    %3186 = vmatprep.subr.mxu0 0.0
    %3187 = vmatpush1.msra.mxu0 0.0
    %3188 = vmatprep.subr.mxu0 0.0
    %3189 = vmatpush1.msra.mxu0 0.0
    %3190 = vmatprep.subr.mxu0 0.0
    %3191 = vmatpush1.msra.mxu0 0.0
    %3192 = vmatprep.subr.mxu0 0.0
    %3193 = vmatpush1.msra.mxu0 0.0
    %3194 = vmatprep.subr.mxu0 0.0
    %3195 = vmatpush1.msra.mxu0 0.0
    %3196 = vmatprep.subr.mxu0 0.0
    %3197 = vmatpush1.msra.mxu0 0.0
    %3198 = vmatprep.subr.mxu0 0.0
    %3199 = vmatpush1.msra.mxu0 0.0
    %3200 = vmatprep.subr.mxu0 0.0
    %3201 = vmatpush1.msra.mxu0 0.0
    %3202 = vmatprep.subr.mxu0 0.0
    %3203 = vmatpush1.msra.mxu0 0.0
    %3204 = vmatprep.subr.mxu0 0.0
    %3205 = vmatpush1.msra.mxu0 0.0
    %3206 = vmatprep.subr.mxu0 0.0
    %3207 = vmatpush1.msra.mxu0 0.0
    %3208 = vmatprep.subr.mxu0 0.0
    %3209 = vmatpush1.msra.mxu0 0.0
    %3210 = vmatprep.subr.mxu0 0.0
    %3211 = vmatpush1.msra.mxu0 0.0
    %3212 = vmatprep.subr.mxu0 0.0
    %3213 = vmatpush1.msra.mxu0 0.0
    %3214 = vmatprep.subr.mxu0 0.0
    %3215 = vmatpush1.msra.mxu0 0.0
    %3216 = vmatprep.subr.mxu0 0.0
    %3217 = vmatpush1.msra.mxu0 0.0
    %3218 = vmatprep.subr.mxu0 0.0
    %3219 = vmatpush1.msra.mxu0 0.0
    %3220 = vmatprep.subr.mxu0 0.0
    %3221 = vmatpush1.msra.mxu0 0.0
    %3222 = vmatprep.subr.mxu0 0.0
    %3223 = vmatpush1.msra.mxu0 0.0
    %3224 = vmatprep.subr.mxu0 0.0
    %3225 = vmatpush1.msra.mxu0 0.0
    %3226 = vmatprep.subr.mxu0 0.0
    %3227 = vmatpush1.msra.mxu0 0.0
    %3228 = vmatprep.subr.mxu0 0.0
    %3229 = vmatpush1.msra.mxu0 0.0
    %3230 = vmatprep.subr.mxu0 0.0
    %3231 = vmatpush1.msra.mxu0 0.0
    %3232 = vmatprep.subr.mxu0 0.0
    %3233 = vmatpush1.msra.mxu0 0.0
    %3234 = vmatprep.subr.mxu0 0.0
    %3235 = vmatpush1.msra.mxu0 0.0
    %3236 = vmatprep.subr.mxu0 0.0
    %3237 = vmatpush1.msra.mxu0 0.0
    %3238 = vmatprep.mubr.f32.mxu0 0.0
    %3239 = vmatmul.mubr.f32.gmra.mrb[0].mxu0 %v3168
    %v3240 = vpop.f32.mrb[0].mxu0
    %v3241 = vadd.f32 %v3165, %v3240
    %v3242 = vpop.f32.mrb[0].mxu0
    %3243 = vdwg.mxu0
    %vm3244 = vcmask 43008
    %v3245 = vsel %vm3244, %v3241, -inf
    %3246 = vmax.xlane.f32.xlu0 %v3245
    %v3247 = vpop.xlane.xlu0 %3246
    %v3248 = vsub.f32 %v3241, %v3247
    %v3249 = vmul.f32 %v3248, 1.442695
    %v3250 = vpow.pop %v3249
    %v3251 = vsel %vm3244, %v3250, 0.0
    %3252 = vadd.xlane.f32.xlu0 %v3251
    %v3253 = vpop.xlane.xlu0 %3252
    %v3254 = vrcp.pop %v3253
    %v3255 = vmul.f32 %v3250, %v3254
    %v3256 = vmul.f32 %v3255, %v3068
    %3258 = vrot.lane.b32.xlu0 %v332, 6
    %v3259 = vpop.permute.xlu0 %3258
    %v3261 = vsel %vm3166, %v3256, %v3259
    %v3262 = vld [vmem:[#allocation2 + $0x240] sm:$0xff]
    %v3263 = vld [vmem:[#allocation2 + $0x248] sm:$0xff]
    %v3264 = vld [vmem:[#allocation2 + $0x250] sm:$0xff]
    %v3265 = vld [vmem:[#allocation2 + $0x258] sm:$0xff]
    %v3266 = vld [vmem:[#allocation2 + $0x260] sm:$0x3f]
    %v3267 = vld [vmem:[#allocation2 + $0x268] sm:$0x1]
    %v3268 = vlaneseq
    %v3269 = vshrl.u32 %v3268, 7
    %v3270 = vsub.s32 0, %v3269
    %v3271 = vrot.slane %v3267, %v3270
    %vm3272 = vcmask 310272
    %v3274 = vsel %vm3272, %v3261, 0
    %v3277 = vsel %vm3170, %v3266, 0
    %3279 = vmatprep.subr.mxu0 0.0
    %3280 = vmatpush1.msra.mxu0 %v3262
    %3281 = vmatprep.subr.mxu0 0.0
    %3282 = vmatpush1.msra.mxu0 %v3263
    %3283 = vmatprep.subr.mxu0 0.0
    %3284 = vmatpush1.msra.mxu0 %v3264
    %3285 = vmatprep.subr.mxu0 0.0
    %3286 = vmatpush1.msra.mxu0 %v3265
    %3287 = vmatprep.subr.mxu0 0.0
    %3288 = vmatpush1.msra.mxu0 %v3277
    %3289 = vmatprep.subr.mxu0 0.0
    %3290 = vmatpush1.msra.mxu0 0.0
    %3291 = vmatprep.subr.mxu0 0.0
    %3292 = vmatpush1.msra.mxu0 0.0
    %3293 = vmatprep.subr.mxu0 0.0
    %3294 = vmatpush1.msra.mxu0 0.0
    %3295 = vmatprep.subr.mxu0 0.0
    %3296 = vmatpush1.msra.mxu0 0.0
    %3297 = vmatprep.subr.mxu0 0.0
    %3298 = vmatpush1.msra.mxu0 0.0
    %3299 = vmatprep.subr.mxu0 0.0
    %3300 = vmatpush1.msra.mxu0 0.0
    %3301 = vmatprep.subr.mxu0 0.0
    %3302 = vmatpush1.msra.mxu0 0.0
    %3303 = vmatprep.subr.mxu0 0.0
    %3304 = vmatpush1.msra.mxu0 0.0
    %3305 = vmatprep.subr.mxu0 0.0
    %3306 = vmatpush1.msra.mxu0 0.0
    %3307 = vmatprep.subr.mxu0 0.0
    %3308 = vmatpush1.msra.mxu0 0.0
    %3309 = vmatprep.subr.mxu0 0.0
    %3310 = vmatpush1.msra.mxu0 0.0
    %3311 = vmatprep.subr.mxu0 0.0
    %3312 = vmatpush1.msra.mxu0 0.0
    %3313 = vmatprep.subr.mxu0 0.0
    %3314 = vmatpush1.msra.mxu0 0.0
    %3315 = vmatprep.subr.mxu0 0.0
    %3316 = vmatpush1.msra.mxu0 0.0
    %3317 = vmatprep.subr.mxu0 0.0
    %3318 = vmatpush1.msra.mxu0 0.0
    %3319 = vmatprep.subr.mxu0 0.0
    %3320 = vmatpush1.msra.mxu0 0.0
    %3321 = vmatprep.subr.mxu0 0.0
    %3322 = vmatpush1.msra.mxu0 0.0
    %3323 = vmatprep.subr.mxu0 0.0
    %3324 = vmatpush1.msra.mxu0 0.0
    %3325 = vmatprep.subr.mxu0 0.0
    %3326 = vmatpush1.msra.mxu0 0.0
    %3327 = vmatprep.subr.mxu0 0.0
    %3328 = vmatpush1.msra.mxu0 0.0
    %3329 = vmatprep.subr.mxu0 0.0
    %3330 = vmatpush1.msra.mxu0 0.0
    %3331 = vmatprep.subr.mxu0 0.0
    %3332 = vmatpush1.msra.mxu0 0.0
    %3333 = vmatprep.subr.mxu0 0.0
    %3334 = vmatpush1.msra.mxu0 0.0
    %3335 = vmatprep.subr.mxu0 0.0
    %3336 = vmatpush1.msra.mxu0 0.0
    %3337 = vmatprep.subr.mxu0 0.0
    %3338 = vmatpush1.msra.mxu0 0.0
    %3339 = vmatprep.subr.mxu0 0.0
    %3340 = vmatpush1.msra.mxu0 0.0
    %3341 = vmatprep.subr.mxu0 0.0
    %3342 = vmatpush1.msra.mxu0 0.0
    %3343 = vmatprep.mubr.f32.mxu0 0.0
    %3344 = vmatmul.mubr.f32.gmra.mrb[0].mxu0 %v3274
    %v3345 = vpop.f32.mrb[0].mxu0
    %v3346 = vadd.f32 %v3271, %v3345
    %v3347 = vpop.f32.mrb[0].mxu0
    %3348 = vdwg.mxu0
    %v3349 = vld [vmem:[#allocation2 + $0x100] sm:$0xff]
    %v3350 = vld [vmem:[#allocation2 + $0x108] sm:$0xff]
    %v3351 = vld [vmem:[#allocation2 + $0x110] sm:$0xff]
    %v3352 = vld [vmem:[#allocation2 + $0x118] sm:$0xff]
    %v3353 = vld [vmem:[#allocation2 + $0x120] sm:$0xff]
    %v3354 = vld [vmem:[#allocation2 + $0x128] sm:$0xff]
    %v3355 = vld [vmem:[#allocation2 + $0x130] sm:$0xff]
    %v3356 = vld [vmem:[#allocation2 + $0x138] sm:$0xff]
    %3358 = vrot.lane.b32.xlu0 %v1011, 64
    %v3359 = vpop.permute.xlu0 %3358
    %v3361 = vsel %vm369, %v3346, %v3359
    %v3362 = vlaneseq
    %v3363 = vshrl.u32 %v3362, 7
    %v3364 = vsub.s32 0, %v3363
    %v3365 = vrot.slane %v3071, %v3364
    %v3367 = vsel %vm375, %v3361, 0
    %3369 = vmatprep.subr.mxu0 0.0
    %3370 = vmatpush1.msra.mxu0 %v3349
    %3371 = vmatprep.subr.mxu0 0.0
    %3372 = vmatpush1.msra.mxu0 %v3350
    %3373 = vmatprep.subr.mxu0 0.0
    %3374 = vmatpush1.msra.mxu0 %v3351
    %3375 = vmatprep.subr.mxu0 0.0
    %3376 = vmatpush1.msra.mxu0 %v3352
    %3377 = vmatprep.subr.mxu0 0.0
    %3378 = vmatpush1.msra.mxu0 %v3353
    %3379 = vmatprep.subr.mxu0 0.0
    %3380 = vmatpush1.msra.mxu0 %v3354
    %3381 = vmatprep.subr.mxu0 0.0
    %3382 = vmatpush1.msra.mxu0 %v3355
    %3383 = vmatprep.subr.mxu0 0.0
    %3384 = vmatpush1.msra.mxu0 %v3356
    %3385 = vmatprep.subr.mxu0 0.0
    %3386 = vmatpush1.msra.mxu0 0.0
    %3387 = vmatprep.subr.mxu0 0.0
    %3388 = vmatpush1.msra.mxu0 0.0
    %3389 = vmatprep.subr.mxu0 0.0
    %3390 = vmatpush1.msra.mxu0 0.0
    %3391 = vmatprep.subr.mxu0 0.0
    %3392 = vmatpush1.msra.mxu0 0.0
    %3393 = vmatprep.subr.mxu0 0.0
    %3394 = vmatpush1.msra.mxu0 0.0
    %3395 = vmatprep.subr.mxu0 0.0
    %3396 = vmatpush1.msra.mxu0 0.0
    %3397 = vmatprep.subr.mxu0 0.0
    %3398 = vmatpush1.msra.mxu0 0.0
    %3399 = vmatprep.subr.mxu0 0.0
    %3400 = vmatpush1.msra.mxu0 0.0
    %3401 = vmatprep.subr.mxu0 0.0
    %3402 = vmatpush1.msra.mxu0 0.0
    %3403 = vmatprep.subr.mxu0 0.0
    %3404 = vmatpush1.msra.mxu0 0.0
    %3405 = vmatprep.subr.mxu0 0.0
    %3406 = vmatpush1.msra.mxu0 0.0
    %3407 = vmatprep.subr.mxu0 0.0
    %3408 = vmatpush1.msra.mxu0 0.0
    %3409 = vmatprep.subr.mxu0 0.0
    %3410 = vmatpush1.msra.mxu0 0.0
    %3411 = vmatprep.subr.mxu0 0.0
    %3412 = vmatpush1.msra.mxu0 0.0
    %3413 = vmatprep.subr.mxu0 0.0
    %3414 = vmatpush1.msra.mxu0 0.0
    %3415 = vmatprep.subr.mxu0 0.0
    %3416 = vmatpush1.msra.mxu0 0.0
    %3417 = vmatprep.subr.mxu0 0.0
    %3418 = vmatpush1.msra.mxu0 0.0
    %3419 = vmatprep.subr.mxu0 0.0
    %3420 = vmatpush1.msra.mxu0 0.0
    %3421 = vmatprep.subr.mxu0 0.0
    %3422 = vmatpush1.msra.mxu0 0.0
    %3423 = vmatprep.subr.mxu0 0.0
    %3424 = vmatpush1.msra.mxu0 0.0
    %3425 = vmatprep.subr.mxu0 0.0
    %3426 = vmatpush1.msra.mxu0 0.0
    %3427 = vmatprep.subr.mxu0 0.0
    %3428 = vmatpush1.msra.mxu0 0.0
    %3429 = vmatprep.subr.mxu0 0.0
    %3430 = vmatpush1.msra.mxu0 0.0
    %3431 = vmatprep.subr.mxu0 0.0
    %3432 = vmatpush1.msra.mxu0 0.0
    %3433 = vmatprep.mubr.f32.mxu0 0.0
    %3434 = vmatmul.mubr.f32.gmra.mrb[0].mxu0 %v3367
    %v3435 = vpop.f32.mrb[0].mxu0
    %v3436 = vadd.f32 %v3365, %v3435
    %v3437 = vpop.f32.mrb[0].mxu0
    %3438 = vdwg.mxu0
    %v3439 = vmul.f32 %v3436, 0.5
    %v3440 = vtanh.pop %v3439
    %v3441 = vadd.f32 %v3440, 1.0
    %v3442 = vmul.f32 %v3441, 0.5
    %v3443 = vtanh.pop %v3436
    %v3444 = vmul.f32 %v3442, %v1012
    %3446 = vrot.lane.b32.xlu0 %v3443, 64
    %v3447 = vpop.permute.xlu0 %3446
    %v3449 = vmul.f32 %v3442, %v3447
    %3451 = vrot.lane.b32.xlu0 %v3449, 32
    %v3452 = vpop.permute.xlu0 %3451
    %v3454 = vadd.f32 %v3444, %v3452
    %v3455 = vtanh.pop %v3454
    %3457 = vrot.lane.b32.xlu0 %v3455, 64
    %v3458 = vpop.permute.xlu0 %3457
    %v3460 = vmul.f32 %v3442, %v3458
    %v3461 = vld [vmem:[#allocation2 + $0x140] sm:$0xff]
    %v3462 = vld [vmem:[#allocation2 + $0x148] sm:$0xff]
    %v3463 = vld [vmem:[#allocation2 + $0x150] sm:$0xff]
    %v3464 = vld [vmem:[#allocation2 + $0x158] sm:$0xff]
    %v3465 = vld [vmem:[#allocation2 + $0x160] sm:$0xff]
    %v3466 = vld [vmem:[#allocation2 + $0x168] sm:$0xff]
    %v3467 = vld [vmem:[#allocation2 + $0x170] sm:$0xff]
    %v3468 = vld [vmem:[#allocation2 + $0x178] sm:$0xff]
    %3470 = vrot.lane.b32.xlu0 %v3460, 32
    %v3471 = vpop.permute.xlu0 %3470
    %3474 = vrot.lane.b32.xlu0 %v1655, 64
    %v3475 = vpop.permute.xlu0 %3474
    %v3477 = vsel %vm369, %v3471, %v3475
    %v3478 = vlaneseq
    %v3479 = vshrl.u32 %v3478, 7
    %v3480 = vsub.s32 1, %v3479
    %v3481 = vrot.slane %v3071, %v3480
    %v3483 = vsel %vm375, %v3477, 0
    %3485 = vmatprep.subr.mxu0 0.0
    %3486 = vmatpush1.msra.mxu0 %v3461
    %3487 = vmatprep.subr.mxu0 0.0
    %3488 = vmatpush1.msra.mxu0 %v3462
    %3489 = vmatprep.subr.mxu0 0.0
    %3490 = vmatpush1.msra.mxu0 %v3463
    %3491 = vmatprep.subr.mxu0 0.0
    %3492 = vmatpush1.msra.mxu0 %v3464
    %3493 = vmatprep.subr.mxu0 0.0
    %3494 = vmatpush1.msra.mxu0 %v3465
    %3495 = vmatprep.subr.mxu0 0.0
    %3496 = vmatpush1.msra.mxu0 %v3466
    %3497 = vmatprep.subr.mxu0 0.0
    %3498 = vmatpush1.msra.mxu0 %v3467
    %3499 = vmatprep.subr.mxu0 0.0
    %3500 = vmatpush1.msra.mxu0 %v3468
    %3501 = vmatprep.subr.mxu0 0.0
    %3502 = vmatpush1.msra.mxu0 0.0
    %3503 = vmatprep.subr.mxu0 0.0
    %3504 = vmatpush1.msra.mxu0 0.0
    %3505 = vmatprep.subr.mxu0 0.0
    %3506 = vmatpush1.msra.mxu0 0.0
    %3507 = vmatprep.subr.mxu0 0.0
    %3508 = vmatpush1.msra.mxu0 0.0
    %3509 = vmatprep.subr.mxu0 0.0
    %3510 = vmatpush1.msra.mxu0 0.0
    %3511 = vmatprep.subr.mxu0 0.0
    %3512 = vmatpush1.msra.mxu0 0.0
    %3513 = vmatprep.subr.mxu0 0.0
    %3514 = vmatpush1.msra.mxu0 0.0
    %3515 = vmatprep.subr.mxu0 0.0
    %3516 = vmatpush1.msra.mxu0 0.0
    %3517 = vmatprep.subr.mxu0 0.0
    %3518 = vmatpush1.msra.mxu0 0.0
    %3519 = vmatprep.subr.mxu0 0.0
    %3520 = vmatpush1.msra.mxu0 0.0
    %3521 = vmatprep.subr.mxu0 0.0
    %3522 = vmatpush1.msra.mxu0 0.0
    %3523 = vmatprep.subr.mxu0 0.0
    %3524 = vmatpush1.msra.mxu0 0.0
    %3525 = vmatprep.subr.mxu0 0.0
    %3526 = vmatpush1.msra.mxu0 0.0
    %3527 = vmatprep.subr.mxu0 0.0
    %3528 = vmatpush1.msra.mxu0 0.0
    %3529 = vmatprep.subr.mxu0 0.0
    %3530 = vmatpush1.msra.mxu0 0.0
    %3531 = vmatprep.subr.mxu0 0.0
    %3532 = vmatpush1.msra.mxu0 0.0
    %3533 = vmatprep.subr.mxu0 0.0
    %3534 = vmatpush1.msra.mxu0 0.0
    %3535 = vmatprep.subr.mxu0 0.0
    %3536 = vmatpush1.msra.mxu0 0.0
    %3537 = vmatprep.subr.mxu0 0.0
    %3538 = vmatpush1.msra.mxu0 0.0
    %3539 = vmatprep.subr.mxu0 0.0
    %3540 = vmatpush1.msra.mxu0 0.0
    %3541 = vmatprep.subr.mxu0 0.0
    %3542 = vmatpush1.msra.mxu0 0.0
    %3543 = vmatprep.subr.mxu0 0.0
    %3544 = vmatpush1.msra.mxu0 0.0
    %3545 = vmatprep.subr.mxu0 0.0
    %3546 = vmatpush1.msra.mxu0 0.0
    %3547 = vmatprep.subr.mxu0 0.0
    %3548 = vmatpush1.msra.mxu0 0.0
    %3549 = vmatprep.mubr.f32.mxu0 0.0
    %3550 = vmatmul.mubr.f32.gmra.mrb[0].mxu0 %v3483
    %v3551 = vpop.f32.mrb[0].mxu0
    %v3552 = vadd.f32 %v3481, %v3551
    %v3553 = vpop.f32.mrb[0].mxu0
    %3554 = vdwg.mxu0
    %v3555 = vmul.f32 %v3552, 0.5
    %v3556 = vtanh.pop %v3555
    %v3557 = vadd.f32 %v3556, 1.0
    %v3558 = vmul.f32 %v3557, 0.5
    %v3559 = vtanh.pop %v3552
    %v3560 = vmul.f32 %v3558, %v1656
    %3562 = vrot.lane.b32.xlu0 %v3559, 64
    %v3563 = vpop.permute.xlu0 %3562
    %v3565 = vmul.f32 %v3558, %v3563
    %3567 = vrot.lane.b32.xlu0 %v3565, 32
    %v3568 = vpop.permute.xlu0 %3567
    %v3570 = vadd.f32 %v3560, %v3568
    %v3571 = vtanh.pop %v3570
    %3573 = vrot.lane.b32.xlu0 %v3571, 64
    %v3574 = vpop.permute.xlu0 %3573
    %v3576 = vmul.f32 %v3558, %v3574
    %v3577 = vld [vmem:[#allocation2 + $0x180] sm:$0xff]
    %v3578 = vld [vmem:[#allocation2 + $0x188] sm:$0xff]
    %v3579 = vld [vmem:[#allocation2 + $0x190] sm:$0xff]
    %v3580 = vld [vmem:[#allocation2 + $0x198] sm:$0xff]
    %v3581 = vld [vmem:[#allocation2 + $0x1a0] sm:$0xff]
    %v3582 = vld [vmem:[#allocation2 + $0x1a8] sm:$0xff]
    %v3583 = vld [vmem:[#allocation2 + $0x1b0] sm:$0xff]
    %v3584 = vld [vmem:[#allocation2 + $0x1b8] sm:$0xff]
    %3586 = vrot.lane.b32.xlu0 %v3576, 32
    %v3587 = vpop.permute.xlu0 %3586
    %3590 = vrot.lane.b32.xlu0 %v2299, 64
    %v3591 = vpop.permute.xlu0 %3590
    %v3593 = vsel %vm369, %v3587, %v3591
    %v3594 = vlaneseq
    %v3595 = vshrl.u32 %v3594, 7
    %v3596 = vsub.s32 2, %v3595
    %v3597 = vrot.slane %v3071, %v3596
    %v3599 = vsel %vm375, %v3593, 0
    %3601 = vmatprep.subr.mxu0 0.0
    %3602 = vmatpush1.msra.mxu0 %v3577
    %3603 = vmatprep.subr.mxu0 0.0
    %3604 = vmatpush1.msra.mxu0 %v3578
    %3605 = vmatprep.subr.mxu0 0.0
    %3606 = vmatpush1.msra.mxu0 %v3579
    %3607 = vmatprep.subr.mxu0 0.0
    %3608 = vmatpush1.msra.mxu0 %v3580
    %3609 = vmatprep.subr.mxu0 0.0
    %3610 = vmatpush1.msra.mxu0 %v3581
    %3611 = vmatprep.subr.mxu0 0.0
    %3612 = vmatpush1.msra.mxu0 %v3582
    %3613 = vmatprep.subr.mxu0 0.0
    %3614 = vmatpush1.msra.mxu0 %v3583
    %3615 = vmatprep.subr.mxu0 0.0
    %3616 = vmatpush1.msra.mxu0 %v3584
    %3617 = vmatprep.subr.mxu0 0.0
    %3618 = vmatpush1.msra.mxu0 0.0
    %3619 = vmatprep.subr.mxu0 0.0
    %3620 = vmatpush1.msra.mxu0 0.0
    %3621 = vmatprep.subr.mxu0 0.0
    %3622 = vmatpush1.msra.mxu0 0.0
    %3623 = vmatprep.subr.mxu0 0.0
    %3624 = vmatpush1.msra.mxu0 0.0
    %3625 = vmatprep.subr.mxu0 0.0
    %3626 = vmatpush1.msra.mxu0 0.0
    %3627 = vmatprep.subr.mxu0 0.0
    %3628 = vmatpush1.msra.mxu0 0.0
    %3629 = vmatprep.subr.mxu0 0.0
    %3630 = vmatpush1.msra.mxu0 0.0
    %3631 = vmatprep.subr.mxu0 0.0
    %3632 = vmatpush1.msra.mxu0 0.0
    %3633 = vmatprep.subr.mxu0 0.0
    %3634 = vmatpush1.msra.mxu0 0.0
    %3635 = vmatprep.subr.mxu0 0.0
    %3636 = vmatpush1.msra.mxu0 0.0
    %3637 = vmatprep.subr.mxu0 0.0
    %3638 = vmatpush1.msra.mxu0 0.0
    %3639 = vmatprep.subr.mxu0 0.0
    %3640 = vmatpush1.msra.mxu0 0.0
    %3641 = vmatprep.subr.mxu0 0.0
    %3642 = vmatpush1.msra.mxu0 0.0
    %3643 = vmatprep.subr.mxu0 0.0
    %3644 = vmatpush1.msra.mxu0 0.0
    %3645 = vmatprep.subr.mxu0 0.0
    %3646 = vmatpush1.msra.mxu0 0.0
    %3647 = vmatprep.subr.mxu0 0.0
    %3648 = vmatpush1.msra.mxu0 0.0
    %3649 = vmatprep.subr.mxu0 0.0
    %3650 = vmatpush1.msra.mxu0 0.0
    %3651 = vmatprep.subr.mxu0 0.0
    %3652 = vmatpush1.msra.mxu0 0.0
    %3653 = vmatprep.subr.mxu0 0.0
    %3654 = vmatpush1.msra.mxu0 0.0
    %3655 = vmatprep.subr.mxu0 0.0
    %3656 = vmatpush1.msra.mxu0 0.0
    %3657 = vmatprep.subr.mxu0 0.0
    %3658 = vmatpush1.msra.mxu0 0.0
    %3659 = vmatprep.subr.mxu0 0.0
    %3660 = vmatpush1.msra.mxu0 0.0
    %3661 = vmatprep.subr.mxu0 0.0
    %3662 = vmatpush1.msra.mxu0 0.0
    %3663 = vmatprep.subr.mxu0 0.0
    %3664 = vmatpush1.msra.mxu0 0.0
    %3665 = vmatprep.mubr.f32.mxu0 0.0
    %3666 = vmatmul.mubr.f32.gmra.mrb[0].mxu0 %v3599
    %v3667 = vpop.f32.mrb[0].mxu0
    %v3668 = vadd.f32 %v3597, %v3667
    %v3669 = vpop.f32.mrb[0].mxu0
    %3670 = vdwg.mxu0
    %v3671 = vmul.f32 %v3668, 0.5
    %v3672 = vtanh.pop %v3671
    %v3673 = vadd.f32 %v3672, 1.0
    %v3674 = vmul.f32 %v3673, 0.5
    %v3675 = vtanh.pop %v3668
    %v3676 = vmul.f32 %v3674, %v2300
    %3678 = vrot.lane.b32.xlu0 %v3675, 64
    %v3679 = vpop.permute.xlu0 %3678
    %v3681 = vmul.f32 %v3674, %v3679
    %3683 = vrot.lane.b32.xlu0 %v3681, 32
    %v3684 = vpop.permute.xlu0 %3683
    %v3686 = vadd.f32 %v3676, %v3684
    %v3687 = vtanh.pop %v3686
    %3689 = vrot.lane.b32.xlu0 %v3687, 64
    %v3690 = vpop.permute.xlu0 %3689
    %v3692 = vmul.f32 %v3674, %v3690
    %v3693 = vld [vmem:[#allocation2 + $0x1c0] sm:$0xff]
    %v3694 = vld [vmem:[#allocation2 + $0x1c8] sm:$0xff]
    %v3695 = vld [vmem:[#allocation2 + $0x1d0] sm:$0xff]
    %v3696 = vld [vmem:[#allocation2 + $0x1d8] sm:$0xff]
    %v3697 = vld [vmem:[#allocation2 + $0x1e0] sm:$0xff]
    %v3698 = vld [vmem:[#allocation2 + $0x1e8] sm:$0xff]
    %v3699 = vld [vmem:[#allocation2 + $0x1f0] sm:$0xff]
    %v3700 = vld [vmem:[#allocation2 + $0x1f8] sm:$0xff]
    %3702 = vrot.lane.b32.xlu0 %v3692, 32
    %v3703 = vpop.permute.xlu0 %3702
    %v3705 = vsel %vm369, %v3703, %v3077
    %v3706 = vlaneseq
    %v3707 = vshrl.u32 %v3706, 7
    %v3708 = vsub.s32 3, %v3707
    %v3709 = vrot.slane %v3071, %v3708
    %v3711 = vsel %vm375, %v3705, 0
    %3713 = vmatprep.subr.mxu0 0.0
    %3714 = vmatpush1.msra.mxu0 %v3693
    %3715 = vmatprep.subr.mxu0 0.0
    %3716 = vmatpush1.msra.mxu0 %v3694
    %3717 = vmatprep.subr.mxu0 0.0
    %3718 = vmatpush1.msra.mxu0 %v3695
    %3719 = vmatprep.subr.mxu0 0.0
    %3720 = vmatpush1.msra.mxu0 %v3696
    %3721 = vmatprep.subr.mxu0 0.0
    %3722 = vmatpush1.msra.mxu0 %v3697
    %3723 = vmatprep.subr.mxu0 0.0
    %3724 = vmatpush1.msra.mxu0 %v3698
    %3725 = vmatprep.subr.mxu0 0.0
    %3726 = vmatpush1.msra.mxu0 %v3699
    %3727 = vmatprep.subr.mxu0 0.0
    %3728 = vmatpush1.msra.mxu0 %v3700
    %3729 = vmatprep.subr.mxu0 0.0
    %3730 = vmatpush1.msra.mxu0 0.0
    %3731 = vmatprep.subr.mxu0 0.0
    %3732 = vmatpush1.msra.mxu0 0.0
    %3733 = vmatprep.subr.mxu0 0.0
    %3734 = vmatpush1.msra.mxu0 0.0
    %3735 = vmatprep.subr.mxu0 0.0
    %3736 = vmatpush1.msra.mxu0 0.0
    %3737 = vmatprep.subr.mxu0 0.0
    %3738 = vmatpush1.msra.mxu0 0.0
    %3739 = vmatprep.subr.mxu0 0.0
    %3740 = vmatpush1.msra.mxu0 0.0
    %3741 = vmatprep.subr.mxu0 0.0
    %3742 = vmatpush1.msra.mxu0 0.0
    %3743 = vmatprep.subr.mxu0 0.0
    %3744 = vmatpush1.msra.mxu0 0.0
    %3745 = vmatprep.subr.mxu0 0.0
    %3746 = vmatpush1.msra.mxu0 0.0
    %3747 = vmatprep.subr.mxu0 0.0
    %3748 = vmatpush1.msra.mxu0 0.0
    %3749 = vmatprep.subr.mxu0 0.0
    %3750 = vmatpush1.msra.mxu0 0.0
    %3751 = vmatprep.subr.mxu0 0.0
    %3752 = vmatpush1.msra.mxu0 0.0
    %3753 = vmatprep.subr.mxu0 0.0
    %3754 = vmatpush1.msra.mxu0 0.0
    %3755 = vmatprep.subr.mxu0 0.0
    %3756 = vmatpush1.msra.mxu0 0.0
    %3757 = vmatprep.subr.mxu0 0.0
    %3758 = vmatpush1.msra.mxu0 0.0
    %3759 = vmatprep.subr.mxu0 0.0
    %3760 = vmatpush1.msra.mxu0 0.0
    %3761 = vmatprep.subr.mxu0 0.0
    %3762 = vmatpush1.msra.mxu0 0.0
    %3763 = vmatprep.subr.mxu0 0.0
    %3764 = vmatpush1.msra.mxu0 0.0
    %3765 = vmatprep.subr.mxu0 0.0
    %3766 = vmatpush1.msra.mxu0 0.0
    %3767 = vmatprep.subr.mxu0 0.0
    %3768 = vmatpush1.msra.mxu0 0.0
    %3769 = vmatprep.subr.mxu0 0.0
    %3770 = vmatpush1.msra.mxu0 0.0
    %3771 = vmatprep.subr.mxu0 0.0
    %3772 = vmatpush1.msra.mxu0 0.0
    %3773 = vmatprep.subr.mxu0 0.0
    %3774 = vmatpush1.msra.mxu0 0.0
    %3775 = vmatprep.subr.mxu0 0.0
    %3776 = vmatpush1.msra.mxu0 0.0
    %3777 = vmatprep.mubr.f32.mxu0 0.0
    %3778 = vmatmul.mubr.f32.gmra.mrb[0].mxu0 %v3711
    %v3779 = vpop.f32.mrb[0].mxu0
    %v3780 = vadd.f32 %v3709, %v3779
    %v3781 = vpop.f32.mrb[0].mxu0
    %3782 = vdwg.mxu0
    %v3783 = vmul.f32 %v3780, 0.5
    %v3784 = vtanh.pop %v3783
    %v3785 = vadd.f32 %v3784, 1.0
    %v3786 = vmul.f32 %v3785, 0.5
    %v3787 = vtanh.pop %v3780
    %v3788 = vmul.f32 %v3786, %v2944
    %3790 = vrot.lane.b32.xlu0 %v3787, 64
    %v3791 = vpop.permute.xlu0 %3790
    %v3793 = vmul.f32 %v3786, %v3791
    %3795 = vrot.lane.b32.xlu0 %v3793, 32
    %v3796 = vpop.permute.xlu0 %3795
    %v3798 = vadd.f32 %v3788, %v3796
    %v3799 = vtanh.pop %v3798
    %3801 = vrot.lane.b32.xlu0 %v3799, 64
    %v3802 = vpop.permute.xlu0 %3801
    %v3804 = vmul.f32 %v3786, %v3802
    %v3805 = vld [vmem:[#allocation2 + $0x270] sm:$0xff]
    %v3806 = vld [vmem:[#allocation2 + $0x278] sm:$0xff]
    %v3807 = vld [vmem:[#allocation2 + $0x280] sm:$0xff]
    %v3808 = vld [vmem:[#allocation2 + $0x288] sm:$0xff]
    %v3809 = vld [vmem:[#allocation2 + $0x290] sm:$0x1]
    %v3810 = vlaneseq
    %v3811 = vshrl.u32 %v3810, 7
    %v3812 = vsub.s32 0, %v3811
    %v3813 = vrot.slane %v3809, %v3812
    %3815 = vrot.lane.b32.xlu0 %v3804, 32
    %v3816 = vpop.permute.xlu0 %3815
    %v3817 = vsel %vm369, %v3816, 0
    %3819 = vmatprep.subr.mxu0 0.0
    %3820 = vmatpush1.msra.mxu0 %v3805
    %3821 = vmatprep.subr.mxu0 0.0
    %3822 = vmatpush1.msra.mxu0 %v3806
    %3823 = vmatprep.subr.mxu0 0.0
    %3824 = vmatpush1.msra.mxu0 %v3807
    %3825 = vmatprep.subr.mxu0 0.0
    %3826 = vmatpush1.msra.mxu0 %v3808
    %3827 = vmatprep.subr.mxu0 0.0
    %3828 = vmatpush1.msra.mxu0 0.0
    %3829 = vmatprep.subr.mxu0 0.0
    %3830 = vmatpush1.msra.mxu0 0.0
    %3831 = vmatprep.subr.mxu0 0.0
    %3832 = vmatpush1.msra.mxu0 0.0
    %3833 = vmatprep.subr.mxu0 0.0
    %3834 = vmatpush1.msra.mxu0 0.0
    %3835 = vmatprep.subr.mxu0 0.0
    %3836 = vmatpush1.msra.mxu0 0.0
    %3837 = vmatprep.subr.mxu0 0.0
    %3838 = vmatpush1.msra.mxu0 0.0
    %3839 = vmatprep.subr.mxu0 0.0
    %3840 = vmatpush1.msra.mxu0 0.0
    %3841 = vmatprep.subr.mxu0 0.0
    %3842 = vmatpush1.msra.mxu0 0.0
    %3843 = vmatprep.subr.mxu0 0.0
    %3844 = vmatpush1.msra.mxu0 0.0
    %3845 = vmatprep.subr.mxu0 0.0
    %3846 = vmatpush1.msra.mxu0 0.0
    %3847 = vmatprep.subr.mxu0 0.0
    %3848 = vmatpush1.msra.mxu0 0.0
    %3849 = vmatprep.subr.mxu0 0.0
    %3850 = vmatpush1.msra.mxu0 0.0
    %3851 = vmatprep.subr.mxu0 0.0
    %3852 = vmatpush1.msra.mxu0 0.0
    %3853 = vmatprep.subr.mxu0 0.0
    %3854 = vmatpush1.msra.mxu0 0.0
    %3855 = vmatprep.subr.mxu0 0.0
    %3856 = vmatpush1.msra.mxu0 0.0
    %3857 = vmatprep.subr.mxu0 0.0
    %3858 = vmatpush1.msra.mxu0 0.0
    %3859 = vmatprep.subr.mxu0 0.0
    %3860 = vmatpush1.msra.mxu0 0.0
    %3861 = vmatprep.subr.mxu0 0.0
    %3862 = vmatpush1.msra.mxu0 0.0
    %3863 = vmatprep.subr.mxu0 0.0
    %3864 = vmatpush1.msra.mxu0 0.0
    %3865 = vmatprep.subr.mxu0 0.0
    %3866 = vmatpush1.msra.mxu0 0.0
    %3867 = vmatprep.subr.mxu0 0.0
    %3868 = vmatpush1.msra.mxu0 0.0
    %3869 = vmatprep.subr.mxu0 0.0
    %3870 = vmatpush1.msra.mxu0 0.0
    %3871 = vmatprep.subr.mxu0 0.0
    %3872 = vmatpush1.msra.mxu0 0.0
    %3873 = vmatprep.subr.mxu0 0.0
    %3874 = vmatpush1.msra.mxu0 0.0
    %3875 = vmatprep.subr.mxu0 0.0
    %3876 = vmatpush1.msra.mxu0 0.0
    %3877 = vmatprep.subr.mxu0 0.0
    %3878 = vmatpush1.msra.mxu0 0.0
    %3879 = vmatprep.subr.mxu0 0.0
    %3880 = vmatpush1.msra.mxu0 0.0
    %3881 = vmatprep.subr.mxu0 0.0
    %3882 = vmatpush1.msra.mxu0 0.0
    %3883 = vmatprep.mubr.f32.mxu0 0.0
    %3884 = vmatmul.mubr.f32.gmra.mrb[0].mxu0 %v3817
    %v3885 = vpop.f32.mrb[0].mxu0
    %v3886 = vadd.f32 %v3813, %v3885
    %v3887 = vpop.f32.mrb[0].mxu0
    %3888 = vdwg.mxu0
    %vm3889 = vcmp.ne.s32.totalorder %v27, 0
    %v3890 = vsel %vm3889, 1, 0
    %v3891 = vcvt.s32.f32 %v3890
    %v3892 = vsub.s32 %v27, 1
    %vm3893 = vcmp.gt.s32.totalorder %v3892, 0
    %v3894 = vsel %vm3893, %v3892, 0
    %3895 = vset.pattern.permute.xlu0 1
    %3896 = vperm.xlu0 %3895, %v3894
    %v3897 = vpop.permute.xlu0 %3896
    %vm3898 = vcmp.eq.s32.totalorder %v3897, %v35
    %v3899 = vsel %vm3898, 1, 0
    %v3900 = vcvt.s32.f32 %v3899
    %vm3901 = vcmask 92160
    %v3902 = vsel %vm3901, %v3886, -inf
    %3903 = vmax.xlane.f32.xlu0 %v3902
    %v3904 = vpop.xlane.xlu0 %3903
    %v3905 = vsub.f32 %v3886, %v3904
    %v3906 = vmul.f32 %v3905, 1.442695
    %v3907 = vpow.pop %v3906
    %v3908 = vsel %vm3901, %v3907, 0.0
    %3909 = vadd.xlane.f32.xlu0 %v3908
    %v3910 = vpop.xlane.xlu0 %3909
    %v3911 = vlog2.pop %v3910
    %v3912 = vmul.f32 %v3911, 0.6931472
    %v3913 = vadd.f32 %v3912, %v3904
    %v3914 = vmul.f32 %v3900, %v3886
    %v3915 = vsel %vm3901, %v3914, 0.0
    %3916 = vadd.xlane.f32.xlu0 %v3915
    %v3917 = vpop.xlane.xlu0 %3916
    %v3918 = vsub.f32 %v3913, %v3917
    %3920 = vrot.lane.b32.xlu0 %v3891, 127
    %v3921 = vpop.permute.xlu0 %3920
    %vm3923 = vcmask 2048
    %v3924 = vsel %vm3923, %v3921, 0.0
    %3925 = vadd.xlane.f32.xlu0 %v3924
    %v3926 = vpop.xlane.xlu0 %3925
    %v3927 = vrot.slane %v3926, 4
    %v3928 = vadd.f32 %v3926, %v3927
    %v3929 = vrot.slane %v3928, 2
    %v3930 = vadd.f32 %v3928, %v3929
    %v3931 = vrot.slane %v3930, 1
    %v3932 = vadd.f32 %v3930, %v3931
    %s3933 = vtos %v3932
    %v3934 = vstv %s3933
    %vm3935 = vcmp.gt.f32.partialorder %v3934, 0.0
    %v3936 = vmul.f32 %v3918, %v3891
    %3938 = vrot.lane.b32.xlu0 %v3936, 127
    %v3939 = vpop.permute.xlu0 %3938
    %v3941 = vsel %vm3923, %v3939, 0.0
    %3942 = vadd.xlane.f32.xlu0 %v3941
    %v3943 = vpop.xlane.xlu0 %3942
    %v3944 = vrot.slane %v3943, 4
    %v3945 = vadd.f32 %v3943, %v3944
    %v3946 = vrot.slane %v3945, 2
    %v3947 = vadd.f32 %v3945, %v3946
    %v3948 = vrot.slane %v3947, 1
    %v3949 = vadd.f32 %v3947, %v3948
    %s3950 = vtos %v3949
    %v3951 = vstv %s3950
    %v3952 = vmax.f32 %v3934, 1.0
    %v3953 = vrcp.pop %v3952
    %v3954 = vmul.f32 %v3951, %v3953
    %v3955 = vsel %vm3935, %v3954, 0.0
    %v3956 = vadd.f32 %v3955, 0.0
    %3958 = vrot.lane.b32.xlu0 %v3804, 64
    %v3959 = vpop.permute.xlu0 %3958
    %3961 = vrot.lane.b32.xlu0 %v3804, 96
    %v3962 = vpop.permute.xlu0 %3961
    %v3964 = vsel %vm369, %v3816, %v3959
    %v3965 = vsel %vm375, %v3964, %v3962
    %v3966 = vsel %vm2971, %v3965, %v3804
    %v3967 = vmul.f32 %v2972, %v3966
    %v3968 = vmul.f32 %v2973, %v3964
    %v3970 = vsel %vm375, %v3968, 0
    %3972 = vmatprep.subr.mxu0 0.0
    %3973 = vmatpush1.msra.mxu0 %v2974
    %3974 = vmatprep.subr.mxu0 0.0
    %3975 = vmatpush1.msra.mxu0 %v2975
    %3976 = vmatprep.subr.mxu0 0.0
    %3977 = vmatpush1.msra.mxu0 %v2976
    %3978 = vmatprep.subr.mxu0 0.0
    %3979 = vmatpush1.msra.mxu0 %v2977
    %3980 = vmatprep.subr.mxu0 0.0
    %3981 = vmatpush1.msra.mxu0 %v2978
    %3982 = vmatprep.subr.mxu0 0.0
    %3983 = vmatpush1.msra.mxu0 %v2979
    %3984 = vmatprep.subr.mxu0 0.0
    %3985 = vmatpush1.msra.mxu0 %v2980
    %3986 = vmatprep.subr.mxu0 0.0
    %3987 = vmatpush1.msra.mxu0 %v2981
    %3988 = vmatprep.subr.mxu0 0.0
    %3989 = vmatpush1.msra.mxu0 %v2982
    %3990 = vmatprep.subr.mxu0 0.0
    %3991 = vmatpush1.msra.mxu0 %v2983
    %3992 = vmatprep.subr.mxu0 0.0
    %3993 = vmatpush1.msra.mxu0 %v2984
    %3994 = vmatprep.subr.mxu0 0.0
    %3995 = vmatpush1.msra.mxu0 %v2985
    %3996 = vmatprep.subr.mxu0 0.0
    %3997 = vmatpush1.msra.mxu0 %v2986
    %3998 = vmatprep.subr.mxu0 0.0
    %3999 = vmatpush1.msra.mxu0 %v2987
    %4000 = vmatprep.subr.mxu0 0.0
    %4001 = vmatpush1.msra.mxu0 %v2988
    %4002 = vmatprep.subr.mxu0 0.0
    %4003 = vmatpush1.msra.mxu0 %v2989
    %4004 = vmatprep.subr.mxu0 0.0
    %4005 = vmatpush1.msra.mxu0 %v2990
    %4006 = vmatprep.subr.mxu0 0.0
    %4007 = vmatpush1.msra.mxu0 %v2991
    %4008 = vmatprep.subr.mxu0 0.0
    %4009 = vmatpush1.msra.mxu0 %v2992
    %4010 = vmatprep.subr.mxu0 0.0
    %4011 = vmatpush1.msra.mxu0 %v2993
    %4012 = vmatprep.subr.mxu0 0.0
    %4013 = vmatpush1.msra.mxu0 %v2994
    %4014 = vmatprep.subr.mxu0 0.0
    %4015 = vmatpush1.msra.mxu0 %v2995
    %4016 = vmatprep.subr.mxu0 0.0
    %4017 = vmatpush1.msra.mxu0 %v2996
    %4018 = vmatprep.subr.mxu0 0.0
    %4019 = vmatpush1.msra.mxu0 %v2997
    %4020 = vmatprep.subr.mxu0 0.0
    %4021 = vmatpush1.msra.mxu0 0.0
    %4022 = vmatprep.subr.mxu0 0.0
    %4023 = vmatpush1.msra.mxu0 0.0
    %4024 = vmatprep.subr.mxu0 0.0
    %4025 = vmatpush1.msra.mxu0 0.0
    %4026 = vmatprep.subr.mxu0 0.0
    %4027 = vmatpush1.msra.mxu0 0.0
    %4028 = vmatprep.subr.mxu0 0.0
    %4029 = vmatpush1.msra.mxu0 0.0
    %4030 = vmatprep.subr.mxu0 0.0
    %4031 = vmatpush1.msra.mxu0 0.0
    %4032 = vmatprep.subr.mxu0 0.0
    %4033 = vmatpush1.msra.mxu0 0.0
    %4034 = vmatprep.subr.mxu0 0.0
    %4035 = vmatpush1.msra.mxu0 0.0
    %4036 = vmatprep.mubr.f32.mxu0 %v3970
    %4037 = vmatmul.mubr.f32.gmra.mrb[0].mxu0 %v3967
    %v4038 = vpop.f32.mrb[0].mxu0
    %v4039 = vadd.f32 0.0, %v4038
    %v4040 = vpop.f32.mrb[0].mxu0
    %4041 = vdwg.mxu0
    %v4043 = vsel %vm3166, %v4039, 0
    %4045 = vmatprep.subr.mxu0 0.0
    %4046 = vmatpush1.msra.mxu0 %v3172
    %4047 = vmatprep.subr.mxu0 0.0
    %4048 = vmatpush1.msra.mxu0 0.0
    %4049 = vmatprep.subr.mxu0 0.0
    %4050 = vmatpush1.msra.mxu0 0.0
    %4051 = vmatprep.subr.mxu0 0.0
    %4052 = vmatpush1.msra.mxu0 0.0
    %4053 = vmatprep.subr.mxu0 0.0
    %4054 = vmatpush1.msra.mxu0 0.0
    %4055 = vmatprep.subr.mxu0 0.0
    %4056 = vmatpush1.msra.mxu0 0.0
    %4057 = vmatprep.subr.mxu0 0.0
    %4058 = vmatpush1.msra.mxu0 0.0
    %4059 = vmatprep.subr.mxu0 0.0
    %4060 = vmatpush1.msra.mxu0 0.0
    %4061 = vmatprep.subr.mxu0 0.0
    %4062 = vmatpush1.msra.mxu0 0.0
    %4063 = vmatprep.subr.mxu0 0.0
    %4064 = vmatpush1.msra.mxu0 0.0
    %4065 = vmatprep.subr.mxu0 0.0
    %4066 = vmatpush1.msra.mxu0 0.0
    %4067 = vmatprep.subr.mxu0 0.0
    %4068 = vmatpush1.msra.mxu0 0.0
    %4069 = vmatprep.subr.mxu0 0.0
    %4070 = vmatpush1.msra.mxu0 0.0
    %4071 = vmatprep.subr.mxu0 0.0
    %4072 = vmatpush1.msra.mxu0 0.0
    %4073 = vmatprep.subr.mxu0 0.0
    %4074 = vmatpush1.msra.mxu0 0.0
    %4075 = vmatprep.subr.mxu0 0.0
    %4076 = vmatpush1.msra.mxu0 0.0
    %4077 = vmatprep.subr.mxu0 0.0
    %4078 = vmatpush1.msra.mxu0 0.0
    %4079 = vmatprep.subr.mxu0 0.0
    %4080 = vmatpush1.msra.mxu0 0.0
    %4081 = vmatprep.subr.mxu0 0.0
    %4082 = vmatpush1.msra.mxu0 0.0
    %4083 = vmatprep.subr.mxu0 0.0
    %4084 = vmatpush1.msra.mxu0 0.0
    %4085 = vmatprep.subr.mxu0 0.0
    %4086 = vmatpush1.msra.mxu0 0.0
    %4087 = vmatprep.subr.mxu0 0.0
    %4088 = vmatpush1.msra.mxu0 0.0
    %4089 = vmatprep.subr.mxu0 0.0
    %4090 = vmatpush1.msra.mxu0 0.0
    %4091 = vmatprep.subr.mxu0 0.0
    %4092 = vmatpush1.msra.mxu0 0.0
    %4093 = vmatprep.subr.mxu0 0.0
    %4094 = vmatpush1.msra.mxu0 0.0
    %4095 = vmatprep.subr.mxu0 0.0
    %4096 = vmatpush1.msra.mxu0 0.0
    %4097 = vmatprep.subr.mxu0 0.0
    %4098 = vmatpush1.msra.mxu0 0.0
    %4099 = vmatprep.subr.mxu0 0.0
    %4100 = vmatpush1.msra.mxu0 0.0
    %4101 = vmatprep.subr.mxu0 0.0
    %4102 = vmatpush1.msra.mxu0 0.0
    %4103 = vmatprep.subr.mxu0 0.0
    %4104 = vmatpush1.msra.mxu0 0.0
    %4105 = vmatprep.subr.mxu0 0.0
    %4106 = vmatpush1.msra.mxu0 0.0
    %4107 = vmatprep.subr.mxu0 0.0
    %4108 = vmatpush1.msra.mxu0 0.0
    %4109 = vmatprep.mubr.f32.mxu0 0.0
    %4110 = vmatmul.mubr.f32.gmra.mrb[0].mxu0 %v4043
    %v4111 = vpop.f32.mrb[0].mxu0
    %v4112 = vadd.f32 %v3165, %v4111
    %v4113 = vpop.f32.mrb[0].mxu0
    %4114 = vdwg.mxu0
    %v4115 = vsel %vm3244, %v4112, -inf
    %4116 = vmax.xlane.f32.xlu0 %v4115
    %v4117 = vpop.xlane.xlu0 %4116
    %v4118 = vsub.f32 %v4112, %v4117
    %v4119 = vmul.f32 %v4118, 1.442695
    %v4120 = vpow.pop %v4119
    %v4121 = vsel %vm3244, %v4120, 0.0
    %4122 = vadd.xlane.f32.xlu0 %v4121
    %v4123 = vpop.xlane.xlu0 %4122
    %v4124 = vrcp.pop %v4123
    %v4125 = vmul.f32 %v4120, %v4124
    %v4126 = vmul.f32 %v4125, %v3068
    %4128 = vrot.lane.b32.xlu0 %v337, 6
    %v4129 = vpop.permute.xlu0 %4128
    %v4131 = vsel %vm3166, %v4126, %v4129
    %v4133 = vsel %vm3272, %v4131, 0
    %4135 = vmatprep.subr.mxu0 0.0
    %4136 = vmatpush1.msra.mxu0 %v3262
    %4137 = vmatprep.subr.mxu0 0.0
    %4138 = vmatpush1.msra.mxu0 %v3263
    %4139 = vmatprep.subr.mxu0 0.0
    %4140 = vmatpush1.msra.mxu0 %v3264
    %4141 = vmatprep.subr.mxu0 0.0
    %4142 = vmatpush1.msra.mxu0 %v3265
    %4143 = vmatprep.subr.mxu0 0.0
    %4144 = vmatpush1.msra.mxu0 %v3277
    %4145 = vmatprep.subr.mxu0 0.0
    %4146 = vmatpush1.msra.mxu0 0.0
    %4147 = vmatprep.subr.mxu0 0.0
    %4148 = vmatpush1.msra.mxu0 0.0
    %4149 = vmatprep.subr.mxu0 0.0
    %4150 = vmatpush1.msra.mxu0 0.0
    %4151 = vmatprep.subr.mxu0 0.0
    %4152 = vmatpush1.msra.mxu0 0.0
    %4153 = vmatprep.subr.mxu0 0.0
    %4154 = vmatpush1.msra.mxu0 0.0
    %4155 = vmatprep.subr.mxu0 0.0
    %4156 = vmatpush1.msra.mxu0 0.0
    %4157 = vmatprep.subr.mxu0 0.0
    %4158 = vmatpush1.msra.mxu0 0.0
    %4159 = vmatprep.subr.mxu0 0.0
    %4160 = vmatpush1.msra.mxu0 0.0
    %4161 = vmatprep.subr.mxu0 0.0
    %4162 = vmatpush1.msra.mxu0 0.0
    %4163 = vmatprep.subr.mxu0 0.0
    %4164 = vmatpush1.msra.mxu0 0.0
    %4165 = vmatprep.subr.mxu0 0.0
    %4166 = vmatpush1.msra.mxu0 0.0
    %4167 = vmatprep.subr.mxu0 0.0
    %4168 = vmatpush1.msra.mxu0 0.0
    %4169 = vmatprep.subr.mxu0 0.0
    %4170 = vmatpush1.msra.mxu0 0.0
    %4171 = vmatprep.subr.mxu0 0.0
    %4172 = vmatpush1.msra.mxu0 0.0
    %4173 = vmatprep.subr.mxu0 0.0
    %4174 = vmatpush1.msra.mxu0 0.0
    %4175 = vmatprep.subr.mxu0 0.0
    %4176 = vmatpush1.msra.mxu0 0.0
    %4177 = vmatprep.subr.mxu0 0.0
    %4178 = vmatpush1.msra.mxu0 0.0
    %4179 = vmatprep.subr.mxu0 0.0
    %4180 = vmatpush1.msra.mxu0 0.0
    %4181 = vmatprep.subr.mxu0 0.0
    %4182 = vmatpush1.msra.mxu0 0.0
    %4183 = vmatprep.subr.mxu0 0.0
    %4184 = vmatpush1.msra.mxu0 0.0
    %4185 = vmatprep.subr.mxu0 0.0
    %4186 = vmatpush1.msra.mxu0 0.0
    %4187 = vmatprep.subr.mxu0 0.0
    %4188 = vmatpush1.msra.mxu0 0.0
    %4189 = vmatprep.subr.mxu0 0.0
    %4190 = vmatpush1.msra.mxu0 0.0
    %4191 = vmatprep.subr.mxu0 0.0
    %4192 = vmatpush1.msra.mxu0 0.0
    %4193 = vmatprep.subr.mxu0 0.0
    %4194 = vmatpush1.msra.mxu0 0.0
    %4195 = vmatprep.subr.mxu0 0.0
    %4196 = vmatpush1.msra.mxu0 0.0
    %4197 = vmatprep.subr.mxu0 0.0
    %4198 = vmatpush1.msra.mxu0 0.0
    %4199 = vmatprep.mubr.f32.mxu0 0.0
    %4200 = vmatmul.mubr.f32.gmra.mrb[0].mxu0 %v4133
    %v4201 = vpop.f32.mrb[0].mxu0
    %v4202 = vadd.f32 %v3271, %v4201
    %v4203 = vpop.f32.mrb[0].mxu0
    %4204 = vdwg.mxu0
    %4205 = vrot.lane.b32.xlu0 %v3460, 64
    %v4206 = vpop.permute.xlu0 %4205
    %v4208 = vsel %vm369, %v4202, %v4206
    %v4210 = vsel %vm375, %v4208, 0
    %4212 = vmatprep.subr.mxu0 0.0
    %4213 = vmatpush1.msra.mxu0 %v3349
    %4214 = vmatprep.subr.mxu0 0.0
    %4215 = vmatpush1.msra.mxu0 %v3350
    %4216 = vmatprep.subr.mxu0 0.0
    %4217 = vmatpush1.msra.mxu0 %v3351
    %4218 = vmatprep.subr.mxu0 0.0
    %4219 = vmatpush1.msra.mxu0 %v3352
    %4220 = vmatprep.subr.mxu0 0.0
    %4221 = vmatpush1.msra.mxu0 %v3353
    %4222 = vmatprep.subr.mxu0 0.0
    %4223 = vmatpush1.msra.mxu0 %v3354
    %4224 = vmatprep.subr.mxu0 0.0
    %4225 = vmatpush1.msra.mxu0 %v3355
    %4226 = vmatprep.subr.mxu0 0.0
    %4227 = vmatpush1.msra.mxu0 %v3356
    %4228 = vmatprep.subr.mxu0 0.0
    %4229 = vmatpush1.msra.mxu0 0.0
    %4230 = vmatprep.subr.mxu0 0.0
    %4231 = vmatpush1.msra.mxu0 0.0
    %4232 = vmatprep.subr.mxu0 0.0
    %4233 = vmatpush1.msra.mxu0 0.0
    %4234 = vmatprep.subr.mxu0 0.0
    %4235 = vmatpush1.msra.mxu0 0.0
    %4236 = vmatprep.subr.mxu0 0.0
    %4237 = vmatpush1.msra.mxu0 0.0
    %4238 = vmatprep.subr.mxu0 0.0
    %4239 = vmatpush1.msra.mxu0 0.0
    %4240 = vmatprep.subr.mxu0 0.0
    %4241 = vmatpush1.msra.mxu0 0.0
    %4242 = vmatprep.subr.mxu0 0.0
    %4243 = vmatpush1.msra.mxu0 0.0
    %4244 = vmatprep.subr.mxu0 0.0
    %4245 = vmatpush1.msra.mxu0 0.0
    %4246 = vmatprep.subr.mxu0 0.0
    %4247 = vmatpush1.msra.mxu0 0.0
    %4248 = vmatprep.subr.mxu0 0.0
    %4249 = vmatpush1.msra.mxu0 0.0
    %4250 = vmatprep.subr.mxu0 0.0
    %4251 = vmatpush1.msra.mxu0 0.0
    %4252 = vmatprep.subr.mxu0 0.0
    %4253 = vmatpush1.msra.mxu0 0.0
    %4254 = vmatprep.subr.mxu0 0.0
    %4255 = vmatpush1.msra.mxu0 0.0
    %4256 = vmatprep.subr.mxu0 0.0
    %4257 = vmatpush1.msra.mxu0 0.0
    %4258 = vmatprep.subr.mxu0 0.0
    %4259 = vmatpush1.msra.mxu0 0.0
    %4260 = vmatprep.subr.mxu0 0.0
    %4261 = vmatpush1.msra.mxu0 0.0
    %4262 = vmatprep.subr.mxu0 0.0
    %4263 = vmatpush1.msra.mxu0 0.0
    %4264 = vmatprep.subr.mxu0 0.0
    %4265 = vmatpush1.msra.mxu0 0.0
    %4266 = vmatprep.subr.mxu0 0.0
    %4267 = vmatpush1.msra.mxu0 0.0
    %4268 = vmatprep.subr.mxu0 0.0
    %4269 = vmatpush1.msra.mxu0 0.0
    %4270 = vmatprep.subr.mxu0 0.0
    %4271 = vmatpush1.msra.mxu0 0.0
    %4272 = vmatprep.subr.mxu0 0.0
    %4273 = vmatpush1.msra.mxu0 0.0
    %4274 = vmatprep.subr.mxu0 0.0
    %4275 = vmatpush1.msra.mxu0 0.0
    %4276 = vmatprep.mubr.f32.mxu0 0.0
    %4277 = vmatmul.mubr.f32.gmra.mrb[0].mxu0 %v4210
    %v4278 = vpop.f32.mrb[0].mxu0
    %v4279 = vadd.f32 %v3365, %v4278
    %v4280 = vpop.f32.mrb[0].mxu0
    %4281 = vdwg.mxu0
    %v4282 = vmul.f32 %v4279, 0.5
    %v4283 = vtanh.pop %v4282
    %v4284 = vadd.f32 %v4283, 1.0
    %v4285 = vmul.f32 %v4284, 0.5
    %v4286 = vtanh.pop %v4279
    %v4287 = vmul.f32 %v4285, %v3454
    %4289 = vrot.lane.b32.xlu0 %v4286, 64
    %v4290 = vpop.permute.xlu0 %4289
    %v4292 = vmul.f32 %v4285, %v4290
    %4294 = vrot.lane.b32.xlu0 %v4292, 32
    %v4295 = vpop.permute.xlu0 %4294
    %v4297 = vadd.f32 %v4287, %v4295
    %v4298 = vtanh.pop %v4297
    %4300 = vrot.lane.b32.xlu0 %v4298, 64
    %v4301 = vpop.permute.xlu0 %4300
    %v4303 = vmul.f32 %v4285, %v4301
    %4305 = vrot.lane.b32.xlu0 %v4303, 32
    %v4306 = vpop.permute.xlu0 %4305
    %4308 = vrot.lane.b32.xlu0 %v3576, 64
    %v4309 = vpop.permute.xlu0 %4308
    %v4311 = vsel %vm369, %v4306, %v4309
    %v4313 = vsel %vm375, %v4311, 0
    %4315 = vmatprep.subr.mxu0 0.0
    %4316 = vmatpush1.msra.mxu0 %v3461
    %4317 = vmatprep.subr.mxu0 0.0
    %4318 = vmatpush1.msra.mxu0 %v3462
    %4319 = vmatprep.subr.mxu0 0.0
    %4320 = vmatpush1.msra.mxu0 %v3463
    %4321 = vmatprep.subr.mxu0 0.0
    %4322 = vmatpush1.msra.mxu0 %v3464
    %4323 = vmatprep.subr.mxu0 0.0
    %4324 = vmatpush1.msra.mxu0 %v3465
    %4325 = vmatprep.subr.mxu0 0.0
    %4326 = vmatpush1.msra.mxu0 %v3466
    %4327 = vmatprep.subr.mxu0 0.0
    %4328 = vmatpush1.msra.mxu0 %v3467
    %4329 = vmatprep.subr.mxu0 0.0
    %4330 = vmatpush1.msra.mxu0 %v3468
    %4331 = vmatprep.subr.mxu0 0.0
    %4332 = vmatpush1.msra.mxu0 0.0
    %4333 = vmatprep.subr.mxu0 0.0
    %4334 = vmatpush1.msra.mxu0 0.0
    %4335 = vmatprep.subr.mxu0 0.0
    %4336 = vmatpush1.msra.mxu0 0.0
    %4337 = vmatprep.subr.mxu0 0.0
    %4338 = vmatpush1.msra.mxu0 0.0
    %4339 = vmatprep.subr.mxu0 0.0
    %4340 = vmatpush1.msra.mxu0 0.0
    %4341 = vmatprep.subr.mxu0 0.0
    %4342 = vmatpush1.msra.mxu0 0.0
    %4343 = vmatprep.subr.mxu0 0.0
    %4344 = vmatpush1.msra.mxu0 0.0
    %4345 = vmatprep.subr.mxu0 0.0
    %4346 = vmatpush1.msra.mxu0 0.0
    %4347 = vmatprep.subr.mxu0 0.0
    %4348 = vmatpush1.msra.mxu0 0.0
    %4349 = vmatprep.subr.mxu0 0.0
    %4350 = vmatpush1.msra.mxu0 0.0
    %4351 = vmatprep.subr.mxu0 0.0
    %4352 = vmatpush1.msra.mxu0 0.0
    %4353 = vmatprep.subr.mxu0 0.0
    %4354 = vmatpush1.msra.mxu0 0.0
    %4355 = vmatprep.subr.mxu0 0.0
    %4356 = vmatpush1.msra.mxu0 0.0
    %4357 = vmatprep.subr.mxu0 0.0
    %4358 = vmatpush1.msra.mxu0 0.0
    %4359 = vmatprep.subr.mxu0 0.0
    %4360 = vmatpush1.msra.mxu0 0.0
    %4361 = vmatprep.subr.mxu0 0.0
    %4362 = vmatpush1.msra.mxu0 0.0
    %4363 = vmatprep.subr.mxu0 0.0
    %4364 = vmatpush1.msra.mxu0 0.0
    %4365 = vmatprep.subr.mxu0 0.0
    %4366 = vmatpush1.msra.mxu0 0.0
    %4367 = vmatprep.subr.mxu0 0.0
    %4368 = vmatpush1.msra.mxu0 0.0
    %4369 = vmatprep.subr.mxu0 0.0
    %4370 = vmatpush1.msra.mxu0 0.0
    %4371 = vmatprep.subr.mxu0 0.0
    %4372 = vmatpush1.msra.mxu0 0.0
    %4373 = vmatprep.subr.mxu0 0.0
    %4374 = vmatpush1.msra.mxu0 0.0
    %4375 = vmatprep.subr.mxu0 0.0
    %4376 = vmatpush1.msra.mxu0 0.0
    %4377 = vmatprep.subr.mxu0 0.0
    %4378 = vmatpush1.msra.mxu0 0.0
    %4379 = vmatprep.mubr.f32.mxu0 0.0
    %4380 = vmatmul.mubr.f32.gmra.mrb[0].mxu0 %v4313
    %v4381 = vpop.f32.mrb[0].mxu0
    %v4382 = vadd.f32 %v3481, %v4381
    %v4383 = vpop.f32.mrb[0].mxu0
    %4384 = vdwg.mxu0
    %v4385 = vmul.f32 %v4382, 0.5
    %v4386 = vtanh.pop %v4385
    %v4387 = vadd.f32 %v4386, 1.0
    %v4388 = vmul.f32 %v4387, 0.5
    %v4389 = vtanh.pop %v4382
    %v4390 = vmul.f32 %v4388, %v3570
    %4392 = vrot.lane.b32.xlu0 %v4389, 64
    %v4393 = vpop.permute.xlu0 %4392
    %v4395 = vmul.f32 %v4388, %v4393
    %4397 = vrot.lane.b32.xlu0 %v4395, 32
    %v4398 = vpop.permute.xlu0 %4397
    %v4400 = vadd.f32 %v4390, %v4398
    %v4401 = vtanh.pop %v4400
    %4403 = vrot.lane.b32.xlu0 %v4401, 64
    %v4404 = vpop.permute.xlu0 %4403
    %v4406 = vmul.f32 %v4388, %v4404
    %4408 = vrot.lane.b32.xlu0 %v4406, 32
    %v4409 = vpop.permute.xlu0 %4408
    %4411 = vrot.lane.b32.xlu0 %v3692, 64
    %v4412 = vpop.permute.xlu0 %4411
    %v4414 = vsel %vm369, %v4409, %v4412
    %v4416 = vsel %vm375, %v4414, 0
    %4418 = vmatprep.subr.mxu0 0.0
    %4419 = vmatpush1.msra.mxu0 %v3577
    %4420 = vmatprep.subr.mxu0 0.0
    %4421 = vmatpush1.msra.mxu0 %v3578
    %4422 = vmatprep.subr.mxu0 0.0
    %4423 = vmatpush1.msra.mxu0 %v3579
    %4424 = vmatprep.subr.mxu0 0.0
    %4425 = vmatpush1.msra.mxu0 %v3580
    %4426 = vmatprep.subr.mxu0 0.0
    %4427 = vmatpush1.msra.mxu0 %v3581
    %4428 = vmatprep.subr.mxu0 0.0
    %4429 = vmatpush1.msra.mxu0 %v3582
    %4430 = vmatprep.subr.mxu0 0.0
    %4431 = vmatpush1.msra.mxu0 %v3583
    %4432 = vmatprep.subr.mxu0 0.0
    %4433 = vmatpush1.msra.mxu0 %v3584
    %4434 = vmatprep.subr.mxu0 0.0
    %4435 = vmatpush1.msra.mxu0 0.0
    %4436 = vmatprep.subr.mxu0 0.0
    %4437 = vmatpush1.msra.mxu0 0.0
    %4438 = vmatprep.subr.mxu0 0.0
    %4439 = vmatpush1.msra.mxu0 0.0
    %4440 = vmatprep.subr.mxu0 0.0
    %4441 = vmatpush1.msra.mxu0 0.0
    %4442 = vmatprep.subr.mxu0 0.0
    %4443 = vmatpush1.msra.mxu0 0.0
    %4444 = vmatprep.subr.mxu0 0.0
    %4445 = vmatpush1.msra.mxu0 0.0
    %4446 = vmatprep.subr.mxu0 0.0
    %4447 = vmatpush1.msra.mxu0 0.0
    %4448 = vmatprep.subr.mxu0 0.0
    %4449 = vmatpush1.msra.mxu0 0.0
    %4450 = vmatprep.subr.mxu0 0.0
    %4451 = vmatpush1.msra.mxu0 0.0
    %4452 = vmatprep.subr.mxu0 0.0
    %4453 = vmatpush1.msra.mxu0 0.0
    %4454 = vmatprep.subr.mxu0 0.0
    %4455 = vmatpush1.msra.mxu0 0.0
    %4456 = vmatprep.subr.mxu0 0.0
    %4457 = vmatpush1.msra.mxu0 0.0
    %4458 = vmatprep.subr.mxu0 0.0
    %4459 = vmatpush1.msra.mxu0 0.0
    %4460 = vmatprep.subr.mxu0 0.0
    %4461 = vmatpush1.msra.mxu0 0.0
    %4462 = vmatprep.subr.mxu0 0.0
    %4463 = vmatpush1.msra.mxu0 0.0
    %4464 = vmatprep.subr.mxu0 0.0
    %4465 = vmatpush1.msra.mxu0 0.0
    %4466 = vmatprep.subr.mxu0 0.0
    %4467 = vmatpush1.msra.mxu0 0.0
    %4468 = vmatprep.subr.mxu0 0.0
    %4469 = vmatpush1.msra.mxu0 0.0
    %4470 = vmatprep.subr.mxu0 0.0
    %4471 = vmatpush1.msra.mxu0 0.0
    %4472 = vmatprep.subr.mxu0 0.0
    %4473 = vmatpush1.msra.mxu0 0.0
    %4474 = vmatprep.subr.mxu0 0.0
    %4475 = vmatpush1.msra.mxu0 0.0
    %4476 = vmatprep.subr.mxu0 0.0
    %4477 = vmatpush1.msra.mxu0 0.0
    %4478 = vmatprep.subr.mxu0 0.0
    %4479 = vmatpush1.msra.mxu0 0.0
    %4480 = vmatprep.subr.mxu0 0.0
    %4481 = vmatpush1.msra.mxu0 0.0
    %4482 = vmatprep.mubr.f32.mxu0 0.0
    %4483 = vmatmul.mubr.f32.gmra.mrb[0].mxu0 %v4416
    %v4484 = vpop.f32.mrb[0].mxu0
    %v4485 = vadd.f32 %v3597, %v4484
    %v4486 = vpop.f32.mrb[0].mxu0
    %4487 = vdwg.mxu0
    %v4488 = vmul.f32 %v4485, 0.5
    %v4489 = vtanh.pop %v4488
    %v4490 = vadd.f32 %v4489, 1.0
    %v4491 = vmul.f32 %v4490, 0.5
    %v4492 = vtanh.pop %v4485
    %v4493 = vmul.f32 %v4491, %v3686
    %4495 = vrot.lane.b32.xlu0 %v4492, 64
    %v4496 = vpop.permute.xlu0 %4495
    %v4498 = vmul.f32 %v4491, %v4496
    %4500 = vrot.lane.b32.xlu0 %v4498, 32
    %v4501 = vpop.permute.xlu0 %4500
    %v4503 = vadd.f32 %v4493, %v4501
    %v4504 = vtanh.pop %v4503
    %4506 = vrot.lane.b32.xlu0 %v4504, 64
    %v4507 = vpop.permute.xlu0 %4506
    %v4509 = vmul.f32 %v4491, %v4507
    %4511 = vrot.lane.b32.xlu0 %v4509, 32
    %v4512 = vpop.permute.xlu0 %4511
    %v4514 = vsel %vm369, %v4512, %v3959
    %v4516 = vsel %vm375, %v4514, 0
    %4518 = vmatprep.subr.mxu0 0.0
    %4519 = vmatpush1.msra.mxu0 %v3693
    %4520 = vmatprep.subr.mxu0 0.0
    %4521 = vmatpush1.msra.mxu0 %v3694
    %4522 = vmatprep.subr.mxu0 0.0
    %4523 = vmatpush1.msra.mxu0 %v3695
    %4524 = vmatprep.subr.mxu0 0.0
    %4525 = vmatpush1.msra.mxu0 %v3696
    %4526 = vmatprep.subr.mxu0 0.0
    %4527 = vmatpush1.msra.mxu0 %v3697
    %4528 = vmatprep.subr.mxu0 0.0
    %4529 = vmatpush1.msra.mxu0 %v3698
    %4530 = vmatprep.subr.mxu0 0.0
    %4531 = vmatpush1.msra.mxu0 %v3699
    %4532 = vmatprep.subr.mxu0 0.0
    %4533 = vmatpush1.msra.mxu0 %v3700
    %4534 = vmatprep.subr.mxu0 0.0
    %4535 = vmatpush1.msra.mxu0 0.0
    %4536 = vmatprep.subr.mxu0 0.0
    %4537 = vmatpush1.msra.mxu0 0.0
    %4538 = vmatprep.subr.mxu0 0.0
    %4539 = vmatpush1.msra.mxu0 0.0
    %4540 = vmatprep.subr.mxu0 0.0
    %4541 = vmatpush1.msra.mxu0 0.0
    %4542 = vmatprep.subr.mxu0 0.0
    %4543 = vmatpush1.msra.mxu0 0.0
    %4544 = vmatprep.subr.mxu0 0.0
    %4545 = vmatpush1.msra.mxu0 0.0
    %4546 = vmatprep.subr.mxu0 0.0
    %4547 = vmatpush1.msra.mxu0 0.0
    %4548 = vmatprep.subr.mxu0 0.0
    %4549 = vmatpush1.msra.mxu0 0.0
    %4550 = vmatprep.subr.mxu0 0.0
    %4551 = vmatpush1.msra.mxu0 0.0
    %4552 = vmatprep.subr.mxu0 0.0
    %4553 = vmatpush1.msra.mxu0 0.0
    %4554 = vmatprep.subr.mxu0 0.0
    %4555 = vmatpush1.msra.mxu0 0.0
    %4556 = vmatprep.subr.mxu0 0.0
    %4557 = vmatpush1.msra.mxu0 0.0
    %4558 = vmatprep.subr.mxu0 0.0
    %4559 = vmatpush1.msra.mxu0 0.0
    %4560 = vmatprep.subr.mxu0 0.0
    %4561 = vmatpush1.msra.mxu0 0.0
    %4562 = vmatprep.subr.mxu0 0.0
    %4563 = vmatpush1.msra.mxu0 0.0
    %4564 = vmatprep.subr.mxu0 0.0
    %4565 = vmatpush1.msra.mxu0 0.0
    %4566 = vmatprep.subr.mxu0 0.0
    %4567 = vmatpush1.msra.mxu0 0.0
    %4568 = vmatprep.subr.mxu0 0.0
    %4569 = vmatpush1.msra.mxu0 0.0
    %4570 = vmatprep.subr.mxu0 0.0
    %4571 = vmatpush1.msra.mxu0 0.0
    %4572 = vmatprep.subr.mxu0 0.0
    %4573 = vmatpush1.msra.mxu0 0.0
    %4574 = vmatprep.subr.mxu0 0.0
    %4575 = vmatpush1.msra.mxu0 0.0
    %4576 = vmatprep.subr.mxu0 0.0
    %4577 = vmatpush1.msra.mxu0 0.0
    %4578 = vmatprep.subr.mxu0 0.0
    %4579 = vmatpush1.msra.mxu0 0.0
    %4580 = vmatprep.subr.mxu0 0.0
    %4581 = vmatpush1.msra.mxu0 0.0
    %4582 = vmatprep.mubr.f32.mxu0 0.0
    %4583 = vmatmul.mubr.f32.gmra.mrb[0].mxu0 %v4516
    %v4584 = vpop.f32.mrb[0].mxu0
    %v4585 = vadd.f32 %v3709, %v4584
    %v4586 = vpop.f32.mrb[0].mxu0
    %4587 = vdwg.mxu0
    %v4588 = vmul.f32 %v4585, 0.5
    %v4589 = vtanh.pop %v4588
    %v4590 = vadd.f32 %v4589, 1.0
    %v4591 = vmul.f32 %v4590, 0.5
    %v4592 = vtanh.pop %v4585
    %v4593 = vmul.f32 %v4591, %v3798
    %4595 = vrot.lane.b32.xlu0 %v4592, 64
    %v4596 = vpop.permute.xlu0 %4595
    %v4598 = vmul.f32 %v4591, %v4596
    %4600 = vrot.lane.b32.xlu0 %v4598, 32
    %v4601 = vpop.permute.xlu0 %4600
    %v4603 = vadd.f32 %v4593, %v4601
    %v4604 = vtanh.pop %v4603
    %4606 = vrot.lane.b32.xlu0 %v4604, 64
    %v4607 = vpop.permute.xlu0 %4606
    %v4609 = vmul.f32 %v4591, %v4607
    %4611 = vrot.lane.b32.xlu0 %v4609, 32
    %v4612 = vpop.permute.xlu0 %4611
    %v4613 = vsel %vm369, %v4612, 0
    %4615 = vmatprep.subr.mxu0 0.0
    %4616 = vmatpush1.msra.mxu0 %v3805
    %4617 = vmatprep.subr.mxu0 0.0
    %4618 = vmatpush1.msra.mxu0 %v3806
    %4619 = vmatprep.subr.mxu0 0.0
    %4620 = vmatpush1.msra.mxu0 %v3807
    %4621 = vmatprep.subr.mxu0 0.0
    %4622 = vmatpush1.msra.mxu0 %v3808
    %4623 = vmatprep.subr.mxu0 0.0
    %4624 = vmatpush1.msra.mxu0 0.0
    %4625 = vmatprep.subr.mxu0 0.0
    %4626 = vmatpush1.msra.mxu0 0.0
    %4627 = vmatprep.subr.mxu0 0.0
    %4628 = vmatpush1.msra.mxu0 0.0
    %4629 = vmatprep.subr.mxu0 0.0
    %4630 = vmatpush1.msra.mxu0 0.0
    %4631 = vmatprep.subr.mxu0 0.0
    %4632 = vmatpush1.msra.mxu0 0.0
    %4633 = vmatprep.subr.mxu0 0.0
    %4634 = vmatpush1.msra.mxu0 0.0
    %4635 = vmatprep.subr.mxu0 0.0
    %4636 = vmatpush1.msra.mxu0 0.0
    %4637 = vmatprep.subr.mxu0 0.0
    %4638 = vmatpush1.msra.mxu0 0.0
    %4639 = vmatprep.subr.mxu0 0.0
    %4640 = vmatpush1.msra.mxu0 0.0
    %4641 = vmatprep.subr.mxu0 0.0
    %4642 = vmatpush1.msra.mxu0 0.0
    %4643 = vmatprep.subr.mxu0 0.0
    %4644 = vmatpush1.msra.mxu0 0.0
    %4645 = vmatprep.subr.mxu0 0.0
    %4646 = vmatpush1.msra.mxu0 0.0
    %4647 = vmatprep.subr.mxu0 0.0
    %4648 = vmatpush1.msra.mxu0 0.0
    %4649 = vmatprep.subr.mxu0 0.0
    %4650 = vmatpush1.msra.mxu0 0.0
    %4651 = vmatprep.subr.mxu0 0.0
    %4652 = vmatpush1.msra.mxu0 0.0
    %4653 = vmatprep.subr.mxu0 0.0
    %4654 = vmatpush1.msra.mxu0 0.0
    %4655 = vmatprep.subr.mxu0 0.0
    %4656 = vmatpush1.msra.mxu0 0.0
    %4657 = vmatprep.subr.mxu0 0.0
    %4658 = vmatpush1.msra.mxu0 0.0
    %4659 = vmatprep.subr.mxu0 0.0
    %4660 = vmatpush1.msra.mxu0 0.0
    %4661 = vmatprep.subr.mxu0 0.0
    %4662 = vmatpush1.msra.mxu0 0.0
    %4663 = vmatprep.subr.mxu0 0.0
    %4664 = vmatpush1.msra.mxu0 0.0
    %4665 = vmatprep.subr.mxu0 0.0
    %4666 = vmatpush1.msra.mxu0 0.0
    %4667 = vmatprep.subr.mxu0 0.0
    %4668 = vmatpush1.msra.mxu0 0.0
    %4669 = vmatprep.subr.mxu0 0.0
    %4670 = vmatpush1.msra.mxu0 0.0
    %4671 = vmatprep.subr.mxu0 0.0
    %4672 = vmatpush1.msra.mxu0 0.0
    %4673 = vmatprep.subr.mxu0 0.0
    %4674 = vmatpush1.msra.mxu0 0.0
    %4675 = vmatprep.subr.mxu0 0.0
    %4676 = vmatpush1.msra.mxu0 0.0
    %4677 = vmatprep.subr.mxu0 0.0
    %4678 = vmatpush1.msra.mxu0 0.0
    %4679 = vmatprep.mubr.f32.mxu0 0.0
    %4680 = vmatmul.mubr.f32.gmra.mrb[0].mxu0 %v4613
    %v4681 = vpop.f32.mrb[0].mxu0
    %v4682 = vadd.f32 %v3813, %v4681
    %v4683 = vpop.f32.mrb[0].mxu0
    %4684 = vdwg.mxu0
    %4685 = vset.pattern.permute.xlu0 2
    %4686 = vperm.xlu0 %4685, %v3894
    %v4687 = vpop.permute.xlu0 %4686
    %vm4688 = vcmp.eq.s32.totalorder %v4687, %v35
    %v4689 = vsel %vm4688, 1, 0
    %v4690 = vcvt.s32.f32 %v4689
    %v4691 = vsel %vm3901, %v4682, -inf
    %4692 = vmax.xlane.f32.xlu0 %v4691
    %v4693 = vpop.xlane.xlu0 %4692
    %v4694 = vsub.f32 %v4682, %v4693
    %v4695 = vmul.f32 %v4694, 1.442695
    %v4696 = vpow.pop %v4695
    %v4697 = vsel %vm3901, %v4696, 0.0
    %4698 = vadd.xlane.f32.xlu0 %v4697
    %v4699 = vpop.xlane.xlu0 %4698
    %v4700 = vlog2.pop %v4699
    %v4701 = vmul.f32 %v4700, 0.6931472
    %v4702 = vadd.f32 %v4701, %v4693
    %v4703 = vmul.f32 %v4690, %v4682
    %v4704 = vsel %vm3901, %v4703, 0.0
    %4705 = vadd.xlane.f32.xlu0 %v4704
    %v4706 = vpop.xlane.xlu0 %4705
    %v4707 = vsub.f32 %v4702, %v4706
    %4708 = vrot.lane.b32.xlu0 %v3891, 126
    %v4709 = vpop.permute.xlu0 %4708
    %v4711 = vsel %vm3923, %v4709, 0.0
    %4712 = vadd.xlane.f32.xlu0 %v4711
    %v4713 = vpop.xlane.xlu0 %4712
    %v4714 = vrot.slane %v4713, 4
    %v4715 = vadd.f32 %v4713, %v4714
    %v4716 = vrot.slane %v4715, 2
    %v4717 = vadd.f32 %v4715, %v4716
    %v4718 = vrot.slane %v4717, 1
    %v4719 = vadd.f32 %v4717, %v4718
    %s4720 = vtos %v4719
    %v4721 = vstv %s4720
    %vm4722 = vcmp.gt.f32.partialorder %v4721, 0.0
    %v4723 = vmul.f32 %v4707, %v3891
    %4725 = vrot.lane.b32.xlu0 %v4723, 126
    %v4726 = vpop.permute.xlu0 %4725
    %v4728 = vsel %vm3923, %v4726, 0.0
    %4729 = vadd.xlane.f32.xlu0 %v4728
    %v4730 = vpop.xlane.xlu0 %4729
    %v4731 = vrot.slane %v4730, 4
    %v4732 = vadd.f32 %v4730, %v4731
    %v4733 = vrot.slane %v4732, 2
    %v4734 = vadd.f32 %v4732, %v4733
    %v4735 = vrot.slane %v4734, 1
    %v4736 = vadd.f32 %v4734, %v4735
    %s4737 = vtos %v4736
    %v4738 = vstv %s4737
    %v4739 = vmax.f32 %v4721, 1.0
    %v4740 = vrcp.pop %v4739
    %v4741 = vmul.f32 %v4738, %v4740
    %v4742 = vsel %vm4722, %v4741, 0.0
    %v4743 = vadd.f32 %v3956, %v4742
    %4745 = vrot.lane.b32.xlu0 %v4609, 64
    %v4746 = vpop.permute.xlu0 %4745
    %4748 = vrot.lane.b32.xlu0 %v4609, 96
    %v4749 = vpop.permute.xlu0 %4748
    %v4751 = vsel %vm369, %v4612, %v4746
    %v4752 = vsel %vm375, %v4751, %v4749
    %v4753 = vsel %vm2971, %v4752, %v4609
    %v4754 = vmul.f32 %v2972, %v4753
    %v4755 = vmul.f32 %v2973, %v4751
    %v4757 = vsel %vm375, %v4755, 0
    %4759 = vmatprep.subr.mxu0 0.0
    %4760 = vmatpush1.msra.mxu0 %v2974
    %4761 = vmatprep.subr.mxu0 0.0
    %4762 = vmatpush1.msra.mxu0 %v2975
    %4763 = vmatprep.subr.mxu0 0.0
    %4764 = vmatpush1.msra.mxu0 %v2976
    %4765 = vmatprep.subr.mxu0 0.0
    %4766 = vmatpush1.msra.mxu0 %v2977
    %4767 = vmatprep.subr.mxu0 0.0
    %4768 = vmatpush1.msra.mxu0 %v2978
    %4769 = vmatprep.subr.mxu0 0.0
    %4770 = vmatpush1.msra.mxu0 %v2979
    %4771 = vmatprep.subr.mxu0 0.0
    %4772 = vmatpush1.msra.mxu0 %v2980
    %4773 = vmatprep.subr.mxu0 0.0
    %4774 = vmatpush1.msra.mxu0 %v2981
    %4775 = vmatprep.subr.mxu0 0.0
    %4776 = vmatpush1.msra.mxu0 %v2982
    %4777 = vmatprep.subr.mxu0 0.0
    %4778 = vmatpush1.msra.mxu0 %v2983
    %4779 = vmatprep.subr.mxu0 0.0
    %4780 = vmatpush1.msra.mxu0 %v2984
    %4781 = vmatprep.subr.mxu0 0.0
    %4782 = vmatpush1.msra.mxu0 %v2985
    %4783 = vmatprep.subr.mxu0 0.0
    %4784 = vmatpush1.msra.mxu0 %v2986
    %4785 = vmatprep.subr.mxu0 0.0
    %4786 = vmatpush1.msra.mxu0 %v2987
    %4787 = vmatprep.subr.mxu0 0.0
    %4788 = vmatpush1.msra.mxu0 %v2988
    %4789 = vmatprep.subr.mxu0 0.0
    %4790 = vmatpush1.msra.mxu0 %v2989
    %4791 = vmatprep.subr.mxu0 0.0
    %4792 = vmatpush1.msra.mxu0 %v2990
    %4793 = vmatprep.subr.mxu0 0.0
    %4794 = vmatpush1.msra.mxu0 %v2991
    %4795 = vmatprep.subr.mxu0 0.0
    %4796 = vmatpush1.msra.mxu0 %v2992
    %4797 = vmatprep.subr.mxu0 0.0
    %4798 = vmatpush1.msra.mxu0 %v2993
    %4799 = vmatprep.subr.mxu0 0.0
    %4800 = vmatpush1.msra.mxu0 %v2994
    %4801 = vmatprep.subr.mxu0 0.0
    %4802 = vmatpush1.msra.mxu0 %v2995
    %4803 = vmatprep.subr.mxu0 0.0
    %4804 = vmatpush1.msra.mxu0 %v2996
    %4805 = vmatprep.subr.mxu0 0.0
    %4806 = vmatpush1.msra.mxu0 %v2997
    %4807 = vmatprep.subr.mxu0 0.0
    %4808 = vmatpush1.msra.mxu0 0.0
    %4809 = vmatprep.subr.mxu0 0.0
    %4810 = vmatpush1.msra.mxu0 0.0
    %4811 = vmatprep.subr.mxu0 0.0
    %4812 = vmatpush1.msra.mxu0 0.0
    %4813 = vmatprep.subr.mxu0 0.0
    %4814 = vmatpush1.msra.mxu0 0.0
    %4815 = vmatprep.subr.mxu0 0.0
    %4816 = vmatpush1.msra.mxu0 0.0
    %4817 = vmatprep.subr.mxu0 0.0
    %4818 = vmatpush1.msra.mxu0 0.0
    %4819 = vmatprep.subr.mxu0 0.0
    %4820 = vmatpush1.msra.mxu0 0.0
    %4821 = vmatprep.subr.mxu0 0.0
    %4822 = vmatpush1.msra.mxu0 0.0
    %4823 = vmatprep.mubr.f32.mxu0 %v4757
    %4824 = vmatmul.mubr.f32.gmra.mrb[0].mxu0 %v4754
    %v4825 = vpop.f32.mrb[0].mxu0
    %v4826 = vadd.f32 0.0, %v4825
    %v4827 = vpop.f32.mrb[0].mxu0
    %4828 = vdwg.mxu0
    %v4830 = vsel %vm3166, %v4826, 0
    %4832 = vmatprep.subr.mxu0 0.0
    %4833 = vmatpush1.msra.mxu0 %v3172
    %4834 = vmatprep.subr.mxu0 0.0
    %4835 = vmatpush1.msra.mxu0 0.0
    %4836 = vmatprep.subr.mxu0 0.0
    %4837 = vmatpush1.msra.mxu0 0.0
    %4838 = vmatprep.subr.mxu0 0.0
    %4839 = vmatpush1.msra.mxu0 0.0
    %4840 = vmatprep.subr.mxu0 0.0
    %4841 = vmatpush1.msra.mxu0 0.0
    %4842 = vmatprep.subr.mxu0 0.0
    %4843 = vmatpush1.msra.mxu0 0.0
    %4844 = vmatprep.subr.mxu0 0.0
    %4845 = vmatpush1.msra.mxu0 0.0
    %4846 = vmatprep.subr.mxu0 0.0
    %4847 = vmatpush1.msra.mxu0 0.0
    %4848 = vmatprep.subr.mxu0 0.0
    %4849 = vmatpush1.msra.mxu0 0.0
    %4850 = vmatprep.subr.mxu0 0.0
    %4851 = vmatpush1.msra.mxu0 0.0
    %4852 = vmatprep.subr.mxu0 0.0
    %4853 = vmatpush1.msra.mxu0 0.0
    %4854 = vmatprep.subr.mxu0 0.0
    %4855 = vmatpush1.msra.mxu0 0.0
    %4856 = vmatprep.subr.mxu0 0.0
    %4857 = vmatpush1.msra.mxu0 0.0
    %4858 = vmatprep.subr.mxu0 0.0
    %4859 = vmatpush1.msra.mxu0 0.0
    %4860 = vmatprep.subr.mxu0 0.0
    %4861 = vmatpush1.msra.mxu0 0.0
    %4862 = vmatprep.subr.mxu0 0.0
    %4863 = vmatpush1.msra.mxu0 0.0
    %4864 = vmatprep.subr.mxu0 0.0
    %4865 = vmatpush1.msra.mxu0 0.0
    %4866 = vmatprep.subr.mxu0 0.0
    %4867 = vmatpush1.msra.mxu0 0.0
    %4868 = vmatprep.subr.mxu0 0.0
    %4869 = vmatpush1.msra.mxu0 0.0
    %4870 = vmatprep.subr.mxu0 0.0
    %4871 = vmatpush1.msra.mxu0 0.0
    %4872 = vmatprep.subr.mxu0 0.0
    %4873 = vmatpush1.msra.mxu0 0.0
    %4874 = vmatprep.subr.mxu0 0.0
    %4875 = vmatpush1.msra.mxu0 0.0
    %4876 = vmatprep.subr.mxu0 0.0
    %4877 = vmatpush1.msra.mxu0 0.0
    %4878 = vmatprep.subr.mxu0 0.0
    %4879 = vmatpush1.msra.mxu0 0.0
    %4880 = vmatprep.subr.mxu0 0.0
    %4881 = vmatpush1.msra.mxu0 0.0
    %4882 = vmatprep.subr.mxu0 0.0
    %4883 = vmatpush1.msra.mxu0 0.0
    %4884 = vmatprep.subr.mxu0 0.0
    %4885 = vmatpush1.msra.mxu0 0.0
    %4886 = vmatprep.subr.mxu0 0.0
    %4887 = vmatpush1.msra.mxu0 0.0
    %4888 = vmatprep.subr.mxu0 0.0
    %4889 = vmatpush1.msra.mxu0 0.0
    %4890 = vmatprep.subr.mxu0 0.0
    %4891 = vmatpush1.msra.mxu0 0.0
    %4892 = vmatprep.subr.mxu0 0.0
    %4893 = vmatpush1.msra.mxu0 0.0
    %4894 = vmatprep.subr.mxu0 0.0
    %4895 = vmatpush1.msra.mxu0 0.0
    %4896 = vmatprep.mubr.f32.mxu0 0.0
    %4897 = vmatmul.mubr.f32.gmra.mrb[0].mxu0 %v4830
    %v4898 = vpop.f32.mrb[0].mxu0
    %v4899 = vadd.f32 %v3165, %v4898
    %v4900 = vpop.f32.mrb[0].mxu0
    %4901 = vdwg.mxu0
    %v4902 = vsel %vm3244, %v4899, -inf
    %4903 = vmax.xlane.f32.xlu0 %v4902
    %v4904 = vpop.xlane.xlu0 %4903
    %v4905 = vsub.f32 %v4899, %v4904
    %v4906 = vmul.f32 %v4905, 1.442695
    %v4907 = vpow.pop %v4906
    %v4908 = vsel %vm3244, %v4907, 0.0
    %4909 = vadd.xlane.f32.xlu0 %v4908
    %v4910 = vpop.xlane.xlu0 %4909
    %v4911 = vrcp.pop %v4910
    %v4912 = vmul.f32 %v4907, %v4911
    %v4913 = vmul.f32 %v4912, %v3068
    %4915 = vrot.lane.b32.xlu0 %v342, 6
    %v4916 = vpop.permute.xlu0 %4915
    %v4918 = vsel %vm3166, %v4913, %v4916
    %v4920 = vsel %vm3272, %v4918, 0
    %4922 = vmatprep.subr.mxu0 0.0
    %4923 = vmatpush1.msra.mxu0 %v3262
    %4924 = vmatprep.subr.mxu0 0.0
    %4925 = vmatpush1.msra.mxu0 %v3263
    %4926 = vmatprep.subr.mxu0 0.0
    %4927 = vmatpush1.msra.mxu0 %v3264
    %4928 = vmatprep.subr.mxu0 0.0
    %4929 = vmatpush1.msra.mxu0 %v3265
    %4930 = vmatprep.subr.mxu0 0.0
    %4931 = vmatpush1.msra.mxu0 %v3277
    %4932 = vmatprep.subr.mxu0 0.0
    %4933 = vmatpush1.msra.mxu0 0.0
    %4934 = vmatprep.subr.mxu0 0.0
    %4935 = vmatpush1.msra.mxu0 0.0
    %4936 = vmatprep.subr.mxu0 0.0
    %4937 = vmatpush1.msra.mxu0 0.0
    %4938 = vmatprep.subr.mxu0 0.0
    %4939 = vmatpush1.msra.mxu0 0.0
    %4940 = vmatprep.subr.mxu0 0.0
    %4941 = vmatpush1.msra.mxu0 0.0
    %4942 = vmatprep.subr.mxu0 0.0
    %4943 = vmatpush1.msra.mxu0 0.0
    %4944 = vmatprep.subr.mxu0 0.0
    %4945 = vmatpush1.msra.mxu0 0.0
    %4946 = vmatprep.subr.mxu0 0.0
    %4947 = vmatpush1.msra.mxu0 0.0
    %4948 = vmatprep.subr.mxu0 0.0
    %4949 = vmatpush1.msra.mxu0 0.0
    %4950 = vmatprep.subr.mxu0 0.0
    %4951 = vmatpush1.msra.mxu0 0.0
    %4952 = vmatprep.subr.mxu0 0.0
    %4953 = vmatpush1.msra.mxu0 0.0
    %4954 = vmatprep.subr.mxu0 0.0
    %4955 = vmatpush1.msra.mxu0 0.0
    %4956 = vmatprep.subr.mxu0 0.0
    %4957 = vmatpush1.msra.mxu0 0.0
    %4958 = vmatprep.subr.mxu0 0.0
    %4959 = vmatpush1.msra.mxu0 0.0
    %4960 = vmatprep.subr.mxu0 0.0
    %4961 = vmatpush1.msra.mxu0 0.0
    %4962 = vmatprep.subr.mxu0 0.0
    %4963 = vmatpush1.msra.mxu0 0.0
    %4964 = vmatprep.subr.mxu0 0.0
    %4965 = vmatpush1.msra.mxu0 0.0
    %4966 = vmatprep.subr.mxu0 0.0
    %4967 = vmatpush1.msra.mxu0 0.0
    %4968 = vmatprep.subr.mxu0 0.0
    %4969 = vmatpush1.msra.mxu0 0.0
    %4970 = vmatprep.subr.mxu0 0.0
    %4971 = vmatpush1.msra.mxu0 0.0
    %4972 = vmatprep.subr.mxu0 0.0
    %4973 = vmatpush1.msra.mxu0 0.0
    %4974 = vmatprep.subr.mxu0 0.0
    %4975 = vmatpush1.msra.mxu0 0.0
    %4976 = vmatprep.subr.mxu0 0.0
    %4977 = vmatpush1.msra.mxu0 0.0
    %4978 = vmatprep.subr.mxu0 0.0
    %4979 = vmatpush1.msra.mxu0 0.0
    %4980 = vmatprep.subr.mxu0 0.0
    %4981 = vmatpush1.msra.mxu0 0.0
    %4982 = vmatprep.subr.mxu0 0.0
    %4983 = vmatpush1.msra.mxu0 0.0
    %4984 = vmatprep.subr.mxu0 0.0
    %4985 = vmatpush1.msra.mxu0 0.0
    %4986 = vmatprep.mubr.f32.mxu0 0.0
    %4987 = vmatmul.mubr.f32.gmra.mrb[0].mxu0 %v4920
    %v4988 = vpop.f32.mrb[0].mxu0
    %v4989 = vadd.f32 %v3271, %v4988
    %v4990 = vpop.f32.mrb[0].mxu0
    %4991 = vdwg.mxu0
    %4992 = vrot.lane.b32.xlu0 %v4303, 64
    %v4993 = vpop.permute.xlu0 %4992
    %v4995 = vsel %vm369, %v4989, %v4993
    %v4997 = vsel %vm375, %v4995, 0
    %4999 = vmatprep.subr.mxu0 0.0
    %5000 = vmatpush1.msra.mxu0 %v3349
    %5001 = vmatprep.subr.mxu0 0.0
    %5002 = vmatpush1.msra.mxu0 %v3350
    %5003 = vmatprep.subr.mxu0 0.0
    %5004 = vmatpush1.msra.mxu0 %v3351
    %5005 = vmatprep.subr.mxu0 0.0
    %5006 = vmatpush1.msra.mxu0 %v3352
    %5007 = vmatprep.subr.mxu0 0.0
    %5008 = vmatpush1.msra.mxu0 %v3353
    %5009 = vmatprep.subr.mxu0 0.0
    %5010 = vmatpush1.msra.mxu0 %v3354
    %5011 = vmatprep.subr.mxu0 0.0
    %5012 = vmatpush1.msra.mxu0 %v3355
    %5013 = vmatprep.subr.mxu0 0.0
    %5014 = vmatpush1.msra.mxu0 %v3356
    %5015 = vmatprep.subr.mxu0 0.0
    %5016 = vmatpush1.msra.mxu0 0.0
    %5017 = vmatprep.subr.mxu0 0.0
    %5018 = vmatpush1.msra.mxu0 0.0
    %5019 = vmatprep.subr.mxu0 0.0
    %5020 = vmatpush1.msra.mxu0 0.0
    %5021 = vmatprep.subr.mxu0 0.0
    %5022 = vmatpush1.msra.mxu0 0.0
    %5023 = vmatprep.subr.mxu0 0.0
    %5024 = vmatpush1.msra.mxu0 0.0
    %5025 = vmatprep.subr.mxu0 0.0
    %5026 = vmatpush1.msra.mxu0 0.0
    %5027 = vmatprep.subr.mxu0 0.0
    %5028 = vmatpush1.msra.mxu0 0.0
    %5029 = vmatprep.subr.mxu0 0.0
    %5030 = vmatpush1.msra.mxu0 0.0
    %5031 = vmatprep.subr.mxu0 0.0
    %5032 = vmatpush1.msra.mxu0 0.0
    %5033 = vmatprep.subr.mxu0 0.0
    %5034 = vmatpush1.msra.mxu0 0.0
    %5035 = vmatprep.subr.mxu0 0.0
    %5036 = vmatpush1.msra.mxu0 0.0
    %5037 = vmatprep.subr.mxu0 0.0
    %5038 = vmatpush1.msra.mxu0 0.0
    %5039 = vmatprep.subr.mxu0 0.0
    %5040 = vmatpush1.msra.mxu0 0.0
    %5041 = vmatprep.subr.mxu0 0.0
    %5042 = vmatpush1.msra.mxu0 0.0
    %5043 = vmatprep.subr.mxu0 0.0
    %5044 = vmatpush1.msra.mxu0 0.0
    %5045 = vmatprep.subr.mxu0 0.0
    %5046 = vmatpush1.msra.mxu0 0.0
    %5047 = vmatprep.subr.mxu0 0.0
    %5048 = vmatpush1.msra.mxu0 0.0
    %5049 = vmatprep.subr.mxu0 0.0
    %5050 = vmatpush1.msra.mxu0 0.0
    %5051 = vmatprep.subr.mxu0 0.0
    %5052 = vmatpush1.msra.mxu0 0.0
    %5053 = vmatprep.subr.mxu0 0.0
    %5054 = vmatpush1.msra.mxu0 0.0
    %5055 = vmatprep.subr.mxu0 0.0
    %5056 = vmatpush1.msra.mxu0 0.0
    %5057 = vmatprep.subr.mxu0 0.0
    %5058 = vmatpush1.msra.mxu0 0.0
    %5059 = vmatprep.subr.mxu0 0.0
    %5060 = vmatpush1.msra.mxu0 0.0
    %5061 = vmatprep.subr.mxu0 0.0
    %5062 = vmatpush1.msra.mxu0 0.0
    %5063 = vmatprep.mubr.f32.mxu0 0.0
    %5064 = vmatmul.mubr.f32.gmra.mrb[0].mxu0 %v4997
    %v5065 = vpop.f32.mrb[0].mxu0
    %v5066 = vadd.f32 %v3365, %v5065
    %v5067 = vpop.f32.mrb[0].mxu0
    %5068 = vdwg.mxu0
    %v5069 = vmul.f32 %v5066, 0.5
    %v5070 = vtanh.pop %v5069
    %v5071 = vadd.f32 %v5070, 1.0
    %v5072 = vmul.f32 %v5071, 0.5
    %v5073 = vtanh.pop %v5066
    %v5074 = vmul.f32 %v5072, %v4297
    %5076 = vrot.lane.b32.xlu0 %v5073, 64
    %v5077 = vpop.permute.xlu0 %5076
    %v5079 = vmul.f32 %v5072, %v5077
    %5081 = vrot.lane.b32.xlu0 %v5079, 32
    %v5082 = vpop.permute.xlu0 %5081
    %v5084 = vadd.f32 %v5074, %v5082
    %v5085 = vtanh.pop %v5084
    %5087 = vrot.lane.b32.xlu0 %v5085, 64
    %v5088 = vpop.permute.xlu0 %5087
    %v5090 = vmul.f32 %v5072, %v5088
    %5092 = vrot.lane.b32.xlu0 %v5090, 32
    %v5093 = vpop.permute.xlu0 %5092
    %5095 = vrot.lane.b32.xlu0 %v4406, 64
    %v5096 = vpop.permute.xlu0 %5095
    %v5098 = vsel %vm369, %v5093, %v5096
    %v5100 = vsel %vm375, %v5098, 0
    %5102 = vmatprep.subr.mxu0 0.0
    %5103 = vmatpush1.msra.mxu0 %v3461
    %5104 = vmatprep.subr.mxu0 0.0
    %5105 = vmatpush1.msra.mxu0 %v3462
    %5106 = vmatprep.subr.mxu0 0.0
    %5107 = vmatpush1.msra.mxu0 %v3463
    %5108 = vmatprep.subr.mxu0 0.0
    %5109 = vmatpush1.msra.mxu0 %v3464
    %5110 = vmatprep.subr.mxu0 0.0
    %5111 = vmatpush1.msra.mxu0 %v3465
    %5112 = vmatprep.subr.mxu0 0.0
    %5113 = vmatpush1.msra.mxu0 %v3466
    %5114 = vmatprep.subr.mxu0 0.0
    %5115 = vmatpush1.msra.mxu0 %v3467
    %5116 = vmatprep.subr.mxu0 0.0
    %5117 = vmatpush1.msra.mxu0 %v3468
    %5118 = vmatprep.subr.mxu0 0.0
    %5119 = vmatpush1.msra.mxu0 0.0
    %5120 = vmatprep.subr.mxu0 0.0
    %5121 = vmatpush1.msra.mxu0 0.0
    %5122 = vmatprep.subr.mxu0 0.0
    %5123 = vmatpush1.msra.mxu0 0.0
    %5124 = vmatprep.subr.mxu0 0.0
    %5125 = vmatpush1.msra.mxu0 0.0
    %5126 = vmatprep.subr.mxu0 0.0
    %5127 = vmatpush1.msra.mxu0 0.0
    %5128 = vmatprep.subr.mxu0 0.0
    %5129 = vmatpush1.msra.mxu0 0.0
    %5130 = vmatprep.subr.mxu0 0.0
    %5131 = vmatpush1.msra.mxu0 0.0
    %5132 = vmatprep.subr.mxu0 0.0
    %5133 = vmatpush1.msra.mxu0 0.0
    %5134 = vmatprep.subr.mxu0 0.0
    %5135 = vmatpush1.msra.mxu0 0.0
    %5136 = vmatprep.subr.mxu0 0.0
    %5137 = vmatpush1.msra.mxu0 0.0
    %5138 = vmatprep.subr.mxu0 0.0
    %5139 = vmatpush1.msra.mxu0 0.0
    %5140 = vmatprep.subr.mxu0 0.0
    %5141 = vmatpush1.msra.mxu0 0.0
    %5142 = vmatprep.subr.mxu0 0.0
    %5143 = vmatpush1.msra.mxu0 0.0
    %5144 = vmatprep.subr.mxu0 0.0
    %5145 = vmatpush1.msra.mxu0 0.0
    %5146 = vmatprep.subr.mxu0 0.0
    %5147 = vmatpush1.msra.mxu0 0.0
    %5148 = vmatprep.subr.mxu0 0.0
    %5149 = vmatpush1.msra.mxu0 0.0
    %5150 = vmatprep.subr.mxu0 0.0
    %5151 = vmatpush1.msra.mxu0 0.0
    %5152 = vmatprep.subr.mxu0 0.0
    %5153 = vmatpush1.msra.mxu0 0.0
    %5154 = vmatprep.subr.mxu0 0.0
    %5155 = vmatpush1.msra.mxu0 0.0
    %5156 = vmatprep.subr.mxu0 0.0
    %5157 = vmatpush1.msra.mxu0 0.0
    %5158 = vmatprep.subr.mxu0 0.0
    %5159 = vmatpush1.msra.mxu0 0.0
    %5160 = vmatprep.subr.mxu0 0.0
    %5161 = vmatpush1.msra.mxu0 0.0
    %5162 = vmatprep.subr.mxu0 0.0
    %5163 = vmatpush1.msra.mxu0 0.0
    %5164 = vmatprep.subr.mxu0 0.0
    %5165 = vmatpush1.msra.mxu0 0.0
    %5166 = vmatprep.mubr.f32.mxu0 0.0
    %5167 = vmatmul.mubr.f32.gmra.mrb[0].mxu0 %v5100
    %v5168 = vpop.f32.mrb[0].mxu0
    %v5169 = vadd.f32 %v3481, %v5168
    %v5170 = vpop.f32.mrb[0].mxu0
    %5171 = vdwg.mxu0
    %v5172 = vmul.f32 %v5169, 0.5
    %v5173 = vtanh.pop %v5172
    %v5174 = vadd.f32 %v5173, 1.0
    %v5175 = vmul.f32 %v5174, 0.5
    %v5176 = vtanh.pop %v5169
    %v5177 = vmul.f32 %v5175, %v4400
    %5179 = vrot.lane.b32.xlu0 %v5176, 64
    %v5180 = vpop.permute.xlu0 %5179
    %v5182 = vmul.f32 %v5175, %v5180
    %5184 = vrot.lane.b32.xlu0 %v5182, 32
    %v5185 = vpop.permute.xlu0 %5184
    %v5187 = vadd.f32 %v5177, %v5185
    %v5188 = vtanh.pop %v5187
    %5190 = vrot.lane.b32.xlu0 %v5188, 64
    %v5191 = vpop.permute.xlu0 %5190
    %v5193 = vmul.f32 %v5175, %v5191
    %5195 = vrot.lane.b32.xlu0 %v5193, 32
    %v5196 = vpop.permute.xlu0 %5195
    %5198 = vrot.lane.b32.xlu0 %v4509, 64
    %v5199 = vpop.permute.xlu0 %5198
    %v5201 = vsel %vm369, %v5196, %v5199
    %v5203 = vsel %vm375, %v5201, 0
    %5205 = vmatprep.subr.mxu0 0.0
    %5206 = vmatpush1.msra.mxu0 %v3577
    %5207 = vmatprep.subr.mxu0 0.0
    %5208 = vmatpush1.msra.mxu0 %v3578
    %5209 = vmatprep.subr.mxu0 0.0
    %5210 = vmatpush1.msra.mxu0 %v3579
    %5211 = vmatprep.subr.mxu0 0.0
    %5212 = vmatpush1.msra.mxu0 %v3580
    %5213 = vmatprep.subr.mxu0 0.0
    %5214 = vmatpush1.msra.mxu0 %v3581
    %5215 = vmatprep.subr.mxu0 0.0
    %5216 = vmatpush1.msra.mxu0 %v3582
    %5217 = vmatprep.subr.mxu0 0.0
    %5218 = vmatpush1.msra.mxu0 %v3583
    %5219 = vmatprep.subr.mxu0 0.0
    %5220 = vmatpush1.msra.mxu0 %v3584
    %5221 = vmatprep.subr.mxu0 0.0
    %5222 = vmatpush1.msra.mxu0 0.0
    %5223 = vmatprep.subr.mxu0 0.0
    %5224 = vmatpush1.msra.mxu0 0.0
    %5225 = vmatprep.subr.mxu0 0.0
    %5226 = vmatpush1.msra.mxu0 0.0
    %5227 = vmatprep.subr.mxu0 0.0
    %5228 = vmatpush1.msra.mxu0 0.0
    %5229 = vmatprep.subr.mxu0 0.0
    %5230 = vmatpush1.msra.mxu0 0.0
    %5231 = vmatprep.subr.mxu0 0.0
    %5232 = vmatpush1.msra.mxu0 0.0
    %5233 = vmatprep.subr.mxu0 0.0
    %5234 = vmatpush1.msra.mxu0 0.0
    %5235 = vmatprep.subr.mxu0 0.0
    %5236 = vmatpush1.msra.mxu0 0.0
    %5237 = vmatprep.subr.mxu0 0.0
    %5238 = vmatpush1.msra.mxu0 0.0
    %5239 = vmatprep.subr.mxu0 0.0
    %5240 = vmatpush1.msra.mxu0 0.0
    %5241 = vmatprep.subr.mxu0 0.0
    %5242 = vmatpush1.msra.mxu0 0.0
    %5243 = vmatprep.subr.mxu0 0.0
    %5244 = vmatpush1.msra.mxu0 0.0
    %5245 = vmatprep.subr.mxu0 0.0
    %5246 = vmatpush1.msra.mxu0 0.0
    %5247 = vmatprep.subr.mxu0 0.0
    %5248 = vmatpush1.msra.mxu0 0.0
    %5249 = vmatprep.subr.mxu0 0.0
    %5250 = vmatpush1.msra.mxu0 0.0
    %5251 = vmatprep.subr.mxu0 0.0
    %5252 = vmatpush1.msra.mxu0 0.0
    %5253 = vmatprep.subr.mxu0 0.0
    %5254 = vmatpush1.msra.mxu0 0.0
    %5255 = vmatprep.subr.mxu0 0.0
    %5256 = vmatpush1.msra.mxu0 0.0
    %5257 = vmatprep.subr.mxu0 0.0
    %5258 = vmatpush1.msra.mxu0 0.0
    %5259 = vmatprep.subr.mxu0 0.0
    %5260 = vmatpush1.msra.mxu0 0.0
    %5261 = vmatprep.subr.mxu0 0.0
    %5262 = vmatpush1.msra.mxu0 0.0
    %5263 = vmatprep.subr.mxu0 0.0
    %5264 = vmatpush1.msra.mxu0 0.0
    %5265 = vmatprep.subr.mxu0 0.0
    %5266 = vmatpush1.msra.mxu0 0.0
    %5267 = vmatprep.subr.mxu0 0.0
    %5268 = vmatpush1.msra.mxu0 0.0
    %5269 = vmatprep.mubr.f32.mxu0 0.0
    %5270 = vmatmul.mubr.f32.gmra.mrb[0].mxu0 %v5203
    %v5271 = vpop.f32.mrb[0].mxu0
    %v5272 = vadd.f32 %v3597, %v5271
    %v5273 = vpop.f32.mrb[0].mxu0
    %5274 = vdwg.mxu0
    %v5275 = vmul.f32 %v5272, 0.5
    %v5276 = vtanh.pop %v5275
    %v5277 = vadd.f32 %v5276, 1.0
    %v5278 = vmul.f32 %v5277, 0.5
    %v5279 = vtanh.pop %v5272
    %v5280 = vmul.f32 %v5278, %v4503
    %5282 = vrot.lane.b32.xlu0 %v5279, 64
    %v5283 = vpop.permute.xlu0 %5282
    %v5285 = vmul.f32 %v5278, %v5283
    %5287 = vrot.lane.b32.xlu0 %v5285, 32
    %v5288 = vpop.permute.xlu0 %5287
    %v5290 = vadd.f32 %v5280, %v5288
    %v5291 = vtanh.pop %v5290
    %5293 = vrot.lane.b32.xlu0 %v5291, 64
    %v5294 = vpop.permute.xlu0 %5293
    %v5296 = vmul.f32 %v5278, %v5294
    %5298 = vrot.lane.b32.xlu0 %v5296, 32
    %v5299 = vpop.permute.xlu0 %5298
    %v5301 = vsel %vm369, %v5299, %v4746
    %v5303 = vsel %vm375, %v5301, 0
    %5305 = vmatprep.subr.mxu0 0.0
    %5306 = vmatpush1.msra.mxu0 %v3693
    %5307 = vmatprep.subr.mxu0 0.0
    %5308 = vmatpush1.msra.mxu0 %v3694
    %5309 = vmatprep.subr.mxu0 0.0
    %5310 = vmatpush1.msra.mxu0 %v3695
    %5311 = vmatprep.subr.mxu0 0.0
    %5312 = vmatpush1.msra.mxu0 %v3696
    %5313 = vmatprep.subr.mxu0 0.0
    %5314 = vmatpush1.msra.mxu0 %v3697
    %5315 = vmatprep.subr.mxu0 0.0
    %5316 = vmatpush1.msra.mxu0 %v3698
    %5317 = vmatprep.subr.mxu0 0.0
    %5318 = vmatpush1.msra.mxu0 %v3699
    %5319 = vmatprep.subr.mxu0 0.0
    %5320 = vmatpush1.msra.mxu0 %v3700
    %5321 = vmatprep.subr.mxu0 0.0
    %5322 = vmatpush1.msra.mxu0 0.0
    %5323 = vmatprep.subr.mxu0 0.0
    %5324 = vmatpush1.msra.mxu0 0.0
    %5325 = vmatprep.subr.mxu0 0.0
    %5326 = vmatpush1.msra.mxu0 0.0
    %5327 = vmatprep.subr.mxu0 0.0
    %5328 = vmatpush1.msra.mxu0 0.0
    %5329 = vmatprep.subr.mxu0 0.0
    %5330 = vmatpush1.msra.mxu0 0.0
    %5331 = vmatprep.subr.mxu0 0.0
    %5332 = vmatpush1.msra.mxu0 0.0
    %5333 = vmatprep.subr.mxu0 0.0
    %5334 = vmatpush1.msra.mxu0 0.0
    %5335 = vmatprep.subr.mxu0 0.0
    %5336 = vmatpush1.msra.mxu0 0.0
    %5337 = vmatprep.subr.mxu0 0.0
    %5338 = vmatpush1.msra.mxu0 0.0
    %5339 = vmatprep.subr.mxu0 0.0
    %5340 = vmatpush1.msra.mxu0 0.0
    %5341 = vmatprep.subr.mxu0 0.0
    %5342 = vmatpush1.msra.mxu0 0.0
    %5343 = vmatprep.subr.mxu0 0.0
    %5344 = vmatpush1.msra.mxu0 0.0
    %5345 = vmatprep.subr.mxu0 0.0
    %5346 = vmatpush1.msra.mxu0 0.0
    %5347 = vmatprep.subr.mxu0 0.0
    %5348 = vmatpush1.msra.mxu0 0.0
    %5349 = vmatprep.subr.mxu0 0.0
    %5350 = vmatpush1.msra.mxu0 0.0
    %5351 = vmatprep.subr.mxu0 0.0
    %5352 = vmatpush1.msra.mxu0 0.0
    %5353 = vmatprep.subr.mxu0 0.0
    %5354 = vmatpush1.msra.mxu0 0.0
    %5355 = vmatprep.subr.mxu0 0.0
    %5356 = vmatpush1.msra.mxu0 0.0
    %5357 = vmatprep.subr.mxu0 0.0
    %5358 = vmatpush1.msra.mxu0 0.0
    %5359 = vmatprep.subr.mxu0 0.0
    %5360 = vmatpush1.msra.mxu0 0.0
    %5361 = vmatprep.subr.mxu0 0.0
    %5362 = vmatpush1.msra.mxu0 0.0
    %5363 = vmatprep.subr.mxu0 0.0
    %5364 = vmatpush1.msra.mxu0 0.0
    %5365 = vmatprep.subr.mxu0 0.0
    %5366 = vmatpush1.msra.mxu0 0.0
    %5367 = vmatprep.subr.mxu0 0.0
    %5368 = vmatpush1.msra.mxu0 0.0
    %5369 = vmatprep.mubr.f32.mxu0 0.0
    %5370 = vmatmul.mubr.f32.gmra.mrb[0].mxu0 %v5303
    %v5371 = vpop.f32.mrb[0].mxu0
    %v5372 = vadd.f32 %v3709, %v5371
    %v5373 = vpop.f32.mrb[0].mxu0
    %5374 = vdwg.mxu0
    %v5375 = vmul.f32 %v5372, 0.5
    %v5376 = vtanh.pop %v5375
    %v5377 = vadd.f32 %v5376, 1.0
    %v5378 = vmul.f32 %v5377, 0.5
    %v5379 = vtanh.pop %v5372
    %v5380 = vmul.f32 %v5378, %v4603
    %5382 = vrot.lane.b32.xlu0 %v5379, 64
    %v5383 = vpop.permute.xlu0 %5382
    %v5385 = vmul.f32 %v5378, %v5383
    %5387 = vrot.lane.b32.xlu0 %v5385, 32
    %v5388 = vpop.permute.xlu0 %5387
    %v5390 = vadd.f32 %v5380, %v5388
    %v5391 = vtanh.pop %v5390
    %5393 = vrot.lane.b32.xlu0 %v5391, 64
    %v5394 = vpop.permute.xlu0 %5393
    %v5396 = vmul.f32 %v5378, %v5394
    %5398 = vrot.lane.b32.xlu0 %v5396, 32
    %v5399 = vpop.permute.xlu0 %5398
    %v5400 = vsel %vm369, %v5399, 0
    %5402 = vmatprep.subr.mxu0 0.0
    %5403 = vmatpush1.msra.mxu0 %v3805
    %5404 = vmatprep.subr.mxu0 0.0
    %5405 = vmatpush1.msra.mxu0 %v3806
    %5406 = vmatprep.subr.mxu0 0.0
    %5407 = vmatpush1.msra.mxu0 %v3807
    %5408 = vmatprep.subr.mxu0 0.0
    %5409 = vmatpush1.msra.mxu0 %v3808
    %5410 = vmatprep.subr.mxu0 0.0
    %5411 = vmatpush1.msra.mxu0 0.0
    %5412 = vmatprep.subr.mxu0 0.0
    %5413 = vmatpush1.msra.mxu0 0.0
    %5414 = vmatprep.subr.mxu0 0.0
    %5415 = vmatpush1.msra.mxu0 0.0
    %5416 = vmatprep.subr.mxu0 0.0
    %5417 = vmatpush1.msra.mxu0 0.0
    %5418 = vmatprep.subr.mxu0 0.0
    %5419 = vmatpush1.msra.mxu0 0.0
    %5420 = vmatprep.subr.mxu0 0.0
    %5421 = vmatpush1.msra.mxu0 0.0
    %5422 = vmatprep.subr.mxu0 0.0
    %5423 = vmatpush1.msra.mxu0 0.0
    %5424 = vmatprep.subr.mxu0 0.0
    %5425 = vmatpush1.msra.mxu0 0.0
    %5426 = vmatprep.subr.mxu0 0.0
    %5427 = vmatpush1.msra.mxu0 0.0
    %5428 = vmatprep.subr.mxu0 0.0
    %5429 = vmatpush1.msra.mxu0 0.0
    %5430 = vmatprep.subr.mxu0 0.0
    %5431 = vmatpush1.msra.mxu0 0.0
    %5432 = vmatprep.subr.mxu0 0.0
    %5433 = vmatpush1.msra.mxu0 0.0
    %5434 = vmatprep.subr.mxu0 0.0
    %5435 = vmatpush1.msra.mxu0 0.0
    %5436 = vmatprep.subr.mxu0 0.0
    %5437 = vmatpush1.msra.mxu0 0.0
    %5438 = vmatprep.subr.mxu0 0.0
    %5439 = vmatpush1.msra.mxu0 0.0
    %5440 = vmatprep.subr.mxu0 0.0
    %5441 = vmatpush1.msra.mxu0 0.0
    %5442 = vmatprep.subr.mxu0 0.0
    %5443 = vmatpush1.msra.mxu0 0.0
    %5444 = vmatprep.subr.mxu0 0.0
    %5445 = vmatpush1.msra.mxu0 0.0
    %5446 = vmatprep.subr.mxu0 0.0
    %5447 = vmatpush1.msra.mxu0 0.0
    %5448 = vmatprep.subr.mxu0 0.0
    %5449 = vmatpush1.msra.mxu0 0.0
    %5450 = vmatprep.subr.mxu0 0.0
    %5451 = vmatpush1.msra.mxu0 0.0
    %5452 = vmatprep.subr.mxu0 0.0
    %5453 = vmatpush1.msra.mxu0 0.0
    %5454 = vmatprep.subr.mxu0 0.0
    %5455 = vmatpush1.msra.mxu0 0.0
    %5456 = vmatprep.subr.mxu0 0.0
    %5457 = vmatpush1.msra.mxu0 0.0
    %5458 = vmatprep.subr.mxu0 0.0
    %5459 = vmatpush1.msra.mxu0 0.0
    %5460 = vmatprep.subr.mxu0 0.0
    %5461 = vmatpush1.msra.mxu0 0.0
    %5462 = vmatprep.subr.mxu0 0.0
    %5463 = vmatpush1.msra.mxu0 0.0
    %5464 = vmatprep.subr.mxu0 0.0
    %5465 = vmatpush1.msra.mxu0 0.0
    %5466 = vmatprep.mubr.f32.mxu0 0.0
    %5467 = vmatmul.mubr.f32.gmra.mrb[0].mxu0 %v5400
    %v5468 = vpop.f32.mrb[0].mxu0
    %v5469 = vadd.f32 %v3813, %v5468
    %v5470 = vpop.f32.mrb[0].mxu0
    %5471 = vdwg.mxu0
    %5472 = vset.pattern.permute.xlu0 3
    %5473 = vperm.xlu0 %5472, %v3894
    %v5474 = vpop.permute.xlu0 %5473
    %vm5475 = vcmp.eq.s32.totalorder %v5474, %v35
    %v5476 = vsel %vm5475, 1, 0
    %v5477 = vcvt.s32.f32 %v5476
    %v5478 = vsel %vm3901, %v5469, -inf
    %5479 = vmax.xlane.f32.xlu0 %v5478
    %v5480 = vpop.xlane.xlu0 %5479
    %v5481 = vsub.f32 %v5469, %v5480
    %v5482 = vmul.f32 %v5481, 1.442695
    %v5483 = vpow.pop %v5482
    %v5484 = vsel %vm3901, %v5483, 0.0
    %5485 = vadd.xlane.f32.xlu0 %v5484
    %v5486 = vpop.xlane.xlu0 %5485
    %v5487 = vlog2.pop %v5486
    %v5488 = vmul.f32 %v5487, 0.6931472
    %v5489 = vadd.f32 %v5488, %v5480
    %v5490 = vmul.f32 %v5477, %v5469
    %v5491 = vsel %vm3901, %v5490, 0.0
    %5492 = vadd.xlane.f32.xlu0 %v5491
    %v5493 = vpop.xlane.xlu0 %5492
    %v5494 = vsub.f32 %v5489, %v5493
    %5495 = vrot.lane.b32.xlu0 %v3891, 125
    %v5496 = vpop.permute.xlu0 %5495
    %v5498 = vsel %vm3923, %v5496, 0.0
    %5499 = vadd.xlane.f32.xlu0 %v5498
    %v5500 = vpop.xlane.xlu0 %5499
    %v5501 = vrot.slane %v5500, 4
    %v5502 = vadd.f32 %v5500, %v5501
    %v5503 = vrot.slane %v5502, 2
    %v5504 = vadd.f32 %v5502, %v5503
    %v5505 = vrot.slane %v5504, 1
    %v5506 = vadd.f32 %v5504, %v5505
    %s5507 = vtos %v5506
    %v5508 = vstv %s5507
    %vm5509 = vcmp.gt.f32.partialorder %v5508, 0.0
    %v5510 = vmul.f32 %v5494, %v3891
    %5512 = vrot.lane.b32.xlu0 %v5510, 125
    %v5513 = vpop.permute.xlu0 %5512
    %v5515 = vsel %vm3923, %v5513, 0.0
    %5516 = vadd.xlane.f32.xlu0 %v5515
    %v5517 = vpop.xlane.xlu0 %5516
    %v5518 = vrot.slane %v5517, 4
    %v5519 = vadd.f32 %v5517, %v5518
    %v5520 = vrot.slane %v5519, 2
    %v5521 = vadd.f32 %v5519, %v5520
    %v5522 = vrot.slane %v5521, 1
    %v5523 = vadd.f32 %v5521, %v5522
    %s5524 = vtos %v5523
    %v5525 = vstv %s5524
    %v5526 = vmax.f32 %v5508, 1.0
    %v5527 = vrcp.pop %v5526
    %v5528 = vmul.f32 %v5525, %v5527
    %v5529 = vsel %vm5509, %v5528, 0.0
    %v5530 = vadd.f32 %v4743, %v5529
    %5532 = vrot.lane.b32.xlu0 %v5396, 64
    %v5533 = vpop.permute.xlu0 %5532
    %5535 = vrot.lane.b32.xlu0 %v5396, 96
    %v5536 = vpop.permute.xlu0 %5535
    %v5538 = vsel %vm369, %v5399, %v5533
    %v5539 = vsel %vm375, %v5538, %v5536
    %v5540 = vsel %vm2971, %v5539, %v5396
    %v5541 = vmul.f32 %v2972, %v5540
    %v5542 = vmul.f32 %v2973, %v5538
    %v5544 = vsel %vm375, %v5542, 0
    %5546 = vmatprep.subr.mxu0 0.0
    %5547 = vmatpush1.msra.mxu0 %v2974
    %5548 = vmatprep.subr.mxu0 0.0
    %5549 = vmatpush1.msra.mxu0 %v2975
    %5550 = vmatprep.subr.mxu0 0.0
    %5551 = vmatpush1.msra.mxu0 %v2976
    %5552 = vmatprep.subr.mxu0 0.0
    %5553 = vmatpush1.msra.mxu0 %v2977
    %5554 = vmatprep.subr.mxu0 0.0
    %5555 = vmatpush1.msra.mxu0 %v2978
    %5556 = vmatprep.subr.mxu0 0.0
    %5557 = vmatpush1.msra.mxu0 %v2979
    %5558 = vmatprep.subr.mxu0 0.0
    %5559 = vmatpush1.msra.mxu0 %v2980
    %5560 = vmatprep.subr.mxu0 0.0
    %5561 = vmatpush1.msra.mxu0 %v2981
    %5562 = vmatprep.subr.mxu0 0.0
    %5563 = vmatpush1.msra.mxu0 %v2982
    %5564 = vmatprep.subr.mxu0 0.0
    %5565 = vmatpush1.msra.mxu0 %v2983
    %5566 = vmatprep.subr.mxu0 0.0
    %5567 = vmatpush1.msra.mxu0 %v2984
    %5568 = vmatprep.subr.mxu0 0.0
    %5569 = vmatpush1.msra.mxu0 %v2985
    %5570 = vmatprep.subr.mxu0 0.0
    %5571 = vmatpush1.msra.mxu0 %v2986
    %5572 = vmatprep.subr.mxu0 0.0
    %5573 = vmatpush1.msra.mxu0 %v2987
    %5574 = vmatprep.subr.mxu0 0.0
    %5575 = vmatpush1.msra.mxu0 %v2988
    %5576 = vmatprep.subr.mxu0 0.0
    %5577 = vmatpush1.msra.mxu0 %v2989
    %5578 = vmatprep.subr.mxu0 0.0
    %5579 = vmatpush1.msra.mxu0 %v2990
    %5580 = vmatprep.subr.mxu0 0.0
    %5581 = vmatpush1.msra.mxu0 %v2991
    %5582 = vmatprep.subr.mxu0 0.0
    %5583 = vmatpush1.msra.mxu0 %v2992
    %5584 = vmatprep.subr.mxu0 0.0
    %5585 = vmatpush1.msra.mxu0 %v2993
    %5586 = vmatprep.subr.mxu0 0.0
    %5587 = vmatpush1.msra.mxu0 %v2994
    %5588 = vmatprep.subr.mxu0 0.0
    %5589 = vmatpush1.msra.mxu0 %v2995
    %5590 = vmatprep.subr.mxu0 0.0
    %5591 = vmatpush1.msra.mxu0 %v2996
    %5592 = vmatprep.subr.mxu0 0.0
    %5593 = vmatpush1.msra.mxu0 %v2997
    %5594 = vmatprep.subr.mxu0 0.0
    %5595 = vmatpush1.msra.mxu0 0.0
    %5596 = vmatprep.subr.mxu0 0.0
    %5597 = vmatpush1.msra.mxu0 0.0
    %5598 = vmatprep.subr.mxu0 0.0
    %5599 = vmatpush1.msra.mxu0 0.0
    %5600 = vmatprep.subr.mxu0 0.0
    %5601 = vmatpush1.msra.mxu0 0.0
    %5602 = vmatprep.subr.mxu0 0.0
    %5603 = vmatpush1.msra.mxu0 0.0
    %5604 = vmatprep.subr.mxu0 0.0
    %5605 = vmatpush1.msra.mxu0 0.0
    %5606 = vmatprep.subr.mxu0 0.0
    %5607 = vmatpush1.msra.mxu0 0.0
    %5608 = vmatprep.subr.mxu0 0.0
    %5609 = vmatpush1.msra.mxu0 0.0
    %5610 = vmatprep.mubr.f32.mxu0 %v5544
    %5611 = vmatmul.mubr.f32.gmra.mrb[0].mxu0 %v5541
    %v5612 = vpop.f32.mrb[0].mxu0
    %v5613 = vadd.f32 0.0, %v5612
    %v5614 = vpop.f32.mrb[0].mxu0
    %5615 = vdwg.mxu0
    %v5617 = vsel %vm3166, %v5613, 0
    %5619 = vmatprep.subr.mxu0 0.0
    %5620 = vmatpush1.msra.mxu0 %v3172
    %5621 = vmatprep.subr.mxu0 0.0
    %5622 = vmatpush1.msra.mxu0 0.0
    %5623 = vmatprep.subr.mxu0 0.0
    %5624 = vmatpush1.msra.mxu0 0.0
    %5625 = vmatprep.subr.mxu0 0.0
    %5626 = vmatpush1.msra.mxu0 0.0
    %5627 = vmatprep.subr.mxu0 0.0
    %5628 = vmatpush1.msra.mxu0 0.0
    %5629 = vmatprep.subr.mxu0 0.0
    %5630 = vmatpush1.msra.mxu0 0.0
    %5631 = vmatprep.subr.mxu0 0.0
    %5632 = vmatpush1.msra.mxu0 0.0
    %5633 = vmatprep.subr.mxu0 0.0
    %5634 = vmatpush1.msra.mxu0 0.0
    %5635 = vmatprep.subr.mxu0 0.0
    %5636 = vmatpush1.msra.mxu0 0.0
    %5637 = vmatprep.subr.mxu0 0.0
    %5638 = vmatpush1.msra.mxu0 0.0
    %5639 = vmatprep.subr.mxu0 0.0
    %5640 = vmatpush1.msra.mxu0 0.0
    %5641 = vmatprep.subr.mxu0 0.0
    %5642 = vmatpush1.msra.mxu0 0.0
    %5643 = vmatprep.subr.mxu0 0.0
    %5644 = vmatpush1.msra.mxu0 0.0
    %5645 = vmatprep.subr.mxu0 0.0
    %5646 = vmatpush1.msra.mxu0 0.0
    %5647 = vmatprep.subr.mxu0 0.0
    %5648 = vmatpush1.msra.mxu0 0.0
    %5649 = vmatprep.subr.mxu0 0.0
    %5650 = vmatpush1.msra.mxu0 0.0
    %5651 = vmatprep.subr.mxu0 0.0
    %5652 = vmatpush1.msra.mxu0 0.0
    %5653 = vmatprep.subr.mxu0 0.0
    %5654 = vmatpush1.msra.mxu0 0.0
    %5655 = vmatprep.subr.mxu0 0.0
    %5656 = vmatpush1.msra.mxu0 0.0
    %5657 = vmatprep.subr.mxu0 0.0
    %5658 = vmatpush1.msra.mxu0 0.0
    %5659 = vmatprep.subr.mxu0 0.0
    %5660 = vmatpush1.msra.mxu0 0.0
    %5661 = vmatprep.subr.mxu0 0.0
    %5662 = vmatpush1.msra.mxu0 0.0
    %5663 = vmatprep.subr.mxu0 0.0
    %5664 = vmatpush1.msra.mxu0 0.0
    %5665 = vmatprep.subr.mxu0 0.0
    %5666 = vmatpush1.msra.mxu0 0.0
    %5667 = vmatprep.subr.mxu0 0.0
    %5668 = vmatpush1.msra.mxu0 0.0
    %5669 = vmatprep.subr.mxu0 0.0
    %5670 = vmatpush1.msra.mxu0 0.0
    %5671 = vmatprep.subr.mxu0 0.0
    %5672 = vmatpush1.msra.mxu0 0.0
    %5673 = vmatprep.subr.mxu0 0.0
    %5674 = vmatpush1.msra.mxu0 0.0
    %5675 = vmatprep.subr.mxu0 0.0
    %5676 = vmatpush1.msra.mxu0 0.0
    %5677 = vmatprep.subr.mxu0 0.0
    %5678 = vmatpush1.msra.mxu0 0.0
    %5679 = vmatprep.subr.mxu0 0.0
    %5680 = vmatpush1.msra.mxu0 0.0
    %5681 = vmatprep.subr.mxu0 0.0
    %5682 = vmatpush1.msra.mxu0 0.0
    %5683 = vmatprep.mubr.f32.mxu0 0.0
    %5684 = vmatmul.mubr.f32.gmra.mrb[0].mxu0 %v5617
    %v5685 = vpop.f32.mrb[0].mxu0
    %v5686 = vadd.f32 %v3165, %v5685
    %v5687 = vpop.f32.mrb[0].mxu0
    %5688 = vdwg.mxu0
    %v5689 = vsel %vm3244, %v5686, -inf
    %5690 = vmax.xlane.f32.xlu0 %v5689
    %v5691 = vpop.xlane.xlu0 %5690
    %v5692 = vsub.f32 %v5686, %v5691
    %v5693 = vmul.f32 %v5692, 1.442695
    %v5694 = vpow.pop %v5693
    %v5695 = vsel %vm3244, %v5694, 0.0
    %5696 = vadd.xlane.f32.xlu0 %v5695
    %v5697 = vpop.xlane.xlu0 %5696
    %v5698 = vrcp.pop %v5697
    %v5699 = vmul.f32 %v5694, %v5698
    %v5700 = vmul.f32 %v5699, %v3068
    %5702 = vrot.lane.b32.xlu0 %v347, 6
    %v5703 = vpop.permute.xlu0 %5702
    %v5705 = vsel %vm3166, %v5700, %v5703
    %v5707 = vsel %vm3272, %v5705, 0
    %5709 = vmatprep.subr.mxu0 0.0
    %5710 = vmatpush1.msra.mxu0 %v3262
    %5711 = vmatprep.subr.mxu0 0.0
    %5712 = vmatpush1.msra.mxu0 %v3263
    %5713 = vmatprep.subr.mxu0 0.0
    %5714 = vmatpush1.msra.mxu0 %v3264
    %5715 = vmatprep.subr.mxu0 0.0
    %5716 = vmatpush1.msra.mxu0 %v3265
    %5717 = vmatprep.subr.mxu0 0.0
    %5718 = vmatpush1.msra.mxu0 %v3277
    %5719 = vmatprep.subr.mxu0 0.0
    %5720 = vmatpush1.msra.mxu0 0.0
    %5721 = vmatprep.subr.mxu0 0.0
    %5722 = vmatpush1.msra.mxu0 0.0
    %5723 = vmatprep.subr.mxu0 0.0
    %5724 = vmatpush1.msra.mxu0 0.0
    %5725 = vmatprep.subr.mxu0 0.0
    %5726 = vmatpush1.msra.mxu0 0.0
    %5727 = vmatprep.subr.mxu0 0.0
    %5728 = vmatpush1.msra.mxu0 0.0
    %5729 = vmatprep.subr.mxu0 0.0
    %5730 = vmatpush1.msra.mxu0 0.0
    %5731 = vmatprep.subr.mxu0 0.0
    %5732 = vmatpush1.msra.mxu0 0.0
    %5733 = vmatprep.subr.mxu0 0.0
    %5734 = vmatpush1.msra.mxu0 0.0
    %5735 = vmatprep.subr.mxu0 0.0
    %5736 = vmatpush1.msra.mxu0 0.0
    %5737 = vmatprep.subr.mxu0 0.0
    %5738 = vmatpush1.msra.mxu0 0.0
    %5739 = vmatprep.subr.mxu0 0.0
    %5740 = vmatpush1.msra.mxu0 0.0
    %5741 = vmatprep.subr.mxu0 0.0
    %5742 = vmatpush1.msra.mxu0 0.0
    %5743 = vmatprep.subr.mxu0 0.0
    %5744 = vmatpush1.msra.mxu0 0.0
    %5745 = vmatprep.subr.mxu0 0.0
    %5746 = vmatpush1.msra.mxu0 0.0
    %5747 = vmatprep.subr.mxu0 0.0
    %5748 = vmatpush1.msra.mxu0 0.0
    %5749 = vmatprep.subr.mxu0 0.0
    %5750 = vmatpush1.msra.mxu0 0.0
    %5751 = vmatprep.subr.mxu0 0.0
    %5752 = vmatpush1.msra.mxu0 0.0
    %5753 = vmatprep.subr.mxu0 0.0
    %5754 = vmatpush1.msra.mxu0 0.0
    %5755 = vmatprep.subr.mxu0 0.0
    %5756 = vmatpush1.msra.mxu0 0.0
    %5757 = vmatprep.subr.mxu0 0.0
    %5758 = vmatpush1.msra.mxu0 0.0
    %5759 = vmatprep.subr.mxu0 0.0
    %5760 = vmatpush1.msra.mxu0 0.0
    %5761 = vmatprep.subr.mxu0 0.0
    %5762 = vmatpush1.msra.mxu0 0.0
    %5763 = vmatprep.subr.mxu0 0.0
    %5764 = vmatpush1.msra.mxu0 0.0
    %5765 = vmatprep.subr.mxu0 0.0
    %5766 = vmatpush1.msra.mxu0 0.0
    %5767 = vmatprep.subr.mxu0 0.0
    %5768 = vmatpush1.msra.mxu0 0.0
    %5769 = vmatprep.subr.mxu0 0.0
    %5770 = vmatpush1.msra.mxu0 0.0
    %5771 = vmatprep.subr.mxu0 0.0
    %5772 = vmatpush1.msra.mxu0 0.0
    %5773 = vmatprep.mubr.f32.mxu0 0.0
    %5774 = vmatmul.mubr.f32.gmra.mrb[0].mxu0 %v5707
    %v5775 = vpop.f32.mrb[0].mxu0
    %v5776 = vadd.f32 %v3271, %v5775
    %v5777 = vpop.f32.mrb[0].mxu0
    %5778 = vdwg.mxu0
    %5779 = vrot.lane.b32.xlu0 %v5090, 64
    %v5780 = vpop.permute.xlu0 %5779
    %v5782 = vsel %vm369, %v5776, %v5780
    %v5784 = vsel %vm375, %v5782, 0
    %5786 = vmatprep.subr.mxu0 0.0
    %5787 = vmatpush1.msra.mxu0 %v3349
    %5788 = vmatprep.subr.mxu0 0.0
    %5789 = vmatpush1.msra.mxu0 %v3350
    %5790 = vmatprep.subr.mxu0 0.0
    %5791 = vmatpush1.msra.mxu0 %v3351
    %5792 = vmatprep.subr.mxu0 0.0
    %5793 = vmatpush1.msra.mxu0 %v3352
    %5794 = vmatprep.subr.mxu0 0.0
    %5795 = vmatpush1.msra.mxu0 %v3353
    %5796 = vmatprep.subr.mxu0 0.0
    %5797 = vmatpush1.msra.mxu0 %v3354
    %5798 = vmatprep.subr.mxu0 0.0
    %5799 = vmatpush1.msra.mxu0 %v3355
    %5800 = vmatprep.subr.mxu0 0.0
    %5801 = vmatpush1.msra.mxu0 %v3356
    %5802 = vmatprep.subr.mxu0 0.0
    %5803 = vmatpush1.msra.mxu0 0.0
    %5804 = vmatprep.subr.mxu0 0.0
    %5805 = vmatpush1.msra.mxu0 0.0
    %5806 = vmatprep.subr.mxu0 0.0
    %5807 = vmatpush1.msra.mxu0 0.0
    %5808 = vmatprep.subr.mxu0 0.0
    %5809 = vmatpush1.msra.mxu0 0.0
    %5810 = vmatprep.subr.mxu0 0.0
    %5811 = vmatpush1.msra.mxu0 0.0
    %5812 = vmatprep.subr.mxu0 0.0
    %5813 = vmatpush1.msra.mxu0 0.0
    %5814 = vmatprep.subr.mxu0 0.0
    %5815 = vmatpush1.msra.mxu0 0.0
    %5816 = vmatprep.subr.mxu0 0.0
    %5817 = vmatpush1.msra.mxu0 0.0
    %5818 = vmatprep.subr.mxu0 0.0
    %5819 = vmatpush1.msra.mxu0 0.0
    %5820 = vmatprep.subr.mxu0 0.0
    %5821 = vmatpush1.msra.mxu0 0.0
    %5822 = vmatprep.subr.mxu0 0.0
    %5823 = vmatpush1.msra.mxu0 0.0
    %5824 = vmatprep.subr.mxu0 0.0
    %5825 = vmatpush1.msra.mxu0 0.0
    %5826 = vmatprep.subr.mxu0 0.0
    %5827 = vmatpush1.msra.mxu0 0.0
    %5828 = vmatprep.subr.mxu0 0.0
    %5829 = vmatpush1.msra.mxu0 0.0
    %5830 = vmatprep.subr.mxu0 0.0
    %5831 = vmatpush1.msra.mxu0 0.0
    %5832 = vmatprep.subr.mxu0 0.0
    %5833 = vmatpush1.msra.mxu0 0.0
    %5834 = vmatprep.subr.mxu0 0.0
    %5835 = vmatpush1.msra.mxu0 0.0
    %5836 = vmatprep.subr.mxu0 0.0
    %5837 = vmatpush1.msra.mxu0 0.0
    %5838 = vmatprep.subr.mxu0 0.0
    %5839 = vmatpush1.msra.mxu0 0.0
    %5840 = vmatprep.subr.mxu0 0.0
    %5841 = vmatpush1.msra.mxu0 0.0
    %5842 = vmatprep.subr.mxu0 0.0
    %5843 = vmatpush1.msra.mxu0 0.0
    %5844 = vmatprep.subr.mxu0 0.0
    %5845 = vmatpush1.msra.mxu0 0.0
    %5846 = vmatprep.subr.mxu0 0.0
    %5847 = vmatpush1.msra.mxu0 0.0
    %5848 = vmatprep.subr.mxu0 0.0
    %5849 = vmatpush1.msra.mxu0 0.0
    %5850 = vmatprep.mubr.f32.mxu0 0.0
    %5851 = vmatmul.mubr.f32.gmra.mrb[0].mxu0 %v5784
    %v5852 = vpop.f32.mrb[0].mxu0
    %v5853 = vadd.f32 %v3365, %v5852
    %v5854 = vpop.f32.mrb[0].mxu0
    %5855 = vdwg.mxu0
    %v5856 = vmul.f32 %v5853, 0.5
    %v5857 = vtanh.pop %v5856
    %v5858 = vadd.f32 %v5857, 1.0
    %v5859 = vmul.f32 %v5858, 0.5
    %v5860 = vtanh.pop %v5853
    %v5861 = vmul.f32 %v5859, %v5084
    %5863 = vrot.lane.b32.xlu0 %v5860, 64
    %v5864 = vpop.permute.xlu0 %5863
    %v5866 = vmul.f32 %v5859, %v5864
    %5868 = vrot.lane.b32.xlu0 %v5866, 32
    %v5869 = vpop.permute.xlu0 %5868
    %v5871 = vadd.f32 %v5861, %v5869
    %v5872 = vtanh.pop %v5871
    %5874 = vrot.lane.b32.xlu0 %v5872, 64
    %v5875 = vpop.permute.xlu0 %5874
    %v5877 = vmul.f32 %v5859, %v5875
    %5879 = vrot.lane.b32.xlu0 %v5877, 32
    %v5880 = vpop.permute.xlu0 %5879
    %5882 = vrot.lane.b32.xlu0 %v5193, 64
    %v5883 = vpop.permute.xlu0 %5882
    %v5885 = vsel %vm369, %v5880, %v5883
    %v5887 = vsel %vm375, %v5885, 0
    %5889 = vmatprep.subr.mxu0 0.0
    %5890 = vmatpush1.msra.mxu0 %v3461
    %5891 = vmatprep.subr.mxu0 0.0
    %5892 = vmatpush1.msra.mxu0 %v3462
    %5893 = vmatprep.subr.mxu0 0.0
    %5894 = vmatpush1.msra.mxu0 %v3463
    %5895 = vmatprep.subr.mxu0 0.0
    %5896 = vmatpush1.msra.mxu0 %v3464
    %5897 = vmatprep.subr.mxu0 0.0
    %5898 = vmatpush1.msra.mxu0 %v3465
    %5899 = vmatprep.subr.mxu0 0.0
    %5900 = vmatpush1.msra.mxu0 %v3466
    %5901 = vmatprep.subr.mxu0 0.0
    %5902 = vmatpush1.msra.mxu0 %v3467
    %5903 = vmatprep.subr.mxu0 0.0
    %5904 = vmatpush1.msra.mxu0 %v3468
    %5905 = vmatprep.subr.mxu0 0.0
    %5906 = vmatpush1.msra.mxu0 0.0
    %5907 = vmatprep.subr.mxu0 0.0
    %5908 = vmatpush1.msra.mxu0 0.0
    %5909 = vmatprep.subr.mxu0 0.0
    %5910 = vmatpush1.msra.mxu0 0.0
    %5911 = vmatprep.subr.mxu0 0.0
    %5912 = vmatpush1.msra.mxu0 0.0
    %5913 = vmatprep.subr.mxu0 0.0
    %5914 = vmatpush1.msra.mxu0 0.0
    %5915 = vmatprep.subr.mxu0 0.0
    %5916 = vmatpush1.msra.mxu0 0.0
    %5917 = vmatprep.subr.mxu0 0.0
    %5918 = vmatpush1.msra.mxu0 0.0
    %5919 = vmatprep.subr.mxu0 0.0
    %5920 = vmatpush1.msra.mxu0 0.0
    %5921 = vmatprep.subr.mxu0 0.0
    %5922 = vmatpush1.msra.mxu0 0.0
    %5923 = vmatprep.subr.mxu0 0.0
    %5924 = vmatpush1.msra.mxu0 0.0
    %5925 = vmatprep.subr.mxu0 0.0
    %5926 = vmatpush1.msra.mxu0 0.0
    %5927 = vmatprep.subr.mxu0 0.0
    %5928 = vmatpush1.msra.mxu0 0.0
    %5929 = vmatprep.subr.mxu0 0.0
    %5930 = vmatpush1.msra.mxu0 0.0
    %5931 = vmatprep.subr.mxu0 0.0
    %5932 = vmatpush1.msra.mxu0 0.0
    %5933 = vmatprep.subr.mxu0 0.0
    %5934 = vmatpush1.msra.mxu0 0.0
    %5935 = vmatprep.subr.mxu0 0.0
    %5936 = vmatpush1.msra.mxu0 0.0
    %5937 = vmatprep.subr.mxu0 0.0
    %5938 = vmatpush1.msra.mxu0 0.0
    %5939 = vmatprep.subr.mxu0 0.0
    %5940 = vmatpush1.msra.mxu0 0.0
    %5941 = vmatprep.subr.mxu0 0.0
    %5942 = vmatpush1.msra.mxu0 0.0
    %5943 = vmatprep.subr.mxu0 0.0
    %5944 = vmatpush1.msra.mxu0 0.0
    %5945 = vmatprep.subr.mxu0 0.0
    %5946 = vmatpush1.msra.mxu0 0.0
    %5947 = vmatprep.subr.mxu0 0.0
    %5948 = vmatpush1.msra.mxu0 0.0
    %5949 = vmatprep.subr.mxu0 0.0
    %5950 = vmatpush1.msra.mxu0 0.0
    %5951 = vmatprep.subr.mxu0 0.0
    %5952 = vmatpush1.msra.mxu0 0.0
    %5953 = vmatprep.mubr.f32.mxu0 0.0
    %5954 = vmatmul.mubr.f32.gmra.mrb[0].mxu0 %v5887
    %v5955 = vpop.f32.mrb[0].mxu0
    %v5956 = vadd.f32 %v3481, %v5955
    %v5957 = vpop.f32.mrb[0].mxu0
    %5958 = vdwg.mxu0
    %v5959 = vmul.f32 %v5956, 0.5
    %v5960 = vtanh.pop %v5959
    %v5961 = vadd.f32 %v5960, 1.0
    %v5962 = vmul.f32 %v5961, 0.5
    %v5963 = vtanh.pop %v5956
    %v5964 = vmul.f32 %v5962, %v5187
    %5966 = vrot.lane.b32.xlu0 %v5963, 64
    %v5967 = vpop.permute.xlu0 %5966
    %v5969 = vmul.f32 %v5962, %v5967
    %5971 = vrot.lane.b32.xlu0 %v5969, 32
    %v5972 = vpop.permute.xlu0 %5971
    %v5974 = vadd.f32 %v5964, %v5972
    %v5975 = vtanh.pop %v5974
    %5977 = vrot.lane.b32.xlu0 %v5975, 64
    %v5978 = vpop.permute.xlu0 %5977
    %v5980 = vmul.f32 %v5962, %v5978
    %5982 = vrot.lane.b32.xlu0 %v5980, 32
    %v5983 = vpop.permute.xlu0 %5982
    %5985 = vrot.lane.b32.xlu0 %v5296, 64
    %v5986 = vpop.permute.xlu0 %5985
    %v5988 = vsel %vm369, %v5983, %v5986
    %v5990 = vsel %vm375, %v5988, 0
    %5992 = vmatprep.subr.mxu0 0.0
    %5993 = vmatpush1.msra.mxu0 %v3577
    %5994 = vmatprep.subr.mxu0 0.0
    %5995 = vmatpush1.msra.mxu0 %v3578
    %5996 = vmatprep.subr.mxu0 0.0
    %5997 = vmatpush1.msra.mxu0 %v3579
    %5998 = vmatprep.subr.mxu0 0.0
    %5999 = vmatpush1.msra.mxu0 %v3580
    %6000 = vmatprep.subr.mxu0 0.0
    %6001 = vmatpush1.msra.mxu0 %v3581
    %6002 = vmatprep.subr.mxu0 0.0
    %6003 = vmatpush1.msra.mxu0 %v3582
    %6004 = vmatprep.subr.mxu0 0.0
    %6005 = vmatpush1.msra.mxu0 %v3583
    %6006 = vmatprep.subr.mxu0 0.0
    %6007 = vmatpush1.msra.mxu0 %v3584
    %6008 = vmatprep.subr.mxu0 0.0
    %6009 = vmatpush1.msra.mxu0 0.0
    %6010 = vmatprep.subr.mxu0 0.0
    %6011 = vmatpush1.msra.mxu0 0.0
    %6012 = vmatprep.subr.mxu0 0.0
    %6013 = vmatpush1.msra.mxu0 0.0
    %6014 = vmatprep.subr.mxu0 0.0
    %6015 = vmatpush1.msra.mxu0 0.0
    %6016 = vmatprep.subr.mxu0 0.0
    %6017 = vmatpush1.msra.mxu0 0.0
    %6018 = vmatprep.subr.mxu0 0.0
    %6019 = vmatpush1.msra.mxu0 0.0
    %6020 = vmatprep.subr.mxu0 0.0
    %6021 = vmatpush1.msra.mxu0 0.0
    %6022 = vmatprep.subr.mxu0 0.0
    %6023 = vmatpush1.msra.mxu0 0.0
    %6024 = vmatprep.subr.mxu0 0.0
    %6025 = vmatpush1.msra.mxu0 0.0
    %6026 = vmatprep.subr.mxu0 0.0
    %6027 = vmatpush1.msra.mxu0 0.0
    %6028 = vmatprep.subr.mxu0 0.0
    %6029 = vmatpush1.msra.mxu0 0.0
    %6030 = vmatprep.subr.mxu0 0.0
    %6031 = vmatpush1.msra.mxu0 0.0
    %6032 = vmatprep.subr.mxu0 0.0
    %6033 = vmatpush1.msra.mxu0 0.0
    %6034 = vmatprep.subr.mxu0 0.0
    %6035 = vmatpush1.msra.mxu0 0.0
    %6036 = vmatprep.subr.mxu0 0.0
    %6037 = vmatpush1.msra.mxu0 0.0
    %6038 = vmatprep.subr.mxu0 0.0
    %6039 = vmatpush1.msra.mxu0 0.0
    %6040 = vmatprep.subr.mxu0 0.0
    %6041 = vmatpush1.msra.mxu0 0.0
    %6042 = vmatprep.subr.mxu0 0.0
    %6043 = vmatpush1.msra.mxu0 0.0
    %6044 = vmatprep.subr.mxu0 0.0
    %6045 = vmatpush1.msra.mxu0 0.0
    %6046 = vmatprep.subr.mxu0 0.0
    %6047 = vmatpush1.msra.mxu0 0.0
    %6048 = vmatprep.subr.mxu0 0.0
    %6049 = vmatpush1.msra.mxu0 0.0
    %6050 = vmatprep.subr.mxu0 0.0
    %6051 = vmatpush1.msra.mxu0 0.0
    %6052 = vmatprep.subr.mxu0 0.0
    %6053 = vmatpush1.msra.mxu0 0.0
    %6054 = vmatprep.subr.mxu0 0.0
    %6055 = vmatpush1.msra.mxu0 0.0
    %6056 = vmatprep.mubr.f32.mxu0 0.0
    %6057 = vmatmul.mubr.f32.gmra.mrb[0].mxu0 %v5990
    %v6058 = vpop.f32.mrb[0].mxu0
    %v6059 = vadd.f32 %v3597, %v6058
    %v6060 = vpop.f32.mrb[0].mxu0
    %6061 = vdwg.mxu0
    %v6062 = vmul.f32 %v6059, 0.5
    %v6063 = vtanh.pop %v6062
    %v6064 = vadd.f32 %v6063, 1.0
    %v6065 = vmul.f32 %v6064, 0.5
    %v6066 = vtanh.pop %v6059
    %v6067 = vmul.f32 %v6065, %v5290
    %6069 = vrot.lane.b32.xlu0 %v6066, 64
    %v6070 = vpop.permute.xlu0 %6069
    %v6072 = vmul.f32 %v6065, %v6070
    %6074 = vrot.lane.b32.xlu0 %v6072, 32
    %v6075 = vpop.permute.xlu0 %6074
    %v6077 = vadd.f32 %v6067, %v6075
    %v6078 = vtanh.pop %v6077
    %6080 = vrot.lane.b32.xlu0 %v6078, 64
    %v6081 = vpop.permute.xlu0 %6080
    %v6083 = vmul.f32 %v6065, %v6081
    %6085 = vrot.lane.b32.xlu0 %v6083, 32
    %v6086 = vpop.permute.xlu0 %6085
    %v6088 = vsel %vm369, %v6086, %v5533
    %v6090 = vsel %vm375, %v6088, 0
    %6092 = vmatprep.subr.mxu0 0.0
    %6093 = vmatpush1.msra.mxu0 %v3693
    %6094 = vmatprep.subr.mxu0 0.0
    %6095 = vmatpush1.msra.mxu0 %v3694
    %6096 = vmatprep.subr.mxu0 0.0
    %6097 = vmatpush1.msra.mxu0 %v3695
    %6098 = vmatprep.subr.mxu0 0.0
    %6099 = vmatpush1.msra.mxu0 %v3696
    %6100 = vmatprep.subr.mxu0 0.0
    %6101 = vmatpush1.msra.mxu0 %v3697
    %6102 = vmatprep.subr.mxu0 0.0
    %6103 = vmatpush1.msra.mxu0 %v3698
    %6104 = vmatprep.subr.mxu0 0.0
    %6105 = vmatpush1.msra.mxu0 %v3699
    %6106 = vmatprep.subr.mxu0 0.0
    %6107 = vmatpush1.msra.mxu0 %v3700
    %6108 = vmatprep.subr.mxu0 0.0
    %6109 = vmatpush1.msra.mxu0 0.0
    %6110 = vmatprep.subr.mxu0 0.0
    %6111 = vmatpush1.msra.mxu0 0.0
    %6112 = vmatprep.subr.mxu0 0.0
    %6113 = vmatpush1.msra.mxu0 0.0
    %6114 = vmatprep.subr.mxu0 0.0
    %6115 = vmatpush1.msra.mxu0 0.0
    %6116 = vmatprep.subr.mxu0 0.0
    %6117 = vmatpush1.msra.mxu0 0.0
    %6118 = vmatprep.subr.mxu0 0.0
    %6119 = vmatpush1.msra.mxu0 0.0
    %6120 = vmatprep.subr.mxu0 0.0
    %6121 = vmatpush1.msra.mxu0 0.0
    %6122 = vmatprep.subr.mxu0 0.0
    %6123 = vmatpush1.msra.mxu0 0.0
    %6124 = vmatprep.subr.mxu0 0.0
    %6125 = vmatpush1.msra.mxu0 0.0
    %6126 = vmatprep.subr.mxu0 0.0
    %6127 = vmatpush1.msra.mxu0 0.0
    %6128 = vmatprep.subr.mxu0 0.0
    %6129 = vmatpush1.msra.mxu0 0.0
    %6130 = vmatprep.subr.mxu0 0.0
    %6131 = vmatpush1.msra.mxu0 0.0
    %6132 = vmatprep.subr.mxu0 0.0
    %6133 = vmatpush1.msra.mxu0 0.0
    %6134 = vmatprep.subr.mxu0 0.0
    %6135 = vmatpush1.msra.mxu0 0.0
    %6136 = vmatprep.subr.mxu0 0.0
    %6137 = vmatpush1.msra.mxu0 0.0
    %6138 = vmatprep.subr.mxu0 0.0
    %6139 = vmatpush1.msra.mxu0 0.0
    %6140 = vmatprep.subr.mxu0 0.0
    %6141 = vmatpush1.msra.mxu0 0.0
    %6142 = vmatprep.subr.mxu0 0.0
    %6143 = vmatpush1.msra.mxu0 0.0
    %6144 = vmatprep.subr.mxu0 0.0
    %6145 = vmatpush1.msra.mxu0 0.0
    %6146 = vmatprep.subr.mxu0 0.0
    %6147 = vmatpush1.msra.mxu0 0.0
    %6148 = vmatprep.subr.mxu0 0.0
    %6149 = vmatpush1.msra.mxu0 0.0
    %6150 = vmatprep.subr.mxu0 0.0
    %6151 = vmatpush1.msra.mxu0 0.0
    %6152 = vmatprep.subr.mxu0 0.0
    %6153 = vmatpush1.msra.mxu0 0.0
    %6154 = vmatprep.subr.mxu0 0.0
    %6155 = vmatpush1.msra.mxu0 0.0
    %6156 = vmatprep.mubr.f32.mxu0 0.0
    %6157 = vmatmul.mubr.f32.gmra.mrb[0].mxu0 %v6090
    %v6158 = vpop.f32.mrb[0].mxu0
    %v6159 = vadd.f32 %v3709, %v6158
    %v6160 = vpop.f32.mrb[0].mxu0
    %6161 = vdwg.mxu0
    %v6162 = vmul.f32 %v6159, 0.5
    %v6163 = vtanh.pop %v6162
    %v6164 = vadd.f32 %v6163, 1.0
    %v6165 = vmul.f32 %v6164, 0.5
    %v6166 = vtanh.pop %v6159
    %v6167 = vmul.f32 %v6165, %v5390
    %6169 = vrot.lane.b32.xlu0 %v6166, 64
    %v6170 = vpop.permute.xlu0 %6169
    %v6172 = vmul.f32 %v6165, %v6170
    %6174 = vrot.lane.b32.xlu0 %v6172, 32
    %v6175 = vpop.permute.xlu0 %6174
    %v6177 = vadd.f32 %v6167, %v6175
    %v6178 = vtanh.pop %v6177
    %6180 = vrot.lane.b32.xlu0 %v6178, 64
    %v6181 = vpop.permute.xlu0 %6180
    %v6183 = vmul.f32 %v6165, %v6181
    %6185 = vrot.lane.b32.xlu0 %v6183, 32
    %v6186 = vpop.permute.xlu0 %6185
    %v6187 = vsel %vm369, %v6186, 0
    %6189 = vmatprep.subr.mxu0 0.0
    %6190 = vmatpush1.msra.mxu0 %v3805
    %6191 = vmatprep.subr.mxu0 0.0
    %6192 = vmatpush1.msra.mxu0 %v3806
    %6193 = vmatprep.subr.mxu0 0.0
    %6194 = vmatpush1.msra.mxu0 %v3807
    %6195 = vmatprep.subr.mxu0 0.0
    %6196 = vmatpush1.msra.mxu0 %v3808
    %6197 = vmatprep.subr.mxu0 0.0
    %6198 = vmatpush1.msra.mxu0 0.0
    %6199 = vmatprep.subr.mxu0 0.0
    %6200 = vmatpush1.msra.mxu0 0.0
    %6201 = vmatprep.subr.mxu0 0.0
    %6202 = vmatpush1.msra.mxu0 0.0
    %6203 = vmatprep.subr.mxu0 0.0
    %6204 = vmatpush1.msra.mxu0 0.0
    %6205 = vmatprep.subr.mxu0 0.0
    %6206 = vmatpush1.msra.mxu0 0.0
    %6207 = vmatprep.subr.mxu0 0.0
    %6208 = vmatpush1.msra.mxu0 0.0
    %6209 = vmatprep.subr.mxu0 0.0
    %6210 = vmatpush1.msra.mxu0 0.0
    %6211 = vmatprep.subr.mxu0 0.0
    %6212 = vmatpush1.msra.mxu0 0.0
    %6213 = vmatprep.subr.mxu0 0.0
    %6214 = vmatpush1.msra.mxu0 0.0
    %6215 = vmatprep.subr.mxu0 0.0
    %6216 = vmatpush1.msra.mxu0 0.0
    %6217 = vmatprep.subr.mxu0 0.0
    %6218 = vmatpush1.msra.mxu0 0.0
    %6219 = vmatprep.subr.mxu0 0.0
    %6220 = vmatpush1.msra.mxu0 0.0
    %6221 = vmatprep.subr.mxu0 0.0
    %6222 = vmatpush1.msra.mxu0 0.0
    %6223 = vmatprep.subr.mxu0 0.0
    %6224 = vmatpush1.msra.mxu0 0.0
    %6225 = vmatprep.subr.mxu0 0.0
    %6226 = vmatpush1.msra.mxu0 0.0
    %6227 = vmatprep.subr.mxu0 0.0
    %6228 = vmatpush1.msra.mxu0 0.0
    %6229 = vmatprep.subr.mxu0 0.0
    %6230 = vmatpush1.msra.mxu0 0.0
    %6231 = vmatprep.subr.mxu0 0.0
    %6232 = vmatpush1.msra.mxu0 0.0
    %6233 = vmatprep.subr.mxu0 0.0
    %6234 = vmatpush1.msra.mxu0 0.0
    %6235 = vmatprep.subr.mxu0 0.0
    %6236 = vmatpush1.msra.mxu0 0.0
    %6237 = vmatprep.subr.mxu0 0.0
    %6238 = vmatpush1.msra.mxu0 0.0
    %6239 = vmatprep.subr.mxu0 0.0
    %6240 = vmatpush1.msra.mxu0 0.0
    %6241 = vmatprep.subr.mxu0 0.0
    %6242 = vmatpush1.msra.mxu0 0.0
    %6243 = vmatprep.subr.mxu0 0.0
    %6244 = vmatpush1.msra.mxu0 0.0
    %6245 = vmatprep.subr.mxu0 0.0
    %6246 = vmatpush1.msra.mxu0 0.0
    %6247 = vmatprep.subr.mxu0 0.0
    %6248 = vmatpush1.msra.mxu0 0.0
    %6249 = vmatprep.subr.mxu0 0.0
    %6250 = vmatpush1.msra.mxu0 0.0
    %6251 = vmatprep.subr.mxu0 0.0
    %6252 = vmatpush1.msra.mxu0 0.0
    %6253 = vmatprep.mubr.f32.mxu0 0.0
    %6254 = vmatmul.mubr.f32.gmra.mrb[0].mxu0 %v6187
    %v6255 = vpop.f32.mrb[0].mxu0
    %v6256 = vadd.f32 %v3813, %v6255
    %v6257 = vpop.f32.mrb[0].mxu0
    %6258 = vdwg.mxu0
    %6259 = vset.pattern.permute.xlu0 4
    %6260 = vperm.xlu0 %6259, %v3894
    %v6261 = vpop.permute.xlu0 %6260
    %vm6262 = vcmp.eq.s32.totalorder %v6261, %v35
    %v6263 = vsel %vm6262, 1, 0
    %v6264 = vcvt.s32.f32 %v6263
    %v6265 = vsel %vm3901, %v6256, -inf
    %6266 = vmax.xlane.f32.xlu0 %v6265
    %v6267 = vpop.xlane.xlu0 %6266
    %v6268 = vsub.f32 %v6256, %v6267
    %v6269 = vmul.f32 %v6268, 1.442695
    %v6270 = vpow.pop %v6269
    %v6271 = vsel %vm3901, %v6270, 0.0
    %6272 = vadd.xlane.f32.xlu0 %v6271
    %v6273 = vpop.xlane.xlu0 %6272
    %v6274 = vlog2.pop %v6273
    %v6275 = vmul.f32 %v6274, 0.6931472
    %v6276 = vadd.f32 %v6275, %v6267
    %v6277 = vmul.f32 %v6264, %v6256
    %v6278 = vsel %vm3901, %v6277, 0.0
    %6279 = vadd.xlane.f32.xlu0 %v6278
    %v6280 = vpop.xlane.xlu0 %6279
    %v6281 = vsub.f32 %v6276, %v6280
    %6282 = vrot.lane.b32.xlu0 %v3891, 124
    %v6283 = vpop.permute.xlu0 %6282
    %v6285 = vsel %vm3923, %v6283, 0.0
    %6286 = vadd.xlane.f32.xlu0 %v6285
    %v6287 = vpop.xlane.xlu0 %6286
    %v6288 = vrot.slane %v6287, 4
    %v6289 = vadd.f32 %v6287, %v6288
    %v6290 = vrot.slane %v6289, 2
    %v6291 = vadd.f32 %v6289, %v6290
    %v6292 = vrot.slane %v6291, 1
    %v6293 = vadd.f32 %v6291, %v6292
    %s6294 = vtos %v6293
    %v6295 = vstv %s6294
    %vm6296 = vcmp.gt.f32.partialorder %v6295, 0.0
    %v6297 = vmul.f32 %v6281, %v3891
    %6299 = vrot.lane.b32.xlu0 %v6297, 124
    %v6300 = vpop.permute.xlu0 %6299
    %v6302 = vsel %vm3923, %v6300, 0.0
    %6303 = vadd.xlane.f32.xlu0 %v6302
    %v6304 = vpop.xlane.xlu0 %6303
    %v6305 = vrot.slane %v6304, 4
    %v6306 = vadd.f32 %v6304, %v6305
    %v6307 = vrot.slane %v6306, 2
    %v6308 = vadd.f32 %v6306, %v6307
    %v6309 = vrot.slane %v6308, 1
    %v6310 = vadd.f32 %v6308, %v6309
    %s6311 = vtos %v6310
    %v6312 = vstv %s6311
    %v6313 = vmax.f32 %v6295, 1.0
    %v6314 = vrcp.pop %v6313
    %v6315 = vmul.f32 %v6312, %v6314
    %v6316 = vsel %vm6296, %v6315, 0.0
    %v6317 = vadd.f32 %v5530, %v6316
    %6319 = vrot.lane.b32.xlu0 %v6183, 64
    %v6320 = vpop.permute.xlu0 %6319
    %6322 = vrot.lane.b32.xlu0 %v6183, 96
    %v6323 = vpop.permute.xlu0 %6322
    %v6325 = vsel %vm369, %v6186, %v6320
    %v6326 = vsel %vm375, %v6325, %v6323
    %v6327 = vsel %vm2971, %v6326, %v6183
    %v6328 = vmul.f32 %v2972, %v6327
    %v6329 = vmul.f32 %v2973, %v6325
    %v6331 = vsel %vm375, %v6329, 0
    %6333 = vmatprep.subr.mxu0 0.0
    %6334 = vmatpush1.msra.mxu0 %v2974
    %6335 = vmatprep.subr.mxu0 0.0
    %6336 = vmatpush1.msra.mxu0 %v2975
    %6337 = vmatprep.subr.mxu0 0.0
    %6338 = vmatpush1.msra.mxu0 %v2976
    %6339 = vmatprep.subr.mxu0 0.0
    %6340 = vmatpush1.msra.mxu0 %v2977
    %6341 = vmatprep.subr.mxu0 0.0
    %6342 = vmatpush1.msra.mxu0 %v2978
    %6343 = vmatprep.subr.mxu0 0.0
    %6344 = vmatpush1.msra.mxu0 %v2979
    %6345 = vmatprep.subr.mxu0 0.0
    %6346 = vmatpush1.msra.mxu0 %v2980
    %6347 = vmatprep.subr.mxu0 0.0
    %6348 = vmatpush1.msra.mxu0 %v2981
    %6349 = vmatprep.subr.mxu0 0.0
    %6350 = vmatpush1.msra.mxu0 %v2982
    %6351 = vmatprep.subr.mxu0 0.0
    %6352 = vmatpush1.msra.mxu0 %v2983
    %6353 = vmatprep.subr.mxu0 0.0
    %6354 = vmatpush1.msra.mxu0 %v2984
    %6355 = vmatprep.subr.mxu0 0.0
    %6356 = vmatpush1.msra.mxu0 %v2985
    %6357 = vmatprep.subr.mxu0 0.0
    %6358 = vmatpush1.msra.mxu0 %v2986
    %6359 = vmatprep.subr.mxu0 0.0
    %6360 = vmatpush1.msra.mxu0 %v2987
    %6361 = vmatprep.subr.mxu0 0.0
    %6362 = vmatpush1.msra.mxu0 %v2988
    %6363 = vmatprep.subr.mxu0 0.0
    %6364 = vmatpush1.msra.mxu0 %v2989
    %6365 = vmatprep.subr.mxu0 0.0
    %6366 = vmatpush1.msra.mxu0 %v2990
    %6367 = vmatprep.subr.mxu0 0.0
    %6368 = vmatpush1.msra.mxu0 %v2991
    %6369 = vmatprep.subr.mxu0 0.0
    %6370 = vmatpush1.msra.mxu0 %v2992
    %6371 = vmatprep.subr.mxu0 0.0
    %6372 = vmatpush1.msra.mxu0 %v2993
    %6373 = vmatprep.subr.mxu0 0.0
    %6374 = vmatpush1.msra.mxu0 %v2994
    %6375 = vmatprep.subr.mxu0 0.0
    %6376 = vmatpush1.msra.mxu0 %v2995
    %6377 = vmatprep.subr.mxu0 0.0
    %6378 = vmatpush1.msra.mxu0 %v2996
    %6379 = vmatprep.subr.mxu0 0.0
    %6380 = vmatpush1.msra.mxu0 %v2997
    %6381 = vmatprep.subr.mxu0 0.0
    %6382 = vmatpush1.msra.mxu0 0.0
    %6383 = vmatprep.subr.mxu0 0.0
    %6384 = vmatpush1.msra.mxu0 0.0
    %6385 = vmatprep.subr.mxu0 0.0
    %6386 = vmatpush1.msra.mxu0 0.0
    %6387 = vmatprep.subr.mxu0 0.0
    %6388 = vmatpush1.msra.mxu0 0.0
    %6389 = vmatprep.subr.mxu0 0.0
    %6390 = vmatpush1.msra.mxu0 0.0
    %6391 = vmatprep.subr.mxu0 0.0
    %6392 = vmatpush1.msra.mxu0 0.0
    %6393 = vmatprep.subr.mxu0 0.0
    %6394 = vmatpush1.msra.mxu0 0.0
    %6395 = vmatprep.subr.mxu0 0.0
    %6396 = vmatpush1.msra.mxu0 0.0
    %6397 = vmatprep.mubr.f32.mxu0 %v6331
    %6398 = vmatmul.mubr.f32.gmra.mrb[0].mxu0 %v6328
    %v6399 = vpop.f32.mrb[0].mxu0
    %v6400 = vadd.f32 0.0, %v6399
    %v6401 = vpop.f32.mrb[0].mxu0
    %6402 = vdwg.mxu0
    %v6404 = vsel %vm3166, %v6400, 0
    %6406 = vmatprep.subr.mxu0 0.0
    %6407 = vmatpush1.msra.mxu0 %v3172
    %6408 = vmatprep.subr.mxu0 0.0
    %6409 = vmatpush1.msra.mxu0 0.0
    %6410 = vmatprep.subr.mxu0 0.0
    %6411 = vmatpush1.msra.mxu0 0.0
    %6412 = vmatprep.subr.mxu0 0.0
    %6413 = vmatpush1.msra.mxu0 0.0
    %6414 = vmatprep.subr.mxu0 0.0
    %6415 = vmatpush1.msra.mxu0 0.0
    %6416 = vmatprep.subr.mxu0 0.0
    %6417 = vmatpush1.msra.mxu0 0.0
    %6418 = vmatprep.subr.mxu0 0.0
    %6419 = vmatpush1.msra.mxu0 0.0
    %6420 = vmatprep.subr.mxu0 0.0
    %6421 = vmatpush1.msra.mxu0 0.0
    %6422 = vmatprep.subr.mxu0 0.0
    %6423 = vmatpush1.msra.mxu0 0.0
    %6424 = vmatprep.subr.mxu0 0.0
    %6425 = vmatpush1.msra.mxu0 0.0
    %6426 = vmatprep.subr.mxu0 0.0
    %6427 = vmatpush1.msra.mxu0 0.0
    %6428 = vmatprep.subr.mxu0 0.0
    %6429 = vmatpush1.msra.mxu0 0.0
    %6430 = vmatprep.subr.mxu0 0.0
    %6431 = vmatpush1.msra.mxu0 0.0
    %6432 = vmatprep.subr.mxu0 0.0
    %6433 = vmatpush1.msra.mxu0 0.0
    %6434 = vmatprep.subr.mxu0 0.0
    %6435 = vmatpush1.msra.mxu0 0.0
    %6436 = vmatprep.subr.mxu0 0.0
    %6437 = vmatpush1.msra.mxu0 0.0
    %6438 = vmatprep.subr.mxu0 0.0
    %6439 = vmatpush1.msra.mxu0 0.0
    %6440 = vmatprep.subr.mxu0 0.0
    %6441 = vmatpush1.msra.mxu0 0.0
    %6442 = vmatprep.subr.mxu0 0.0
    %6443 = vmatpush1.msra.mxu0 0.0
    %6444 = vmatprep.subr.mxu0 0.0
    %6445 = vmatpush1.msra.mxu0 0.0
    %6446 = vmatprep.subr.mxu0 0.0
    %6447 = vmatpush1.msra.mxu0 0.0
    %6448 = vmatprep.subr.mxu0 0.0
    %6449 = vmatpush1.msra.mxu0 0.0
    %6450 = vmatprep.subr.mxu0 0.0
    %6451 = vmatpush1.msra.mxu0 0.0
    %6452 = vmatprep.subr.mxu0 0.0
    %6453 = vmatpush1.msra.mxu0 0.0
    %6454 = vmatprep.subr.mxu0 0.0
    %6455 = vmatpush1.msra.mxu0 0.0
    %6456 = vmatprep.subr.mxu0 0.0
    %6457 = vmatpush1.msra.mxu0 0.0
    %6458 = vmatprep.subr.mxu0 0.0
    %6459 = vmatpush1.msra.mxu0 0.0
    %6460 = vmatprep.subr.mxu0 0.0
    %6461 = vmatpush1.msra.mxu0 0.0
    %6462 = vmatprep.subr.mxu0 0.0
    %6463 = vmatpush1.msra.mxu0 0.0
    %6464 = vmatprep.subr.mxu0 0.0
    %6465 = vmatpush1.msra.mxu0 0.0
    %6466 = vmatprep.subr.mxu0 0.0
    %6467 = vmatpush1.msra.mxu0 0.0
    %6468 = vmatprep.subr.mxu0 0.0
    %6469 = vmatpush1.msra.mxu0 0.0
    %6470 = vmatprep.mubr.f32.mxu0 0.0
    %6471 = vmatmul.mubr.f32.gmra.mrb[0].mxu0 %v6404
    %v6472 = vpop.f32.mrb[0].mxu0
    %v6473 = vadd.f32 %v3165, %v6472
    %v6474 = vpop.f32.mrb[0].mxu0
    %6475 = vdwg.mxu0
    %v6476 = vsel %vm3244, %v6473, -inf
    %6477 = vmax.xlane.f32.xlu0 %v6476
    %v6478 = vpop.xlane.xlu0 %6477
    %v6479 = vsub.f32 %v6473, %v6478
    %v6480 = vmul.f32 %v6479, 1.442695
    %v6481 = vpow.pop %v6480
    %v6482 = vsel %vm3244, %v6481, 0.0
    %6483 = vadd.xlane.f32.xlu0 %v6482
    %v6484 = vpop.xlane.xlu0 %6483
    %v6485 = vrcp.pop %v6484
    %v6486 = vmul.f32 %v6481, %v6485
    %v6487 = vmul.f32 %v6486, %v3068
    %6489 = vrot.lane.b32.xlu0 %v352, 6
    %v6490 = vpop.permute.xlu0 %6489
    %v6492 = vsel %vm3166, %v6487, %v6490
    %v6494 = vsel %vm3272, %v6492, 0
    %6496 = vmatprep.subr.mxu0 0.0
    %6497 = vmatpush1.msra.mxu0 %v3262
    %6498 = vmatprep.subr.mxu0 0.0
    %6499 = vmatpush1.msra.mxu0 %v3263
    %6500 = vmatprep.subr.mxu0 0.0
    %6501 = vmatpush1.msra.mxu0 %v3264
    %6502 = vmatprep.subr.mxu0 0.0
    %6503 = vmatpush1.msra.mxu0 %v3265
    %6504 = vmatprep.subr.mxu0 0.0
    %6505 = vmatpush1.msra.mxu0 %v3277
    %6506 = vmatprep.subr.mxu0 0.0
    %6507 = vmatpush1.msra.mxu0 0.0
    %6508 = vmatprep.subr.mxu0 0.0
    %6509 = vmatpush1.msra.mxu0 0.0
    %6510 = vmatprep.subr.mxu0 0.0
    %6511 = vmatpush1.msra.mxu0 0.0
    %6512 = vmatprep.subr.mxu0 0.0
    %6513 = vmatpush1.msra.mxu0 0.0
    %6514 = vmatprep.subr.mxu0 0.0
    %6515 = vmatpush1.msra.mxu0 0.0
    %6516 = vmatprep.subr.mxu0 0.0
    %6517 = vmatpush1.msra.mxu0 0.0
    %6518 = vmatprep.subr.mxu0 0.0
    %6519 = vmatpush1.msra.mxu0 0.0
    %6520 = vmatprep.subr.mxu0 0.0
    %6521 = vmatpush1.msra.mxu0 0.0
    %6522 = vmatprep.subr.mxu0 0.0
    %6523 = vmatpush1.msra.mxu0 0.0
    %6524 = vmatprep.subr.mxu0 0.0
    %6525 = vmatpush1.msra.mxu0 0.0
    %6526 = vmatprep.subr.mxu0 0.0
    %6527 = vmatpush1.msra.mxu0 0.0
    %6528 = vmatprep.subr.mxu0 0.0
    %6529 = vmatpush1.msra.mxu0 0.0
    %6530 = vmatprep.subr.mxu0 0.0
    %6531 = vmatpush1.msra.mxu0 0.0
    %6532 = vmatprep.subr.mxu0 0.0
    %6533 = vmatpush1.msra.mxu0 0.0
    %6534 = vmatprep.subr.mxu0 0.0
    %6535 = vmatpush1.msra.mxu0 0.0
    %6536 = vmatprep.subr.mxu0 0.0
    %6537 = vmatpush1.msra.mxu0 0.0
    %6538 = vmatprep.subr.mxu0 0.0
    %6539 = vmatpush1.msra.mxu0 0.0
    %6540 = vmatprep.subr.mxu0 0.0
    %6541 = vmatpush1.msra.mxu0 0.0
    %6542 = vmatprep.subr.mxu0 0.0
    %6543 = vmatpush1.msra.mxu0 0.0
    %6544 = vmatprep.subr.mxu0 0.0
    %6545 = vmatpush1.msra.mxu0 0.0
    %6546 = vmatprep.subr.mxu0 0.0
    %6547 = vmatpush1.msra.mxu0 0.0
    %6548 = vmatprep.subr.mxu0 0.0
    %6549 = vmatpush1.msra.mxu0 0.0
    %6550 = vmatprep.subr.mxu0 0.0
    %6551 = vmatpush1.msra.mxu0 0.0
    %6552 = vmatprep.subr.mxu0 0.0
    %6553 = vmatpush1.msra.mxu0 0.0
    %6554 = vmatprep.subr.mxu0 0.0
    %6555 = vmatpush1.msra.mxu0 0.0
    %6556 = vmatprep.subr.mxu0 0.0
    %6557 = vmatpush1.msra.mxu0 0.0
    %6558 = vmatprep.subr.mxu0 0.0
    %6559 = vmatpush1.msra.mxu0 0.0
    %6560 = vmatprep.mubr.f32.mxu0 0.0
    %6561 = vmatmul.mubr.f32.gmra.mrb[0].mxu0 %v6494
    %v6562 = vpop.f32.mrb[0].mxu0
    %v6563 = vadd.f32 %v3271, %v6562
    %v6564 = vpop.f32.mrb[0].mxu0
    %6565 = vdwg.mxu0
    %6566 = vrot.lane.b32.xlu0 %v5877, 64
    %v6567 = vpop.permute.xlu0 %6566
    %v6569 = vsel %vm369, %v6563, %v6567
    %v6571 = vsel %vm375, %v6569, 0
    %6573 = vmatprep.subr.mxu0 0.0
    %6574 = vmatpush1.msra.mxu0 %v3349
    %6575 = vmatprep.subr.mxu0 0.0
    %6576 = vmatpush1.msra.mxu0 %v3350
    %6577 = vmatprep.subr.mxu0 0.0
    %6578 = vmatpush1.msra.mxu0 %v3351
    %6579 = vmatprep.subr.mxu0 0.0
    %6580 = vmatpush1.msra.mxu0 %v3352
    %6581 = vmatprep.subr.mxu0 0.0
    %6582 = vmatpush1.msra.mxu0 %v3353
    %6583 = vmatprep.subr.mxu0 0.0
    %6584 = vmatpush1.msra.mxu0 %v3354
    %6585 = vmatprep.subr.mxu0 0.0
    %6586 = vmatpush1.msra.mxu0 %v3355
    %6587 = vmatprep.subr.mxu0 0.0
    %6588 = vmatpush1.msra.mxu0 %v3356
    %6589 = vmatprep.subr.mxu0 0.0
    %6590 = vmatpush1.msra.mxu0 0.0
    %6591 = vmatprep.subr.mxu0 0.0
    %6592 = vmatpush1.msra.mxu0 0.0
    %6593 = vmatprep.subr.mxu0 0.0
    %6594 = vmatpush1.msra.mxu0 0.0
    %6595 = vmatprep.subr.mxu0 0.0
    %6596 = vmatpush1.msra.mxu0 0.0
    %6597 = vmatprep.subr.mxu0 0.0
    %6598 = vmatpush1.msra.mxu0 0.0
    %6599 = vmatprep.subr.mxu0 0.0
    %6600 = vmatpush1.msra.mxu0 0.0
    %6601 = vmatprep.subr.mxu0 0.0
    %6602 = vmatpush1.msra.mxu0 0.0
    %6603 = vmatprep.subr.mxu0 0.0
    %6604 = vmatpush1.msra.mxu0 0.0
    %6605 = vmatprep.subr.mxu0 0.0
    %6606 = vmatpush1.msra.mxu0 0.0
    %6607 = vmatprep.subr.mxu0 0.0
    %6608 = vmatpush1.msra.mxu0 0.0
    %6609 = vmatprep.subr.mxu0 0.0
    %6610 = vmatpush1.msra.mxu0 0.0
    %6611 = vmatprep.subr.mxu0 0.0
    %6612 = vmatpush1.msra.mxu0 0.0
    %6613 = vmatprep.subr.mxu0 0.0
    %6614 = vmatpush1.msra.mxu0 0.0
    %6615 = vmatprep.subr.mxu0 0.0
    %6616 = vmatpush1.msra.mxu0 0.0
    %6617 = vmatprep.subr.mxu0 0.0
    %6618 = vmatpush1.msra.mxu0 0.0
    %6619 = vmatprep.subr.mxu0 0.0
    %6620 = vmatpush1.msra.mxu0 0.0
    %6621 = vmatprep.subr.mxu0 0.0
    %6622 = vmatpush1.msra.mxu0 0.0
    %6623 = vmatprep.subr.mxu0 0.0
    %6624 = vmatpush1.msra.mxu0 0.0
    %6625 = vmatprep.subr.mxu0 0.0
    %6626 = vmatpush1.msra.mxu0 0.0
    %6627 = vmatprep.subr.mxu0 0.0
    %6628 = vmatpush1.msra.mxu0 0.0
    %6629 = vmatprep.subr.mxu0 0.0
    %6630 = vmatpush1.msra.mxu0 0.0
    %6631 = vmatprep.subr.mxu0 0.0
    %6632 = vmatpush1.msra.mxu0 0.0
    %6633 = vmatprep.subr.mxu0 0.0
    %6634 = vmatpush1.msra.mxu0 0.0
    %6635 = vmatprep.subr.mxu0 0.0
    %6636 = vmatpush1.msra.mxu0 0.0
    %6637 = vmatprep.mubr.f32.mxu0 0.0
    %6638 = vmatmul.mubr.f32.gmra.mrb[0].mxu0 %v6571
    %v6639 = vpop.f32.mrb[0].mxu0
    %v6640 = vadd.f32 %v3365, %v6639
    %v6641 = vpop.f32.mrb[0].mxu0
    %6642 = vdwg.mxu0
    %v6643 = vmul.f32 %v6640, 0.5
    %v6644 = vtanh.pop %v6643
    %v6645 = vadd.f32 %v6644, 1.0
    %v6646 = vmul.f32 %v6645, 0.5
    %v6647 = vtanh.pop %v6640
    %v6648 = vmul.f32 %v6646, %v5871
    %6650 = vrot.lane.b32.xlu0 %v6647, 64
    %v6651 = vpop.permute.xlu0 %6650
    %v6653 = vmul.f32 %v6646, %v6651
    %6655 = vrot.lane.b32.xlu0 %v6653, 32
    %v6656 = vpop.permute.xlu0 %6655
    %v6658 = vadd.f32 %v6648, %v6656
    %v6659 = vtanh.pop %v6658
    %6661 = vrot.lane.b32.xlu0 %v6659, 64
    %v6662 = vpop.permute.xlu0 %6661
    %v6664 = vmul.f32 %v6646, %v6662
    %6666 = vrot.lane.b32.xlu0 %v6664, 32
    %v6667 = vpop.permute.xlu0 %6666
    %6669 = vrot.lane.b32.xlu0 %v5980, 64
    %v6670 = vpop.permute.xlu0 %6669
    %v6672 = vsel %vm369, %v6667, %v6670
    %v6674 = vsel %vm375, %v6672, 0
    %6676 = vmatprep.subr.mxu0 0.0
    %6677 = vmatpush1.msra.mxu0 %v3461
    %6678 = vmatprep.subr.mxu0 0.0
    %6679 = vmatpush1.msra.mxu0 %v3462
    %6680 = vmatprep.subr.mxu0 0.0
    %6681 = vmatpush1.msra.mxu0 %v3463
    %6682 = vmatprep.subr.mxu0 0.0
    %6683 = vmatpush1.msra.mxu0 %v3464
    %6684 = vmatprep.subr.mxu0 0.0
    %6685 = vmatpush1.msra.mxu0 %v3465
    %6686 = vmatprep.subr.mxu0 0.0
    %6687 = vmatpush1.msra.mxu0 %v3466
    %6688 = vmatprep.subr.mxu0 0.0
    %6689 = vmatpush1.msra.mxu0 %v3467
    %6690 = vmatprep.subr.mxu0 0.0
    %6691 = vmatpush1.msra.mxu0 %v3468
    %6692 = vmatprep.subr.mxu0 0.0
    %6693 = vmatpush1.msra.mxu0 0.0
    %6694 = vmatprep.subr.mxu0 0.0
    %6695 = vmatpush1.msra.mxu0 0.0
    %6696 = vmatprep.subr.mxu0 0.0
    %6697 = vmatpush1.msra.mxu0 0.0
    %6698 = vmatprep.subr.mxu0 0.0
    %6699 = vmatpush1.msra.mxu0 0.0
    %6700 = vmatprep.subr.mxu0 0.0
    %6701 = vmatpush1.msra.mxu0 0.0
    %6702 = vmatprep.subr.mxu0 0.0
    %6703 = vmatpush1.msra.mxu0 0.0
    %6704 = vmatprep.subr.mxu0 0.0
    %6705 = vmatpush1.msra.mxu0 0.0
    %6706 = vmatprep.subr.mxu0 0.0
    %6707 = vmatpush1.msra.mxu0 0.0
    %6708 = vmatprep.subr.mxu0 0.0
    %6709 = vmatpush1.msra.mxu0 0.0
    %6710 = vmatprep.subr.mxu0 0.0
    %6711 = vmatpush1.msra.mxu0 0.0
    %6712 = vmatprep.subr.mxu0 0.0
    %6713 = vmatpush1.msra.mxu0 0.0
    %6714 = vmatprep.subr.mxu0 0.0
    %6715 = vmatpush1.msra.mxu0 0.0
    %6716 = vmatprep.subr.mxu0 0.0
    %6717 = vmatpush1.msra.mxu0 0.0
    %6718 = vmatprep.subr.mxu0 0.0
    %6719 = vmatpush1.msra.mxu0 0.0
    %6720 = vmatprep.subr.mxu0 0.0
    %6721 = vmatpush1.msra.mxu0 0.0
    %6722 = vmatprep.subr.mxu0 0.0
    %6723 = vmatpush1.msra.mxu0 0.0
    %6724 = vmatprep.subr.mxu0 0.0
    %6725 = vmatpush1.msra.mxu0 0.0
    %6726 = vmatprep.subr.mxu0 0.0
    %6727 = vmatpush1.msra.mxu0 0.0
    %6728 = vmatprep.subr.mxu0 0.0
    %6729 = vmatpush1.msra.mxu0 0.0
    %6730 = vmatprep.subr.mxu0 0.0
    %6731 = vmatpush1.msra.mxu0 0.0
    %6732 = vmatprep.subr.mxu0 0.0
    %6733 = vmatpush1.msra.mxu0 0.0
    %6734 = vmatprep.subr.mxu0 0.0
    %6735 = vmatpush1.msra.mxu0 0.0
    %6736 = vmatprep.subr.mxu0 0.0
    %6737 = vmatpush1.msra.mxu0 0.0
    %6738 = vmatprep.subr.mxu0 0.0
    %6739 = vmatpush1.msra.mxu0 0.0
    %6740 = vmatprep.mubr.f32.mxu0 0.0
    %6741 = vmatmul.mubr.f32.gmra.mrb[0].mxu0 %v6674
    %v6742 = vpop.f32.mrb[0].mxu0
    %v6743 = vadd.f32 %v3481, %v6742
    %v6744 = vpop.f32.mrb[0].mxu0
    %6745 = vdwg.mxu0
    %v6746 = vmul.f32 %v6743, 0.5
    %v6747 = vtanh.pop %v6746
    %v6748 = vadd.f32 %v6747, 1.0
    %v6749 = vmul.f32 %v6748, 0.5
    %v6750 = vtanh.pop %v6743
    %v6751 = vmul.f32 %v6749, %v5974
    %6753 = vrot.lane.b32.xlu0 %v6750, 64
    %v6754 = vpop.permute.xlu0 %6753
    %v6756 = vmul.f32 %v6749, %v6754
    %6758 = vrot.lane.b32.xlu0 %v6756, 32
    %v6759 = vpop.permute.xlu0 %6758
    %v6761 = vadd.f32 %v6751, %v6759
    %v6762 = vtanh.pop %v6761
    %6764 = vrot.lane.b32.xlu0 %v6762, 64
    %v6765 = vpop.permute.xlu0 %6764
    %v6767 = vmul.f32 %v6749, %v6765
    %6769 = vrot.lane.b32.xlu0 %v6767, 32
    %v6770 = vpop.permute.xlu0 %6769
    %6772 = vrot.lane.b32.xlu0 %v6083, 64
    %v6773 = vpop.permute.xlu0 %6772
    %v6775 = vsel %vm369, %v6770, %v6773
    %v6777 = vsel %vm375, %v6775, 0
    %6779 = vmatprep.subr.mxu0 0.0
    %6780 = vmatpush1.msra.mxu0 %v3577
    %6781 = vmatprep.subr.mxu0 0.0
    %6782 = vmatpush1.msra.mxu0 %v3578
    %6783 = vmatprep.subr.mxu0 0.0
    %6784 = vmatpush1.msra.mxu0 %v3579
    %6785 = vmatprep.subr.mxu0 0.0
    %6786 = vmatpush1.msra.mxu0 %v3580
    %6787 = vmatprep.subr.mxu0 0.0
    %6788 = vmatpush1.msra.mxu0 %v3581
    %6789 = vmatprep.subr.mxu0 0.0
    %6790 = vmatpush1.msra.mxu0 %v3582
    %6791 = vmatprep.subr.mxu0 0.0
    %6792 = vmatpush1.msra.mxu0 %v3583
    %6793 = vmatprep.subr.mxu0 0.0
    %6794 = vmatpush1.msra.mxu0 %v3584
    %6795 = vmatprep.subr.mxu0 0.0
    %6796 = vmatpush1.msra.mxu0 0.0
    %6797 = vmatprep.subr.mxu0 0.0
    %6798 = vmatpush1.msra.mxu0 0.0
    %6799 = vmatprep.subr.mxu0 0.0
    %6800 = vmatpush1.msra.mxu0 0.0
    %6801 = vmatprep.subr.mxu0 0.0
    %6802 = vmatpush1.msra.mxu0 0.0
    %6803 = vmatprep.subr.mxu0 0.0
    %6804 = vmatpush1.msra.mxu0 0.0
    %6805 = vmatprep.subr.mxu0 0.0
    %6806 = vmatpush1.msra.mxu0 0.0
    %6807 = vmatprep.subr.mxu0 0.0
    %6808 = vmatpush1.msra.mxu0 0.0
    %6809 = vmatprep.subr.mxu0 0.0
    %6810 = vmatpush1.msra.mxu0 0.0
    %6811 = vmatprep.subr.mxu0 0.0
    %6812 = vmatpush1.msra.mxu0 0.0
    %6813 = vmatprep.subr.mxu0 0.0
    %6814 = vmatpush1.msra.mxu0 0.0
    %6815 = vmatprep.subr.mxu0 0.0
    %6816 = vmatpush1.msra.mxu0 0.0
    %6817 = vmatprep.subr.mxu0 0.0
    %6818 = vmatpush1.msra.mxu0 0.0
    %6819 = vmatprep.subr.mxu0 0.0
    %6820 = vmatpush1.msra.mxu0 0.0
    %6821 = vmatprep.subr.mxu0 0.0
    %6822 = vmatpush1.msra.mxu0 0.0
    %6823 = vmatprep.subr.mxu0 0.0
    %6824 = vmatpush1.msra.mxu0 0.0
    %6825 = vmatprep.subr.mxu0 0.0
    %6826 = vmatpush1.msra.mxu0 0.0
    %6827 = vmatprep.subr.mxu0 0.0
    %6828 = vmatpush1.msra.mxu0 0.0
    %6829 = vmatprep.subr.mxu0 0.0
    %6830 = vmatpush1.msra.mxu0 0.0
    %6831 = vmatprep.subr.mxu0 0.0
    %6832 = vmatpush1.msra.mxu0 0.0
    %6833 = vmatprep.subr.mxu0 0.0
    %6834 = vmatpush1.msra.mxu0 0.0
    %6835 = vmatprep.subr.mxu0 0.0
    %6836 = vmatpush1.msra.mxu0 0.0
    %6837 = vmatprep.subr.mxu0 0.0
    %6838 = vmatpush1.msra.mxu0 0.0
    %6839 = vmatprep.subr.mxu0 0.0
    %6840 = vmatpush1.msra.mxu0 0.0
    %6841 = vmatprep.subr.mxu0 0.0
    %6842 = vmatpush1.msra.mxu0 0.0
    %6843 = vmatprep.mubr.f32.mxu0 0.0
    %6844 = vmatmul.mubr.f32.gmra.mrb[0].mxu0 %v6777
    %v6845 = vpop.f32.mrb[0].mxu0
    %v6846 = vadd.f32 %v3597, %v6845
    %v6847 = vpop.f32.mrb[0].mxu0
    %6848 = vdwg.mxu0
    %v6849 = vmul.f32 %v6846, 0.5
    %v6850 = vtanh.pop %v6849
    %v6851 = vadd.f32 %v6850, 1.0
    %v6852 = vmul.f32 %v6851, 0.5
    %v6853 = vtanh.pop %v6846
    %v6854 = vmul.f32 %v6852, %v6077
    %6856 = vrot.lane.b32.xlu0 %v6853, 64
    %v6857 = vpop.permute.xlu0 %6856
    %v6859 = vmul.f32 %v6852, %v6857
    %6861 = vrot.lane.b32.xlu0 %v6859, 32
    %v6862 = vpop.permute.xlu0 %6861
    %v6864 = vadd.f32 %v6854, %v6862
    %v6865 = vtanh.pop %v6864
    %6867 = vrot.lane.b32.xlu0 %v6865, 64
    %v6868 = vpop.permute.xlu0 %6867
    %v6870 = vmul.f32 %v6852, %v6868
    %6872 = vrot.lane.b32.xlu0 %v6870, 32
    %v6873 = vpop.permute.xlu0 %6872
    %v6875 = vsel %vm369, %v6873, %v6320
    %v6877 = vsel %vm375, %v6875, 0
    %6879 = vmatprep.subr.mxu0 0.0
    %6880 = vmatpush1.msra.mxu0 %v3693
    %6881 = vmatprep.subr.mxu0 0.0
    %6882 = vmatpush1.msra.mxu0 %v3694
    %6883 = vmatprep.subr.mxu0 0.0
    %6884 = vmatpush1.msra.mxu0 %v3695
    %6885 = vmatprep.subr.mxu0 0.0
    %6886 = vmatpush1.msra.mxu0 %v3696
    %6887 = vmatprep.subr.mxu0 0.0
    %6888 = vmatpush1.msra.mxu0 %v3697
    %6889 = vmatprep.subr.mxu0 0.0
    %6890 = vmatpush1.msra.mxu0 %v3698
    %6891 = vmatprep.subr.mxu0 0.0
    %6892 = vmatpush1.msra.mxu0 %v3699
    %6893 = vmatprep.subr.mxu0 0.0
    %6894 = vmatpush1.msra.mxu0 %v3700
    %6895 = vmatprep.subr.mxu0 0.0
    %6896 = vmatpush1.msra.mxu0 0.0
    %6897 = vmatprep.subr.mxu0 0.0
    %6898 = vmatpush1.msra.mxu0 0.0
    %6899 = vmatprep.subr.mxu0 0.0
    %6900 = vmatpush1.msra.mxu0 0.0
    %6901 = vmatprep.subr.mxu0 0.0
    %6902 = vmatpush1.msra.mxu0 0.0
    %6903 = vmatprep.subr.mxu0 0.0
    %6904 = vmatpush1.msra.mxu0 0.0
    %6905 = vmatprep.subr.mxu0 0.0
    %6906 = vmatpush1.msra.mxu0 0.0
    %6907 = vmatprep.subr.mxu0 0.0
    %6908 = vmatpush1.msra.mxu0 0.0
    %6909 = vmatprep.subr.mxu0 0.0
    %6910 = vmatpush1.msra.mxu0 0.0
    %6911 = vmatprep.subr.mxu0 0.0
    %6912 = vmatpush1.msra.mxu0 0.0
    %6913 = vmatprep.subr.mxu0 0.0
    %6914 = vmatpush1.msra.mxu0 0.0
    %6915 = vmatprep.subr.mxu0 0.0
    %6916 = vmatpush1.msra.mxu0 0.0
    %6917 = vmatprep.subr.mxu0 0.0
    %6918 = vmatpush1.msra.mxu0 0.0
    %6919 = vmatprep.subr.mxu0 0.0
    %6920 = vmatpush1.msra.mxu0 0.0
    %6921 = vmatprep.subr.mxu0 0.0
    %6922 = vmatpush1.msra.mxu0 0.0
    %6923 = vmatprep.subr.mxu0 0.0
    %6924 = vmatpush1.msra.mxu0 0.0
    %6925 = vmatprep.subr.mxu0 0.0
    %6926 = vmatpush1.msra.mxu0 0.0
    %6927 = vmatprep.subr.mxu0 0.0
    %6928 = vmatpush1.msra.mxu0 0.0
    %6929 = vmatprep.subr.mxu0 0.0
    %6930 = vmatpush1.msra.mxu0 0.0
    %6931 = vmatprep.subr.mxu0 0.0
    %6932 = vmatpush1.msra.mxu0 0.0
    %6933 = vmatprep.subr.mxu0 0.0
    %6934 = vmatpush1.msra.mxu0 0.0
    %6935 = vmatprep.subr.mxu0 0.0
    %6936 = vmatpush1.msra.mxu0 0.0
    %6937 = vmatprep.subr.mxu0 0.0
    %6938 = vmatpush1.msra.mxu0 0.0
    %6939 = vmatprep.subr.mxu0 0.0
    %6940 = vmatpush1.msra.mxu0 0.0
    %6941 = vmatprep.subr.mxu0 0.0
    %6942 = vmatpush1.msra.mxu0 0.0
    %6943 = vmatprep.mubr.f32.mxu0 0.0
    %6944 = vmatmul.mubr.f32.gmra.mrb[0].mxu0 %v6877
    %v6945 = vpop.f32.mrb[0].mxu0
    %v6946 = vadd.f32 %v3709, %v6945
    %v6947 = vpop.f32.mrb[0].mxu0
    %6948 = vdwg.mxu0
    %v6949 = vmul.f32 %v6946, 0.5
    %v6950 = vtanh.pop %v6949
    %v6951 = vadd.f32 %v6950, 1.0
    %v6952 = vmul.f32 %v6951, 0.5
    %v6953 = vtanh.pop %v6946
    %v6954 = vmul.f32 %v6952, %v6177
    %6956 = vrot.lane.b32.xlu0 %v6953, 64
    %v6957 = vpop.permute.xlu0 %6956
    %v6959 = vmul.f32 %v6952, %v6957
    %6961 = vrot.lane.b32.xlu0 %v6959, 32
    %v6962 = vpop.permute.xlu0 %6961
    %v6964 = vadd.f32 %v6954, %v6962
    %v6965 = vtanh.pop %v6964
    %6967 = vrot.lane.b32.xlu0 %v6965, 64
    %v6968 = vpop.permute.xlu0 %6967
    %v6970 = vmul.f32 %v6952, %v6968
    %6972 = vrot.lane.b32.xlu0 %v6970, 32
    %v6973 = vpop.permute.xlu0 %6972
    %v6974 = vsel %vm369, %v6973, 0
    %6976 = vmatprep.subr.mxu0 0.0
    %6977 = vmatpush1.msra.mxu0 %v3805
    %6978 = vmatprep.subr.mxu0 0.0
    %6979 = vmatpush1.msra.mxu0 %v3806
    %6980 = vmatprep.subr.mxu0 0.0
    %6981 = vmatpush1.msra.mxu0 %v3807
    %6982 = vmatprep.subr.mxu0 0.0
    %6983 = vmatpush1.msra.mxu0 %v3808
    %6984 = vmatprep.subr.mxu0 0.0
    %6985 = vmatpush1.msra.mxu0 0.0
    %6986 = vmatprep.subr.mxu0 0.0
    %6987 = vmatpush1.msra.mxu0 0.0
    %6988 = vmatprep.subr.mxu0 0.0
    %6989 = vmatpush1.msra.mxu0 0.0
    %6990 = vmatprep.subr.mxu0 0.0
    %6991 = vmatpush1.msra.mxu0 0.0
    %6992 = vmatprep.subr.mxu0 0.0
    %6993 = vmatpush1.msra.mxu0 0.0
    %6994 = vmatprep.subr.mxu0 0.0
    %6995 = vmatpush1.msra.mxu0 0.0
    %6996 = vmatprep.subr.mxu0 0.0
    %6997 = vmatpush1.msra.mxu0 0.0
    %6998 = vmatprep.subr.mxu0 0.0
    %6999 = vmatpush1.msra.mxu0 0.0
    %7000 = vmatprep.subr.mxu0 0.0
    %7001 = vmatpush1.msra.mxu0 0.0
    %7002 = vmatprep.subr.mxu0 0.0
    %7003 = vmatpush1.msra.mxu0 0.0
    %7004 = vmatprep.subr.mxu0 0.0
    %7005 = vmatpush1.msra.mxu0 0.0
    %7006 = vmatprep.subr.mxu0 0.0
    %7007 = vmatpush1.msra.mxu0 0.0
    %7008 = vmatprep.subr.mxu0 0.0
    %7009 = vmatpush1.msra.mxu0 0.0
    %7010 = vmatprep.subr.mxu0 0.0
    %7011 = vmatpush1.msra.mxu0 0.0
    %7012 = vmatprep.subr.mxu0 0.0
    %7013 = vmatpush1.msra.mxu0 0.0
    %7014 = vmatprep.subr.mxu0 0.0
    %7015 = vmatpush1.msra.mxu0 0.0
    %7016 = vmatprep.subr.mxu0 0.0
    %7017 = vmatpush1.msra.mxu0 0.0
    %7018 = vmatprep.subr.mxu0 0.0
    %7019 = vmatpush1.msra.mxu0 0.0
    %7020 = vmatprep.subr.mxu0 0.0
    %7021 = vmatpush1.msra.mxu0 0.0
    %7022 = vmatprep.subr.mxu0 0.0
    %7023 = vmatpush1.msra.mxu0 0.0
    %7024 = vmatprep.subr.mxu0 0.0
    %7025 = vmatpush1.msra.mxu0 0.0
    %7026 = vmatprep.subr.mxu0 0.0
    %7027 = vmatpush1.msra.mxu0 0.0
    %7028 = vmatprep.subr.mxu0 0.0
    %7029 = vmatpush1.msra.mxu0 0.0
    %7030 = vmatprep.subr.mxu0 0.0
    %7031 = vmatpush1.msra.mxu0 0.0
    %7032 = vmatprep.subr.mxu0 0.0
    %7033 = vmatpush1.msra.mxu0 0.0
    %7034 = vmatprep.subr.mxu0 0.0
    %7035 = vmatpush1.msra.mxu0 0.0
    %7036 = vmatprep.subr.mxu0 0.0
    %7037 = vmatpush1.msra.mxu0 0.0
    %7038 = vmatprep.subr.mxu0 0.0
    %7039 = vmatpush1.msra.mxu0 0.0
    %7040 = vmatprep.mubr.f32.mxu0 0.0
    %7041 = vmatmul.mubr.f32.gmra.mrb[0].mxu0 %v6974
    %v7042 = vpop.f32.mrb[0].mxu0
    %v7043 = vadd.f32 %v3813, %v7042
    %v7044 = vpop.f32.mrb[0].mxu0
    %7045 = vdwg.mxu0
    %7046 = vset.pattern.permute.xlu0 5
    %7047 = vperm.xlu0 %7046, %v3894
    %v7048 = vpop.permute.xlu0 %7047
    %vm7049 = vcmp.eq.s32.totalorder %v7048, %v35
    %v7050 = vsel %vm7049, 1, 0
    %v7051 = vcvt.s32.f32 %v7050
    %v7052 = vsel %vm3901, %v7043, -inf
    %7053 = vmax.xlane.f32.xlu0 %v7052
    %v7054 = vpop.xlane.xlu0 %7053
    %v7055 = vsub.f32 %v7043, %v7054
    %v7056 = vmul.f32 %v7055, 1.442695
    %v7057 = vpow.pop %v7056
    %v7058 = vsel %vm3901, %v7057, 0.0
    %7059 = vadd.xlane.f32.xlu0 %v7058
    %v7060 = vpop.xlane.xlu0 %7059
    %v7061 = vlog2.pop %v7060
    %v7062 = vmul.f32 %v7061, 0.6931472
    %v7063 = vadd.f32 %v7062, %v7054
    %v7064 = vmul.f32 %v7051, %v7043
    %v7065 = vsel %vm3901, %v7064, 0.0
    %7066 = vadd.xlane.f32.xlu0 %v7065
    %v7067 = vpop.xlane.xlu0 %7066
    %v7068 = vsub.f32 %v7063, %v7067
    %7069 = vrot.lane.b32.xlu0 %v3891, 123
    %v7070 = vpop.permute.xlu0 %7069
    %v7072 = vsel %vm3923, %v7070, 0.0
    %7073 = vadd.xlane.f32.xlu0 %v7072
    %v7074 = vpop.xlane.xlu0 %7073
    %v7075 = vrot.slane %v7074, 4
    %v7076 = vadd.f32 %v7074, %v7075
    %v7077 = vrot.slane %v7076, 2
    %v7078 = vadd.f32 %v7076, %v7077
    %v7079 = vrot.slane %v7078, 1
    %v7080 = vadd.f32 %v7078, %v7079
    %s7081 = vtos %v7080
    %v7082 = vstv %s7081
    %vm7083 = vcmp.gt.f32.partialorder %v7082, 0.0
    %v7084 = vmul.f32 %v7068, %v3891
    %7086 = vrot.lane.b32.xlu0 %v7084, 123
    %v7087 = vpop.permute.xlu0 %7086
    %v7089 = vsel %vm3923, %v7087, 0.0
    %7090 = vadd.xlane.f32.xlu0 %v7089
    %v7091 = vpop.xlane.xlu0 %7090
    %v7092 = vrot.slane %v7091, 4
    %v7093 = vadd.f32 %v7091, %v7092
    %v7094 = vrot.slane %v7093, 2
    %v7095 = vadd.f32 %v7093, %v7094
    %v7096 = vrot.slane %v7095, 1
    %v7097 = vadd.f32 %v7095, %v7096
    %s7098 = vtos %v7097
    %v7099 = vstv %s7098
    %v7100 = vmax.f32 %v7082, 1.0
    %v7101 = vrcp.pop %v7100
    %v7102 = vmul.f32 %v7099, %v7101
    %v7103 = vsel %vm7083, %v7102, 0.0
    %v7104 = vadd.f32 %v6317, %v7103
    %7106 = vrot.lane.b32.xlu0 %v6970, 64
    %v7107 = vpop.permute.xlu0 %7106
    %7109 = vrot.lane.b32.xlu0 %v6970, 96
    %v7110 = vpop.permute.xlu0 %7109
    %v7112 = vsel %vm369, %v6973, %v7107
    %v7113 = vsel %vm375, %v7112, %v7110
    %v7114 = vsel %vm2971, %v7113, %v6970
    %v7115 = vmul.f32 %v2972, %v7114
    %v7116 = vmul.f32 %v2973, %v7112
    %v7118 = vsel %vm375, %v7116, 0
    %7120 = vmatprep.subr.mxu0 0.0
    %7121 = vmatpush1.msra.mxu0 %v2974
    %7122 = vmatprep.subr.mxu0 0.0
    %7123 = vmatpush1.msra.mxu0 %v2975
    %7124 = vmatprep.subr.mxu0 0.0
    %7125 = vmatpush1.msra.mxu0 %v2976
    %7126 = vmatprep.subr.mxu0 0.0
    %7127 = vmatpush1.msra.mxu0 %v2977
    %7128 = vmatprep.subr.mxu0 0.0
    %7129 = vmatpush1.msra.mxu0 %v2978
    %7130 = vmatprep.subr.mxu0 0.0
    %7131 = vmatpush1.msra.mxu0 %v2979
    %7132 = vmatprep.subr.mxu0 0.0
    %7133 = vmatpush1.msra.mxu0 %v2980
    %7134 = vmatprep.subr.mxu0 0.0
    %7135 = vmatpush1.msra.mxu0 %v2981
    %7136 = vmatprep.subr.mxu0 0.0
    %7137 = vmatpush1.msra.mxu0 %v2982
    %7138 = vmatprep.subr.mxu0 0.0
    %7139 = vmatpush1.msra.mxu0 %v2983
    %7140 = vmatprep.subr.mxu0 0.0
    %7141 = vmatpush1.msra.mxu0 %v2984
    %7142 = vmatprep.subr.mxu0 0.0
    %7143 = vmatpush1.msra.mxu0 %v2985
    %7144 = vmatprep.subr.mxu0 0.0
    %7145 = vmatpush1.msra.mxu0 %v2986
    %7146 = vmatprep.subr.mxu0 0.0
    %7147 = vmatpush1.msra.mxu0 %v2987
    %7148 = vmatprep.subr.mxu0 0.0
    %7149 = vmatpush1.msra.mxu0 %v2988
    %7150 = vmatprep.subr.mxu0 0.0
    %7151 = vmatpush1.msra.mxu0 %v2989
    %7152 = vmatprep.subr.mxu0 0.0
    %7153 = vmatpush1.msra.mxu0 %v2990
    %7154 = vmatprep.subr.mxu0 0.0
    %7155 = vmatpush1.msra.mxu0 %v2991
    %7156 = vmatprep.subr.mxu0 0.0
    %7157 = vmatpush1.msra.mxu0 %v2992
    %7158 = vmatprep.subr.mxu0 0.0
    %7159 = vmatpush1.msra.mxu0 %v2993
    %7160 = vmatprep.subr.mxu0 0.0
    %7161 = vmatpush1.msra.mxu0 %v2994
    %7162 = vmatprep.subr.mxu0 0.0
    %7163 = vmatpush1.msra.mxu0 %v2995
    %7164 = vmatprep.subr.mxu0 0.0
    %7165 = vmatpush1.msra.mxu0 %v2996
    %7166 = vmatprep.subr.mxu0 0.0
    %7167 = vmatpush1.msra.mxu0 %v2997
    %7168 = vmatprep.subr.mxu0 0.0
    %7169 = vmatpush1.msra.mxu0 0.0
    %7170 = vmatprep.subr.mxu0 0.0
    %7171 = vmatpush1.msra.mxu0 0.0
    %7172 = vmatprep.subr.mxu0 0.0
    %7173 = vmatpush1.msra.mxu0 0.0
    %7174 = vmatprep.subr.mxu0 0.0
    %7175 = vmatpush1.msra.mxu0 0.0
    %7176 = vmatprep.subr.mxu0 0.0
    %7177 = vmatpush1.msra.mxu0 0.0
    %7178 = vmatprep.subr.mxu0 0.0
    %7179 = vmatpush1.msra.mxu0 0.0
    %7180 = vmatprep.subr.mxu0 0.0
    %7181 = vmatpush1.msra.mxu0 0.0
    %7182 = vmatprep.subr.mxu0 0.0
    %7183 = vmatpush1.msra.mxu0 0.0
    %7184 = vmatprep.mubr.f32.mxu0 %v7118
    %7185 = vmatmul.mubr.f32.gmra.mrb[0].mxu0 %v7115
    %v7186 = vpop.f32.mrb[0].mxu0
    %v7187 = vadd.f32 0.0, %v7186
    %v7188 = vpop.f32.mrb[0].mxu0
    %7189 = vdwg.mxu0
    %v7191 = vsel %vm3166, %v7187, 0
    %7193 = vmatprep.subr.mxu0 0.0
    %7194 = vmatpush1.msra.mxu0 %v3172
    %7195 = vmatprep.subr.mxu0 0.0
    %7196 = vmatpush1.msra.mxu0 0.0
    %7197 = vmatprep.subr.mxu0 0.0
    %7198 = vmatpush1.msra.mxu0 0.0
    %7199 = vmatprep.subr.mxu0 0.0
    %7200 = vmatpush1.msra.mxu0 0.0
    %7201 = vmatprep.subr.mxu0 0.0
    %7202 = vmatpush1.msra.mxu0 0.0
    %7203 = vmatprep.subr.mxu0 0.0
    %7204 = vmatpush1.msra.mxu0 0.0
    %7205 = vmatprep.subr.mxu0 0.0
    %7206 = vmatpush1.msra.mxu0 0.0
    %7207 = vmatprep.subr.mxu0 0.0
    %7208 = vmatpush1.msra.mxu0 0.0
    %7209 = vmatprep.subr.mxu0 0.0
    %7210 = vmatpush1.msra.mxu0 0.0
    %7211 = vmatprep.subr.mxu0 0.0
    %7212 = vmatpush1.msra.mxu0 0.0
    %7213 = vmatprep.subr.mxu0 0.0
    %7214 = vmatpush1.msra.mxu0 0.0
    %7215 = vmatprep.subr.mxu0 0.0
    %7216 = vmatpush1.msra.mxu0 0.0
    %7217 = vmatprep.subr.mxu0 0.0
    %7218 = vmatpush1.msra.mxu0 0.0
    %7219 = vmatprep.subr.mxu0 0.0
    %7220 = vmatpush1.msra.mxu0 0.0
    %7221 = vmatprep.subr.mxu0 0.0
    %7222 = vmatpush1.msra.mxu0 0.0
    %7223 = vmatprep.subr.mxu0 0.0
    %7224 = vmatpush1.msra.mxu0 0.0
    %7225 = vmatprep.subr.mxu0 0.0
    %7226 = vmatpush1.msra.mxu0 0.0
    %7227 = vmatprep.subr.mxu0 0.0
    %7228 = vmatpush1.msra.mxu0 0.0
    %7229 = vmatprep.subr.mxu0 0.0
    %7230 = vmatpush1.msra.mxu0 0.0
    %7231 = vmatprep.subr.mxu0 0.0
    %7232 = vmatpush1.msra.mxu0 0.0
    %7233 = vmatprep.subr.mxu0 0.0
    %7234 = vmatpush1.msra.mxu0 0.0
    %7235 = vmatprep.subr.mxu0 0.0
    %7236 = vmatpush1.msra.mxu0 0.0
    %7237 = vmatprep.subr.mxu0 0.0
    %7238 = vmatpush1.msra.mxu0 0.0
    %7239 = vmatprep.subr.mxu0 0.0
    %7240 = vmatpush1.msra.mxu0 0.0
    %7241 = vmatprep.subr.mxu0 0.0
    %7242 = vmatpush1.msra.mxu0 0.0
    %7243 = vmatprep.subr.mxu0 0.0
    %7244 = vmatpush1.msra.mxu0 0.0
    %7245 = vmatprep.subr.mxu0 0.0
    %7246 = vmatpush1.msra.mxu0 0.0
    %7247 = vmatprep.subr.mxu0 0.0
    %7248 = vmatpush1.msra.mxu0 0.0
    %7249 = vmatprep.subr.mxu0 0.0
    %7250 = vmatpush1.msra.mxu0 0.0
    %7251 = vmatprep.subr.mxu0 0.0
    %7252 = vmatpush1.msra.mxu0 0.0
    %7253 = vmatprep.subr.mxu0 0.0
    %7254 = vmatpush1.msra.mxu0 0.0
    %7255 = vmatprep.subr.mxu0 0.0
    %7256 = vmatpush1.msra.mxu0 0.0
    %7257 = vmatprep.mubr.f32.mxu0 0.0
    %7258 = vmatmul.mubr.f32.gmra.mrb[0].mxu0 %v7191
    %v7259 = vpop.f32.mrb[0].mxu0
    %v7260 = vadd.f32 %v3165, %v7259
    %v7261 = vpop.f32.mrb[0].mxu0
    %7262 = vdwg.mxu0
    %v7263 = vsel %vm3244, %v7260, -inf
    %7264 = vmax.xlane.f32.xlu0 %v7263
    %v7265 = vpop.xlane.xlu0 %7264
    %v7266 = vsub.f32 %v7260, %v7265
    %v7267 = vmul.f32 %v7266, 1.442695
    %v7268 = vpow.pop %v7267
    %v7269 = vsel %vm3244, %v7268, 0.0
    %7270 = vadd.xlane.f32.xlu0 %v7269
    %v7271 = vpop.xlane.xlu0 %7270
    %v7272 = vrcp.pop %v7271
    %v7273 = vmul.f32 %v7268, %v7272
    %v7274 = vmul.f32 %v7273, %v3068
    %7276 = vrot.lane.b32.xlu0 %v357, 6
    %v7277 = vpop.permute.xlu0 %7276
    %v7279 = vsel %vm3166, %v7274, %v7277
    %v7281 = vsel %vm3272, %v7279, 0
    %7283 = vmatprep.subr.mxu0 0.0
    %7284 = vmatpush1.msra.mxu0 %v3262
    %7285 = vmatprep.subr.mxu0 0.0
    %7286 = vmatpush1.msra.mxu0 %v3263
    %7287 = vmatprep.subr.mxu0 0.0
    %7288 = vmatpush1.msra.mxu0 %v3264
    %7289 = vmatprep.subr.mxu0 0.0
    %7290 = vmatpush1.msra.mxu0 %v3265
    %7291 = vmatprep.subr.mxu0 0.0
    %7292 = vmatpush1.msra.mxu0 %v3277
    %7293 = vmatprep.subr.mxu0 0.0
    %7294 = vmatpush1.msra.mxu0 0.0
    %7295 = vmatprep.subr.mxu0 0.0
    %7296 = vmatpush1.msra.mxu0 0.0
    %7297 = vmatprep.subr.mxu0 0.0
    %7298 = vmatpush1.msra.mxu0 0.0
    %7299 = vmatprep.subr.mxu0 0.0
    %7300 = vmatpush1.msra.mxu0 0.0
    %7301 = vmatprep.subr.mxu0 0.0
    %7302 = vmatpush1.msra.mxu0 0.0
    %7303 = vmatprep.subr.mxu0 0.0
    %7304 = vmatpush1.msra.mxu0 0.0
    %7305 = vmatprep.subr.mxu0 0.0
    %7306 = vmatpush1.msra.mxu0 0.0
    %7307 = vmatprep.subr.mxu0 0.0
    %7308 = vmatpush1.msra.mxu0 0.0
    %7309 = vmatprep.subr.mxu0 0.0
    %7310 = vmatpush1.msra.mxu0 0.0
    %7311 = vmatprep.subr.mxu0 0.0
    %7312 = vmatpush1.msra.mxu0 0.0
    %7313 = vmatprep.subr.mxu0 0.0
    %7314 = vmatpush1.msra.mxu0 0.0
    %7315 = vmatprep.subr.mxu0 0.0
    %7316 = vmatpush1.msra.mxu0 0.0
    %7317 = vmatprep.subr.mxu0 0.0
    %7318 = vmatpush1.msra.mxu0 0.0
    %7319 = vmatprep.subr.mxu0 0.0
    %7320 = vmatpush1.msra.mxu0 0.0
    %7321 = vmatprep.subr.mxu0 0.0
    %7322 = vmatpush1.msra.mxu0 0.0
    %7323 = vmatprep.subr.mxu0 0.0
    %7324 = vmatpush1.msra.mxu0 0.0
    %7325 = vmatprep.subr.mxu0 0.0
    %7326 = vmatpush1.msra.mxu0 0.0
    %7327 = vmatprep.subr.mxu0 0.0
    %7328 = vmatpush1.msra.mxu0 0.0
    %7329 = vmatprep.subr.mxu0 0.0
    %7330 = vmatpush1.msra.mxu0 0.0
    %7331 = vmatprep.subr.mxu0 0.0
    %7332 = vmatpush1.msra.mxu0 0.0
    %7333 = vmatprep.subr.mxu0 0.0
    %7334 = vmatpush1.msra.mxu0 0.0
    %7335 = vmatprep.subr.mxu0 0.0
    %7336 = vmatpush1.msra.mxu0 0.0
    %7337 = vmatprep.subr.mxu0 0.0
    %7338 = vmatpush1.msra.mxu0 0.0
    %7339 = vmatprep.subr.mxu0 0.0
    %7340 = vmatpush1.msra.mxu0 0.0
    %7341 = vmatprep.subr.mxu0 0.0
    %7342 = vmatpush1.msra.mxu0 0.0
    %7343 = vmatprep.subr.mxu0 0.0
    %7344 = vmatpush1.msra.mxu0 0.0
    %7345 = vmatprep.subr.mxu0 0.0
    %7346 = vmatpush1.msra.mxu0 0.0
    %7347 = vmatprep.mubr.f32.mxu0 0.0
    %7348 = vmatmul.mubr.f32.gmra.mrb[0].mxu0 %v7281
    %v7349 = vpop.f32.mrb[0].mxu0
    %v7350 = vadd.f32 %v3271, %v7349
    %v7351 = vpop.f32.mrb[0].mxu0
    %7352 = vdwg.mxu0
    %7353 = vrot.lane.b32.xlu0 %v6664, 64
    %v7354 = vpop.permute.xlu0 %7353
    %v7356 = vsel %vm369, %v7350, %v7354
    %v7358 = vsel %vm375, %v7356, 0
    %7360 = vmatprep.subr.mxu0 0.0
    %7361 = vmatpush1.msra.mxu0 %v3349
    %7362 = vmatprep.subr.mxu0 0.0
    %7363 = vmatpush1.msra.mxu0 %v3350
    %7364 = vmatprep.subr.mxu0 0.0
    %7365 = vmatpush1.msra.mxu0 %v3351
    %7366 = vmatprep.subr.mxu0 0.0
    %7367 = vmatpush1.msra.mxu0 %v3352
    %7368 = vmatprep.subr.mxu0 0.0
    %7369 = vmatpush1.msra.mxu0 %v3353
    %7370 = vmatprep.subr.mxu0 0.0
    %7371 = vmatpush1.msra.mxu0 %v3354
    %7372 = vmatprep.subr.mxu0 0.0
    %7373 = vmatpush1.msra.mxu0 %v3355
    %7374 = vmatprep.subr.mxu0 0.0
    %7375 = vmatpush1.msra.mxu0 %v3356
    %7376 = vmatprep.subr.mxu0 0.0
    %7377 = vmatpush1.msra.mxu0 0.0
    %7378 = vmatprep.subr.mxu0 0.0
    %7379 = vmatpush1.msra.mxu0 0.0
    %7380 = vmatprep.subr.mxu0 0.0
    %7381 = vmatpush1.msra.mxu0 0.0
    %7382 = vmatprep.subr.mxu0 0.0
    %7383 = vmatpush1.msra.mxu0 0.0
    %7384 = vmatprep.subr.mxu0 0.0
    %7385 = vmatpush1.msra.mxu0 0.0
    %7386 = vmatprep.subr.mxu0 0.0
    %7387 = vmatpush1.msra.mxu0 0.0
    %7388 = vmatprep.subr.mxu0 0.0
    %7389 = vmatpush1.msra.mxu0 0.0
    %7390 = vmatprep.subr.mxu0 0.0
    %7391 = vmatpush1.msra.mxu0 0.0
    %7392 = vmatprep.subr.mxu0 0.0
    %7393 = vmatpush1.msra.mxu0 0.0
    %7394 = vmatprep.subr.mxu0 0.0
    %7395 = vmatpush1.msra.mxu0 0.0
    %7396 = vmatprep.subr.mxu0 0.0
    %7397 = vmatpush1.msra.mxu0 0.0
    %7398 = vmatprep.subr.mxu0 0.0
    %7399 = vmatpush1.msra.mxu0 0.0
    %7400 = vmatprep.subr.mxu0 0.0
    %7401 = vmatpush1.msra.mxu0 0.0
    %7402 = vmatprep.subr.mxu0 0.0
    %7403 = vmatpush1.msra.mxu0 0.0
    %7404 = vmatprep.subr.mxu0 0.0
    %7405 = vmatpush1.msra.mxu0 0.0
    %7406 = vmatprep.subr.mxu0 0.0
    %7407 = vmatpush1.msra.mxu0 0.0
    %7408 = vmatprep.subr.mxu0 0.0
    %7409 = vmatpush1.msra.mxu0 0.0
    %7410 = vmatprep.subr.mxu0 0.0
    %7411 = vmatpush1.msra.mxu0 0.0
    %7412 = vmatprep.subr.mxu0 0.0
    %7413 = vmatpush1.msra.mxu0 0.0
    %7414 = vmatprep.subr.mxu0 0.0
    %7415 = vmatpush1.msra.mxu0 0.0
    %7416 = vmatprep.subr.mxu0 0.0
    %7417 = vmatpush1.msra.mxu0 0.0
    %7418 = vmatprep.subr.mxu0 0.0
    %7419 = vmatpush1.msra.mxu0 0.0
    %7420 = vmatprep.subr.mxu0 0.0
    %7421 = vmatpush1.msra.mxu0 0.0
    %7422 = vmatprep.subr.mxu0 0.0
    %7423 = vmatpush1.msra.mxu0 0.0
    %7424 = vmatprep.mubr.f32.mxu0 0.0
    %7425 = vmatmul.mubr.f32.gmra.mrb[0].mxu0 %v7358
    %v7426 = vpop.f32.mrb[0].mxu0
    %v7427 = vadd.f32 %v3365, %v7426
    %v7428 = vpop.f32.mrb[0].mxu0
    %7429 = vdwg.mxu0
    %v7430 = vmul.f32 %v7427, 0.5
    %v7431 = vtanh.pop %v7430
    %v7432 = vadd.f32 %v7431, 1.0
    %v7433 = vmul.f32 %v7432, 0.5
    %v7434 = vtanh.pop %v7427
    %v7435 = vmul.f32 %v7433, %v6658
    %7437 = vrot.lane.b32.xlu0 %v7434, 64
    %v7438 = vpop.permute.xlu0 %7437
    %v7440 = vmul.f32 %v7433, %v7438
    %7442 = vrot.lane.b32.xlu0 %v7440, 32
    %v7443 = vpop.permute.xlu0 %7442
    %v7445 = vadd.f32 %v7435, %v7443
    %v7446 = vtanh.pop %v7445
    %7448 = vrot.lane.b32.xlu0 %v7446, 64
    %v7449 = vpop.permute.xlu0 %7448
    %v7451 = vmul.f32 %v7433, %v7449
    %7453 = vrot.lane.b32.xlu0 %v7451, 32
    %v7454 = vpop.permute.xlu0 %7453
    %7456 = vrot.lane.b32.xlu0 %v6767, 64
    %v7457 = vpop.permute.xlu0 %7456
    %v7459 = vsel %vm369, %v7454, %v7457
    %v7461 = vsel %vm375, %v7459, 0
    %7463 = vmatprep.subr.mxu0 0.0
    %7464 = vmatpush1.msra.mxu0 %v3461
    %7465 = vmatprep.subr.mxu0 0.0
    %7466 = vmatpush1.msra.mxu0 %v3462
    %7467 = vmatprep.subr.mxu0 0.0
    %7468 = vmatpush1.msra.mxu0 %v3463
    %7469 = vmatprep.subr.mxu0 0.0
    %7470 = vmatpush1.msra.mxu0 %v3464
    %7471 = vmatprep.subr.mxu0 0.0
    %7472 = vmatpush1.msra.mxu0 %v3465
    %7473 = vmatprep.subr.mxu0 0.0
    %7474 = vmatpush1.msra.mxu0 %v3466
    %7475 = vmatprep.subr.mxu0 0.0
    %7476 = vmatpush1.msra.mxu0 %v3467
    %7477 = vmatprep.subr.mxu0 0.0
    %7478 = vmatpush1.msra.mxu0 %v3468
    %7479 = vmatprep.subr.mxu0 0.0
    %7480 = vmatpush1.msra.mxu0 0.0
    %7481 = vmatprep.subr.mxu0 0.0
    %7482 = vmatpush1.msra.mxu0 0.0
    %7483 = vmatprep.subr.mxu0 0.0
    %7484 = vmatpush1.msra.mxu0 0.0
    %7485 = vmatprep.subr.mxu0 0.0
    %7486 = vmatpush1.msra.mxu0 0.0
    %7487 = vmatprep.subr.mxu0 0.0
    %7488 = vmatpush1.msra.mxu0 0.0
    %7489 = vmatprep.subr.mxu0 0.0
    %7490 = vmatpush1.msra.mxu0 0.0
    %7491 = vmatprep.subr.mxu0 0.0
    %7492 = vmatpush1.msra.mxu0 0.0
    %7493 = vmatprep.subr.mxu0 0.0
    %7494 = vmatpush1.msra.mxu0 0.0
    %7495 = vmatprep.subr.mxu0 0.0
    %7496 = vmatpush1.msra.mxu0 0.0
    %7497 = vmatprep.subr.mxu0 0.0
    %7498 = vmatpush1.msra.mxu0 0.0
    %7499 = vmatprep.subr.mxu0 0.0
    %7500 = vmatpush1.msra.mxu0 0.0
    %7501 = vmatprep.subr.mxu0 0.0
    %7502 = vmatpush1.msra.mxu0 0.0
    %7503 = vmatprep.subr.mxu0 0.0
    %7504 = vmatpush1.msra.mxu0 0.0
    %7505 = vmatprep.subr.mxu0 0.0
    %7506 = vmatpush1.msra.mxu0 0.0
    %7507 = vmatprep.subr.mxu0 0.0
    %7508 = vmatpush1.msra.mxu0 0.0
    %7509 = vmatprep.subr.mxu0 0.0
    %7510 = vmatpush1.msra.mxu0 0.0
    %7511 = vmatprep.subr.mxu0 0.0
    %7512 = vmatpush1.msra.mxu0 0.0
    %7513 = vmatprep.subr.mxu0 0.0
    %7514 = vmatpush1.msra.mxu0 0.0
    %7515 = vmatprep.subr.mxu0 0.0
    %7516 = vmatpush1.msra.mxu0 0.0
    %7517 = vmatprep.subr.mxu0 0.0
    %7518 = vmatpush1.msra.mxu0 0.0
    %7519 = vmatprep.subr.mxu0 0.0
    %7520 = vmatpush1.msra.mxu0 0.0
    %7521 = vmatprep.subr.mxu0 0.0
    %7522 = vmatpush1.msra.mxu0 0.0
    %7523 = vmatprep.subr.mxu0 0.0
    %7524 = vmatpush1.msra.mxu0 0.0
    %7525 = vmatprep.subr.mxu0 0.0
    %7526 = vmatpush1.msra.mxu0 0.0
    %7527 = vmatprep.mubr.f32.mxu0 0.0
    %7528 = vmatmul.mubr.f32.gmra.mrb[0].mxu0 %v7461
    %v7529 = vpop.f32.mrb[0].mxu0
    %v7530 = vadd.f32 %v3481, %v7529
    %v7531 = vpop.f32.mrb[0].mxu0
    %7532 = vdwg.mxu0
    %v7533 = vmul.f32 %v7530, 0.5
    %v7534 = vtanh.pop %v7533
    %v7535 = vadd.f32 %v7534, 1.0
    %v7536 = vmul.f32 %v7535, 0.5
    %v7537 = vtanh.pop %v7530
    %v7538 = vmul.f32 %v7536, %v6761
    %7540 = vrot.lane.b32.xlu0 %v7537, 64
    %v7541 = vpop.permute.xlu0 %7540
    %v7543 = vmul.f32 %v7536, %v7541
    %7545 = vrot.lane.b32.xlu0 %v7543, 32
    %v7546 = vpop.permute.xlu0 %7545
    %v7548 = vadd.f32 %v7538, %v7546
    %v7549 = vtanh.pop %v7548
    %7551 = vrot.lane.b32.xlu0 %v7549, 64
    %v7552 = vpop.permute.xlu0 %7551
    %v7554 = vmul.f32 %v7536, %v7552
    %7556 = vrot.lane.b32.xlu0 %v7554, 32
    %v7557 = vpop.permute.xlu0 %7556
    %7559 = vrot.lane.b32.xlu0 %v6870, 64
    %v7560 = vpop.permute.xlu0 %7559
    %v7562 = vsel %vm369, %v7557, %v7560
    %v7564 = vsel %vm375, %v7562, 0
    %7566 = vmatprep.subr.mxu0 0.0
    %7567 = vmatpush1.msra.mxu0 %v3577
    %7568 = vmatprep.subr.mxu0 0.0
    %7569 = vmatpush1.msra.mxu0 %v3578
    %7570 = vmatprep.subr.mxu0 0.0
    %7571 = vmatpush1.msra.mxu0 %v3579
    %7572 = vmatprep.subr.mxu0 0.0
    %7573 = vmatpush1.msra.mxu0 %v3580
    %7574 = vmatprep.subr.mxu0 0.0
    %7575 = vmatpush1.msra.mxu0 %v3581
    %7576 = vmatprep.subr.mxu0 0.0
    %7577 = vmatpush1.msra.mxu0 %v3582
    %7578 = vmatprep.subr.mxu0 0.0
    %7579 = vmatpush1.msra.mxu0 %v3583
    %7580 = vmatprep.subr.mxu0 0.0
    %7581 = vmatpush1.msra.mxu0 %v3584
    %7582 = vmatprep.subr.mxu0 0.0
    %7583 = vmatpush1.msra.mxu0 0.0
    %7584 = vmatprep.subr.mxu0 0.0
    %7585 = vmatpush1.msra.mxu0 0.0
    %7586 = vmatprep.subr.mxu0 0.0
    %7587 = vmatpush1.msra.mxu0 0.0
    %7588 = vmatprep.subr.mxu0 0.0
    %7589 = vmatpush1.msra.mxu0 0.0
    %7590 = vmatprep.subr.mxu0 0.0
    %7591 = vmatpush1.msra.mxu0 0.0
    %7592 = vmatprep.subr.mxu0 0.0
    %7593 = vmatpush1.msra.mxu0 0.0
    %7594 = vmatprep.subr.mxu0 0.0
    %7595 = vmatpush1.msra.mxu0 0.0
    %7596 = vmatprep.subr.mxu0 0.0
    %7597 = vmatpush1.msra.mxu0 0.0
    %7598 = vmatprep.subr.mxu0 0.0
    %7599 = vmatpush1.msra.mxu0 0.0
    %7600 = vmatprep.subr.mxu0 0.0
    %7601 = vmatpush1.msra.mxu0 0.0
    %7602 = vmatprep.subr.mxu0 0.0
    %7603 = vmatpush1.msra.mxu0 0.0
    %7604 = vmatprep.subr.mxu0 0.0
    %7605 = vmatpush1.msra.mxu0 0.0
    %7606 = vmatprep.subr.mxu0 0.0
    %7607 = vmatpush1.msra.mxu0 0.0
    %7608 = vmatprep.subr.mxu0 0.0
    %7609 = vmatpush1.msra.mxu0 0.0
    %7610 = vmatprep.subr.mxu0 0.0
    %7611 = vmatpush1.msra.mxu0 0.0
    %7612 = vmatprep.subr.mxu0 0.0
    %7613 = vmatpush1.msra.mxu0 0.0
    %7614 = vmatprep.subr.mxu0 0.0
    %7615 = vmatpush1.msra.mxu0 0.0
    %7616 = vmatprep.subr.mxu0 0.0
    %7617 = vmatpush1.msra.mxu0 0.0
    %7618 = vmatprep.subr.mxu0 0.0
    %7619 = vmatpush1.msra.mxu0 0.0
    %7620 = vmatprep.subr.mxu0 0.0
    %7621 = vmatpush1.msra.mxu0 0.0
    %7622 = vmatprep.subr.mxu0 0.0
    %7623 = vmatpush1.msra.mxu0 0.0
    %7624 = vmatprep.subr.mxu0 0.0
    %7625 = vmatpush1.msra.mxu0 0.0
    %7626 = vmatprep.subr.mxu0 0.0
    %7627 = vmatpush1.msra.mxu0 0.0
    %7628 = vmatprep.subr.mxu0 0.0
    %7629 = vmatpush1.msra.mxu0 0.0
    %7630 = vmatprep.mubr.f32.mxu0 0.0
    %7631 = vmatmul.mubr.f32.gmra.mrb[0].mxu0 %v7564
    %v7632 = vpop.f32.mrb[0].mxu0
    %v7633 = vadd.f32 %v3597, %v7632
    %v7634 = vpop.f32.mrb[0].mxu0
    %7635 = vdwg.mxu0
    %v7636 = vmul.f32 %v7633, 0.5
    %v7637 = vtanh.pop %v7636
    %v7638 = vadd.f32 %v7637, 1.0
    %v7639 = vmul.f32 %v7638, 0.5
    %v7640 = vtanh.pop %v7633
    %v7641 = vmul.f32 %v7639, %v6864
    %7643 = vrot.lane.b32.xlu0 %v7640, 64
    %v7644 = vpop.permute.xlu0 %7643
    %v7646 = vmul.f32 %v7639, %v7644
    %7648 = vrot.lane.b32.xlu0 %v7646, 32
    %v7649 = vpop.permute.xlu0 %7648
    %v7651 = vadd.f32 %v7641, %v7649
    %v7652 = vtanh.pop %v7651
    %7654 = vrot.lane.b32.xlu0 %v7652, 64
    %v7655 = vpop.permute.xlu0 %7654
    %v7657 = vmul.f32 %v7639, %v7655
    %7659 = vrot.lane.b32.xlu0 %v7657, 32
    %v7660 = vpop.permute.xlu0 %7659
    %v7662 = vsel %vm369, %v7660, %v7107
    %v7664 = vsel %vm375, %v7662, 0
    %7666 = vmatprep.subr.mxu0 0.0
    %7667 = vmatpush1.msra.mxu0 %v3693
    %7668 = vmatprep.subr.mxu0 0.0
    %7669 = vmatpush1.msra.mxu0 %v3694
    %7670 = vmatprep.subr.mxu0 0.0
    %7671 = vmatpush1.msra.mxu0 %v3695
    %7672 = vmatprep.subr.mxu0 0.0
    %7673 = vmatpush1.msra.mxu0 %v3696
    %7674 = vmatprep.subr.mxu0 0.0
    %7675 = vmatpush1.msra.mxu0 %v3697
    %7676 = vmatprep.subr.mxu0 0.0
    %7677 = vmatpush1.msra.mxu0 %v3698
    %7678 = vmatprep.subr.mxu0 0.0
    %7679 = vmatpush1.msra.mxu0 %v3699
    %7680 = vmatprep.subr.mxu0 0.0
    %7681 = vmatpush1.msra.mxu0 %v3700
    %7682 = vmatprep.subr.mxu0 0.0
    %7683 = vmatpush1.msra.mxu0 0.0
    %7684 = vmatprep.subr.mxu0 0.0
    %7685 = vmatpush1.msra.mxu0 0.0
    %7686 = vmatprep.subr.mxu0 0.0
    %7687 = vmatpush1.msra.mxu0 0.0
    %7688 = vmatprep.subr.mxu0 0.0
    %7689 = vmatpush1.msra.mxu0 0.0
    %7690 = vmatprep.subr.mxu0 0.0
    %7691 = vmatpush1.msra.mxu0 0.0
    %7692 = vmatprep.subr.mxu0 0.0
    %7693 = vmatpush1.msra.mxu0 0.0
    %7694 = vmatprep.subr.mxu0 0.0
    %7695 = vmatpush1.msra.mxu0 0.0
    %7696 = vmatprep.subr.mxu0 0.0
    %7697 = vmatpush1.msra.mxu0 0.0
    %7698 = vmatprep.subr.mxu0 0.0
    %7699 = vmatpush1.msra.mxu0 0.0
    %7700 = vmatprep.subr.mxu0 0.0
    %7701 = vmatpush1.msra.mxu0 0.0
    %7702 = vmatprep.subr.mxu0 0.0
    %7703 = vmatpush1.msra.mxu0 0.0
    %7704 = vmatprep.subr.mxu0 0.0
    %7705 = vmatpush1.msra.mxu0 0.0
    %7706 = vmatprep.subr.mxu0 0.0
    %7707 = vmatpush1.msra.mxu0 0.0
    %7708 = vmatprep.subr.mxu0 0.0
    %7709 = vmatpush1.msra.mxu0 0.0
    %7710 = vmatprep.subr.mxu0 0.0
    %7711 = vmatpush1.msra.mxu0 0.0
    %7712 = vmatprep.subr.mxu0 0.0
    %7713 = vmatpush1.msra.mxu0 0.0
    %7714 = vmatprep.subr.mxu0 0.0
    %7715 = vmatpush1.msra.mxu0 0.0
    %7716 = vmatprep.subr.mxu0 0.0
    %7717 = vmatpush1.msra.mxu0 0.0
    %7718 = vmatprep.subr.mxu0 0.0
    %7719 = vmatpush1.msra.mxu0 0.0
    %7720 = vmatprep.subr.mxu0 0.0
    %7721 = vmatpush1.msra.mxu0 0.0
    %7722 = vmatprep.subr.mxu0 0.0
    %7723 = vmatpush1.msra.mxu0 0.0
    %7724 = vmatprep.subr.mxu0 0.0
    %7725 = vmatpush1.msra.mxu0 0.0
    %7726 = vmatprep.subr.mxu0 0.0
    %7727 = vmatpush1.msra.mxu0 0.0
    %7728 = vmatprep.subr.mxu0 0.0
    %7729 = vmatpush1.msra.mxu0 0.0
    %7730 = vmatprep.mubr.f32.mxu0 0.0
    %7731 = vmatmul.mubr.f32.gmra.mrb[0].mxu0 %v7664
    %v7732 = vpop.f32.mrb[0].mxu0
    %v7733 = vadd.f32 %v3709, %v7732
    %v7734 = vpop.f32.mrb[0].mxu0
    %7735 = vdwg.mxu0
    %v7736 = vmul.f32 %v7733, 0.5
    %v7737 = vtanh.pop %v7736
    %v7738 = vadd.f32 %v7737, 1.0
    %v7739 = vmul.f32 %v7738, 0.5
    %v7740 = vtanh.pop %v7733
    %v7741 = vmul.f32 %v7739, %v6964
    %7743 = vrot.lane.b32.xlu0 %v7740, 64
    %v7744 = vpop.permute.xlu0 %7743
    %v7746 = vmul.f32 %v7739, %v7744
    %7748 = vrot.lane.b32.xlu0 %v7746, 32
    %v7749 = vpop.permute.xlu0 %7748
    %v7751 = vadd.f32 %v7741, %v7749
    %v7752 = vtanh.pop %v7751
    %7754 = vrot.lane.b32.xlu0 %v7752, 64
    %v7755 = vpop.permute.xlu0 %7754
    %v7757 = vmul.f32 %v7739, %v7755
    %7759 = vrot.lane.b32.xlu0 %v7757, 32
    %v7760 = vpop.permute.xlu0 %7759
    %v7761 = vsel %vm369, %v7760, 0
    %7763 = vmatprep.subr.mxu0 0.0
    %7764 = vmatpush1.msra.mxu0 %v3805
    %7765 = vmatprep.subr.mxu0 0.0
    %7766 = vmatpush1.msra.mxu0 %v3806
    %7767 = vmatprep.subr.mxu0 0.0
    %7768 = vmatpush1.msra.mxu0 %v3807
    %7769 = vmatprep.subr.mxu0 0.0
    %7770 = vmatpush1.msra.mxu0 %v3808
    %7771 = vmatprep.subr.mxu0 0.0
    %7772 = vmatpush1.msra.mxu0 0.0
    %7773 = vmatprep.subr.mxu0 0.0
    %7774 = vmatpush1.msra.mxu0 0.0
    %7775 = vmatprep.subr.mxu0 0.0
    %7776 = vmatpush1.msra.mxu0 0.0
    %7777 = vmatprep.subr.mxu0 0.0
    %7778 = vmatpush1.msra.mxu0 0.0
    %7779 = vmatprep.subr.mxu0 0.0
    %7780 = vmatpush1.msra.mxu0 0.0
    %7781 = vmatprep.subr.mxu0 0.0
    %7782 = vmatpush1.msra.mxu0 0.0
    %7783 = vmatprep.subr.mxu0 0.0
    %7784 = vmatpush1.msra.mxu0 0.0
    %7785 = vmatprep.subr.mxu0 0.0
    %7786 = vmatpush1.msra.mxu0 0.0
    %7787 = vmatprep.subr.mxu0 0.0
    %7788 = vmatpush1.msra.mxu0 0.0
    %7789 = vmatprep.subr.mxu0 0.0
    %7790 = vmatpush1.msra.mxu0 0.0
    %7791 = vmatprep.subr.mxu0 0.0
    %7792 = vmatpush1.msra.mxu0 0.0
    %7793 = vmatprep.subr.mxu0 0.0
    %7794 = vmatpush1.msra.mxu0 0.0
    %7795 = vmatprep.subr.mxu0 0.0
    %7796 = vmatpush1.msra.mxu0 0.0
    %7797 = vmatprep.subr.mxu0 0.0
    %7798 = vmatpush1.msra.mxu0 0.0
    %7799 = vmatprep.subr.mxu0 0.0
    %7800 = vmatpush1.msra.mxu0 0.0
    %7801 = vmatprep.subr.mxu0 0.0
    %7802 = vmatpush1.msra.mxu0 0.0
    %7803 = vmatprep.subr.mxu0 0.0
    %7804 = vmatpush1.msra.mxu0 0.0
    %7805 = vmatprep.subr.mxu0 0.0
    %7806 = vmatpush1.msra.mxu0 0.0
    %7807 = vmatprep.subr.mxu0 0.0
    %7808 = vmatpush1.msra.mxu0 0.0
    %7809 = vmatprep.subr.mxu0 0.0
    %7810 = vmatpush1.msra.mxu0 0.0
    %7811 = vmatprep.subr.mxu0 0.0
    %7812 = vmatpush1.msra.mxu0 0.0
    %7813 = vmatprep.subr.mxu0 0.0
    %7814 = vmatpush1.msra.mxu0 0.0
    %7815 = vmatprep.subr.mxu0 0.0
    %7816 = vmatpush1.msra.mxu0 0.0
    %7817 = vmatprep.subr.mxu0 0.0
    %7818 = vmatpush1.msra.mxu0 0.0
    %7819 = vmatprep.subr.mxu0 0.0
    %7820 = vmatpush1.msra.mxu0 0.0
    %7821 = vmatprep.subr.mxu0 0.0
    %7822 = vmatpush1.msra.mxu0 0.0
    %7823 = vmatprep.subr.mxu0 0.0
    %7824 = vmatpush1.msra.mxu0 0.0
    %7825 = vmatprep.subr.mxu0 0.0
    %7826 = vmatpush1.msra.mxu0 0.0
    %7827 = vmatprep.mubr.f32.mxu0 0.0
    %7828 = vmatmul.mubr.f32.gmra.mrb[0].mxu0 %v7761
    %v7829 = vpop.f32.mrb[0].mxu0
    %v7830 = vadd.f32 %v3813, %v7829
    %v7831 = vpop.f32.mrb[0].mxu0
    %7832 = vdwg.mxu0
    %7833 = vset.pattern.permute.xlu0 6
    %7834 = vperm.xlu0 %7833, %v3894
    %v7835 = vpop.permute.xlu0 %7834
    %vm7836 = vcmp.eq.s32.totalorder %v7835, %v35
    %v7837 = vsel %vm7836, 1, 0
    %v7838 = vcvt.s32.f32 %v7837
    %v7839 = vsel %vm3901, %v7830, -inf
    %7840 = vmax.xlane.f32.xlu0 %v7839
    %v7841 = vpop.xlane.xlu0 %7840
    %v7842 = vsub.f32 %v7830, %v7841
    %v7843 = vmul.f32 %v7842, 1.442695
    %v7844 = vpow.pop %v7843
    %v7845 = vsel %vm3901, %v7844, 0.0
    %7846 = vadd.xlane.f32.xlu0 %v7845
    %v7847 = vpop.xlane.xlu0 %7846
    %v7848 = vlog2.pop %v7847
    %v7849 = vmul.f32 %v7848, 0.6931472
    %v7850 = vadd.f32 %v7849, %v7841
    %v7851 = vmul.f32 %v7838, %v7830
    %v7852 = vsel %vm3901, %v7851, 0.0
    %7853 = vadd.xlane.f32.xlu0 %v7852
    %v7854 = vpop.xlane.xlu0 %7853
    %v7855 = vsub.f32 %v7850, %v7854
    %7856 = vrot.lane.b32.xlu0 %v3891, 122
    %v7857 = vpop.permute.xlu0 %7856
    %v7859 = vsel %vm3923, %v7857, 0.0
    %7860 = vadd.xlane.f32.xlu0 %v7859
    %v7861 = vpop.xlane.xlu0 %7860
    %v7862 = vrot.slane %v7861, 4
    %v7863 = vadd.f32 %v7861, %v7862
    %v7864 = vrot.slane %v7863, 2
    %v7865 = vadd.f32 %v7863, %v7864
    %v7866 = vrot.slane %v7865, 1
    %v7867 = vadd.f32 %v7865, %v7866
    %s7868 = vtos %v7867
    %v7869 = vstv %s7868
    %vm7870 = vcmp.gt.f32.partialorder %v7869, 0.0
    %v7871 = vmul.f32 %v7855, %v3891
    %7873 = vrot.lane.b32.xlu0 %v7871, 122
    %v7874 = vpop.permute.xlu0 %7873
    %v7876 = vsel %vm3923, %v7874, 0.0
    %7877 = vadd.xlane.f32.xlu0 %v7876
    %v7878 = vpop.xlane.xlu0 %7877
    %v7879 = vrot.slane %v7878, 4
    %v7880 = vadd.f32 %v7878, %v7879
    %v7881 = vrot.slane %v7880, 2
    %v7882 = vadd.f32 %v7880, %v7881
    %v7883 = vrot.slane %v7882, 1
    %v7884 = vadd.f32 %v7882, %v7883
    %s7885 = vtos %v7884
    %v7886 = vstv %s7885
    %v7887 = vmax.f32 %v7869, 1.0
    %v7888 = vrcp.pop %v7887
    %v7889 = vmul.f32 %v7886, %v7888
    %v7890 = vsel %vm7870, %v7889, 0.0
    %v7891 = vadd.f32 %v7104, %v7890
    %vm7892 = vcmask 0
    %7893 = vst.msk [vmem:[#allocation5] sm:$0x1] %vm7892, %v7891
    // Predicated region
    $region14: #{attention_forward.1} parent=1 // pred_check
      _
    $region15: #{attention_forward.1} parent=1 // pred_check_branch
      %7895 = sbr.rel (0) target = $region17
    $region16: #{attention_forward.1} parent=1 // pred_region
      %s7897 = ssub.s32 16, 16
      %7898 = vsyncadd [#allocation4], %s7897
      %s7900 = sshll.u32 [#allocation5], 4
      %s7901 = int_to_ptr.vmem [resolvable:$true] %s7900
      %7903 = dma.vmem_to_hbm [thread:$0]  %s7901, 16, %s2, [#allocation4]
    $region17: #{attention_forward.1} parent=1 // pred_fallthru
      _
    // Predicated region
    $region18: #{attention_forward.1} parent=1 // pred_check
      _
    $region19: #{attention_forward.1} parent=1 // pred_check_branch
      %7905 = sbr.rel (0) target = $region21
    $region20: #{attention_forward.1} parent=1 // pred_region
      %7906 = dma.done [#allocation4], 16
    $region21: #{attention_forward.1} parent=1 // pred_fallthru
      _
    %7907 = vsyncpa [#allocation3], 1
    %7908 = vsyncpa [#allocation4], 1

</llo_original>
